<compile_context>
chip_gen: v7x
topology: tpu7x:2x2x1
jax: 0.10.0
libtpu: 0.0.40
codegen_flags: <defaults>
</compile_context>

<pallas_src>
import math
import functools

import jax
import jax.numpy as jnp
from jax import lax
from jax.experimental import pallas as pl
from jax.experimental.pallas import tpu as pltpu


def _round_up(x, m):
    return ((x + m - 1) // m) * m


# ----------------------------------------------------------------------------
# Tiled matmul: bf16 MXU inputs, f32 accumulation in VMEM scratch.
# ----------------------------------------------------------------------------
def _matmul_kernel(a_ref, b_ref, o_ref, acc_ref):
    @pl.when(pl.program_id(2) == 0)
    def _():
        acc_ref[...] = jnp.zeros_like(acc_ref)

    acc_ref[...] += jnp.dot(a_ref[...], b_ref[...],
                            preferred_element_type=jnp.float32)

    @pl.when(pl.program_id(2) == pl.num_programs(2) - 1)
    def _():
        o_ref[...] = acc_ref[...].astype(o_ref.dtype)


def pl_matmul(a, b):
    """(M, K) @ (K, N) -> (M, N) f32. Operands are fed to the MXU in bf16."""
    M, K = a.shape
    K2, N = b.shape
    assert K == K2
    a = a.astype(jnp.bfloat16)
    b = b.astype(jnp.bfloat16)
    # Tile sizes: bounded so double-buffered blocks stay far below VMEM on all
    # generations (incl. v7x's 64 MiB); sublane dim rounded to 16 for bf16 packing.
    tm = min(256, _round_up(M, 16))
    tn = min(256, _round_up(N, 128))
    tk = min(512, _round_up(K, 128))
    Mp, Kp, Np = _round_up(M, tm), _round_up(K, tk), _round_up(N, tn)
    if (Mp, Kp) != (M, K):
        a = jnp.pad(a, ((0, Mp - M), (0, Kp - K)))
    if (Kp, Np) != (K, N):
        b = jnp.pad(b, ((0, Kp - K), (0, Np - N)))
    out = pl.pallas_call(
        _matmul_kernel,
        grid=(Mp // tm, Np // tn, Kp // tk),
        in_specs=[pl.BlockSpec((tm, tk), lambda i, j, k: (i, k)),
                  pl.BlockSpec((tk, tn), lambda i, j, k: (k, j))],
        out_specs=pl.BlockSpec((tm, tn), lambda i, j, k: (i, j)),
        out_shape=jax.ShapeDtypeStruct((Mp, Np), jnp.float32),
        scratch_shapes=[pltpu.VMEM((tm, tn), jnp.float32)],
        compiler_params=pltpu.CompilerParams(
            dimension_semantics=("parallel", "parallel", "arbitrary"),
            vmem_limit_bytes=32 * 1024 * 1024),
    )(a, b)
    return out[:M, :N]


# ----------------------------------------------------------------------------
# Fused residual-add + RMSNorm (prenorm), row-tiled.
# ----------------------------------------------------------------------------
def _add_rmsnorm_kernel(x_ref, r_ref, w_ref, y_ref, res_ref, *, eps):
    s = x_ref[...] + r_ref[...]
    res_ref[...] = s
    ms = jnp.mean(s * s, axis=-1, keepdims=True)
    y_ref[...] = s * lax.rsqrt(ms + eps) * w_ref[...]


def pl_add_rmsnorm(x2, r2, w, eps=1e-5):
    # x2, r2: (N, D); returns (rmsnorm(x2 + r2) * w, x2 + r2)  -- mamba fused prenorm.
    N, D = x2.shape
    tm = min(256, _round_up(N, 8))
    Np = _round_up(N, tm)
    x2 = x2.astype(jnp.float32)
    r2 = r2.astype(jnp.float32)
    if Np != N:
        x2 = jnp.pad(x2, ((0, Np - N), (0, 0)))
        r2 = jnp.pad(r2, ((0, Np - N), (0, 0)))
    w2 = w.reshape(1, D).astype(jnp.float32)
    kernel = functools.partial(_add_rmsnorm_kernel, eps=eps)
    y, res = pl.pallas_call(
        kernel,
        grid=(Np // tm,),
        in_specs=[pl.BlockSpec((tm, D), lambda i: (i, 0)),
                  pl.BlockSpec((tm, D), lambda i: (i, 0)),
                  pl.BlockSpec((1, D), lambda i: (0, 0))],
        out_specs=(pl.BlockSpec((tm, D), lambda i: (i, 0)),
                   pl.BlockSpec((tm, D), lambda i: (i, 0))),
        out_shape=(jax.ShapeDtypeStruct((Np, D), jnp.float32),
                   jax.ShapeDtypeStruct((Np, D), jnp.float32)),
        compiler_params=pltpu.CompilerParams(dimension_semantics=("parallel",)),
    )(x2, r2, w2)
    return y[:N], res[:N]


# ----------------------------------------------------------------------------
# Depthwise causal conv1d + SiLU. Causal halo built in VMEM (no HBM pad copy).
# ----------------------------------------------------------------------------
def _dwconv_silu_kernel(x_ref, w_ref, b_ref, o_ref, xpad_sc):
    L, C = o_ref.shape
    d_conv = w_ref.shape[0]
    # Build causally padded copy in VMEM scratch: d_conv-1 zero rows on top.
    xpad_sc[pl.ds(0, d_conv - 1), :] = jnp.zeros((d_conv - 1, C), jnp.float32)
    xpad_sc[pl.ds(d_conv - 1, L), :] = x_ref[...]
    acc = jnp.zeros((L, C), jnp.float32) + b_ref[...]
    for k in range(d_conv):                       # static unroll over small kernel
        acc = acc + xpad_sc[pl.ds(k, L), :] * w_ref[k]
    # SiLU via approx reciprocal on the EUP (frees VALU slots in this VPU-bound kernel)
    o_ref[...] = acc * pl.reciprocal(1.0 + jnp.exp(-acc), approx=True)


def pl_dwconv_silu(xc, conv_w, conv_b):
    # xc: (B, L, C); conv_w: torch (C, 1, d_conv); causal depthwise conv1d + SiLU.
    B, L, C = xc.shape
    d_conv = conv_w.shape[-1]
    wT = jnp.transpose(conv_w[:, 0, :], (1, 0)).astype(jnp.float32)   # (d_conv, C)
    b2 = conv_b.reshape(1, C).astype(jnp.float32)
    return pl.pallas_call(
        _dwconv_silu_kernel,
        grid=(B,),
        in_specs=[pl.BlockSpec((None, L, C), lambda i: (i, 0, 0)),
                  pl.BlockSpec((d_conv, C), lambda i: (0, 0)),
                  pl.BlockSpec((1, C), lambda i: (0, 0))],
        out_specs=pl.BlockSpec((None, L, C), lambda i: (i, 0, 0)),
        out_shape=jax.ShapeDtypeStruct((B, L, C), jnp.float32),
        scratch_shapes=[pltpu.VMEM((L + d_conv - 1, C), jnp.float32)],
        compiler_params=pltpu.CompilerParams(dimension_semantics=("parallel",)),
    )(xc.astype(jnp.float32), wT, b2)


# ----------------------------------------------------------------------------
# Selective scan: grid = (batch, time-chunk); B/C as VMEM tensors; the state
# update is a full (d_state, d_inner) tile per step; softplus / dt*u / D*u and
# the SiLU(z) gating are hoisted out of the serial loop; dense output store.
# ----------------------------------------------------------------------------
def _selective_scan_kernel(u_ref, dt_ref, z_ref, B_ref, C_ref, AT_ref, D_ref,
                           dtb_ref, y_ref, h_sc, dt_sc, dtu_sc, y_sc):
    Tc = u_ref.shape[0]

    # Reset recurrent state at the start of each batch element's scan.
    @pl.when(pl.program_id(1) == 0)
    def _():
        h_sc[...] = jnp.zeros_like(h_sc)

    # ---- vectorized per-chunk precompute (off the serial critical path) ----
    v = dt_ref[...] + dtb_ref[...]                                        # (Tc, d_inner)
    dt_sc[...] = jnp.maximum(v, 0.0) + jnp.log(1.0 + jnp.exp(-jnp.abs(v)))  # softplus
    dtu_sc[...] = dt_sc[...] * u_ref[...]                                 # dt * u

    AT = AT_ref[...]                              # (d_state, d_inner), loop-invariant

    # ---- serial recurrence: only the h update stays sequential ----
    def body(t, carry):
        dt_t = dt_sc[t]                                           # (d_inner,)
        a_t = jnp.exp(AT * dt_t)                                  # (d_state, d_inner)
        b_row = B_ref[pl.ds(t, 1), :]                             # (1, d_state)
        dtu_row = dtu_sc[pl.ds(t, 1), :]                          # (1, d_inner)
        # outer product B_t (x) (dt_t*u_t) on the MXU -> (d_state, d_inner)
        dbu_t = jnp.einsum('kn,kd->nd', b_row, dtu_row,
                           preferred_element_type=jnp.float32)
        h = a_t * h_sc[...] + dbu_t
        h_sc[...] = h
        c_row = C_ref[pl.ds(t, 1), :]                             # (1, d_state)
        y_sc[pl.ds(t, 1), :] = jnp.dot(c_row, h,
                                       preferred_element_type=jnp.float32)
        return carry

    lax.fori_loop(0, Tc, body, 0)

    # ---- dense, lane-aligned output store: skip connection + SiLU(z) gating ----
    z = z_ref[...]
    gate = z * pl.reciprocal(1.0 + jnp.exp(-z), approx=True)
    y_ref[...] = (D_ref[...] * u_ref[...] + y_sc[...]) * gate


def pl_selective_scan(u, dt, z, Bm, Cm, A, D, dt_bias):
    # u, dt, z: (B, L, d_inner); Bm, Cm: (B, L, d_state); A: (d_inner, d_state)
    B, L, d_inner = u.shape
    d_state = A.shape[1]
    AT = jnp.transpose(A).astype(jnp.float32)                 # (d_state, d_inner)
    D2 = D.reshape(1, d_inner).astype(jnp.float32)
    dtb2 = dt_bias.reshape(1, d_inner).astype(jnp.float32)
    f32 = jnp.float32
    # Time-chunking bounds per-chunk VMEM scratch; toy sequence lengths fit one chunk.
    Tc = 128 if (L % 128 == 0) else L
    grid = (B, L // Tc)
    return pl.pallas_call(
        _selective_scan_kernel,
        grid=grid,
        in_specs=[pl.BlockSpec((None, Tc, d_inner), lambda b, c: (b, c, 0)),   # u
                  pl.BlockSpec((None, Tc, d_inner), lambda b, c: (b, c, 0)),   # dt
                  pl.BlockSpec((None, Tc, d_inner), lambda b, c: (b, c, 0)),   # z
                  pl.BlockSpec((None, Tc, d_state), lambda b, c: (b, c, 0)),   # B
                  pl.BlockSpec((None, Tc, d_state), lambda b, c: (b, c, 0)),   # C
                  pl.BlockSpec((d_state, d_inner), lambda b, c: (0, 0)),       # A^T
                  pl.BlockSpec((1, d_inner), lambda b, c: (0, 0)),             # D
                  pl.BlockSpec((1, d_inner), lambda b, c: (0, 0))],            # dt_bias
        out_specs=pl.BlockSpec((None, Tc, d_inner), lambda b, c: (b, c, 0)),
        out_shape=jax.ShapeDtypeStruct((B, L, d_inner), f32),
        scratch_shapes=[pltpu.VMEM((d_state, d_inner), f32),   # h (persists over chunks)
                        pltpu.VMEM((Tc, d_inner), f32),        # softplus(dt + bias)
                        pltpu.VMEM((Tc, d_inner), f32),        # dt * u
                        pltpu.VMEM((Tc, d_inner), f32)],       # y accumulation
        compiler_params=pltpu.CompilerParams(
            dimension_semantics=("parallel", "arbitrary")),
    )(u.astype(f32), dt.astype(f32), z.astype(f32),
      Bm.astype(f32), Cm.astype(f32), AT, D2, dtb2)


# ----------------------------------------------------------------------------
# Model glue (pure JAX reshapes / control flow; all heavy math via the kernels)
# ----------------------------------------------------------------------------
def mamba_mixer(x, p):
    b, L, d = x.shape
    d_inner, dt_rank = p['d_inner'], p['dt_rank']
    d_state = p['A_log'].shape[1]
    xz = pl_matmul(x.reshape(b * L, d), p['in_proj_w'].T).reshape(b, L, 2 * d_inner)
    xc, z = xz[..., :d_inner], xz[..., d_inner:]
    xconv = pl_dwconv_silu(xc, p['conv_w'], p['conv_b'])                   # (b, L, d_inner)
    # Fuse x_proj's dt-rank slice with dt_proj into one weight so a single MXU pass
    # yields [dt | B | C] (avoids a K=dt_rank matmul and a kernel launch).
    w_dt = p['dt_proj_w'] @ p['x_proj_w'][:dt_rank]                        # tiny weight prep
    w_big = jnp.concatenate([w_dt, p['x_proj_w'][dt_rank:]], axis=0)       # (d_inner+2*d_state, d_inner)
    dbl = pl_matmul(xconv.reshape(b * L, d_inner), w_big.T)                # (bL, d_inner+2*d_state)
    dt = dbl[:, :d_inner].reshape(b, L, d_inner)
    Bm = dbl[:, d_inner:d_inner + d_state].reshape(b, L, d_state)
    Cm = dbl[:, d_inner + d_state:].reshape(b, L, d_state)
    A = -jnp.exp(p['A_log'])
    y = pl_selective_scan(xconv, dt, z, Bm, Cm, A, p['D'], p['dt_proj_b'])
    return pl_matmul(y.reshape(b * L, d_inner), p['out_proj_w'].T).reshape(b, L, d)


def block_forward(hidden, residual, p):
    # fused_add_norm prenorm path: residual_out = hidden + residual; h = RMSNorm(residual_out)*w
    b, L, d = hidden.shape
    res_in = residual if residual is not None else jnp.zeros_like(hidden)
    normed2, resout2 = pl_add_rmsnorm(hidden.reshape(b * L, d),
                                      res_in.reshape(b * L, d),
                                      p['norm_w'], eps=1e-5)
    out = mamba_mixer(normed2.reshape(b, L, d), p)
    return out, resout2.reshape(b, L, d)


def downsample_forward(x, res, p):
    b, s, c = x.shape
    res_in = res if res is not None else jnp.zeros_like(x)
    normed2, _ = pl_add_rmsnorm(x.reshape(b * s, c), res_in.reshape(b * s, c),
                                p['norm_w'], eps=1e-5)
    normed = normed2.reshape(b, s, c)
    side = int(round(math.sqrt(s)))
    # mirror torch: view(b, side, side, c).transpose(1, 3) -> (b, c, side, side)
    T = jnp.swapaxes(normed.reshape(b, side, side, c), 1, 3)
    S1 = side // 2
    patches = T.reshape(b, c, S1, 2, S1, 2)
    patches = jnp.transpose(patches, (0, 2, 4, 1, 3, 5)).reshape(b * S1 * S1, c * 4)
    wflat = p['conv_w'].reshape(2 * c, c * 4)                              # (2c, c*2*2)
    out = pl_matmul(patches, wflat.T).reshape(b, S1, S1, 2 * c)
    # mirror torch: conv_out.transpose(1, 3).reshape(b, s // 4, 2c)
    out = jnp.swapaxes(out, 1, 2).reshape(b, s // 4, 2 * c)
    return out, None


def stem_conv(img, w):
    # img: NCHW (B, 3, H, W); w: (d_model, 3, 3, 3); pad=1, stride=1, no bias.
    b, cin, H, W = img.shape
    xp = jnp.pad(img.astype(jnp.float32), ((0, 0), (0, 0), (1, 1), (1, 1)))
    cols = [xp[:, :, kh:kh + H, kw:kw + W] for kh in range(3) for kw in range(3)]
    patches = jnp.stack(cols, axis=2)                                      # (b, cin, 9, H, W)
    patches = jnp.transpose(patches, (0, 3, 4, 1, 2)).reshape(b * H * W, cin * 9)
    wflat = w.reshape(w.shape[0], -1)
    out = pl_matmul(patches, wflat.T)
    # equals torch: conv(img).view(b, c, h*w).transpose(1, 2)
    return out.reshape(b, H * W, w.shape[0])


def mamba_lm_forward(params, img, class_token='last'):
    hidden = stem_conv(img, params['stem_w'])
    residual = None
    for p in params['layers']:
        if p['type'] == 'block':
            hidden, residual = block_forward(hidden, residual, p)
        else:
            hidden, residual = downsample_forward(hidden, residual, p)
    residual = hidden + residual if residual is not None else hidden
    hidden = residual
    if class_token == 'last':
        hidden = hidden[:, -1]
    elif class_token == 'mean':
        hidden = hidden.mean(1)
    else:
        raise NotImplementedError
    normed, _ = pl_add_rmsnorm(hidden, jnp.zeros_like(hidden),
                               params['final_norm_w'], eps=1e-5)
    return pl_matmul(normed, params['lm_head_w'].T)


# ----------------------------------------------------------------------------
# Deterministic synthetic parameter init (shapes per the module's __init__)
# ----------------------------------------------------------------------------
def init_params(key, d_model=16, n_layer=8, vocab=10, d_state=16, d_conv=4, expand=2):
    keys = iter(jax.random.split(key, 256))

    def nrm(shape):
        return 0.02 * jax.random.normal(next(keys), shape, dtype=jnp.float32)

    def block(m):
        d_inner = expand * m
        dt_rank = math.ceil(m / 16)
        return {'type': 'block', 'd_model': m, 'd_inner': d_inner, 'dt_rank': dt_rank,
                'norm_w': jnp.ones((m,), jnp.float32),
                'in_proj_w': nrm((2 * d_inner, m)),
                'conv_w': nrm((d_inner, 1, d_conv)),
                'conv_b': nrm((d_inner,)),
                'x_proj_w': nrm((dt_rank + 2 * d_state, d_inner)),
                'dt_proj_w': nrm((d_inner, dt_rank)),
                'dt_proj_b': nrm((d_inner,)),
                'A_log': jnp.log(jnp.tile(jnp.arange(1, d_state + 1, dtype=jnp.float32)[None, :],
                                          (d_inner, 1))),
                'D': jnp.ones((d_inner,), jnp.float32),
                'out_proj_w': nrm((m, d_inner))}

    def down(c):
        return {'type': 'down', 'c': c,
                'norm_w': jnp.ones((c,), jnp.float32),
                'conv_w': nrm((2 * c, c, 2, 2))}

    layers = [block(d_model) if i < 2 else block(d_model * 2 if i < 6 else d_model * 4)
              for i in range(n_layer)]
    layers.insert(2, down(d_model))            # exactly as MixerModel.__init__
    layers.insert(7, down(d_model * 2))
    return {'stem_w': nrm((d_model, 3, 3, 3)),
            'layers': layers,
            'final_norm_w': jnp.ones((4 * d_model,), jnp.float32),
            'lm_head_w': nrm((vocab, 4 * d_model))}


if __name__ == "__main__":
    key = jax.random.PRNGKey(0)
    kp, kx = jax.random.split(key)
    d_model, n_layer, vocab = 16, 8, 10
    params = init_params(kp, d_model=d_model, n_layer=n_layer, vocab=vocab)
    img = jax.random.normal(kx, (2, 3, 8, 8), dtype=jnp.float32)   # NCHW like PyTorch

    fwd = jax.jit(lambda im: mamba_lm_forward(params, im, class_token='last'))
    logits = fwd(img)
    jax.block_until_ready(logits)
    assert logits.shape == (2, vocab), logits.shape
    assert bool(jnp.all(jnp.isfinite(logits)))
    print("KERNEL_OK")
</pallas_src>

<mosaic_0001>
module attributes {stable_mosaic.version = 11 : i64} {
  func.func @_matmul_kernel(%arg0: i32, %arg1: i32, %arg2: i32, %arg3: memref<128x128xbf16, #tpu.memory_space<vmem>>, %arg4: memref<128x128xbf16, #tpu.memory_space<vmem>>, %arg5: memref<128x128xf32, #tpu.memory_space<vmem>>, %arg6: memref<128x128xf32, #tpu.memory_space<vmem>>) attributes {dimension_semantics = [#tpu.dimension_semantics<parallel>, #tpu.dimension_semantics<parallel>, #tpu.dimension_semantics<arbitrary>], iteration_bounds = array<i64: 1, 1, 1>, scalar_prefetch = 0 : i64, scratch_operands = 1 : i64, tpu.core_type = #tpu.core_type<tc>, window_params = [{transform_indices = @transform_0, window_bounds = array<i64: 128, 128>}, {transform_indices = @transform_1, window_bounds = array<i64: 128, 128>}, {transform_indices = @transform_2, window_bounds = array<i64: 128, 128>}]} {
    %c0_i32 = arith.constant 0 : i32
    %0 = arith.cmpi eq, %arg2, %c0_i32 : i32
    %1 = arith.extui %0 : i1 to i32
    %c0_i32_0 = arith.constant 0 : i32
    %2 = arith.cmpi ne, %1, %c0_i32_0 : i32
    scf.if %2 {
      %cst_10 = arith.constant 0.000000e+00 : f32
      %12 = vector.broadcast %cst_10 : f32 to vector<128x128xf32>
      %c0_11 = arith.constant 0 : index
      %c0_12 = arith.constant 0 : index
      %13 = vector.load %arg6[%c0_11, %c0_12] : memref<128x128xf32, #tpu.memory_space<vmem>>, vector<128x128xf32>
      tpu.vector_store %arg6[%c0_11, %c0_12], %12 {strides = array<i32>} : memref<128x128xf32, #tpu.memory_space<vmem>>, vector<128x128xf32>,
    } else {
    }
    %c0 = arith.constant 0 : index
    %c0_1 = arith.constant 0 : index
    %3 = vector.load %arg6[%c0, %c0_1] : memref<128x128xf32, #tpu.memory_space<vmem>>, vector<128x128xf32>
    %c0_2 = arith.constant 0 : index
    %c0_3 = arith.constant 0 : index
    %4 = vector.load %arg3[%c0_2, %c0_3] : memref<128x128xbf16, #tpu.memory_space<vmem>>, vector<128x128xbf16>
    %c0_4 = arith.constant 0 : index
    %c0_5 = arith.constant 0 : index
    %5 = vector.load %arg4[%c0_4, %c0_5] : memref<128x128xbf16, #tpu.memory_space<vmem>>, vector<128x128xbf16>
    %cst = arith.constant dense<0.000000e+00> : vector<128x128xf32>
    %6 = tpu.matmul %4, %5, %cst {dimension_numbers = #tpu.dot_dimension_numbers<[1], [0], [0], [1], [0, 0, 1, 1], [], []>} : vector<128x128xbf16>, vector<128x128xbf16>, vector<128x128xf32> -> vector<128x128xf32>
    %7 = arith.addf %3, %6 : vector<128x128xf32>
    %c0_6 = arith.constant 0 : index
    %c0_7 = arith.constant 0 : index
    %8 = vector.load %arg6[%c0_6, %c0_7] : memref<128x128xf32, #tpu.memory_space<vmem>>, vector<128x128xf32>
    tpu.vector_store %arg6[%c0_6, %c0_7], %7 {strides = array<i32>} : memref<128x128xf32, #tpu.memory_space<vmem>>, vector<128x128xf32>,
    %c0_i32_8 = arith.constant 0 : i32
    %9 = arith.cmpi eq, %arg2, %c0_i32_8 : i32
    %10 = arith.extui %9 : i1 to i32
    %c0_i32_9 = arith.constant 0 : i32
    %11 = arith.cmpi ne, %10, %c0_i32_9 : i32
    scf.if %11 {
      %c0_10 = arith.constant 0 : index
      %c0_11 = arith.constant 0 : index
      %12 = vector.load %arg6[%c0_10, %c0_11] : memref<128x128xf32, #tpu.memory_space<vmem>>, vector<128x128xf32>
      %c0_12 = arith.constant 0 : index
      %c0_13 = arith.constant 0 : index
      %13 = vector.load %arg5[%c0_12, %c0_13] : memref<128x128xf32, #tpu.memory_space<vmem>>, vector<128x128xf32>
      tpu.vector_store %arg5[%c0_12, %c0_13], %12 {strides = array<i32>} : memref<128x128xf32, #tpu.memory_space<vmem>>, vector<128x128xf32>,
    } else {
    }
    return
  }
  func.func @transform_0(%arg0: i32, %arg1: i32, %arg2: i32) -> (i32, i32) {
    %c0_i32 = arith.constant 0 : i32
    return %arg0, %arg2 : i32, i32
  }
  func.func @transform_1(%arg0: i32, %arg1: i32, %arg2: i32) -> (i32, i32) {
    %c0_i32 = arith.constant 0 : i32
    return %arg2, %arg1 : i32, i32
  }
  func.func @transform_2(%arg0: i32, %arg1: i32, %arg2: i32) -> (i32, i32) {
    %c0_i32 = arith.constant 0 : i32
    return %arg0, %arg1 : i32, i32
  }
}

module attributes {stable_mosaic.version = 11 : i64} {
  func.func @_add_rmsnorm_kernel(%arg0: i32, %arg1: memref<128x16xf32, #tpu.memory_space<vmem>>, %arg2: memref<128x16xf32, #tpu.memory_space<vmem>>, %arg3: memref<1x16xf32, #tpu.memory_space<vmem>>, %arg4: memref<128x16xf32, #tpu.memory_space<vmem>>, %arg5: memref<128x16xf32, #tpu.memory_space<vmem>>) attributes {dimension_semantics = [#tpu.dimension_semantics<parallel>], iteration_bounds = array<i64: 1>, scalar_prefetch = 0 : i64, scratch_operands = 0 : i64, tpu.core_type = #tpu.core_type<tc>, window_params = [{transform_indices = @transform_0, window_bounds = array<i64: 128, 16>}, {transform_indices = @transform_1, window_bounds = array<i64: 128, 16>}, {pipeline_mode = #tpu.pipeline_mode<synchronous>, transform_indices = @transform_2, window_bounds = array<i64: 1, 16>}, {transform_indices = @transform_3, window_bounds = array<i64: 128, 16>}, {transform_indices = @transform_4, window_bounds = array<i64: 128, 16>}]} {
    %c0 = arith.constant 0 : index
    %c0_0 = arith.constant 0 : index
    %0 = vector.load %arg1[%c0, %c0_0] : memref<128x16xf32, #tpu.memory_space<vmem>>, vector<128x16xf32>
    %c0_1 = arith.constant 0 : index
    %c0_2 = arith.constant 0 : index
    %1 = vector.load %arg2[%c0_1, %c0_2] : memref<128x16xf32, #tpu.memory_space<vmem>>, vector<128x16xf32>
    %2 = arith.addf %0, %1 : vector<128x16xf32>
    %c0_3 = arith.constant 0 : index
    %c0_4 = arith.constant 0 : index
    %3 = vector.load %arg5[%c0_3, %c0_4] : memref<128x16xf32, #tpu.memory_space<vmem>>, vector<128x16xf32>
    tpu.vector_store %arg5[%c0_3, %c0_4], %2 {strides = array<i32>} : memref<128x16xf32, #tpu.memory_space<vmem>>, vector<128x16xf32>,
    %4 = arith.mulf %2, %2 : vector<128x16xf32>
    %cst = arith.constant dense<0.000000e+00> : vector<128xf32>
    %5 = vector.multi_reduction <add>, %4, %cst [1] : vector<128x16xf32> to vector<128xf32>
    %6 = vector.shape_cast %5 : vector<128xf32> to vector<128x1xf32>
    %cst_5 = arith.constant 1.600000e+01 : f32
    %7 = vector.broadcast %cst_5 : f32 to vector<128x1xf32>
    %8 = arith.divf %6, %7 : vector<128x1xf32>
    %cst_6 = arith.constant 9.99999974E-6 : f32
    %9 = vector.broadcast %cst_6 : f32 to vector<128x1xf32>
    %10 = arith.addf %8, %9 : vector<128x1xf32>
    %11 = math.rsqrt %10 : vector<128x1xf32>
    %12 = vector.broadcast %11 : vector<128x1xf32> to vector<128x16xf32>
    %13 = arith.mulf %2, %12 : vector<128x16xf32>
    %c0_7 = arith.constant 0 : index
    %c0_8 = arith.constant 0 : index
    %14 = vector.load %arg3[%c0_7, %c0_8] : memref<1x16xf32, #tpu.memory_space<vmem>>, vector<1x16xf32>
    %15 = vector.broadcast %14 : vector<1x16xf32> to vector<128x16xf32>
    %16 = arith.mulf %13, %15 : vector<128x16xf32>
    %c0_9 = arith.constant 0 : index
    %c0_10 = arith.constant 0 : index
    %17 = vector.load %arg4[%c0_9, %c0_10] : memref<128x16xf32, #tpu.memory_space<vmem>>, vector<128x16xf32>
    tpu.vector_store %arg4[%c0_9, %c0_10], %16 {strides = array<i32>} : memref<128x16xf32, #tpu.memory_space<vmem>>, vector<128x16xf32>,
    return
  }
  func.func @transform_0(%arg0: i32) -> (i32, i32) {
    %c0_i32 = arith.constant 0 : i32
    %c0_i32_0 = arith.constant 0 : i32
    return %arg0, %c0_i32 : i32, i32
  }
  func.func @transform_1(%arg0: i32) -> (i32, i32) {
    %c0_i32 = arith.constant 0 : i32
    %c0_i32_0 = arith.constant 0 : i32
    return %arg0, %c0_i32 : i32, i32
  }
  func.func @transform_2(%arg0: i32) -> (i32, i32) {
    %c0_i32 = arith.constant 0 : i32
    %c0_i32_0 = arith.constant 0 : i32
    %c0_i32_1 = arith.constant 0 : i32
    return %c0_i32, %c0_i32_0 : i32, i32
  }
  func.func @transform_3(%arg0: i32) -> (i32, i32) {
    %c0_i32 = arith.constant 0 : i32
    %c0_i32_0 = arith.constant 0 : i32
    return %arg0, %c0_i32 : i32, i32
  }
  func.func @transform_4(%arg0: i32) -> (i32, i32) {
    %c0_i32 = arith.constant 0 : i32
    %c0_i32_0 = arith.constant 0 : i32
    return %arg0, %c0_i32 : i32, i32
  }
}

module attributes {stable_mosaic.version = 11 : i64} {
  func.func @_dwconv_silu_kernel(%arg0: i32, %arg1: memref<1x64x32xf32, #tpu.memory_space<vmem>>, %arg2: memref<4x32xf32, #tpu.memory_space<vmem>>, %arg3: memref<1x32xf32, #tpu.memory_space<vmem>>, %arg4: memref<1x64x32xf32, #tpu.memory_space<vmem>>, %arg5: memref<67x32xf32, #tpu.memory_space<vmem>>) attributes {dimension_semantics = [#tpu.dimension_semantics<parallel>], iteration_bounds = array<i64: 2>, scalar_prefetch = 0 : i64, scratch_operands = 1 : i64, tpu.core_type = #tpu.core_type<tc>, window_params = [{transform_indices = @transform_0, window_bounds = array<i64: 1, 64, 32>}, {pipeline_mode = #tpu.pipeline_mode<synchronous>, transform_indices = @transform_1, window_bounds = array<i64: 4, 32>}, {pipeline_mode = #tpu.pipeline_mode<synchronous>, transform_indices = @transform_2, window_bounds = array<i64: 1, 32>}, {transform_indices = @transform_3, window_bounds = array<i64: 1, 64, 32>}]} {
    %cst = arith.constant 0.000000e+00 : f32
    %0 = vector.broadcast %cst : f32 to vector<3x32xf32>
    %c0 = arith.constant 0 : index
    %c0_0 = arith.constant 0 : index
    %1 = vector.load %arg5[%c0, %c0_0] : memref<67x32xf32, #tpu.memory_space<vmem>>, vector<3x32xf32>
    tpu.vector_store %arg5[%c0, %c0_0], %0 {strides = array<i32>} : memref<67x32xf32, #tpu.memory_space<vmem>>, vector<3x32xf32>,
    %c0_1 = arith.constant 0 : index
    %c0_2 = arith.constant 0 : index
    %c0_3 = arith.constant 0 : index
    %2 = vector.load %arg1[%c0_1, %c0_2, %c0_3] : memref<1x64x32xf32, #tpu.memory_space<vmem>>, vector<1x64x32xf32>
    %3 = vector.shape_cast %2 : vector<1x64x32xf32> to vector<64x32xf32>
    %c3 = arith.constant 3 : index
    %c0_4 = arith.constant 0 : index
    %4 = vector.load %arg5[%c3, %c0_4] : memref<67x32xf32, #tpu.memory_space<vmem>>, vector<64x32xf32>
    tpu.vector_store %arg5[%c3, %c0_4], %3 {strides = array<i32>} : memref<67x32xf32, #tpu.memory_space<vmem>>, vector<64x32xf32>,
    %cst_5 = arith.constant 0.000000e+00 : f32
    %5 = vector.broadcast %cst_5 : f32 to vector<64x32xf32>
    %c0_6 = arith.constant 0 : index
    %c0_7 = arith.constant 0 : index
    %6 = vector.load %arg3[%c0_6, %c0_7] : memref<1x32xf32, #tpu.memory_space<vmem>>, vector<1x32xf32>
    %7 = vector.broadcast %6 : vector<1x32xf32> to vector<64x32xf32>
    %8 = arith.addf %5, %7 : vector<64x32xf32>
    %c0_8 = arith.constant 0 : index
    %c0_9 = arith.constant 0 : index
    %9 = vector.load %arg5[%c0_8, %c0_9] : memref<67x32xf32, #tpu.memory_space<vmem>>, vector<64x32xf32>
    %c0_10 = arith.constant 0 : index
    %c0_11 = arith.constant 0 : index
    %10 = vector.load %arg2[%c0_10, %c0_11] : memref<4x32xf32, #tpu.memory_space<vmem>>, vector<1x32xf32>
    %11 = vector.shape_cast %10 : vector<1x32xf32> to vector<32xf32>
    %12 = vector.shape_cast %11 : vector<32xf32> to vector<1x32xf32>
    %13 = vector.broadcast %12 : vector<1x32xf32> to vector<64x32xf32>
    %14 = arith.mulf %9, %13 : vector<64x32xf32>
    %15 = arith.addf %8, %14 : vector<64x32xf32>
    %c1 = arith.constant 1 : index
    %c0_12 = arith.constant 0 : index
    %16 = vector.load %arg5[%c1, %c0_12] : memref<67x32xf32, #tpu.memory_space<vmem>>, vector<64x32xf32>
    %c1_13 = arith.constant 1 : index
    %c0_14 = arith.constant 0 : index
    %17 = vector.load %arg2[%c1_13, %c0_14] : memref<4x32xf32, #tpu.memory_space<vmem>>, vector<1x32xf32>
    %18 = vector.shape_cast %17 : vector<1x32xf32> to vector<32xf32>
    %19 = vector.shape_cast %18 : vector<32xf32> to vector<1x32xf32>
    %20 = vector.broadcast %19 : vector<1x32xf32> to vector<64x32xf32>
    %21 = arith.mulf %16, %20 : vector<64x32xf32>
    %22 = arith.addf %15, %21 : vector<64x32xf32>
    %c2 = arith.constant 2 : index
    %c0_15 = arith.constant 0 : index
    %23 = vector.load %arg5[%c2, %c0_15] : memref<67x32xf32, #tpu.memory_space<vmem>>, vector<64x32xf32>
    %c2_16 = arith.constant 2 : index
    %c0_17 = arith.constant 0 : index
    %24 = vector.load %arg2[%c2_16, %c0_17] : memref<4x32xf32, #tpu.memory_space<vmem>>, vector<1x32xf32>
    %25 = vector.shape_cast %24 : vector<1x32xf32> to vector<32xf32>
    %26 = vector.shape_cast %25 : vector<32xf32> to vector<1x32xf32>
    %27 = vector.broadcast %26 : vector<1x32xf32> to vector<64x32xf32>
    %28 = arith.mulf %23, %27 : vector<64x32xf32>
    %29 = arith.addf %22, %28 : vector<64x32xf32>
    %c3_18 = arith.constant 3 : index
    %c0_19 = arith.constant 0 : index
    %30 = vector.load %arg5[%c3_18, %c0_19] : memref<67x32xf32, #tpu.memory_space<vmem>>, vector<64x32xf32>
    %c3_20 = arith.constant 3 : index
    %c0_21 = arith.constant 0 : index
    %31 = vector.load %arg2[%c3_20, %c0_21] : memref<4x32xf32, #tpu.memory_space<vmem>>, vector<1x32xf32>
    %32 = vector.shape_cast %31 : vector<1x32xf32> to vector<32xf32>
    %33 = vector.shape_cast %32 : vector<32xf32> to vector<1x32xf32>
    %34 = vector.broadcast %33 : vector<1x32xf32> to vector<64x32xf32>
    %35 = arith.mulf %30, %34 : vector<64x32xf32>
    %36 = arith.addf %29, %35 : vector<64x32xf32>
    %cst_22 = arith.constant 0.000000e+00 : f32
    %37 = vector.broadcast %cst_22 : f32 to vector<64x32xf32>
    %38 = arith.subf %37, %36 : vector<64x32xf32>
    %39 = math.exp %38 : vector<64x32xf32>
    %cst_23 = arith.constant 1.000000e+00 : f32
    %40 = vector.broadcast %cst_23 : f32 to vector<64x32xf32>
    %41 = arith.addf %40, %39 : vector<64x32xf32>
    %42 = tpu.reciprocal %41 {approx = true} : vector<64x32xf32> -> vector<64x32xf32>
    %43 = arith.mulf %36, %42 : vector<64x32xf32>
    %c0_24 = arith.constant 0 : index
    %c0_25 = arith.constant 0 : index
    %c0_26 = arith.constant 0 : index
    %44 = vector.load %arg4[%c0_24, %c0_25, %c0_26] : memref<1x64x32xf32, #tpu.memory_space<vmem>>, vector<1x64x32xf32>
    %45 = vector.shape_cast %44 : vector<1x64x32xf32> to vector<64x32xf32>
    %46 = vector.shape_cast %43 : vector<64x32xf32> to vector<1x64x32xf32>
    tpu.vector_store %arg4[%c0_24, %c0_25, %c0_26], %46 {strides = array<i32>} : memref<1x64x32xf32, #tpu.memory_space<vmem>>, vector<1x64x32xf32>,
    return
  }
  func.func @transform_0(%arg0: i32) -> (i32, i32, i32) {
    %c0_i32 = arith.constant 0 : i32
    %c0_i32_0 = arith.constant 0 : i32
    %c0_i32_1 = arith.constant 0 : i32
    return %arg0, %c0_i32, %c0_i32_0 : i32, i32, i32
  }
  func.func @transform_1(%arg0: i32) -> (i32, i32) {
    %c0_i32 = arith.constant 0 : i32
    %c0_i32_0 = arith.constant 0 : i32
    %c0_i32_1 = arith.constant 0 : i32
    return %c0_i32, %c0_i32_0 : i32, i32
  }
  func.func @transform_2(%arg0: i32) -> (i32, i32) {
    %c0_i32 = arith.constant 0 : i32
    %c0_i32_0 = arith.constant 0 : i32
    %c0_i32_1 = arith.constant 0 : i32
    return %c0_i32, %c0_i32_0 : i32, i32
  }
  func.func @transform_3(%arg0: i32) -> (i32, i32, i32) {
    %c0_i32 = arith.constant 0 : i32
    %c0_i32_0 = arith.constant 0 : i32
    %c0_i32_1 = arith.constant 0 : i32
    return %arg0, %c0_i32, %c0_i32_0 : i32, i32, i32
  }
}

module attributes {stable_mosaic.version = 11 : i64} {
  func.func @_selective_scan_kernel(%arg0: i32, %arg1: i32, %arg2: memref<1x64x32xf32, #tpu.memory_space<vmem>>, %arg3: memref<1x64x32xf32, #tpu.memory_space<vmem>>, %arg4: memref<1x64x32xf32, #tpu.memory_space<vmem>>, %arg5: memref<1x64x16xf32, #tpu.memory_space<vmem>>, %arg6: memref<1x64x16xf32, #tpu.memory_space<vmem>>, %arg7: memref<16x32xf32, #tpu.memory_space<vmem>>, %arg8: memref<1x32xf32, #tpu.memory_space<vmem>>, %arg9: memref<1x32xf32, #tpu.memory_space<vmem>>, %arg10: memref<1x64x32xf32, #tpu.memory_space<vmem>>, %arg11: memref<16x32xf32, #tpu.memory_space<vmem>>, %arg12: memref<64x32xf32, #tpu.memory_space<vmem>>, %arg13: memref<64x32xf32, #tpu.memory_space<vmem>>, %arg14: memref<64x32xf32, #tpu.memory_space<vmem>>) attributes {dimension_semantics = [#tpu.dimension_semantics<parallel>, #tpu.dimension_semantics<arbitrary>], iteration_bounds = array<i64: 2, 1>, scalar_prefetch = 0 : i64, scratch_operands = 4 : i64, tpu.core_type = #tpu.core_type<tc>, window_params = [{transform_indices = @transform_0, window_bounds = array<i64: 1, 64, 32>}, {transform_indices = @transform_1, window_bounds = array<i64: 1, 64, 32>}, {transform_indices = @transform_2, window_bounds = array<i64: 1, 64, 32>}, {transform_indices = @transform_3, window_bounds = array<i64: 1, 64, 16>}, {transform_indices = @transform_4, window_bounds = array<i64: 1, 64, 16>}, {pipeline_mode = #tpu.pipeline_mode<synchronous>, transform_indices = @transform_5, window_bounds = array<i64: 16, 32>}, {pipeline_mode = #tpu.pipeline_mode<synchronous>, transform_indices = @transform_6, window_bounds = array<i64: 1, 32>}, {pipeline_mode = #tpu.pipeline_mode<synchronous>, transform_indices = @transform_7, window_bounds = array<i64: 1, 32>}, {transform_indices = @transform_8, window_bounds = array<i64: 1, 64, 32>}]} {
    %c0_i32 = arith.constant 0 : i32
    %0 = arith.cmpi eq, %arg1, %c0_i32 : i32
    %1 = arith.extui %0 : i1 to i32
    %c0_i32_0 = arith.constant 0 : i32
    %2 = arith.cmpi ne, %1, %c0_i32_0 : i32
    scf.if %2 {
      %cst_35 = arith.constant 0.000000e+00 : f32
      %46 = vector.broadcast %cst_35 : f32 to vector<16x32xf32>
      %c0_36 = arith.constant 0 : index
      %c0_37 = arith.constant 0 : index
      %47 = vector.load %arg11[%c0_36, %c0_37] : memref<16x32xf32, #tpu.memory_space<vmem>>, vector<16x32xf32>
      tpu.vector_store %arg11[%c0_36, %c0_37], %46 {strides = array<i32>} : memref<16x32xf32, #tpu.memory_space<vmem>>, vector<16x32xf32>,
    } else {
    }
    %c0 = arith.constant 0 : index
    %c0_1 = arith.constant 0 : index
    %c0_2 = arith.constant 0 : index
    %3 = vector.load %arg3[%c0, %c0_1, %c0_2] : memref<1x64x32xf32, #tpu.memory_space<vmem>>, vector<1x64x32xf32>
    %4 = vector.shape_cast %3 : vector<1x64x32xf32> to vector<64x32xf32>
    %c0_3 = arith.constant 0 : index
    %c0_4 = arith.constant 0 : index
    %5 = vector.load %arg9[%c0_3, %c0_4] : memref<1x32xf32, #tpu.memory_space<vmem>>, vector<1x32xf32>
    %6 = vector.broadcast %5 : vector<1x32xf32> to vector<64x32xf32>
    %7 = arith.addf %4, %6 : vector<64x32xf32>
    %cst = arith.constant 0.000000e+00 : f32
    %8 = vector.broadcast %cst : f32 to vector<64x32xf32>
    %9 = arith.maximumf %7, %8 : vector<64x32xf32>
    %10 = math.absf %7 : vector<64x32xf32>
    %cst_5 = arith.constant 0.000000e+00 : f32
    %11 = vector.broadcast %cst_5 : f32 to vector<64x32xf32>
    %12 = arith.subf %11, %10 : vector<64x32xf32>
    %13 = math.exp %12 : vector<64x32xf32>
    %cst_6 = arith.constant 1.000000e+00 : f32
    %14 = vector.broadcast %cst_6 : f32 to vector<64x32xf32>
    %15 = arith.addf %14, %13 : vector<64x32xf32>
    %16 = math.log %15 : vector<64x32xf32>
    %17 = arith.addf %9, %16 : vector<64x32xf32>
    %c0_7 = arith.constant 0 : index
    %c0_8 = arith.constant 0 : index
    %18 = vector.load %arg12[%c0_7, %c0_8] : memref<64x32xf32, #tpu.memory_space<vmem>>, vector<64x32xf32>
    tpu.vector_store %arg12[%c0_7, %c0_8], %17 {strides = array<i32>} : memref<64x32xf32, #tpu.memory_space<vmem>>, vector<64x32xf32>,
    %c0_9 = arith.constant 0 : index
    %c0_10 = arith.constant 0 : index
    %19 = vector.load %arg12[%c0_9, %c0_10] : memref<64x32xf32, #tpu.memory_space<vmem>>, vector<64x32xf32>
    %c0_11 = arith.constant 0 : index
    %c0_12 = arith.constant 0 : index
    %c0_13 = arith.constant 0 : index
    %20 = vector.load %arg2[%c0_11, %c0_12, %c0_13] : memref<1x64x32xf32, #tpu.memory_space<vmem>>, vector<1x64x32xf32>
    %21 = vector.shape_cast %20 : vector<1x64x32xf32> to vector<64x32xf32>
    %22 = arith.mulf %19, %21 : vector<64x32xf32>
    %c0_14 = arith.constant 0 : index
    %c0_15 = arith.constant 0 : index
    %23 = vector.load %arg13[%c0_14, %c0_15] : memref<64x32xf32, #tpu.memory_space<vmem>>, vector<64x32xf32>
    tpu.vector_store %arg13[%c0_14, %c0_15], %22 {strides = array<i32>} : memref<64x32xf32, #tpu.memory_space<vmem>>, vector<64x32xf32>,
    %c0_16 = arith.constant 0 : index
    %c0_17 = arith.constant 0 : index
    %24 = vector.load %arg7[%c0_16, %c0_17] : memref<16x32xf32, #tpu.memory_space<vmem>>, vector<16x32xf32>
    %c0_i32_18 = arith.constant 0 : i32
    %c64_i32 = arith.constant 64 : i32
    %25 = arith.addi %c0_i32_18, %c64_i32 : i32
    %c1_i32 = arith.constant 1 : i32
    scf.for %arg15 = %c0_i32_18 to %25 step %c1_i32  : i32 {
      %46 = arith.index_cast %arg15 : i32 to index
      %c0_35 = arith.constant 0 : index
      %47 = vector.load %arg12[%46, %c0_35] : memref<64x32xf32, #tpu.memory_space<vmem>>, vector<1x32xf32>
      %48 = vector.shape_cast %47 : vector<1x32xf32> to vector<32xf32>
      %49 = vector.shape_cast %48 : vector<32xf32> to vector<1x32xf32>
      %50 = vector.broadcast %49 : vector<1x32xf32> to vector<16x32xf32>
      %51 = arith.mulf %24, %50 : vector<16x32xf32>
      %52 = math.exp %51 : vector<16x32xf32>
      %c0_36 = arith.constant 0 : index
      %53 = arith.index_cast %arg15 : i32 to index
      %c0_37 = arith.constant 0 : index
      %54 = vector.load %arg5[%c0_36, %53, %c0_37] : memref<1x64x16xf32, #tpu.memory_space<vmem>>, vector<1x1x16xf32>
      %55 = vector.shape_cast %54 : vector<1x1x16xf32> to vector<1x16xf32>
      %56 = arith.index_cast %arg15 : i32 to index
      %c0_38 = arith.constant 0 : index
      %57 = vector.load %arg13[%56, %c0_38] : memref<64x32xf32, #tpu.memory_space<vmem>>, vector<1x32xf32>
      "tpu.trace_start"() <{level = 10 : i32, message = "kn,kd->nd"}> : () -> ()
      %cst_39 = arith.constant dense<0.000000e+00> : vector<16x32xf32>
      %58 = tpu.matmul %55, %57, %cst_39 {dimension_numbers = #tpu.dot_dimension_numbers<[0], [0], [1], [1], [0, 1, 1, 1], [], []>} : vector<1x16xf32>, vector<1x32xf32>, vector<16x32xf32> -> vector<16x32xf32>
      "tpu.trace_stop"() : () -> ()
      %c0_40 = arith.constant 0 : index
      %c0_41 = arith.constant 0 : index
      %59 = vector.load %arg11[%c0_40, %c0_41] : memref<16x32xf32, #tpu.memory_space<vmem>>, vector<16x32xf32>
      %60 = arith.mulf %52, %59 : vector<16x32xf32>
      %61 = arith.addf %60, %58 : vector<16x32xf32>
      %c0_42 = arith.constant 0 : index
      %c0_43 = arith.constant 0 : index
      %62 = vector.load %arg11[%c0_42, %c0_43] : memref<16x32xf32, #tpu.memory_space<vmem>>, vector<16x32xf32>
      tpu.vector_store %arg11[%c0_42, %c0_43], %61 {strides = array<i32>} : memref<16x32xf32, #tpu.memory_space<vmem>>, vector<16x32xf32>,
      %c0_44 = arith.constant 0 : index
      %63 = arith.index_cast %arg15 : i32 to index
      %c0_45 = arith.constant 0 : index
      %64 = vector.load %arg6[%c0_44, %63, %c0_45] : memref<1x64x16xf32, #tpu.memory_space<vmem>>, vector<1x1x16xf32>
      %65 = vector.shape_cast %64 : vector<1x1x16xf32> to vector<1x16xf32>
      %cst_46 = arith.constant dense<0.000000e+00> : vector<1x32xf32>
      %66 = tpu.matmul %65, %61, %cst_46 {dimension_numbers = #tpu.dot_dimension_numbers<[1], [0], [0], [1], [0, 0, 1, 1], [], []>} : vector<1x16xf32>, vector<16x32xf32>, vector<1x32xf32> -> vector<1x32xf32>
      %67 = arith.index_cast %arg15 : i32 to index
      %c0_47 = arith.constant 0 : index
      %68 = vector.load %arg14[%67, %c0_47] : memref<64x32xf32, #tpu.memory_space<vmem>>, vector<1x32xf32>
      tpu.vector_store %arg14[%67, %c0_47], %66 {strides = array<i32>} : memref<64x32xf32, #tpu.memory_space<vmem>>, vector<1x32xf32>,
    }
    %c64_i32_19 = arith.constant 64 : i32
    %c0_20 = arith.constant 0 : index
    %c0_21 = arith.constant 0 : index
    %c0_22 = arith.constant 0 : index
    %26 = vector.load %arg4[%c0_20, %c0_21, %c0_22] : memref<1x64x32xf32, #tpu.memory_space<vmem>>, vector<1x64x32xf32>
    %27 = vector.shape_cast %26 : vector<1x64x32xf32> to vector<64x32xf32>
    %cst_23 = arith.constant 0.000000e+00 : f32
    %28 = vector.broadcast %cst_23 : f32 to vector<64x32xf32>
    %29 = arith.subf %28, %27 : vector<64x32xf32>
    %30 = math.exp %29 : vector<64x32xf32>
    %cst_24 = arith.constant 1.000000e+00 : f32
    %31 = vector.broadcast %cst_24 : f32 to vector<64x32xf32>
    %32 = arith.addf %31, %30 : vector<64x32xf32>
    %33 = tpu.reciprocal %32 {approx = true} : vector<64x32xf32> -> vector<64x32xf32>
    %34 = arith.mulf %27, %33 : vector<64x32xf32>
    %c0_25 = arith.constant 0 : index
    %c0_26 = arith.constant 0 : index
    %35 = vector.load %arg8[%c0_25, %c0_26] : memref<1x32xf32, #tpu.memory_space<vmem>>, vector<1x32xf32>
    %c0_27 = arith.constant 0 : index
    %c0_28 = arith.constant 0 : index
    %c0_29 = arith.constant 0 : index
    %36 = vector.load %arg2[%c0_27, %c0_28, %c0_29] : memref<1x64x32xf32, #tpu.memory_space<vmem>>, vector<1x64x32xf32>
    %37 = vector.shape_cast %36 : vector<1x64x32xf32> to vector<64x32xf32>
    %38 = vector.broadcast %35 : vector<1x32xf32> to vector<64x32xf32>
    %39 = arith.mulf %38, %37 : vector<64x32xf32>
    %c0_30 = arith.constant 0 : index
    %c0_31 = arith.constant 0 : index
    %40 = vector.load %arg14[%c0_30, %c0_31] : memref<64x32xf32, #tpu.memory_space<vmem>>, vector<64x32xf32>
    %41 = arith.addf %39, %40 : vector<64x32xf32>
    %42 = arith.mulf %41, %34 : vector<64x32xf32>
    %c0_32 = arith.constant 0 : index
    %c0_33 = arith.constant 0 : index
    %c0_34 = arith.constant 0 : index
    %43 = vector.load %arg10[%c0_32, %c0_33, %c0_34] : memref<1x64x32xf32, #tpu.memory_space<vmem>>, vector<1x64x32xf32>
    %44 = vector.shape_cast %43 : vector<1x64x32xf32> to vector<64x32xf32>
    %45 = vector.shape_cast %42 : vector<64x32xf32> to vector<1x64x32xf32>
    tpu.vector_store %arg10[%c0_32, %c0_33, %c0_34], %45 {strides = array<i32>} : memref<1x64x32xf32, #tpu.memory_space<vmem>>, vector<1x64x32xf32>,
    return
  }
  func.func @transform_0(%arg0: i32, %arg1: i32) -> (i32, i32, i32) {
    %c0_i32 = arith.constant 0 : i32
    %c0_i32_0 = arith.constant 0 : i32
    return %arg0, %arg1, %c0_i32 : i32, i32, i32
  }
  func.func @transform_1(%arg0: i32, %arg1: i32) -> (i32, i32, i32) {
    %c0_i32 = arith.constant 0 : i32
    %c0_i32_0 = arith.constant 0 : i32
    return %arg0, %arg1, %c0_i32 : i32, i32, i32
  }
  func.func @transform_2(%arg0: i32, %arg1: i32) -> (i32, i32, i32) {
    %c0_i32 = arith.constant 0 : i32
    %c0_i32_0 = arith.constant 0 : i32
    return %arg0, %arg1, %c0_i32 : i32, i32, i32
  }
  func.func @transform_3(%arg0: i32, %arg1: i32) -> (i32, i32, i32) {
    %c0_i32 = arith.constant 0 : i32
    %c0_i32_0 = arith.constant 0 : i32
    return %arg0, %arg1, %c0_i32 : i32, i32, i32
  }
  func.func @transform_4(%arg0: i32, %arg1: i32) -> (i32, i32, i32) {
    %c0_i32 = arith.constant 0 : i32
    %c0_i32_0 = arith.constant 0 : i32
    return %arg0, %arg1, %c0_i32 : i32, i32, i32
  }
  func.func @transform_5(%arg0: i32, %arg1: i32) -> (i32, i32) {
    %c0_i32 = arith.constant 0 : i32
    %c0_i32_0 = arith.constant 0 : i32
    %c0_i32_1 = arith.constant 0 : i32
    return %c0_i32, %c0_i32_0 : i32, i32
  }
  func.func @transform_6(%arg0: i32, %arg1: i32) -> (i32, i32) {
    %c0_i32 = arith.constant 0 : i32
    %c0_i32_0 = arith.constant 0 : i32
    %c0_i32_1 = arith.constant 0 : i32
    return %c0_i32, %c0_i32_0 : i32, i32
  }
  func.func @transform_7(%arg0: i32, %arg1: i32) -> (i32, i32) {
    %c0_i32 = arith.constant 0 : i32
    %c0_i32_0 = arith.constant 0 : i32
    %c0_i32_1 = arith.constant 0 : i32
    return %c0_i32, %c0_i32_0 : i32, i32
  }
  func.func @transform_8(%arg0: i32, %arg1: i32) -> (i32, i32, i32) {
    %c0_i32 = arith.constant 0 : i32
    %c0_i32_0 = arith.constant 0 : i32
    return %arg0, %arg1, %c0_i32 : i32, i32, i32
  }
}

module attributes {stable_mosaic.version = 11 : i64} {
  func.func @_add_rmsnorm_kernel(%arg0: i32, %arg1: memref<128x16xf32, #tpu.memory_space<vmem>>, %arg2: memref<128x16xf32, #tpu.memory_space<vmem>>, %arg3: memref<1x16xf32, #tpu.memory_space<vmem>>, %arg4: memref<128x16xf32, #tpu.memory_space<vmem>>, %arg5: memref<128x16xf32, #tpu.memory_space<vmem>>) attributes {dimension_semantics = [#tpu.dimension_semantics<parallel>], iteration_bounds = array<i64: 1>, scalar_prefetch = 0 : i64, scratch_operands = 0 : i64, tpu.core_type = #tpu.core_type<tc>, window_params = [{transform_indices = @transform_0, window_bounds = array<i64: 128, 16>}, {transform_indices = @transform_1, window_bounds = array<i64: 128, 16>}, {pipeline_mode = #tpu.pipeline_mode<synchronous>, transform_indices = @transform_2, window_bounds = array<i64: 1, 16>}, {transform_indices = @transform_3, window_bounds = array<i64: 128, 16>}, {transform_indices = @transform_4, window_bounds = array<i64: 128, 16>}]} {
    %c0 = arith.constant 0 : index
    %c0_0 = arith.constant 0 : index
    %0 = vector.load %arg1[%c0, %c0_0] : memref<128x16xf32, #tpu.memory_space<vmem>>, vector<128x16xf32>
    %c0_1 = arith.constant 0 : index
    %c0_2 = arith.constant 0 : index
    %1 = vector.load %arg2[%c0_1, %c0_2] : memref<128x16xf32, #tpu.memory_space<vmem>>, vector<128x16xf32>
    %2 = arith.addf %0, %1 : vector<128x16xf32>
    %c0_3 = arith.constant 0 : index
    %c0_4 = arith.constant 0 : index
    %3 = vector.load %arg5[%c0_3, %c0_4] : memref<128x16xf32, #tpu.memory_space<vmem>>, vector<128x16xf32>
    tpu.vector_store %arg5[%c0_3, %c0_4], %2 {strides = array<i32>} : memref<128x16xf32, #tpu.memory_space<vmem>>, vector<128x16xf32>,
    %4 = arith.mulf %2, %2 : vector<128x16xf32>
    %cst = arith.constant dense<0.000000e+00> : vector<128xf32>
    %5 = vector.multi_reduction <add>, %4, %cst [1] : vector<128x16xf32> to vector<128xf32>
    %6 = vector.shape_cast %5 : vector<128xf32> to vector<128x1xf32>
    %cst_5 = arith.constant 1.600000e+01 : f32
    %7 = vector.broadcast %cst_5 : f32 to vector<128x1xf32>
    %8 = arith.divf %6, %7 : vector<128x1xf32>
    %cst_6 = arith.constant 9.99999974E-6 : f32
    %9 = vector.broadcast %cst_6 : f32 to vector<128x1xf32>
    %10 = arith.addf %8, %9 : vector<128x1xf32>
    %11 = math.rsqrt %10 : vector<128x1xf32>
    %12 = vector.broadcast %11 : vector<128x1xf32> to vector<128x16xf32>
    %13 = arith.mulf %2, %12 : vector<128x16xf32>
    %c0_7 = arith.constant 0 : index
    %c0_8 = arith.constant 0 : index
    %14 = vector.load %arg3[%c0_7, %c0_8] : memref<1x16xf32, #tpu.memory_space<vmem>>, vector<1x16xf32>
    %15 = vector.broadcast %14 : vector<1x16xf32> to vector<128x16xf32>
    %16 = arith.mulf %13, %15 : vector<128x16xf32>
    %c0_9 = arith.constant 0 : index
    %c0_10 = arith.constant 0 : index
    %17 = vector.load %arg4[%c0_9, %c0_10] : memref<128x16xf32, #tpu.memory_space<vmem>>, vector<128x16xf32>
    tpu.vector_store %arg4[%c0_9, %c0_10], %16 {strides = array<i32>} : memref<128x16xf32, #tpu.memory_space<vmem>>, vector<128x16xf32>,
    return
  }
  func.func @transform_0(%arg0: i32) -> (i32, i32) {
    %c0_i32 = arith.constant 0 : i32
    %c0_i32_0 = arith.constant 0 : i32
    return %arg0, %c0_i32 : i32, i32
  }
  func.func @transform_1(%arg0: i32) -> (i32, i32) {
    %c0_i32 = arith.constant 0 : i32
    %c0_i32_0 = arith.constant 0 : i32
    return %arg0, %c0_i32 : i32, i32
  }
  func.func @transform_2(%arg0: i32) -> (i32, i32) {
    %c0_i32 = arith.constant 0 : i32
    %c0_i32_0 = arith.constant 0 : i32
    %c0_i32_1 = arith.constant 0 : i32
    return %c0_i32, %c0_i32_0 : i32, i32
  }
  func.func @transform_3(%arg0: i32) -> (i32, i32) {
    %c0_i32 = arith.constant 0 : i32
    %c0_i32_0 = arith.constant 0 : i32
    return %arg0, %c0_i32 : i32, i32
  }
  func.func @transform_4(%arg0: i32) -> (i32, i32) {
    %c0_i32 = arith.constant 0 : i32
    %c0_i32_0 = arith.constant 0 : i32
    return %arg0, %c0_i32 : i32, i32
  }
}

module attributes {stable_mosaic.version = 11 : i64} {
  func.func @_matmul_kernel(%arg0: i32, %arg1: i32, %arg2: i32, %arg3: memref<32x128xbf16, #tpu.memory_space<vmem>>, %arg4: memref<128x128xbf16, #tpu.memory_space<vmem>>, %arg5: memref<32x128xf32, #tpu.memory_space<vmem>>, %arg6: memref<32x128xf32, #tpu.memory_space<vmem>>) attributes {dimension_semantics = [#tpu.dimension_semantics<parallel>, #tpu.dimension_semantics<parallel>, #tpu.dimension_semantics<arbitrary>], iteration_bounds = array<i64: 1, 1, 1>, scalar_prefetch = 0 : i64, scratch_operands = 1 : i64, tpu.core_type = #tpu.core_type<tc>, window_params = [{transform_indices = @transform_0, window_bounds = array<i64: 32, 128>}, {transform_indices = @transform_1, window_bounds = array<i64: 128, 128>}, {transform_indices = @transform_2, window_bounds = array<i64: 32, 128>}]} {
    %c0_i32 = arith.constant 0 : i32
    %0 = arith.cmpi eq, %arg2, %c0_i32 : i32
    %1 = arith.extui %0 : i1 to i32
    %c0_i32_0 = arith.constant 0 : i32
    %2 = arith.cmpi ne, %1, %c0_i32_0 : i32
    scf.if %2 {
      %cst_10 = arith.constant 0.000000e+00 : f32
      %12 = vector.broadcast %cst_10 : f32 to vector<32x128xf32>
      %c0_11 = arith.constant 0 : index
      %c0_12 = arith.constant 0 : index
      %13 = vector.load %arg6[%c0_11, %c0_12] : memref<32x128xf32, #tpu.memory_space<vmem>>, vector<32x128xf32>
      tpu.vector_store %arg6[%c0_11, %c0_12], %12 {strides = array<i32>} : memref<32x128xf32, #tpu.memory_space<vmem>>, vector<32x128xf32>,
    } else {
    }
    %c0 = arith.constant 0 : index
    %c0_1 = arith.constant 0 : index
    %3 = vector.load %arg6[%c0, %c0_1] : memref<32x128xf32, #tpu.memory_space<vmem>>, vector<32x128xf32>
    %c0_2 = arith.constant 0 : index
    %c0_3 = arith.constant 0 : index
    %4 = vector.load %arg3[%c0_2, %c0_3] : memref<32x128xbf16, #tpu.memory_space<vmem>>, vector<32x128xbf16>
    %c0_4 = arith.constant 0 : index
    %c0_5 = arith.constant 0 : index
    %5 = vector.load %arg4[%c0_4, %c0_5] : memref<128x128xbf16, #tpu.memory_space<vmem>>, vector<128x128xbf16>
    %cst = arith.constant dense<0.000000e+00> : vector<32x128xf32>
    %6 = tpu.matmul %4, %5, %cst {dimension_numbers = #tpu.dot_dimension_numbers<[1], [0], [0], [1], [0, 0, 1, 1], [], []>} : vector<32x128xbf16>, vector<128x128xbf16>, vector<32x128xf32> -> vector<32x128xf32>
    %7 = arith.addf %3, %6 : vector<32x128xf32>
    %c0_6 = arith.constant 0 : index
    %c0_7 = arith.constant 0 : index
    %8 = vector.load %arg6[%c0_6, %c0_7] : memref<32x128xf32, #tpu.memory_space<vmem>>, vector<32x128xf32>
    tpu.vector_store %arg6[%c0_6, %c0_7], %7 {strides = array<i32>} : memref<32x128xf32, #tpu.memory_space<vmem>>, vector<32x128xf32>,
    %c0_i32_8 = arith.constant 0 : i32
    %9 = arith.cmpi eq, %arg2, %c0_i32_8 : i32
    %10 = arith.extui %9 : i1 to i32
    %c0_i32_9 = arith.constant 0 : i32
    %11 = arith.cmpi ne, %10, %c0_i32_9 : i32
    scf.if %11 {
      %c0_10 = arith.constant 0 : index
      %c0_11 = arith.constant 0 : index
      %12 = vector.load %arg6[%c0_10, %c0_11] : memref<32x128xf32, #tpu.memory_space<vmem>>, vector<32x128xf32>
      %c0_12 = arith.constant 0 : index
      %c0_13 = arith.constant 0 : index
      %13 = vector.load %arg5[%c0_12, %c0_13] : memref<32x128xf32, #tpu.memory_space<vmem>>, vector<32x128xf32>
      tpu.vector_store %arg5[%c0_12, %c0_13], %12 {strides = array<i32>} : memref<32x128xf32, #tpu.memory_space<vmem>>, vector<32x128xf32>,
    } else {
    }
    return
  }
  func.func @transform_0(%arg0: i32, %arg1: i32, %arg2: i32) -> (i32, i32) {
    %c0_i32 = arith.constant 0 : i32
    return %arg0, %arg2 : i32, i32
  }
  func.func @transform_1(%arg0: i32, %arg1: i32, %arg2: i32) -> (i32, i32) {
    %c0_i32 = arith.constant 0 : i32
    return %arg2, %arg1 : i32, i32
  }
  func.func @transform_2(%arg0: i32, %arg1: i32, %arg2: i32) -> (i32, i32) {
    %c0_i32 = arith.constant 0 : i32
    return %arg0, %arg1 : i32, i32
  }
}

module attributes {stable_mosaic.version = 11 : i64} {
  func.func @_add_rmsnorm_kernel(%arg0: i32, %arg1: memref<32x32xf32, #tpu.memory_space<vmem>>, %arg2: memref<32x32xf32, #tpu.memory_space<vmem>>, %arg3: memref<1x32xf32, #tpu.memory_space<vmem>>, %arg4: memref<32x32xf32, #tpu.memory_space<vmem>>, %arg5: memref<32x32xf32, #tpu.memory_space<vmem>>) attributes {dimension_semantics = [#tpu.dimension_semantics<parallel>], iteration_bounds = array<i64: 1>, scalar_prefetch = 0 : i64, scratch_operands = 0 : i64, tpu.core_type = #tpu.core_type<tc>, window_params = [{transform_indices = @transform_0, window_bounds = array<i64: 32, 32>}, {transform_indices = @transform_1, window_bounds = array<i64: 32, 32>}, {pipeline_mode = #tpu.pipeline_mode<synchronous>, transform_indices = @transform_2, window_bounds = array<i64: 1, 32>}, {transform_indices = @transform_3, window_bounds = array<i64: 32, 32>}, {transform_indices = @transform_4, window_bounds = array<i64: 32, 32>}]} {
    %c0 = arith.constant 0 : index
    %c0_0 = arith.constant 0 : index
    %0 = vector.load %arg1[%c0, %c0_0] : memref<32x32xf32, #tpu.memory_space<vmem>>, vector<32x32xf32>
    %c0_1 = arith.constant 0 : index
    %c0_2 = arith.constant 0 : index
    %1 = vector.load %arg2[%c0_1, %c0_2] : memref<32x32xf32, #tpu.memory_space<vmem>>, vector<32x32xf32>
    %2 = arith.addf %0, %1 : vector<32x32xf32>
    %c0_3 = arith.constant 0 : index
    %c0_4 = arith.constant 0 : index
    %3 = vector.load %arg5[%c0_3, %c0_4] : memref<32x32xf32, #tpu.memory_space<vmem>>, vector<32x32xf32>
    tpu.vector_store %arg5[%c0_3, %c0_4], %2 {strides = array<i32>} : memref<32x32xf32, #tpu.memory_space<vmem>>, vector<32x32xf32>,
    %4 = arith.mulf %2, %2 : vector<32x32xf32>
    %cst = arith.constant dense<0.000000e+00> : vector<32xf32>
    %5 = vector.multi_reduction <add>, %4, %cst [1] : vector<32x32xf32> to vector<32xf32>
    %6 = vector.shape_cast %5 : vector<32xf32> to vector<32x1xf32>
    %cst_5 = arith.constant 3.200000e+01 : f32
    %7 = vector.broadcast %cst_5 : f32 to vector<32x1xf32>
    %8 = arith.divf %6, %7 : vector<32x1xf32>
    %cst_6 = arith.constant 9.99999974E-6 : f32
    %9 = vector.broadcast %cst_6 : f32 to vector<32x1xf32>
    %10 = arith.addf %8, %9 : vector<32x1xf32>
    %11 = math.rsqrt %10 : vector<32x1xf32>
    %12 = vector.broadcast %11 : vector<32x1xf32> to vector<32x32xf32>
    %13 = arith.mulf %2, %12 : vector<32x32xf32>
    %c0_7 = arith.constant 0 : index
    %c0_8 = arith.constant 0 : index
    %14 = vector.load %arg3[%c0_7, %c0_8] : memref<1x32xf32, #tpu.memory_space<vmem>>, vector<1x32xf32>
    %15 = vector.broadcast %14 : vector<1x32xf32> to vector<32x32xf32>
    %16 = arith.mulf %13, %15 : vector<32x32xf32>
    %c0_9 = arith.constant 0 : index
    %c0_10 = arith.constant 0 : index
    %17 = vector.load %arg4[%c0_9, %c0_10] : memref<32x32xf32, #tpu.memory_space<vmem>>, vector<32x32xf32>
    tpu.vector_store %arg4[%c0_9, %c0_10], %16 {strides = array<i32>} : memref<32x32xf32, #tpu.memory_space<vmem>>, vector<32x32xf32>,
    return
  }
  func.func @transform_0(%arg0: i32) -> (i32, i32) {
    %c0_i32 = arith.constant 0 : i32
    %c0_i32_0 = arith.constant 0 : i32
    return %arg0, %c0_i32 : i32, i32
  }
  func.func @transform_1(%arg0: i32) -> (i32, i32) {
    %c0_i32 = arith.constant 0 : i32
    %c0_i32_0 = arith.constant 0 : i32
    return %arg0, %c0_i32 : i32, i32
  }
  func.func @transform_2(%arg0: i32) -> (i32, i32) {
    %c0_i32 = arith.constant 0 : i32
    %c0_i32_0 = arith.constant 0 : i32
    %c0_i32_1 = arith.constant 0 : i32
    return %c0_i32, %c0_i32_0 : i32, i32
  }
  func.func @transform_3(%arg0: i32) -> (i32, i32) {
    %c0_i32 = arith.constant 0 : i32
    %c0_i32_0 = arith.constant 0 : i32
    return %arg0, %c0_i32 : i32, i32
  }
  func.func @transform_4(%arg0: i32) -> (i32, i32) {
    %c0_i32 = arith.constant 0 : i32
    %c0_i32_0 = arith.constant 0 : i32
    return %arg0, %c0_i32 : i32, i32
  }
}

module attributes {stable_mosaic.version = 11 : i64} {
  func.func @_dwconv_silu_kernel(%arg0: i32, %arg1: memref<1x16x64xf32, #tpu.memory_space<vmem>>, %arg2: memref<4x64xf32, #tpu.memory_space<vmem>>, %arg3: memref<1x64xf32, #tpu.memory_space<vmem>>, %arg4: memref<1x16x64xf32, #tpu.memory_space<vmem>>, %arg5: memref<19x64xf32, #tpu.memory_space<vmem>>) attributes {dimension_semantics = [#tpu.dimension_semantics<parallel>], iteration_bounds = array<i64: 2>, scalar_prefetch = 0 : i64, scratch_operands = 1 : i64, tpu.core_type = #tpu.core_type<tc>, window_params = [{transform_indices = @transform_0, window_bounds = array<i64: 1, 16, 64>}, {pipeline_mode = #tpu.pipeline_mode<synchronous>, transform_indices = @transform_1, window_bounds = array<i64: 4, 64>}, {pipeline_mode = #tpu.pipeline_mode<synchronous>, transform_indices = @transform_2, window_bounds = array<i64: 1, 64>}, {transform_indices = @transform_3, window_bounds = array<i64: 1, 16, 64>}]} {
    %cst = arith.constant 0.000000e+00 : f32
    %0 = vector.broadcast %cst : f32 to vector<3x64xf32>
    %c0 = arith.constant 0 : index
    %c0_0 = arith.constant 0 : index
    %1 = vector.load %arg5[%c0, %c0_0] : memref<19x64xf32, #tpu.memory_space<vmem>>, vector<3x64xf32>
    tpu.vector_store %arg5[%c0, %c0_0], %0 {strides = array<i32>} : memref<19x64xf32, #tpu.memory_space<vmem>>, vector<3x64xf32>,
    %c0_1 = arith.constant 0 : index
    %c0_2 = arith.constant 0 : index
    %c0_3 = arith.constant 0 : index
    %2 = vector.load %arg1[%c0_1, %c0_2, %c0_3] : memref<1x16x64xf32, #tpu.memory_space<vmem>>, vector<1x16x64xf32>
    %3 = vector.shape_cast %2 : vector<1x16x64xf32> to vector<16x64xf32>
    %c3 = arith.constant 3 : index
    %c0_4 = arith.constant 0 : index
    %4 = vector.load %arg5[%c3, %c0_4] : memref<19x64xf32, #tpu.memory_space<vmem>>, vector<16x64xf32>
    tpu.vector_store %arg5[%c3, %c0_4], %3 {strides = array<i32>} : memref<19x64xf32, #tpu.memory_space<vmem>>, vector<16x64xf32>,
    %cst_5 = arith.constant 0.000000e+00 : f32
    %5 = vector.broadcast %cst_5 : f32 to vector<16x64xf32>
    %c0_6 = arith.constant 0 : index
    %c0_7 = arith.constant 0 : index
    %6 = vector.load %arg3[%c0_6, %c0_7] : memref<1x64xf32, #tpu.memory_space<vmem>>, vector<1x64xf32>
    %7 = vector.broadcast %6 : vector<1x64xf32> to vector<16x64xf32>
    %8 = arith.addf %5, %7 : vector<16x64xf32>
    %c0_8 = arith.constant 0 : index
    %c0_9 = arith.constant 0 : index
    %9 = vector.load %arg5[%c0_8, %c0_9] : memref<19x64xf32, #tpu.memory_space<vmem>>, vector<16x64xf32>
    %c0_10 = arith.constant 0 : index
    %c0_11 = arith.constant 0 : index
    %10 = vector.load %arg2[%c0_10, %c0_11] : memref<4x64xf32, #tpu.memory_space<vmem>>, vector<1x64xf32>
    %11 = vector.shape_cast %10 : vector<1x64xf32> to vector<64xf32>
    %12 = vector.shape_cast %11 : vector<64xf32> to vector<1x64xf32>
    %13 = vector.broadcast %12 : vector<1x64xf32> to vector<16x64xf32>
    %14 = arith.mulf %9, %13 : vector<16x64xf32>
    %15 = arith.addf %8, %14 : vector<16x64xf32>
    %c1 = arith.constant 1 : index
    %c0_12 = arith.constant 0 : index
    %16 = vector.load %arg5[%c1, %c0_12] : memref<19x64xf32, #tpu.memory_space<vmem>>, vector<16x64xf32>
    %c1_13 = arith.constant 1 : index
    %c0_14 = arith.constant 0 : index
    %17 = vector.load %arg2[%c1_13, %c0_14] : memref<4x64xf32, #tpu.memory_space<vmem>>, vector<1x64xf32>
    %18 = vector.shape_cast %17 : vector<1x64xf32> to vector<64xf32>
    %19 = vector.shape_cast %18 : vector<64xf32> to vector<1x64xf32>
    %20 = vector.broadcast %19 : vector<1x64xf32> to vector<16x64xf32>
    %21 = arith.mulf %16, %20 : vector<16x64xf32>
    %22 = arith.addf %15, %21 : vector<16x64xf32>
    %c2 = arith.constant 2 : index
    %c0_15 = arith.constant 0 : index
    %23 = vector.load %arg5[%c2, %c0_15] : memref<19x64xf32, #tpu.memory_space<vmem>>, vector<16x64xf32>
    %c2_16 = arith.constant 2 : index
    %c0_17 = arith.constant 0 : index
    %24 = vector.load %arg2[%c2_16, %c0_17] : memref<4x64xf32, #tpu.memory_space<vmem>>, vector<1x64xf32>
    %25 = vector.shape_cast %24 : vector<1x64xf32> to vector<64xf32>
    %26 = vector.shape_cast %25 : vector<64xf32> to vector<1x64xf32>
    %27 = vector.broadcast %26 : vector<1x64xf32> to vector<16x64xf32>
    %28 = arith.mulf %23, %27 : vector<16x64xf32>
    %29 = arith.addf %22, %28 : vector<16x64xf32>
    %c3_18 = arith.constant 3 : index
    %c0_19 = arith.constant 0 : index
    %30 = vector.load %arg5[%c3_18, %c0_19] : memref<19x64xf32, #tpu.memory_space<vmem>>, vector<16x64xf32>
    %c3_20 = arith.constant 3 : index
    %c0_21 = arith.constant 0 : index
    %31 = vector.load %arg2[%c3_20, %c0_21] : memref<4x64xf32, #tpu.memory_space<vmem>>, vector<1x64xf32>
    %32 = vector.shape_cast %31 : vector<1x64xf32> to vector<64xf32>
    %33 = vector.shape_cast %32 : vector<64xf32> to vector<1x64xf32>
    %34 = vector.broadcast %33 : vector<1x64xf32> to vector<16x64xf32>
    %35 = arith.mulf %30, %34 : vector<16x64xf32>
    %36 = arith.addf %29, %35 : vector<16x64xf32>
    %cst_22 = arith.constant 0.000000e+00 : f32
    %37 = vector.broadcast %cst_22 : f32 to vector<16x64xf32>
    %38 = arith.subf %37, %36 : vector<16x64xf32>
    %39 = math.exp %38 : vector<16x64xf32>
    %cst_23 = arith.constant 1.000000e+00 : f32
    %40 = vector.broadcast %cst_23 : f32 to vector<16x64xf32>
    %41 = arith.addf %40, %39 : vector<16x64xf32>
    %42 = tpu.reciprocal %41 {approx = true} : vector<16x64xf32> -> vector<16x64xf32>
    %43 = arith.mulf %36, %42 : vector<16x64xf32>
    %c0_24 = arith.constant 0 : index
    %c0_25 = arith.constant 0 : index
    %c0_26 = arith.constant 0 : index
    %44 = vector.load %arg4[%c0_24, %c0_25, %c0_26] : memref<1x16x64xf32, #tpu.memory_space<vmem>>, vector<1x16x64xf32>
    %45 = vector.shape_cast %44 : vector<1x16x64xf32> to vector<16x64xf32>
    %46 = vector.shape_cast %43 : vector<16x64xf32> to vector<1x16x64xf32>
    tpu.vector_store %arg4[%c0_24, %c0_25, %c0_26], %46 {strides = array<i32>} : memref<1x16x64xf32, #tpu.memory_space<vmem>>, vector<1x16x64xf32>,
    return
  }
  func.func @transform_0(%arg0: i32) -> (i32, i32, i32) {
    %c0_i32 = arith.constant 0 : i32
    %c0_i32_0 = arith.constant 0 : i32
    %c0_i32_1 = arith.constant 0 : i32
    return %arg0, %c0_i32, %c0_i32_0 : i32, i32, i32
  }
  func.func @transform_1(%arg0: i32) -> (i32, i32) {
    %c0_i32 = arith.constant 0 : i32
    %c0_i32_0 = arith.constant 0 : i32
    %c0_i32_1 = arith.constant 0 : i32
    return %c0_i32, %c0_i32_0 : i32, i32
  }
  func.func @transform_2(%arg0: i32) -> (i32, i32) {
    %c0_i32 = arith.constant 0 : i32
    %c0_i32_0 = arith.constant 0 : i32
    %c0_i32_1 = arith.constant 0 : i32
    return %c0_i32, %c0_i32_0 : i32, i32
  }
  func.func @transform_3(%arg0: i32) -> (i32, i32, i32) {
    %c0_i32 = arith.constant 0 : i32
    %c0_i32_0 = arith.constant 0 : i32
    %c0_i32_1 = arith.constant 0 : i32
    return %arg0, %c0_i32, %c0_i32_0 : i32, i32, i32
  }
}

module attributes {stable_mosaic.version = 11 : i64} {
  func.func @_selective_scan_kernel(%arg0: i32, %arg1: i32, %arg2: memref<1x16x64xf32, #tpu.memory_space<vmem>>, %arg3: memref<1x16x64xf32, #tpu.memory_space<vmem>>, %arg4: memref<1x16x64xf32, #tpu.memory_space<vmem>>, %arg5: memref<1x16x16xf32, #tpu.memory_space<vmem>>, %arg6: memref<1x16x16xf32, #tpu.memory_space<vmem>>, %arg7: memref<16x64xf32, #tpu.memory_space<vmem>>, %arg8: memref<1x64xf32, #tpu.memory_space<vmem>>, %arg9: memref<1x64xf32, #tpu.memory_space<vmem>>, %arg10: memref<1x16x64xf32, #tpu.memory_space<vmem>>, %arg11: memref<16x64xf32, #tpu.memory_space<vmem>>, %arg12: memref<16x64xf32, #tpu.memory_space<vmem>>, %arg13: memref<16x64xf32, #tpu.memory_space<vmem>>, %arg14: memref<16x64xf32, #tpu.memory_space<vmem>>) attributes {dimension_semantics = [#tpu.dimension_semantics<parallel>, #tpu.dimension_semantics<arbitrary>], iteration_bounds = array<i64: 2, 1>, scalar_prefetch = 0 : i64, scratch_operands = 4 : i64, tpu.core_type = #tpu.core_type<tc>, window_params = [{transform_indices = @transform_0, window_bounds = array<i64: 1, 16, 64>}, {transform_indices = @transform_1, window_bounds = array<i64: 1, 16, 64>}, {transform_indices = @transform_2, window_bounds = array<i64: 1, 16, 64>}, {transform_indices = @transform_3, window_bounds = array<i64: 1, 16, 16>}, {transform_indices = @transform_4, window_bounds = array<i64: 1, 16, 16>}, {pipeline_mode = #tpu.pipeline_mode<synchronous>, transform_indices = @transform_5, window_bounds = array<i64: 16, 64>}, {pipeline_mode = #tpu.pipeline_mode<synchronous>, transform_indices = @transform_6, window_bounds = array<i64: 1, 64>}, {pipeline_mode = #tpu.pipeline_mode<synchronous>, transform_indices = @transform_7, window_bounds = array<i64: 1, 64>}, {transform_indices = @transform_8, window_bounds = array<i64: 1, 16, 64>}]} {
    %c0_i32 = arith.constant 0 : i32
    %0 = arith.cmpi eq, %arg1, %c0_i32 : i32
    %1 = arith.extui %0 : i1 to i32
    %c0_i32_0 = arith.constant 0 : i32
    %2 = arith.cmpi ne, %1, %c0_i32_0 : i32
    scf.if %2 {
      %cst_35 = arith.constant 0.000000e+00 : f32
      %46 = vector.broadcast %cst_35 : f32 to vector<16x64xf32>
      %c0_36 = arith.constant 0 : index
      %c0_37 = arith.constant 0 : index
      %47 = vector.load %arg11[%c0_36, %c0_37] : memref<16x64xf32, #tpu.memory_space<vmem>>, vector<16x64xf32>
      tpu.vector_store %arg11[%c0_36, %c0_37], %46 {strides = array<i32>} : memref<16x64xf32, #tpu.memory_space<vmem>>, vector<16x64xf32>,
    } else {
    }
    %c0 = arith.constant 0 : index
    %c0_1 = arith.constant 0 : index
    %c0_2 = arith.constant 0 : index
    %3 = vector.load %arg3[%c0, %c0_1, %c0_2] : memref<1x16x64xf32, #tpu.memory_space<vmem>>, vector<1x16x64xf32>
    %4 = vector.shape_cast %3 : vector<1x16x64xf32> to vector<16x64xf32>
    %c0_3 = arith.constant 0 : index
    %c0_4 = arith.constant 0 : index
    %5 = vector.load %arg9[%c0_3, %c0_4] : memref<1x64xf32, #tpu.memory_space<vmem>>, vector<1x64xf32>
    %6 = vector.broadcast %5 : vector<1x64xf32> to vector<16x64xf32>
    %7 = arith.addf %4, %6 : vector<16x64xf32>
    %cst = arith.constant 0.000000e+00 : f32
    %8 = vector.broadcast %cst : f32 to vector<16x64xf32>
    %9 = arith.maximumf %7, %8 : vector<16x64xf32>
    %10 = math.absf %7 : vector<16x64xf32>
    %cst_5 = arith.constant 0.000000e+00 : f32
    %11 = vector.broadcast %cst_5 : f32 to vector<16x64xf32>
    %12 = arith.subf %11, %10 : vector<16x64xf32>
    %13 = math.exp %12 : vector<16x64xf32>
    %cst_6 = arith.constant 1.000000e+00 : f32
    %14 = vector.broadcast %cst_6 : f32 to vector<16x64xf32>
    %15 = arith.addf %14, %13 : vector<16x64xf32>
    %16 = math.log %15 : vector<16x64xf32>
    %17 = arith.addf %9, %16 : vector<16x64xf32>
    %c0_7 = arith.constant 0 : index
    %c0_8 = arith.constant 0 : index
    %18 = vector.load %arg12[%c0_7, %c0_8] : memref<16x64xf32, #tpu.memory_space<vmem>>, vector<16x64xf32>
    tpu.vector_store %arg12[%c0_7, %c0_8], %17 {strides = array<i32>} : memref<16x64xf32, #tpu.memory_space<vmem>>, vector<16x64xf32>,
    %c0_9 = arith.constant 0 : index
    %c0_10 = arith.constant 0 : index
    %19 = vector.load %arg12[%c0_9, %c0_10] : memref<16x64xf32, #tpu.memory_space<vmem>>, vector<16x64xf32>
    %c0_11 = arith.constant 0 : index
    %c0_12 = arith.constant 0 : index
    %c0_13 = arith.constant 0 : index
    %20 = vector.load %arg2[%c0_11, %c0_12, %c0_13] : memref<1x16x64xf32, #tpu.memory_space<vmem>>, vector<1x16x64xf32>
    %21 = vector.shape_cast %20 : vector<1x16x64xf32> to vector<16x64xf32>
    %22 = arith.mulf %19, %21 : vector<16x64xf32>
    %c0_14 = arith.constant 0 : index
    %c0_15 = arith.constant 0 : index
    %23 = vector.load %arg13[%c0_14, %c0_15] : memref<16x64xf32, #tpu.memory_space<vmem>>, vector<16x64xf32>
    tpu.vector_store %arg13[%c0_14, %c0_15], %22 {strides = array<i32>} : memref<16x64xf32, #tpu.memory_space<vmem>>, vector<16x64xf32>,
    %c0_16 = arith.constant 0 : index
    %c0_17 = arith.constant 0 : index
    %24 = vector.load %arg7[%c0_16, %c0_17] : memref<16x64xf32, #tpu.memory_space<vmem>>, vector<16x64xf32>
    %c0_i32_18 = arith.constant 0 : i32
    %c16_i32 = arith.constant 16 : i32
    %25 = arith.addi %c0_i32_18, %c16_i32 : i32
    %c1_i32 = arith.constant 1 : i32
    scf.for %arg15 = %c0_i32_18 to %25 step %c1_i32  : i32 {
      %46 = arith.index_cast %arg15 : i32 to index
      %c0_35 = arith.constant 0 : index
      %47 = vector.load %arg12[%46, %c0_35] : memref<16x64xf32, #tpu.memory_space<vmem>>, vector<1x64xf32>
      %48 = vector.shape_cast %47 : vector<1x64xf32> to vector<64xf32>
      %49 = vector.shape_cast %48 : vector<64xf32> to vector<1x64xf32>
      %50 = vector.broadcast %49 : vector<1x64xf32> to vector<16x64xf32>
      %51 = arith.mulf %24, %50 : vector<16x64xf32>
      %52 = math.exp %51 : vector<16x64xf32>
      %c0_36 = arith.constant 0 : index
      %53 = arith.index_cast %arg15 : i32 to index
      %c0_37 = arith.constant 0 : index
      %54 = vector.load %arg5[%c0_36, %53, %c0_37] : memref<1x16x16xf32, #tpu.memory_space<vmem>>, vector<1x1x16xf32>
      %55 = vector.shape_cast %54 : vector<1x1x16xf32> to vector<1x16xf32>
      %56 = arith.index_cast %arg15 : i32 to index
      %c0_38 = arith.constant 0 : index
      %57 = vector.load %arg13[%56, %c0_38] : memref<16x64xf32, #tpu.memory_space<vmem>>, vector<1x64xf32>
      "tpu.trace_start"() <{level = 10 : i32, message = "kn,kd->nd"}> : () -> ()
      %cst_39 = arith.constant dense<0.000000e+00> : vector<16x64xf32>
      %58 = tpu.matmul %55, %57, %cst_39 {dimension_numbers = #tpu.dot_dimension_numbers<[0], [0], [1], [1], [0, 1, 1, 1], [], []>} : vector<1x16xf32>, vector<1x64xf32>, vector<16x64xf32> -> vector<16x64xf32>
      "tpu.trace_stop"() : () -> ()
      %c0_40 = arith.constant 0 : index
      %c0_41 = arith.constant 0 : index
      %59 = vector.load %arg11[%c0_40, %c0_41] : memref<16x64xf32, #tpu.memory_space<vmem>>, vector<16x64xf32>
      %60 = arith.mulf %52, %59 : vector<16x64xf32>
      %61 = arith.addf %60, %58 : vector<16x64xf32>
      %c0_42 = arith.constant 0 : index
      %c0_43 = arith.constant 0 : index
      %62 = vector.load %arg11[%c0_42, %c0_43] : memref<16x64xf32, #tpu.memory_space<vmem>>, vector<16x64xf32>
      tpu.vector_store %arg11[%c0_42, %c0_43], %61 {strides = array<i32>} : memref<16x64xf32, #tpu.memory_space<vmem>>, vector<16x64xf32>,
      %c0_44 = arith.constant 0 : index
      %63 = arith.index_cast %arg15 : i32 to index
      %c0_45 = arith.constant 0 : index
      %64 = vector.load %arg6[%c0_44, %63, %c0_45] : memref<1x16x16xf32, #tpu.memory_space<vmem>>, vector<1x1x16xf32>
      %65 = vector.shape_cast %64 : vector<1x1x16xf32> to vector<1x16xf32>
      %cst_46 = arith.constant dense<0.000000e+00> : vector<1x64xf32>
      %66 = tpu.matmul %65, %61, %cst_46 {dimension_numbers = #tpu.dot_dimension_numbers<[1], [0], [0], [1], [0, 0, 1, 1], [], []>} : vector<1x16xf32>, vector<16x64xf32>, vector<1x64xf32> -> vector<1x64xf32>
      %67 = arith.index_cast %arg15 : i32 to index
      %c0_47 = arith.constant 0 : index
      %68 = vector.load %arg14[%67, %c0_47] : memref<16x64xf32, #tpu.memory_space<vmem>>, vector<1x64xf32>
      tpu.vector_store %arg14[%67, %c0_47], %66 {strides = array<i32>} : memref<16x64xf32, #tpu.memory_space<vmem>>, vector<1x64xf32>,
    }
    %c16_i32_19 = arith.constant 16 : i32
    %c0_20 = arith.constant 0 : index
    %c0_21 = arith.constant 0 : index
    %c0_22 = arith.constant 0 : index
    %26 = vector.load %arg4[%c0_20, %c0_21, %c0_22] : memref<1x16x64xf32, #tpu.memory_space<vmem>>, vector<1x16x64xf32>
    %27 = vector.shape_cast %26 : vector<1x16x64xf32> to vector<16x64xf32>
    %cst_23 = arith.constant 0.000000e+00 : f32
    %28 = vector.broadcast %cst_23 : f32 to vector<16x64xf32>
    %29 = arith.subf %28, %27 : vector<16x64xf32>
    %30 = math.exp %29 : vector<16x64xf32>
    %cst_24 = arith.constant 1.000000e+00 : f32
    %31 = vector.broadcast %cst_24 : f32 to vector<16x64xf32>
    %32 = arith.addf %31, %30 : vector<16x64xf32>
    %33 = tpu.reciprocal %32 {approx = true} : vector<16x64xf32> -> vector<16x64xf32>
    %34 = arith.mulf %27, %33 : vector<16x64xf32>
    %c0_25 = arith.constant 0 : index
    %c0_26 = arith.constant 0 : index
    %35 = vector.load %arg8[%c0_25, %c0_26] : memref<1x64xf32, #tpu.memory_space<vmem>>, vector<1x64xf32>
    %c0_27 = arith.constant 0 : index
    %c0_28 = arith.constant 0 : index
    %c0_29 = arith.constant 0 : index
    %36 = vector.load %arg2[%c0_27, %c0_28, %c0_29] : memref<1x16x64xf32, #tpu.memory_space<vmem>>, vector<1x16x64xf32>
    %37 = vector.shape_cast %36 : vector<1x16x64xf32> to vector<16x64xf32>
    %38 = vector.broadcast %35 : vector<1x64xf32> to vector<16x64xf32>
    %39 = arith.mulf %38, %37 : vector<16x64xf32>
    %c0_30 = arith.constant 0 : index
    %c0_31 = arith.constant 0 : index
    %40 = vector.load %arg14[%c0_30, %c0_31] : memref<16x64xf32, #tpu.memory_space<vmem>>, vector<16x64xf32>
    %41 = arith.addf %39, %40 : vector<16x64xf32>
    %42 = arith.mulf %41, %34 : vector<16x64xf32>
    %c0_32 = arith.constant 0 : index
    %c0_33 = arith.constant 0 : index
    %c0_34 = arith.constant 0 : index
    %43 = vector.load %arg10[%c0_32, %c0_33, %c0_34] : memref<1x16x64xf32, #tpu.memory_space<vmem>>, vector<1x16x64xf32>
    %44 = vector.shape_cast %43 : vector<1x16x64xf32> to vector<16x64xf32>
    %45 = vector.shape_cast %42 : vector<16x64xf32> to vector<1x16x64xf32>
    tpu.vector_store %arg10[%c0_32, %c0_33, %c0_34], %45 {strides = array<i32>} : memref<1x16x64xf32, #tpu.memory_space<vmem>>, vector<1x16x64xf32>,
    return
  }
  func.func @transform_0(%arg0: i32, %arg1: i32) -> (i32, i32, i32) {
    %c0_i32 = arith.constant 0 : i32
    %c0_i32_0 = arith.constant 0 : i32
    return %arg0, %arg1, %c0_i32 : i32, i32, i32
  }
  func.func @transform_1(%arg0: i32, %arg1: i32) -> (i32, i32, i32) {
    %c0_i32 = arith.constant 0 : i32
    %c0_i32_0 = arith.constant 0 : i32
    return %arg0, %arg1, %c0_i32 : i32, i32, i32
  }
  func.func @transform_2(%arg0: i32, %arg1: i32) -> (i32, i32, i32) {
    %c0_i32 = arith.constant 0 : i32
    %c0_i32_0 = arith.constant 0 : i32
    return %arg0, %arg1, %c0_i32 : i32, i32, i32
  }
  func.func @transform_3(%arg0: i32, %arg1: i32) -> (i32, i32, i32) {
    %c0_i32 = arith.constant 0 : i32
    %c0_i32_0 = arith.constant 0 : i32
    return %arg0, %arg1, %c0_i32 : i32, i32, i32
  }
  func.func @transform_4(%arg0: i32, %arg1: i32) -> (i32, i32, i32) {
    %c0_i32 = arith.constant 0 : i32
    %c0_i32_0 = arith.constant 0 : i32
    return %arg0, %arg1, %c0_i32 : i32, i32, i32
  }
  func.func @transform_5(%arg0: i32, %arg1: i32) -> (i32, i32) {
    %c0_i32 = arith.constant 0 : i32
    %c0_i32_0 = arith.constant 0 : i32
    %c0_i32_1 = arith.constant 0 : i32
    return %c0_i32, %c0_i32_0 : i32, i32
  }
  func.func @transform_6(%arg0: i32, %arg1: i32) -> (i32, i32) {
    %c0_i32 = arith.constant 0 : i32
    %c0_i32_0 = arith.constant 0 : i32
    %c0_i32_1 = arith.constant 0 : i32
    return %c0_i32, %c0_i32_0 : i32, i32
  }
  func.func @transform_7(%arg0: i32, %arg1: i32) -> (i32, i32) {
    %c0_i32 = arith.constant 0 : i32
    %c0_i32_0 = arith.constant 0 : i32
    %c0_i32_1 = arith.constant 0 : i32
    return %c0_i32, %c0_i32_0 : i32, i32
  }
  func.func @transform_8(%arg0: i32, %arg1: i32) -> (i32, i32, i32) {
    %c0_i32 = arith.constant 0 : i32
    %c0_i32_0 = arith.constant 0 : i32
    return %arg0, %arg1, %c0_i32 : i32, i32, i32
  }
}

module attributes {stable_mosaic.version = 11 : i64} {
  func.func @_add_rmsnorm_kernel(%arg0: i32, %arg1: memref<32x32xf32, #tpu.memory_space<vmem>>, %arg2: memref<32x32xf32, #tpu.memory_space<vmem>>, %arg3: memref<1x32xf32, #tpu.memory_space<vmem>>, %arg4: memref<32x32xf32, #tpu.memory_space<vmem>>, %arg5: memref<32x32xf32, #tpu.memory_space<vmem>>) attributes {dimension_semantics = [#tpu.dimension_semantics<parallel>], iteration_bounds = array<i64: 1>, scalar_prefetch = 0 : i64, scratch_operands = 0 : i64, tpu.core_type = #tpu.core_type<tc>, window_params = [{transform_indices = @transform_0, window_bounds = array<i64: 32, 32>}, {transform_indices = @transform_1, window_bounds = array<i64: 32, 32>}, {pipeline_mode = #tpu.pipeline_mode<synchronous>, transform_indices = @transform_2, window_bounds = array<i64: 1, 32>}, {transform_indices = @transform_3, window_bounds = array<i64: 32, 32>}, {transform_indices = @transform_4, window_bounds = array<i64: 32, 32>}]} {
    %c0 = arith.constant 0 : index
    %c0_0 = arith.constant 0 : index
    %0 = vector.load %arg1[%c0, %c0_0] : memref<32x32xf32, #tpu.memory_space<vmem>>, vector<32x32xf32>
    %c0_1 = arith.constant 0 : index
    %c0_2 = arith.constant 0 : index
    %1 = vector.load %arg2[%c0_1, %c0_2] : memref<32x32xf32, #tpu.memory_space<vmem>>, vector<32x32xf32>
    %2 = arith.addf %0, %1 : vector<32x32xf32>
    %c0_3 = arith.constant 0 : index
    %c0_4 = arith.constant 0 : index
    %3 = vector.load %arg5[%c0_3, %c0_4] : memref<32x32xf32, #tpu.memory_space<vmem>>, vector<32x32xf32>
    tpu.vector_store %arg5[%c0_3, %c0_4], %2 {strides = array<i32>} : memref<32x32xf32, #tpu.memory_space<vmem>>, vector<32x32xf32>,
    %4 = arith.mulf %2, %2 : vector<32x32xf32>
    %cst = arith.constant dense<0.000000e+00> : vector<32xf32>
    %5 = vector.multi_reduction <add>, %4, %cst [1] : vector<32x32xf32> to vector<32xf32>
    %6 = vector.shape_cast %5 : vector<32xf32> to vector<32x1xf32>
    %cst_5 = arith.constant 3.200000e+01 : f32
    %7 = vector.broadcast %cst_5 : f32 to vector<32x1xf32>
    %8 = arith.divf %6, %7 : vector<32x1xf32>
    %cst_6 = arith.constant 9.99999974E-6 : f32
    %9 = vector.broadcast %cst_6 : f32 to vector<32x1xf32>
    %10 = arith.addf %8, %9 : vector<32x1xf32>
    %11 = math.rsqrt %10 : vector<32x1xf32>
    %12 = vector.broadcast %11 : vector<32x1xf32> to vector<32x32xf32>
    %13 = arith.mulf %2, %12 : vector<32x32xf32>
    %c0_7 = arith.constant 0 : index
    %c0_8 = arith.constant 0 : index
    %14 = vector.load %arg3[%c0_7, %c0_8] : memref<1x32xf32, #tpu.memory_space<vmem>>, vector<1x32xf32>
    %15 = vector.broadcast %14 : vector<1x32xf32> to vector<32x32xf32>
    %16 = arith.mulf %13, %15 : vector<32x32xf32>
    %c0_9 = arith.constant 0 : index
    %c0_10 = arith.constant 0 : index
    %17 = vector.load %arg4[%c0_9, %c0_10] : memref<32x32xf32, #tpu.memory_space<vmem>>, vector<32x32xf32>
    tpu.vector_store %arg4[%c0_9, %c0_10], %16 {strides = array<i32>} : memref<32x32xf32, #tpu.memory_space<vmem>>, vector<32x32xf32>,
    return
  }
  func.func @transform_0(%arg0: i32) -> (i32, i32) {
    %c0_i32 = arith.constant 0 : i32
    %c0_i32_0 = arith.constant 0 : i32
    return %arg0, %c0_i32 : i32, i32
  }
  func.func @transform_1(%arg0: i32) -> (i32, i32) {
    %c0_i32 = arith.constant 0 : i32
    %c0_i32_0 = arith.constant 0 : i32
    return %arg0, %c0_i32 : i32, i32
  }
  func.func @transform_2(%arg0: i32) -> (i32, i32) {
    %c0_i32 = arith.constant 0 : i32
    %c0_i32_0 = arith.constant 0 : i32
    %c0_i32_1 = arith.constant 0 : i32
    return %c0_i32, %c0_i32_0 : i32, i32
  }
  func.func @transform_3(%arg0: i32) -> (i32, i32) {
    %c0_i32 = arith.constant 0 : i32
    %c0_i32_0 = arith.constant 0 : i32
    return %arg0, %c0_i32 : i32, i32
  }
  func.func @transform_4(%arg0: i32) -> (i32, i32) {
    %c0_i32 = arith.constant 0 : i32
    %c0_i32_0 = arith.constant 0 : i32
    return %arg0, %c0_i32 : i32, i32
  }
}

module attributes {stable_mosaic.version = 11 : i64} {
  func.func @_matmul_kernel(%arg0: i32, %arg1: i32, %arg2: i32, %arg3: memref<16x128xbf16, #tpu.memory_space<vmem>>, %arg4: memref<128x128xbf16, #tpu.memory_space<vmem>>, %arg5: memref<16x128xf32, #tpu.memory_space<vmem>>, %arg6: memref<16x128xf32, #tpu.memory_space<vmem>>) attributes {dimension_semantics = [#tpu.dimension_semantics<parallel>, #tpu.dimension_semantics<parallel>, #tpu.dimension_semantics<arbitrary>], iteration_bounds = array<i64: 1, 1, 1>, scalar_prefetch = 0 : i64, scratch_operands = 1 : i64, tpu.core_type = #tpu.core_type<tc>, window_params = [{transform_indices = @transform_0, window_bounds = array<i64: 16, 128>}, {transform_indices = @transform_1, window_bounds = array<i64: 128, 128>}, {transform_indices = @transform_2, window_bounds = array<i64: 16, 128>}]} {
    %c0_i32 = arith.constant 0 : i32
    %0 = arith.cmpi eq, %arg2, %c0_i32 : i32
    %1 = arith.extui %0 : i1 to i32
    %c0_i32_0 = arith.constant 0 : i32
    %2 = arith.cmpi ne, %1, %c0_i32_0 : i32
    scf.if %2 {
      %cst_10 = arith.constant 0.000000e+00 : f32
      %12 = vector.broadcast %cst_10 : f32 to vector<16x128xf32>
      %c0_11 = arith.constant 0 : index
      %c0_12 = arith.constant 0 : index
      %13 = vector.load %arg6[%c0_11, %c0_12] : memref<16x128xf32, #tpu.memory_space<vmem>>, vector<16x128xf32>
      tpu.vector_store %arg6[%c0_11, %c0_12], %12 {strides = array<i32>} : memref<16x128xf32, #tpu.memory_space<vmem>>, vector<16x128xf32>,
    } else {
    }
    %c0 = arith.constant 0 : index
    %c0_1 = arith.constant 0 : index
    %3 = vector.load %arg6[%c0, %c0_1] : memref<16x128xf32, #tpu.memory_space<vmem>>, vector<16x128xf32>
    %c0_2 = arith.constant 0 : index
    %c0_3 = arith.constant 0 : index
    %4 = vector.load %arg3[%c0_2, %c0_3] : memref<16x128xbf16, #tpu.memory_space<vmem>>, vector<16x128xbf16>
    %c0_4 = arith.constant 0 : index
    %c0_5 = arith.constant 0 : index
    %5 = vector.load %arg4[%c0_4, %c0_5] : memref<128x128xbf16, #tpu.memory_space<vmem>>, vector<128x128xbf16>
    %cst = arith.constant dense<0.000000e+00> : vector<16x128xf32>
    %6 = tpu.matmul %4, %5, %cst {dimension_numbers = #tpu.dot_dimension_numbers<[1], [0], [0], [1], [0, 0, 1, 1], [], []>} : vector<16x128xbf16>, vector<128x128xbf16>, vector<16x128xf32> -> vector<16x128xf32>
    %7 = arith.addf %3, %6 : vector<16x128xf32>
    %c0_6 = arith.constant 0 : index
    %c0_7 = arith.constant 0 : index
    %8 = vector.load %arg6[%c0_6, %c0_7] : memref<16x128xf32, #tpu.memory_space<vmem>>, vector<16x128xf32>
    tpu.vector_store %arg6[%c0_6, %c0_7], %7 {strides = array<i32>} : memref<16x128xf32, #tpu.memory_space<vmem>>, vector<16x128xf32>,
    %c0_i32_8 = arith.constant 0 : i32
    %9 = arith.cmpi eq, %arg2, %c0_i32_8 : i32
    %10 = arith.extui %9 : i1 to i32
    %c0_i32_9 = arith.constant 0 : i32
    %11 = arith.cmpi ne, %10, %c0_i32_9 : i32
    scf.if %11 {
      %c0_10 = arith.constant 0 : index
      %c0_11 = arith.constant 0 : index
      %12 = vector.load %arg6[%c0_10, %c0_11] : memref<16x128xf32, #tpu.memory_space<vmem>>, vector<16x128xf32>
      %c0_12 = arith.constant 0 : index
      %c0_13 = arith.constant 0 : index
      %13 = vector.load %arg5[%c0_12, %c0_13] : memref<16x128xf32, #tpu.memory_space<vmem>>, vector<16x128xf32>
      tpu.vector_store %arg5[%c0_12, %c0_13], %12 {strides = array<i32>} : memref<16x128xf32, #tpu.memory_space<vmem>>, vector<16x128xf32>,
    } else {
    }
    return
  }
  func.func @transform_0(%arg0: i32, %arg1: i32, %arg2: i32) -> (i32, i32) {
    %c0_i32 = arith.constant 0 : i32
    return %arg0, %arg2 : i32, i32
  }
  func.func @transform_1(%arg0: i32, %arg1: i32, %arg2: i32) -> (i32, i32) {
    %c0_i32 = arith.constant 0 : i32
    return %arg2, %arg1 : i32, i32
  }
  func.func @transform_2(%arg0: i32, %arg1: i32, %arg2: i32) -> (i32, i32) {
    %c0_i32 = arith.constant 0 : i32
    return %arg0, %arg1 : i32, i32
  }
}

module attributes {stable_mosaic.version = 11 : i64} {
  func.func @_add_rmsnorm_kernel(%arg0: i32, %arg1: memref<8x64xf32, #tpu.memory_space<vmem>>, %arg2: memref<8x64xf32, #tpu.memory_space<vmem>>, %arg3: memref<1x64xf32, #tpu.memory_space<vmem>>, %arg4: memref<8x64xf32, #tpu.memory_space<vmem>>, %arg5: memref<8x64xf32, #tpu.memory_space<vmem>>) attributes {dimension_semantics = [#tpu.dimension_semantics<parallel>], iteration_bounds = array<i64: 1>, scalar_prefetch = 0 : i64, scratch_operands = 0 : i64, tpu.core_type = #tpu.core_type<tc>, window_params = [{transform_indices = @transform_0, window_bounds = array<i64: 8, 64>}, {transform_indices = @transform_1, window_bounds = array<i64: 8, 64>}, {pipeline_mode = #tpu.pipeline_mode<synchronous>, transform_indices = @transform_2, window_bounds = array<i64: 1, 64>}, {transform_indices = @transform_3, window_bounds = array<i64: 8, 64>}, {transform_indices = @transform_4, window_bounds = array<i64: 8, 64>}]} {
    %c0 = arith.constant 0 : index
    %c0_0 = arith.constant 0 : index
    %0 = vector.load %arg1[%c0, %c0_0] : memref<8x64xf32, #tpu.memory_space<vmem>>, vector<8x64xf32>
    %c0_1 = arith.constant 0 : index
    %c0_2 = arith.constant 0 : index
    %1 = vector.load %arg2[%c0_1, %c0_2] : memref<8x64xf32, #tpu.memory_space<vmem>>, vector<8x64xf32>
    %2 = arith.addf %0, %1 : vector<8x64xf32>
    %c0_3 = arith.constant 0 : index
    %c0_4 = arith.constant 0 : index
    %3 = vector.load %arg5[%c0_3, %c0_4] : memref<8x64xf32, #tpu.memory_space<vmem>>, vector<8x64xf32>
    tpu.vector_store %arg5[%c0_3, %c0_4], %2 {strides = array<i32>} : memref<8x64xf32, #tpu.memory_space<vmem>>, vector<8x64xf32>,
    %4 = arith.mulf %2, %2 : vector<8x64xf32>
    %cst = arith.constant dense<0.000000e+00> : vector<8xf32>
    %5 = vector.multi_reduction <add>, %4, %cst [1] : vector<8x64xf32> to vector<8xf32>
    %6 = vector.shape_cast %5 : vector<8xf32> to vector<8x1xf32>
    %cst_5 = arith.constant 6.400000e+01 : f32
    %7 = vector.broadcast %cst_5 : f32 to vector<8x1xf32>
    %8 = arith.divf %6, %7 : vector<8x1xf32>
    %cst_6 = arith.constant 9.99999974E-6 : f32
    %9 = vector.broadcast %cst_6 : f32 to vector<8x1xf32>
    %10 = arith.addf %8, %9 : vector<8x1xf32>
    %11 = math.rsqrt %10 : vector<8x1xf32>
    %12 = vector.broadcast %11 : vector<8x1xf32> to vector<8x64xf32>
    %13 = arith.mulf %2, %12 : vector<8x64xf32>
    %c0_7 = arith.constant 0 : index
    %c0_8 = arith.constant 0 : index
    %14 = vector.load %arg3[%c0_7, %c0_8] : memref<1x64xf32, #tpu.memory_space<vmem>>, vector<1x64xf32>
    %15 = vector.broadcast %14 : vector<1x64xf32> to vector<8x64xf32>
    %16 = arith.mulf %13, %15 : vector<8x64xf32>
    %c0_9 = arith.constant 0 : index
    %c0_10 = arith.constant 0 : index
    %17 = vector.load %arg4[%c0_9, %c0_10] : memref<8x64xf32, #tpu.memory_space<vmem>>, vector<8x64xf32>
    tpu.vector_store %arg4[%c0_9, %c0_10], %16 {strides = array<i32>} : memref<8x64xf32, #tpu.memory_space<vmem>>, vector<8x64xf32>,
    return
  }
  func.func @transform_0(%arg0: i32) -> (i32, i32) {
    %c0_i32 = arith.constant 0 : i32
    %c0_i32_0 = arith.constant 0 : i32
    return %arg0, %c0_i32 : i32, i32
  }
  func.func @transform_1(%arg0: i32) -> (i32, i32) {
    %c0_i32 = arith.constant 0 : i32
    %c0_i32_0 = arith.constant 0 : i32
    return %arg0, %c0_i32 : i32, i32
  }
  func.func @transform_2(%arg0: i32) -> (i32, i32) {
    %c0_i32 = arith.constant 0 : i32
    %c0_i32_0 = arith.constant 0 : i32
    %c0_i32_1 = arith.constant 0 : i32
    return %c0_i32, %c0_i32_0 : i32, i32
  }
  func.func @transform_3(%arg0: i32) -> (i32, i32) {
    %c0_i32 = arith.constant 0 : i32
    %c0_i32_0 = arith.constant 0 : i32
    return %arg0, %c0_i32 : i32, i32
  }
  func.func @transform_4(%arg0: i32) -> (i32, i32) {
    %c0_i32 = arith.constant 0 : i32
    %c0_i32_0 = arith.constant 0 : i32
    return %arg0, %c0_i32 : i32, i32
  }
}

module attributes {stable_mosaic.version = 11 : i64} {
  func.func @_matmul_kernel(%arg0: i32, %arg1: i32, %arg2: i32, %arg3: memref<16x128xbf16, #tpu.memory_space<vmem>>, %arg4: memref<128x256xbf16, #tpu.memory_space<vmem>>, %arg5: memref<16x256xf32, #tpu.memory_space<vmem>>, %arg6: memref<16x256xf32, #tpu.memory_space<vmem>>) attributes {dimension_semantics = [#tpu.dimension_semantics<parallel>, #tpu.dimension_semantics<parallel>, #tpu.dimension_semantics<arbitrary>], iteration_bounds = array<i64: 1, 1, 1>, scalar_prefetch = 0 : i64, scratch_operands = 1 : i64, tpu.core_type = #tpu.core_type<tc>, window_params = [{transform_indices = @transform_0, window_bounds = array<i64: 16, 128>}, {transform_indices = @transform_1, window_bounds = array<i64: 128, 256>}, {transform_indices = @transform_2, window_bounds = array<i64: 16, 256>}]} {
    %c0_i32 = arith.constant 0 : i32
    %0 = arith.cmpi eq, %arg2, %c0_i32 : i32
    %1 = arith.extui %0 : i1 to i32
    %c0_i32_0 = arith.constant 0 : i32
    %2 = arith.cmpi ne, %1, %c0_i32_0 : i32
    scf.if %2 {
      %cst_10 = arith.constant 0.000000e+00 : f32
      %12 = vector.broadcast %cst_10 : f32 to vector<16x256xf32>
      %c0_11 = arith.constant 0 : index
      %c0_12 = arith.constant 0 : index
      %13 = vector.load %arg6[%c0_11, %c0_12] : memref<16x256xf32, #tpu.memory_space<vmem>>, vector<16x256xf32>
      tpu.vector_store %arg6[%c0_11, %c0_12], %12 {strides = array<i32>} : memref<16x256xf32, #tpu.memory_space<vmem>>, vector<16x256xf32>,
    } else {
    }
    %c0 = arith.constant 0 : index
    %c0_1 = arith.constant 0 : index
    %3 = vector.load %arg6[%c0, %c0_1] : memref<16x256xf32, #tpu.memory_space<vmem>>, vector<16x256xf32>
    %c0_2 = arith.constant 0 : index
    %c0_3 = arith.constant 0 : index
    %4 = vector.load %arg3[%c0_2, %c0_3] : memref<16x128xbf16, #tpu.memory_space<vmem>>, vector<16x128xbf16>
    %c0_4 = arith.constant 0 : index
    %c0_5 = arith.constant 0 : index
    %5 = vector.load %arg4[%c0_4, %c0_5] : memref<128x256xbf16, #tpu.memory_space<vmem>>, vector<128x256xbf16>
    %cst = arith.constant dense<0.000000e+00> : vector<16x256xf32>
    %6 = tpu.matmul %4, %5, %cst {dimension_numbers = #tpu.dot_dimension_numbers<[1], [0], [0], [1], [0, 0, 1, 1], [], []>} : vector<16x128xbf16>, vector<128x256xbf16>, vector<16x256xf32> -> vector<16x256xf32>
    %7 = arith.addf %3, %6 : vector<16x256xf32>
    %c0_6 = arith.constant 0 : index
    %c0_7 = arith.constant 0 : index
    %8 = vector.load %arg6[%c0_6, %c0_7] : memref<16x256xf32, #tpu.memory_space<vmem>>, vector<16x256xf32>
    tpu.vector_store %arg6[%c0_6, %c0_7], %7 {strides = array<i32>} : memref<16x256xf32, #tpu.memory_space<vmem>>, vector<16x256xf32>,
    %c0_i32_8 = arith.constant 0 : i32
    %9 = arith.cmpi eq, %arg2, %c0_i32_8 : i32
    %10 = arith.extui %9 : i1 to i32
    %c0_i32_9 = arith.constant 0 : i32
    %11 = arith.cmpi ne, %10, %c0_i32_9 : i32
    scf.if %11 {
      %c0_10 = arith.constant 0 : index
      %c0_11 = arith.constant 0 : index
      %12 = vector.load %arg6[%c0_10, %c0_11] : memref<16x256xf32, #tpu.memory_space<vmem>>, vector<16x256xf32>
      %c0_12 = arith.constant 0 : index
      %c0_13 = arith.constant 0 : index
      %13 = vector.load %arg5[%c0_12, %c0_13] : memref<16x256xf32, #tpu.memory_space<vmem>>, vector<16x256xf32>
      tpu.vector_store %arg5[%c0_12, %c0_13], %12 {strides = array<i32>} : memref<16x256xf32, #tpu.memory_space<vmem>>, vector<16x256xf32>,
    } else {
    }
    return
  }
  func.func @transform_0(%arg0: i32, %arg1: i32, %arg2: i32) -> (i32, i32) {
    %c0_i32 = arith.constant 0 : i32
    return %arg0, %arg2 : i32, i32
  }
  func.func @transform_1(%arg0: i32, %arg1: i32, %arg2: i32) -> (i32, i32) {
    %c0_i32 = arith.constant 0 : i32
    return %arg2, %arg1 : i32, i32
  }
  func.func @transform_2(%arg0: i32, %arg1: i32, %arg2: i32) -> (i32, i32) {
    %c0_i32 = arith.constant 0 : i32
    return %arg0, %arg1 : i32, i32
  }
}

module attributes {stable_mosaic.version = 11 : i64} {
  func.func @_dwconv_silu_kernel(%arg0: i32, %arg1: memref<1x4x128xf32, #tpu.memory_space<vmem>>, %arg2: memref<4x128xf32, #tpu.memory_space<vmem>>, %arg3: memref<1x128xf32, #tpu.memory_space<vmem>>, %arg4: memref<1x4x128xf32, #tpu.memory_space<vmem>>, %arg5: memref<7x128xf32, #tpu.memory_space<vmem>>) attributes {dimension_semantics = [#tpu.dimension_semantics<parallel>], iteration_bounds = array<i64: 2>, scalar_prefetch = 0 : i64, scratch_operands = 1 : i64, tpu.core_type = #tpu.core_type<tc>, window_params = [{transform_indices = @transform_0, window_bounds = array<i64: 1, 4, 128>}, {pipeline_mode = #tpu.pipeline_mode<synchronous>, transform_indices = @transform_1, window_bounds = array<i64: 4, 128>}, {pipeline_mode = #tpu.pipeline_mode<synchronous>, transform_indices = @transform_2, window_bounds = array<i64: 1, 128>}, {transform_indices = @transform_3, window_bounds = array<i64: 1, 4, 128>}]} {
    %cst = arith.constant 0.000000e+00 : f32
    %0 = vector.broadcast %cst : f32 to vector<3x128xf32>
    %c0 = arith.constant 0 : index
    %c0_0 = arith.constant 0 : index
    %1 = vector.load %arg5[%c0, %c0_0] : memref<7x128xf32, #tpu.memory_space<vmem>>, vector<3x128xf32>
    tpu.vector_store %arg5[%c0, %c0_0], %0 {strides = array<i32>} : memref<7x128xf32, #tpu.memory_space<vmem>>, vector<3x128xf32>,
    %c0_1 = arith.constant 0 : index
    %c0_2 = arith.constant 0 : index
    %c0_3 = arith.constant 0 : index
    %2 = vector.load %arg1[%c0_1, %c0_2, %c0_3] : memref<1x4x128xf32, #tpu.memory_space<vmem>>, vector<1x4x128xf32>
    %3 = vector.shape_cast %2 : vector<1x4x128xf32> to vector<4x128xf32>
    %c3 = arith.constant 3 : index
    %c0_4 = arith.constant 0 : index
    %4 = vector.load %arg5[%c3, %c0_4] : memref<7x128xf32, #tpu.memory_space<vmem>>, vector<4x128xf32>
    tpu.vector_store %arg5[%c3, %c0_4], %3 {strides = array<i32>} : memref<7x128xf32, #tpu.memory_space<vmem>>, vector<4x128xf32>,
    %cst_5 = arith.constant 0.000000e+00 : f32
    %5 = vector.broadcast %cst_5 : f32 to vector<4x128xf32>
    %c0_6 = arith.constant 0 : index
    %c0_7 = arith.constant 0 : index
    %6 = vector.load %arg3[%c0_6, %c0_7] : memref<1x128xf32, #tpu.memory_space<vmem>>, vector<1x128xf32>
    %7 = vector.broadcast %6 : vector<1x128xf32> to vector<4x128xf32>
    %8 = arith.addf %5, %7 : vector<4x128xf32>
    %c0_8 = arith.constant 0 : index
    %c0_9 = arith.constant 0 : index
    %9 = vector.load %arg5[%c0_8, %c0_9] : memref<7x128xf32, #tpu.memory_space<vmem>>, vector<4x128xf32>
    %c0_10 = arith.constant 0 : index
    %c0_11 = arith.constant 0 : index
    %10 = vector.load %arg2[%c0_10, %c0_11] : memref<4x128xf32, #tpu.memory_space<vmem>>, vector<1x128xf32>
    %11 = vector.shape_cast %10 : vector<1x128xf32> to vector<128xf32>
    %12 = vector.shape_cast %11 : vector<128xf32> to vector<1x128xf32>
    %13 = vector.broadcast %12 : vector<1x128xf32> to vector<4x128xf32>
    %14 = arith.mulf %9, %13 : vector<4x128xf32>
    %15 = arith.addf %8, %14 : vector<4x128xf32>
    %c1 = arith.constant 1 : index
    %c0_12 = arith.constant 0 : index
    %16 = vector.load %arg5[%c1, %c0_12] : memref<7x128xf32, #tpu.memory_space<vmem>>, vector<4x128xf32>
    %c1_13 = arith.constant 1 : index
    %c0_14 = arith.constant 0 : index
    %17 = vector.load %arg2[%c1_13, %c0_14] : memref<4x128xf32, #tpu.memory_space<vmem>>, vector<1x128xf32>
    %18 = vector.shape_cast %17 : vector<1x128xf32> to vector<128xf32>
    %19 = vector.shape_cast %18 : vector<128xf32> to vector<1x128xf32>
    %20 = vector.broadcast %19 : vector<1x128xf32> to vector<4x128xf32>
    %21 = arith.mulf %16, %20 : vector<4x128xf32>
    %22 = arith.addf %15, %21 : vector<4x128xf32>
    %c2 = arith.constant 2 : index
    %c0_15 = arith.constant 0 : index
    %23 = vector.load %arg5[%c2, %c0_15] : memref<7x128xf32, #tpu.memory_space<vmem>>, vector<4x128xf32>
    %c2_16 = arith.constant 2 : index
    %c0_17 = arith.constant 0 : index
    %24 = vector.load %arg2[%c2_16, %c0_17] : memref<4x128xf32, #tpu.memory_space<vmem>>, vector<1x128xf32>
    %25 = vector.shape_cast %24 : vector<1x128xf32> to vector<128xf32>
    %26 = vector.shape_cast %25 : vector<128xf32> to vector<1x128xf32>
    %27 = vector.broadcast %26 : vector<1x128xf32> to vector<4x128xf32>
    %28 = arith.mulf %23, %27 : vector<4x128xf32>
    %29 = arith.addf %22, %28 : vector<4x128xf32>
    %c3_18 = arith.constant 3 : index
    %c0_19 = arith.constant 0 : index
    %30 = vector.load %arg5[%c3_18, %c0_19] : memref<7x128xf32, #tpu.memory_space<vmem>>, vector<4x128xf32>
    %c3_20 = arith.constant 3 : index
    %c0_21 = arith.constant 0 : index
    %31 = vector.load %arg2[%c3_20, %c0_21] : memref<4x128xf32, #tpu.memory_space<vmem>>, vector<1x128xf32>
    %32 = vector.shape_cast %31 : vector<1x128xf32> to vector<128xf32>
    %33 = vector.shape_cast %32 : vector<128xf32> to vector<1x128xf32>
    %34 = vector.broadcast %33 : vector<1x128xf32> to vector<4x128xf32>
    %35 = arith.mulf %30, %34 : vector<4x128xf32>
    %36 = arith.addf %29, %35 : vector<4x128xf32>
    %cst_22 = arith.constant 0.000000e+00 : f32
    %37 = vector.broadcast %cst_22 : f32 to vector<4x128xf32>
    %38 = arith.subf %37, %36 : vector<4x128xf32>
    %39 = math.exp %38 : vector<4x128xf32>
    %cst_23 = arith.constant 1.000000e+00 : f32
    %40 = vector.broadcast %cst_23 : f32 to vector<4x128xf32>
    %41 = arith.addf %40, %39 : vector<4x128xf32>
    %42 = tpu.reciprocal %41 {approx = true} : vector<4x128xf32> -> vector<4x128xf32>
    %43 = arith.mulf %36, %42 : vector<4x128xf32>
    %c0_24 = arith.constant 0 : index
    %c0_25 = arith.constant 0 : index
    %c0_26 = arith.constant 0 : index
    %44 = vector.load %arg4[%c0_24, %c0_25, %c0_26] : memref<1x4x128xf32, #tpu.memory_space<vmem>>, vector<1x4x128xf32>
    %45 = vector.shape_cast %44 : vector<1x4x128xf32> to vector<4x128xf32>
    %46 = vector.shape_cast %43 : vector<4x128xf32> to vector<1x4x128xf32>
    tpu.vector_store %arg4[%c0_24, %c0_25, %c0_26], %46 {strides = array<i32>} : memref<1x4x128xf32, #tpu.memory_space<vmem>>, vector<1x4x128xf32>,
    return
  }
  func.func @transform_0(%arg0: i32) -> (i32, i32, i32) {
    %c0_i32 = arith.constant 0 : i32
    %c0_i32_0 = arith.constant 0 : i32
    %c0_i32_1 = arith.constant 0 : i32
    return %arg0, %c0_i32, %c0_i32_0 : i32, i32, i32
  }
  func.func @transform_1(%arg0: i32) -> (i32, i32) {
    %c0_i32 = arith.constant 0 : i32
    %c0_i32_0 = arith.constant 0 : i32
    %c0_i32_1 = arith.constant 0 : i32
    return %c0_i32, %c0_i32_0 : i32, i32
  }
  func.func @transform_2(%arg0: i32) -> (i32, i32) {
    %c0_i32 = arith.constant 0 : i32
    %c0_i32_0 = arith.constant 0 : i32
    %c0_i32_1 = arith.constant 0 : i32
    return %c0_i32, %c0_i32_0 : i32, i32
  }
  func.func @transform_3(%arg0: i32) -> (i32, i32, i32) {
    %c0_i32 = arith.constant 0 : i32
    %c0_i32_0 = arith.constant 0 : i32
    %c0_i32_1 = arith.constant 0 : i32
    return %arg0, %c0_i32, %c0_i32_0 : i32, i32, i32
  }
}

module attributes {stable_mosaic.version = 11 : i64} {
  func.func @_selective_scan_kernel(%arg0: i32, %arg1: i32, %arg2: memref<1x4x128xf32, #tpu.memory_space<vmem>>, %arg3: memref<1x4x128xf32, #tpu.memory_space<vmem>>, %arg4: memref<1x4x128xf32, #tpu.memory_space<vmem>>, %arg5: memref<1x4x16xf32, #tpu.memory_space<vmem>>, %arg6: memref<1x4x16xf32, #tpu.memory_space<vmem>>, %arg7: memref<16x128xf32, #tpu.memory_space<vmem>>, %arg8: memref<1x128xf32, #tpu.memory_space<vmem>>, %arg9: memref<1x128xf32, #tpu.memory_space<vmem>>, %arg10: memref<1x4x128xf32, #tpu.memory_space<vmem>>, %arg11: memref<16x128xf32, #tpu.memory_space<vmem>>, %arg12: memref<4x128xf32, #tpu.memory_space<vmem>>, %arg13: memref<4x128xf32, #tpu.memory_space<vmem>>, %arg14: memref<4x128xf32, #tpu.memory_space<vmem>>) attributes {dimension_semantics = [#tpu.dimension_semantics<parallel>, #tpu.dimension_semantics<arbitrary>], iteration_bounds = array<i64: 2, 1>, scalar_prefetch = 0 : i64, scratch_operands = 4 : i64, tpu.core_type = #tpu.core_type<tc>, window_params = [{transform_indices = @transform_0, window_bounds = array<i64: 1, 4, 128>}, {transform_indices = @transform_1, window_bounds = array<i64: 1, 4, 128>}, {transform_indices = @transform_2, window_bounds = array<i64: 1, 4, 128>}, {transform_indices = @transform_3, window_bounds = array<i64: 1, 4, 16>}, {transform_indices = @transform_4, window_bounds = array<i64: 1, 4, 16>}, {pipeline_mode = #tpu.pipeline_mode<synchronous>, transform_indices = @transform_5, window_bounds = array<i64: 16, 128>}, {pipeline_mode = #tpu.pipeline_mode<synchronous>, transform_indices = @transform_6, window_bounds = array<i64: 1, 128>}, {pipeline_mode = #tpu.pipeline_mode<synchronous>, transform_indices = @transform_7, window_bounds = array<i64: 1, 128>}, {transform_indices = @transform_8, window_bounds = array<i64: 1, 4, 128>}]} {
    %c0_i32 = arith.constant 0 : i32
    %0 = arith.cmpi eq, %arg1, %c0_i32 : i32
    %1 = arith.extui %0 : i1 to i32
    %c0_i32_0 = arith.constant 0 : i32
    %2 = arith.cmpi ne, %1, %c0_i32_0 : i32
    scf.if %2 {
      %cst_35 = arith.constant 0.000000e+00 : f32
      %46 = vector.broadcast %cst_35 : f32 to vector<16x128xf32>
      %c0_36 = arith.constant 0 : index
      %c0_37 = arith.constant 0 : index
      %47 = vector.load %arg11[%c0_36, %c0_37] : memref<16x128xf32, #tpu.memory_space<vmem>>, vector<16x128xf32>
      tpu.vector_store %arg11[%c0_36, %c0_37], %46 {strides = array<i32>} : memref<16x128xf32, #tpu.memory_space<vmem>>, vector<16x128xf32>,
    } else {
    }
    %c0 = arith.constant 0 : index
    %c0_1 = arith.constant 0 : index
    %c0_2 = arith.constant 0 : index
    %3 = vector.load %arg3[%c0, %c0_1, %c0_2] : memref<1x4x128xf32, #tpu.memory_space<vmem>>, vector<1x4x128xf32>
    %4 = vector.shape_cast %3 : vector<1x4x128xf32> to vector<4x128xf32>
    %c0_3 = arith.constant 0 : index
    %c0_4 = arith.constant 0 : index
    %5 = vector.load %arg9[%c0_3, %c0_4] : memref<1x128xf32, #tpu.memory_space<vmem>>, vector<1x128xf32>
    %6 = vector.broadcast %5 : vector<1x128xf32> to vector<4x128xf32>
    %7 = arith.addf %4, %6 : vector<4x128xf32>
    %cst = arith.constant 0.000000e+00 : f32
    %8 = vector.broadcast %cst : f32 to vector<4x128xf32>
    %9 = arith.maximumf %7, %8 : vector<4x128xf32>
    %10 = math.absf %7 : vector<4x128xf32>
    %cst_5 = arith.constant 0.000000e+00 : f32
    %11 = vector.broadcast %cst_5 : f32 to vector<4x128xf32>
    %12 = arith.subf %11, %10 : vector<4x128xf32>
    %13 = math.exp %12 : vector<4x128xf32>
    %cst_6 = arith.constant 1.000000e+00 : f32
    %14 = vector.broadcast %cst_6 : f32 to vector<4x128xf32>
    %15 = arith.addf %14, %13 : vector<4x128xf32>
    %16 = math.log %15 : vector<4x128xf32>
    %17 = arith.addf %9, %16 : vector<4x128xf32>
    %c0_7 = arith.constant 0 : index
    %c0_8 = arith.constant 0 : index
    %18 = vector.load %arg12[%c0_7, %c0_8] : memref<4x128xf32, #tpu.memory_space<vmem>>, vector<4x128xf32>
    tpu.vector_store %arg12[%c0_7, %c0_8], %17 {strides = array<i32>} : memref<4x128xf32, #tpu.memory_space<vmem>>, vector<4x128xf32>,
    %c0_9 = arith.constant 0 : index
    %c0_10 = arith.constant 0 : index
    %19 = vector.load %arg12[%c0_9, %c0_10] : memref<4x128xf32, #tpu.memory_space<vmem>>, vector<4x128xf32>
    %c0_11 = arith.constant 0 : index
    %c0_12 = arith.constant 0 : index
    %c0_13 = arith.constant 0 : index
    %20 = vector.load %arg2[%c0_11, %c0_12, %c0_13] : memref<1x4x128xf32, #tpu.memory_space<vmem>>, vector<1x4x128xf32>
    %21 = vector.shape_cast %20 : vector<1x4x128xf32> to vector<4x128xf32>
    %22 = arith.mulf %19, %21 : vector<4x128xf32>
    %c0_14 = arith.constant 0 : index
    %c0_15 = arith.constant 0 : index
    %23 = vector.load %arg13[%c0_14, %c0_15] : memref<4x128xf32, #tpu.memory_space<vmem>>, vector<4x128xf32>
    tpu.vector_store %arg13[%c0_14, %c0_15], %22 {strides = array<i32>} : memref<4x128xf32, #tpu.memory_space<vmem>>, vector<4x128xf32>,
    %c0_16 = arith.constant 0 : index
    %c0_17 = arith.constant 0 : index
    %24 = vector.load %arg7[%c0_16, %c0_17] : memref<16x128xf32, #tpu.memory_space<vmem>>, vector<16x128xf32>
    %c0_i32_18 = arith.constant 0 : i32
    %c4_i32 = arith.constant 4 : i32
    %25 = arith.addi %c0_i32_18, %c4_i32 : i32
    %c1_i32 = arith.constant 1 : i32
    scf.for %arg15 = %c0_i32_18 to %25 step %c1_i32  : i32 {
      %46 = arith.index_cast %arg15 : i32 to index
      %c0_35 = arith.constant 0 : index
      %47 = vector.load %arg12[%46, %c0_35] : memref<4x128xf32, #tpu.memory_space<vmem>>, vector<1x128xf32>
      %48 = vector.shape_cast %47 : vector<1x128xf32> to vector<128xf32>
      %49 = vector.shape_cast %48 : vector<128xf32> to vector<1x128xf32>
      %50 = vector.broadcast %49 : vector<1x128xf32> to vector<16x128xf32>
      %51 = arith.mulf %24, %50 : vector<16x128xf32>
      %52 = math.exp %51 : vector<16x128xf32>
      %c0_36 = arith.constant 0 : index
      %53 = arith.index_cast %arg15 : i32 to index
      %c0_37 = arith.constant 0 : index
      %54 = vector.load %arg5[%c0_36, %53, %c0_37] : memref<1x4x16xf32, #tpu.memory_space<vmem>>, vector<1x1x16xf32>
      %55 = vector.shape_cast %54 : vector<1x1x16xf32> to vector<1x16xf32>
      %56 = arith.index_cast %arg15 : i32 to index
      %c0_38 = arith.constant 0 : index
      %57 = vector.load %arg13[%56, %c0_38] : memref<4x128xf32, #tpu.memory_space<vmem>>, vector<1x128xf32>
      "tpu.trace_start"() <{level = 10 : i32, message = "kn,kd->nd"}> : () -> ()
      %cst_39 = arith.constant dense<0.000000e+00> : vector<16x128xf32>
      %58 = tpu.matmul %55, %57, %cst_39 {dimension_numbers = #tpu.dot_dimension_numbers<[0], [0], [1], [1], [0, 1, 1, 1], [], []>} : vector<1x16xf32>, vector<1x128xf32>, vector<16x128xf32> -> vector<16x128xf32>
      "tpu.trace_stop"() : () -> ()
      %c0_40 = arith.constant 0 : index
      %c0_41 = arith.constant 0 : index
      %59 = vector.load %arg11[%c0_40, %c0_41] : memref<16x128xf32, #tpu.memory_space<vmem>>, vector<16x128xf32>
      %60 = arith.mulf %52, %59 : vector<16x128xf32>
      %61 = arith.addf %60, %58 : vector<16x128xf32>
      %c0_42 = arith.constant 0 : index
      %c0_43 = arith.constant 0 : index
      %62 = vector.load %arg11[%c0_42, %c0_43] : memref<16x128xf32, #tpu.memory_space<vmem>>, vector<16x128xf32>
      tpu.vector_store %arg11[%c0_42, %c0_43], %61 {strides = array<i32>} : memref<16x128xf32, #tpu.memory_space<vmem>>, vector<16x128xf32>,
      %c0_44 = arith.constant 0 : index
      %63 = arith.index_cast %arg15 : i32 to index
      %c0_45 = arith.constant 0 : index
      %64 = vector.load %arg6[%c0_44, %63, %c0_45] : memref<1x4x16xf32, #tpu.memory_space<vmem>>, vector<1x1x16xf32>
      %65 = vector.shape_cast %64 : vector<1x1x16xf32> to vector<1x16xf32>
      %cst_46 = arith.constant dense<0.000000e+00> : vector<1x128xf32>
      %66 = tpu.matmul %65, %61, %cst_46 {dimension_numbers = #tpu.dot_dimension_numbers<[1], [0], [0], [1], [0, 0, 1, 1], [], []>} : vector<1x16xf32>, vector<16x128xf32>, vector<1x128xf32> -> vector<1x128xf32>
      %67 = arith.index_cast %arg15 : i32 to index
      %c0_47 = arith.constant 0 : index
      %68 = vector.load %arg14[%67, %c0_47] : memref<4x128xf32, #tpu.memory_space<vmem>>, vector<1x128xf32>
      tpu.vector_store %arg14[%67, %c0_47], %66 {strides = array<i32>} : memref<4x128xf32, #tpu.memory_space<vmem>>, vector<1x128xf32>,
    }
    %c4_i32_19 = arith.constant 4 : i32
    %c0_20 = arith.constant 0 : index
    %c0_21 = arith.constant 0 : index
    %c0_22 = arith.constant 0 : index
    %26 = vector.load %arg4[%c0_20, %c0_21, %c0_22] : memref<1x4x128xf32, #tpu.memory_space<vmem>>, vector<1x4x128xf32>
    %27 = vector.shape_cast %26 : vector<1x4x128xf32> to vector<4x128xf32>
    %cst_23 = arith.constant 0.000000e+00 : f32
    %28 = vector.broadcast %cst_23 : f32 to vector<4x128xf32>
    %29 = arith.subf %28, %27 : vector<4x128xf32>
    %30 = math.exp %29 : vector<4x128xf32>
    %cst_24 = arith.constant 1.000000e+00 : f32
    %31 = vector.broadcast %cst_24 : f32 to vector<4x128xf32>
    %32 = arith.addf %31, %30 : vector<4x128xf32>
    %33 = tpu.reciprocal %32 {approx = true} : vector<4x128xf32> -> vector<4x128xf32>
    %34 = arith.mulf %27, %33 : vector<4x128xf32>
    %c0_25 = arith.constant 0 : index
    %c0_26 = arith.constant 0 : index
    %35 = vector.load %arg8[%c0_25, %c0_26] : memref<1x128xf32, #tpu.memory_space<vmem>>, vector<1x128xf32>
    %c0_27 = arith.constant 0 : index
    %c0_28 = arith.constant 0 : index
    %c0_29 = arith.constant 0 : index
    %36 = vector.load %arg2[%c0_27, %c0_28, %c0_29] : memref<1x4x128xf32, #tpu.memory_space<vmem>>, vector<1x4x128xf32>
    %37 = vector.shape_cast %36 : vector<1x4x128xf32> to vector<4x128xf32>
    %38 = vector.broadcast %35 : vector<1x128xf32> to vector<4x128xf32>
    %39 = arith.mulf %38, %37 : vector<4x128xf32>
    %c0_30 = arith.constant 0 : index
    %c0_31 = arith.constant 0 : index
    %40 = vector.load %arg14[%c0_30, %c0_31] : memref<4x128xf32, #tpu.memory_space<vmem>>, vector<4x128xf32>
    %41 = arith.addf %39, %40 : vector<4x128xf32>
    %42 = arith.mulf %41, %34 : vector<4x128xf32>
    %c0_32 = arith.constant 0 : index
    %c0_33 = arith.constant 0 : index
    %c0_34 = arith.constant 0 : index
    %43 = vector.load %arg10[%c0_32, %c0_33, %c0_34] : memref<1x4x128xf32, #tpu.memory_space<vmem>>, vector<1x4x128xf32>
    %44 = vector.shape_cast %43 : vector<1x4x128xf32> to vector<4x128xf32>
    %45 = vector.shape_cast %42 : vector<4x128xf32> to vector<1x4x128xf32>
    tpu.vector_store %arg10[%c0_32, %c0_33, %c0_34], %45 {strides = array<i32>} : memref<1x4x128xf32, #tpu.memory_space<vmem>>, vector<1x4x128xf32>,
    return
  }
  func.func @transform_0(%arg0: i32, %arg1: i32) -> (i32, i32, i32) {
    %c0_i32 = arith.constant 0 : i32
    %c0_i32_0 = arith.constant 0 : i32
    return %arg0, %arg1, %c0_i32 : i32, i32, i32
  }
  func.func @transform_1(%arg0: i32, %arg1: i32) -> (i32, i32, i32) {
    %c0_i32 = arith.constant 0 : i32
    %c0_i32_0 = arith.constant 0 : i32
    return %arg0, %arg1, %c0_i32 : i32, i32, i32
  }
  func.func @transform_2(%arg0: i32, %arg1: i32) -> (i32, i32, i32) {
    %c0_i32 = arith.constant 0 : i32
    %c0_i32_0 = arith.constant 0 : i32
    return %arg0, %arg1, %c0_i32 : i32, i32, i32
  }
  func.func @transform_3(%arg0: i32, %arg1: i32) -> (i32, i32, i32) {
    %c0_i32 = arith.constant 0 : i32
    %c0_i32_0 = arith.constant 0 : i32
    return %arg0, %arg1, %c0_i32 : i32, i32, i32
  }
  func.func @transform_4(%arg0: i32, %arg1: i32) -> (i32, i32, i32) {
    %c0_i32 = arith.constant 0 : i32
    %c0_i32_0 = arith.constant 0 : i32
    return %arg0, %arg1, %c0_i32 : i32, i32, i32
  }
  func.func @transform_5(%arg0: i32, %arg1: i32) -> (i32, i32) {
    %c0_i32 = arith.constant 0 : i32
    %c0_i32_0 = arith.constant 0 : i32
    %c0_i32_1 = arith.constant 0 : i32
    return %c0_i32, %c0_i32_0 : i32, i32
  }
  func.func @transform_6(%arg0: i32, %arg1: i32) -> (i32, i32) {
    %c0_i32 = arith.constant 0 : i32
    %c0_i32_0 = arith.constant 0 : i32
    %c0_i32_1 = arith.constant 0 : i32
    return %c0_i32, %c0_i32_0 : i32, i32
  }
  func.func @transform_7(%arg0: i32, %arg1: i32) -> (i32, i32) {
    %c0_i32 = arith.constant 0 : i32
    %c0_i32_0 = arith.constant 0 : i32
    %c0_i32_1 = arith.constant 0 : i32
    return %c0_i32, %c0_i32_0 : i32, i32
  }
  func.func @transform_8(%arg0: i32, %arg1: i32) -> (i32, i32, i32) {
    %c0_i32 = arith.constant 0 : i32
    %c0_i32_0 = arith.constant 0 : i32
    return %arg0, %arg1, %c0_i32 : i32, i32, i32
  }
}

module attributes {stable_mosaic.version = 11 : i64} {
  func.func @_add_rmsnorm_kernel(%arg0: i32, %arg1: memref<8x64xf32, #tpu.memory_space<vmem>>, %arg2: memref<8x64xf32, #tpu.memory_space<vmem>>, %arg3: memref<1x64xf32, #tpu.memory_space<vmem>>, %arg4: memref<8x64xf32, #tpu.memory_space<vmem>>, %arg5: memref<8x64xf32, #tpu.memory_space<vmem>>) attributes {dimension_semantics = [#tpu.dimension_semantics<parallel>], iteration_bounds = array<i64: 1>, scalar_prefetch = 0 : i64, scratch_operands = 0 : i64, tpu.core_type = #tpu.core_type<tc>, window_params = [{transform_indices = @transform_0, window_bounds = array<i64: 8, 64>}, {transform_indices = @transform_1, window_bounds = array<i64: 8, 64>}, {pipeline_mode = #tpu.pipeline_mode<synchronous>, transform_indices = @transform_2, window_bounds = array<i64: 1, 64>}, {transform_indices = @transform_3, window_bounds = array<i64: 8, 64>}, {transform_indices = @transform_4, window_bounds = array<i64: 8, 64>}]} {
    %c0 = arith.constant 0 : index
    %c0_0 = arith.constant 0 : index
    %0 = vector.load %arg1[%c0, %c0_0] : memref<8x64xf32, #tpu.memory_space<vmem>>, vector<8x64xf32>
    %c0_1 = arith.constant 0 : index
    %c0_2 = arith.constant 0 : index
    %1 = vector.load %arg2[%c0_1, %c0_2] : memref<8x64xf32, #tpu.memory_space<vmem>>, vector<8x64xf32>
    %2 = arith.addf %0, %1 : vector<8x64xf32>
    %c0_3 = arith.constant 0 : index
    %c0_4 = arith.constant 0 : index
    %3 = vector.load %arg5[%c0_3, %c0_4] : memref<8x64xf32, #tpu.memory_space<vmem>>, vector<8x64xf32>
    tpu.vector_store %arg5[%c0_3, %c0_4], %2 {strides = array<i32>} : memref<8x64xf32, #tpu.memory_space<vmem>>, vector<8x64xf32>,
    %4 = arith.mulf %2, %2 : vector<8x64xf32>
    %cst = arith.constant dense<0.000000e+00> : vector<8xf32>
    %5 = vector.multi_reduction <add>, %4, %cst [1] : vector<8x64xf32> to vector<8xf32>
    %6 = vector.shape_cast %5 : vector<8xf32> to vector<8x1xf32>
    %cst_5 = arith.constant 6.400000e+01 : f32
    %7 = vector.broadcast %cst_5 : f32 to vector<8x1xf32>
    %8 = arith.divf %6, %7 : vector<8x1xf32>
    %cst_6 = arith.constant 9.99999974E-6 : f32
    %9 = vector.broadcast %cst_6 : f32 to vector<8x1xf32>
    %10 = arith.addf %8, %9 : vector<8x1xf32>
    %11 = math.rsqrt %10 : vector<8x1xf32>
    %12 = vector.broadcast %11 : vector<8x1xf32> to vector<8x64xf32>
    %13 = arith.mulf %2, %12 : vector<8x64xf32>
    %c0_7 = arith.constant 0 : index
    %c0_8 = arith.constant 0 : index
    %14 = vector.load %arg3[%c0_7, %c0_8] : memref<1x64xf32, #tpu.memory_space<vmem>>, vector<1x64xf32>
    %15 = vector.broadcast %14 : vector<1x64xf32> to vector<8x64xf32>
    %16 = arith.mulf %13, %15 : vector<8x64xf32>
    %c0_9 = arith.constant 0 : index
    %c0_10 = arith.constant 0 : index
    %17 = vector.load %arg4[%c0_9, %c0_10] : memref<8x64xf32, #tpu.memory_space<vmem>>, vector<8x64xf32>
    tpu.vector_store %arg4[%c0_9, %c0_10], %16 {strides = array<i32>} : memref<8x64xf32, #tpu.memory_space<vmem>>, vector<8x64xf32>,
    return
  }
  func.func @transform_0(%arg0: i32) -> (i32, i32) {
    %c0_i32 = arith.constant 0 : i32
    %c0_i32_0 = arith.constant 0 : i32
    return %arg0, %c0_i32 : i32, i32
  }
  func.func @transform_1(%arg0: i32) -> (i32, i32) {
    %c0_i32 = arith.constant 0 : i32
    %c0_i32_0 = arith.constant 0 : i32
    return %arg0, %c0_i32 : i32, i32
  }
  func.func @transform_2(%arg0: i32) -> (i32, i32) {
    %c0_i32 = arith.constant 0 : i32
    %c0_i32_0 = arith.constant 0 : i32
    %c0_i32_1 = arith.constant 0 : i32
    return %c0_i32, %c0_i32_0 : i32, i32
  }
  func.func @transform_3(%arg0: i32) -> (i32, i32) {
    %c0_i32 = arith.constant 0 : i32
    %c0_i32_0 = arith.constant 0 : i32
    return %arg0, %c0_i32 : i32, i32
  }
  func.func @transform_4(%arg0: i32) -> (i32, i32) {
    %c0_i32 = arith.constant 0 : i32
    %c0_i32_0 = arith.constant 0 : i32
    return %arg0, %c0_i32 : i32, i32
  }
}

</mosaic_0001>

<llo_original>
// kernel: _lambda_.55
$region0: #{_lambda_.55}
  #allocation0 [shape = 'u32[]', space=smem, size = 0x4, offset = 0x4, fixed_abs, tag = 'smem constant byte address 0x4 - core index']
  #allocation1 [shape = 'u32[144,128]{1,0:T(1,128)}', space=vmem, size = 0x12000, scoped, tag = 'internal scratch']
  #allocation2 [shape = 'f32[128,128]{1,0:T(8,128)}', space=vmem, size = 0x10000, scoped, tag = 'scratch operand']
  %s0 = inlined_call_operand.vmem [shape: bf16[128,128], index: 0, kind: input, shape index: {}]
  %s1 = inlined_call_operand.vmem [shape: bf16[128,128], index: 1, kind: input, shape index: {}]
  %s2 = inlined_call_operand.vmem [shape: f32[128,128], index: 2, kind: output, shape index: {}]
  %s3 = sld [smem:[#allocation0]]
  $region26: #{_lambda_.55} parent=0
    _
  %s5 = ssub.s32 1, %s3
  %s6 = scalar_select 0, %s5, %s3
  // Predicated region
  $region2: #{_lambda_.55} parent=0 // pred_check
    _
  $region3: #{_lambda_.55} parent=0 // pred_check_branch
    %8 = sbr.rel (0) target = $region5
  $region4: #{_lambda_.55} parent=0 // pred_region
    _
  $region5: #{_lambda_.55} parent=0 // pred_fallthru
    _
  // Predicated region
  $region6: #{_lambda_.55} parent=0 // pred_check
    _
  $region7: #{_lambda_.55} parent=0 // pred_check_branch
    %10 = sbr.rel (0) target = $region9
  $region8: #{_lambda_.55} parent=0 // pred_region
    _
  $region9: #{_lambda_.55} parent=0 // pred_fallthru
    _
  %p12 = scmp.eq.s32.totalorder 0, 0
  // Predicated region
  $region10: #{_lambda_.55} parent=0 // pred_check
    %p13 = pneg %p12
  $region11: #{_lambda_.55} parent=0 // pred_check_branch
    %15 = sbr.rel (%p13) target = $region13
  $region12: #{_lambda_.55} parent=0 // pred_region
    %16 = vst [vmem:[#allocation2] sm:$0xff] 0.0
    %17 = vst [vmem:[#allocation2 + $0x8] sm:$0xff] 0.0
    %18 = vst [vmem:[#allocation2 + $0x10] sm:$0xff] 0.0
    %19 = vst [vmem:[#allocation2 + $0x18] sm:$0xff] 0.0
    %20 = vst [vmem:[#allocation2 + $0x20] sm:$0xff] 0.0
    %21 = vst [vmem:[#allocation2 + $0x28] sm:$0xff] 0.0
    %22 = vst [vmem:[#allocation2 + $0x30] sm:$0xff] 0.0
    %23 = vst [vmem:[#allocation2 + $0x38] sm:$0xff] 0.0
    %24 = vst [vmem:[#allocation2 + $0x40] sm:$0xff] 0.0
    %25 = vst [vmem:[#allocation2 + $0x48] sm:$0xff] 0.0
    %26 = vst [vmem:[#allocation2 + $0x50] sm:$0xff] 0.0
    %27 = vst [vmem:[#allocation2 + $0x58] sm:$0xff] 0.0
    %28 = vst [vmem:[#allocation2 + $0x60] sm:$0xff] 0.0
    %29 = vst [vmem:[#allocation2 + $0x68] sm:$0xff] 0.0
    %30 = vst [vmem:[#allocation2 + $0x70] sm:$0xff] 0.0
    %31 = vst [vmem:[#allocation2 + $0x78] sm:$0xff] 0.0
  $region13: #{_lambda_.55} parent=0 // pred_fallthru
    _
  %v32 = vld [vmem:[#allocation2] sm:$0xff]
  %v33 = vld [vmem:[#allocation2 + $0x8] sm:$0xff]
  %v34 = vld [vmem:[#allocation2 + $0x10] sm:$0xff]
  %v35 = vld [vmem:[#allocation2 + $0x18] sm:$0xff]
  %v36 = vld [vmem:[#allocation2 + $0x20] sm:$0xff]
  %v37 = vld [vmem:[#allocation2 + $0x28] sm:$0xff]
  %v38 = vld [vmem:[#allocation2 + $0x30] sm:$0xff]
  %v39 = vld [vmem:[#allocation2 + $0x38] sm:$0xff]
  %v40 = vld [vmem:[#allocation2 + $0x40] sm:$0xff]
  %v41 = vld [vmem:[#allocation2 + $0x48] sm:$0xff]
  %v42 = vld [vmem:[#allocation2 + $0x50] sm:$0xff]
  %v43 = vld [vmem:[#allocation2 + $0x58] sm:$0xff]
  %v44 = vld [vmem:[#allocation2 + $0x60] sm:$0xff]
  %v45 = vld [vmem:[#allocation2 + $0x68] sm:$0xff]
  %v46 = vld [vmem:[#allocation2 + $0x70] sm:$0xff]
  %v47 = vld [vmem:[#allocation2 + $0x78] sm:$0xff]
  %v48 = vld [vmem:[%s0] sm:$0xf]
  %v49 = vld [vmem:[%s0 + $0x4] sm:$0xf]
  %v50 = vld [vmem:[%s0 + $0x8] sm:$0xf]
  %v51 = vld [vmem:[%s0 + $0xc] sm:$0xf]
  %v52 = vld [vmem:[%s0 + $0x10] sm:$0xf]
  %v53 = vld [vmem:[%s0 + $0x14] sm:$0xf]
  %v54 = vld [vmem:[%s0 + $0x18] sm:$0xf]
  %v55 = vld [vmem:[%s0 + $0x1c] sm:$0xf]
  %v56 = vld [vmem:[%s0 + $0x20] sm:$0xf]
  %v57 = vld [vmem:[%s0 + $0x24] sm:$0xf]
  %v58 = vld [vmem:[%s0 + $0x28] sm:$0xf]
  %v59 = vld [vmem:[%s0 + $0x2c] sm:$0xf]
  %v60 = vld [vmem:[%s0 + $0x30] sm:$0xf]
  %v61 = vld [vmem:[%s0 + $0x34] sm:$0xf]
  %v62 = vld [vmem:[%s0 + $0x38] sm:$0xf]
  %v63 = vld [vmem:[%s0 + $0x3c] sm:$0xf]
  %v64 = vld [vmem:[%s1] sm:$0xf]
  %v65 = vld [vmem:[%s1 + $0x4] sm:$0xf]
  %v66 = vld [vmem:[%s1 + $0x8] sm:$0xf]
  %v67 = vld [vmem:[%s1 + $0xc] sm:$0xf]
  %v68 = vld [vmem:[%s1 + $0x10] sm:$0xf]
  %v69 = vld [vmem:[%s1 + $0x14] sm:$0xf]
  %v70 = vld [vmem:[%s1 + $0x18] sm:$0xf]
  %v71 = vld [vmem:[%s1 + $0x1c] sm:$0xf]
  %v72 = vld [vmem:[%s1 + $0x20] sm:$0xf]
  %v73 = vld [vmem:[%s1 + $0x24] sm:$0xf]
  %v74 = vld [vmem:[%s1 + $0x28] sm:$0xf]
  %v75 = vld [vmem:[%s1 + $0x2c] sm:$0xf]
  %v76 = vld [vmem:[%s1 + $0x30] sm:$0xf]
  %v77 = vld [vmem:[%s1 + $0x34] sm:$0xf]
  %v78 = vld [vmem:[%s1 + $0x38] sm:$0xf]
  %v79 = vld [vmem:[%s1 + $0x3c] sm:$0xf]
  %v96 = vunpack.c.l.b16 %v48
  %v97 = vunpack.c.l.b16 %v49
  %v98 = vunpack.c.l.b16 %v50
  %v99 = vunpack.c.l.b16 %v51
  %v100 = vunpack.c.l.b16 %v52
  %v101 = vunpack.c.l.b16 %v53
  %v102 = vunpack.c.l.b16 %v54
  %v103 = vunpack.c.l.b16 %v55
  %v104 = vunpack.c.l.b16 %v56
  %v105 = vunpack.c.l.b16 %v57
  %v106 = vunpack.c.l.b16 %v58
  %v107 = vunpack.c.l.b16 %v59
  %v108 = vunpack.c.l.b16 %v60
  %v109 = vunpack.c.l.b16 %v61
  %v110 = vunpack.c.l.b16 %v62
  %v111 = vunpack.c.l.b16 %v63
  %v112 = vpack.c.b16 %v97, %v96
  %v113 = vpack.c.b16 %v99, %v98
  %v114 = vpack.c.b16 %v101, %v100
  %v115 = vpack.c.b16 %v103, %v102
  %v116 = vpack.c.b16 %v105, %v104
  %v117 = vpack.c.b16 %v107, %v106
  %v118 = vpack.c.b16 %v109, %v108
  %v119 = vpack.c.b16 %v111, %v110
  %v144 = vunpack.c.l.b16 %v64
  %v145 = vunpack.c.l.b16 %v65
  %v146 = vunpack.c.l.b16 %v66
  %v147 = vunpack.c.l.b16 %v67
  %v148 = vunpack.c.l.b16 %v68
  %v149 = vunpack.c.l.b16 %v69
  %v150 = vunpack.c.l.b16 %v70
  %v151 = vunpack.c.l.b16 %v71
  %v152 = vunpack.c.l.b16 %v72
  %v153 = vunpack.c.l.b16 %v73
  %v154 = vunpack.c.l.b16 %v74
  %v155 = vunpack.c.l.b16 %v75
  %v156 = vunpack.c.l.b16 %v76
  %v157 = vunpack.c.l.b16 %v77
  %v158 = vunpack.c.l.b16 %v78
  %v159 = vunpack.c.l.b16 %v79
  %v160 = vpack.c.b16 %v145, %v144
  %v161 = vpack.c.b16 %v147, %v146
  %v162 = vpack.c.b16 %v149, %v148
  %v163 = vpack.c.b16 %v151, %v150
  %v164 = vpack.c.b16 %v153, %v152
  %v165 = vpack.c.b16 %v155, %v154
  %v166 = vpack.c.b16 %v157, %v156
  %v167 = vpack.c.b16 %v159, %v158
  %176 = vmatprep.subr.bf16.mxu0 0
  %177 = vmatpush1.bf16.msra.mxu0 %v160
  %178 = vmatprep.subr.bf16.mxu0 0
  %179 = vmatpush1.bf16.msra.mxu0 %v161
  %180 = vmatprep.subr.bf16.mxu0 0
  %181 = vmatpush1.bf16.msra.mxu0 %v162
  %182 = vmatprep.subr.bf16.mxu0 0
  %183 = vmatpush1.bf16.msra.mxu0 %v163
  %184 = vmatprep.subr.bf16.mxu0 0
  %185 = vmatpush1.bf16.msra.mxu0 %v164
  %186 = vmatprep.subr.bf16.mxu0 0
  %187 = vmatpush1.bf16.msra.mxu0 %v165
  %188 = vmatprep.subr.bf16.mxu0 0
  %189 = vmatpush1.bf16.msra.mxu0 %v166
  %190 = vmatprep.subr.bf16.mxu0 0
  %191 = vmatpush1.bf16.msra.mxu0 %v167
  %192 = vmatprep.subr.bf16.mxu0 0
  %193 = vmatpush1.bf16.msra.mxu0 0
  %194 = vmatprep.subr.bf16.mxu0 0
  %195 = vmatpush1.bf16.msra.mxu0 0
  %196 = vmatprep.subr.bf16.mxu0 0
  %197 = vmatpush1.bf16.msra.mxu0 0
  %198 = vmatprep.subr.bf16.mxu0 0
  %199 = vmatpush1.bf16.msra.mxu0 0
  %200 = vmatprep.subr.bf16.mxu0 0
  %201 = vmatpush1.bf16.msra.mxu0 0
  %202 = vmatprep.subr.bf16.mxu0 0
  %203 = vmatpush1.bf16.msra.mxu0 0
  %204 = vmatprep.subr.bf16.mxu0 0
  %205 = vmatpush1.bf16.msra.mxu0 0
  %206 = vmatprep.subr.bf16.mxu0 0
  %207 = vmatpush1.bf16.msra.mxu0 0
  %208 = vmatprep.mubr.bf16.mxu0 0
  %209 = vmatmul.mubr.bf16.gmra.mrb[0].mxu0 %v112
  %v210 = vpop.f32.mrb[0].mxu0
  %v211 = vadd.f32 0.0, %v210
  %v212 = vpop.f32.mrb[0].mxu0
  %v213 = vpop.f32.mrb[0].mxu0
  %v214 = vadd.f32 0.0, %v213
  %v215 = vpop.f32.mrb[0].mxu0
  %216 = vmatprep.mubr.bf16.mxu0 0
  %217 = vmatmul.mubr.bf16.gmra.mrb[0].mxu0 %v113
  %v218 = vpop.f32.mrb[0].mxu0
  %v219 = vadd.f32 0.0, %v218
  %v220 = vpop.f32.mrb[0].mxu0
  %v221 = vpop.f32.mrb[0].mxu0
  %v222 = vadd.f32 0.0, %v221
  %v223 = vpop.f32.mrb[0].mxu0
  %224 = vmatprep.mubr.bf16.mxu0 0
  %225 = vmatmul.mubr.bf16.gmra.mrb[0].mxu0 %v114
  %v226 = vpop.f32.mrb[0].mxu0
  %v227 = vadd.f32 0.0, %v226
  %v228 = vpop.f32.mrb[0].mxu0
  %v229 = vpop.f32.mrb[0].mxu0
  %v230 = vadd.f32 0.0, %v229
  %v231 = vpop.f32.mrb[0].mxu0
  %232 = vmatprep.mubr.bf16.mxu0 0
  %233 = vmatmul.mubr.bf16.gmra.mrb[0].mxu0 %v115
  %v234 = vpop.f32.mrb[0].mxu0
  %v235 = vadd.f32 0.0, %v234
  %v236 = vpop.f32.mrb[0].mxu0
  %v237 = vpop.f32.mrb[0].mxu0
  %v238 = vadd.f32 0.0, %v237
  %v239 = vpop.f32.mrb[0].mxu0
  %240 = vmatprep.mubr.bf16.mxu0 0
  %241 = vmatmul.mubr.bf16.gmra.mrb[0].mxu0 %v116
  %v242 = vpop.f32.mrb[0].mxu0
  %v243 = vadd.f32 0.0, %v242
  %v244 = vpop.f32.mrb[0].mxu0
  %v245 = vpop.f32.mrb[0].mxu0
  %v246 = vadd.f32 0.0, %v245
  %v247 = vpop.f32.mrb[0].mxu0
  %248 = vmatprep.mubr.bf16.mxu0 0
  %249 = vmatmul.mubr.bf16.gmra.mrb[0].mxu0 %v117
  %v250 = vpop.f32.mrb[0].mxu0
  %v251 = vadd.f32 0.0, %v250
  %v252 = vpop.f32.mrb[0].mxu0
  %v253 = vpop.f32.mrb[0].mxu0
  %v254 = vadd.f32 0.0, %v253
  %v255 = vpop.f32.mrb[0].mxu0
  %256 = vmatprep.mubr.bf16.mxu0 0
  %257 = vmatmul.mubr.bf16.gmra.mrb[0].mxu0 %v118
  %v258 = vpop.f32.mrb[0].mxu0
  %v259 = vadd.f32 0.0, %v258
  %v260 = vpop.f32.mrb[0].mxu0
  %v261 = vpop.f32.mrb[0].mxu0
  %v262 = vadd.f32 0.0, %v261
  %v263 = vpop.f32.mrb[0].mxu0
  %264 = vmatprep.mubr.bf16.mxu0 0
  %265 = vmatmul.mubr.bf16.gmra.mrb[0].mxu0 %v119
  %v266 = vpop.f32.mrb[0].mxu0
  %v267 = vadd.f32 0.0, %v266
  %v268 = vpop.f32.mrb[0].mxu0
  %v269 = vpop.f32.mrb[0].mxu0
  %v270 = vadd.f32 0.0, %v269
  %v271 = vpop.f32.mrb[0].mxu0
  %272 = vdwg.mxu0
  %v273 = vadd.f32 %v32, %v211
  %v274 = vadd.f32 %v33, %v214
  %v275 = vadd.f32 %v34, %v219
  %v276 = vadd.f32 %v35, %v222
  %v277 = vadd.f32 %v36, %v227
  %v278 = vadd.f32 %v37, %v230
  %v279 = vadd.f32 %v38, %v235
  %v280 = vadd.f32 %v39, %v238
  %v281 = vadd.f32 %v40, %v243
  %v282 = vadd.f32 %v41, %v246
  %v283 = vadd.f32 %v42, %v251
  %v284 = vadd.f32 %v43, %v254
  %v285 = vadd.f32 %v44, %v259
  %v286 = vadd.f32 %v45, %v262
  %v287 = vadd.f32 %v46, %v267
  %v288 = vadd.f32 %v47, %v270
  %289 = vst [vmem:[#allocation2] sm:$0xff] %v273
  %290 = vst [vmem:[#allocation2 + $0x8] sm:$0xff] %v274
  %291 = vst [vmem:[#allocation2 + $0x10] sm:$0xff] %v275
  %292 = vst [vmem:[#allocation2 + $0x18] sm:$0xff] %v276
  %293 = vst [vmem:[#allocation2 + $0x20] sm:$0xff] %v277
  %294 = vst [vmem:[#allocation2 + $0x28] sm:$0xff] %v278
  %295 = vst [vmem:[#allocation2 + $0x30] sm:$0xff] %v279
  %296 = vst [vmem:[#allocation2 + $0x38] sm:$0xff] %v280
  %297 = vst [vmem:[#allocation2 + $0x40] sm:$0xff] %v281
  %298 = vst [vmem:[#allocation2 + $0x48] sm:$0xff] %v282
  %299 = vst [vmem:[#allocation2 + $0x50] sm:$0xff] %v283
  %300 = vst [vmem:[#allocation2 + $0x58] sm:$0xff] %v284
  %301 = vst [vmem:[#allocation2 + $0x60] sm:$0xff] %v285
  %302 = vst [vmem:[#allocation2 + $0x68] sm:$0xff] %v286
  %303 = vst [vmem:[#allocation2 + $0x70] sm:$0xff] %v287
  %304 = vst [vmem:[#allocation2 + $0x78] sm:$0xff] %v288
  // Predicated region
  $region14: #{_lambda_.55} parent=0 // pred_check
    %p305 = pneg %p12
  $region15: #{_lambda_.55} parent=0 // pred_check_branch
    %307 = sbr.rel (%p305) target = $region17
  $region16: #{_lambda_.55} parent=0 // pred_region
    %v308 = vld [vmem:[#allocation2] sm:$0xff]
    %v309 = vld [vmem:[#allocation2 + $0x8] sm:$0xff]
    %v310 = vld [vmem:[#allocation2 + $0x10] sm:$0xff]
    %v311 = vld [vmem:[#allocation2 + $0x18] sm:$0xff]
    %v312 = vld [vmem:[#allocation2 + $0x20] sm:$0xff]
    %v313 = vld [vmem:[#allocation2 + $0x28] sm:$0xff]
    %v314 = vld [vmem:[#allocation2 + $0x30] sm:$0xff]
    %v315 = vld [vmem:[#allocation2 + $0x38] sm:$0xff]
    %v316 = vld [vmem:[#allocation2 + $0x40] sm:$0xff]
    %v317 = vld [vmem:[#allocation2 + $0x48] sm:$0xff]
    %v318 = vld [vmem:[#allocation2 + $0x50] sm:$0xff]
    %v319 = vld [vmem:[#allocation2 + $0x58] sm:$0xff]
    %v320 = vld [vmem:[#allocation2 + $0x60] sm:$0xff]
    %v321 = vld [vmem:[#allocation2 + $0x68] sm:$0xff]
    %v322 = vld [vmem:[#allocation2 + $0x70] sm:$0xff]
    %v323 = vld [vmem:[#allocation2 + $0x78] sm:$0xff]
    %324 = vst [vmem:[%s2] sm:$0xff] %v308
    %325 = vst [vmem:[%s2 + $0x8] sm:$0xff] %v309
    %326 = vst [vmem:[%s2 + $0x10] sm:$0xff] %v310
    %327 = vst [vmem:[%s2 + $0x18] sm:$0xff] %v311
    %328 = vst [vmem:[%s2 + $0x20] sm:$0xff] %v312
    %329 = vst [vmem:[%s2 + $0x28] sm:$0xff] %v313
    %330 = vst [vmem:[%s2 + $0x30] sm:$0xff] %v314
    %331 = vst [vmem:[%s2 + $0x38] sm:$0xff] %v315
    %332 = vst [vmem:[%s2 + $0x40] sm:$0xff] %v316
    %333 = vst [vmem:[%s2 + $0x48] sm:$0xff] %v317
    %334 = vst [vmem:[%s2 + $0x50] sm:$0xff] %v318
    %335 = vst [vmem:[%s2 + $0x58] sm:$0xff] %v319
    %336 = vst [vmem:[%s2 + $0x60] sm:$0xff] %v320
    %337 = vst [vmem:[%s2 + $0x68] sm:$0xff] %v321
    %338 = vst [vmem:[%s2 + $0x70] sm:$0xff] %v322
    %339 = vst [vmem:[%s2 + $0x78] sm:$0xff] %v323
  $region17: #{_lambda_.55} parent=0 // pred_fallthru
    _
  // Predicated region
  $region18: #{_lambda_.55} parent=0 // pred_check
    _
  $region19: #{_lambda_.55} parent=0 // pred_check_branch
    %341 = sbr.rel (0) target = $region21
  $region20: #{_lambda_.55} parent=0 // pred_region
    _
  $region21: #{_lambda_.55} parent=0 // pred_fallthru
    _
  // Predicated region
  $region22: #{_lambda_.55} parent=0 // pred_check
    _
  $region23: #{_lambda_.55} parent=0 // pred_check_branch
    %343 = sbr.rel (0) target = $region25
  $region24: #{_lambda_.55} parent=0 // pred_region
    _
  $region25: #{_lambda_.55} parent=0 // pred_fallthru
    _

// kernel: _lambda_.56
$region0: #{_lambda_.56}
  #allocation0 [shape = 'u32[]', space=smem, size = 0x4, offset = 0x4, fixed_abs, tag = 'smem constant byte address 0x4 - core index']
  #allocation1 [shape = 'u32[144,128]{1,0:T(1,128)}', space=vmem, size = 0x12000, scoped, tag = 'internal scratch']
  %s0 = inlined_call_operand.vmem [shape: f32[128,16], index: 0, kind: input, shape index: {}]
  %s1 = inlined_call_operand.vmem [shape: f32[128,16], index: 1, kind: input, shape index: {}]
  %s2 = inlined_call_operand.vmem [shape: f32[1,16], index: 2, kind: input, shape index: {}]
  %s3 = inlined_call_operand.vmem [shape: f32[128,16], index: 3, kind: output, shape index: {0}]
  %s4 = inlined_call_operand.vmem [shape: f32[128,16], index: 4, kind: output, shape index: {1}]
  %5 = xla_tuple %s3, %s4
  %s6 = sld [smem:[#allocation0]]
  $region30: #{_lambda_.56} parent=0
    _
  %s8 = ssub.s32 1, %s6
  %s9 = scalar_select 0, %s8, %s6
  // Predicated region
  $region2: #{_lambda_.56} parent=0 // pred_check
    _
  $region3: #{_lambda_.56} parent=0 // pred_check_branch
    %11 = sbr.rel (0) target = $region5
  $region4: #{_lambda_.56} parent=0 // pred_region
    _
  $region5: #{_lambda_.56} parent=0 // pred_fallthru
    _
  // Predicated region
  $region6: #{_lambda_.56} parent=0 // pred_check
    _
  $region7: #{_lambda_.56} parent=0 // pred_check_branch
    %13 = sbr.rel (0) target = $region9
  $region8: #{_lambda_.56} parent=0 // pred_region
    _
  $region9: #{_lambda_.56} parent=0 // pred_fallthru
    _
  // Predicated region
  $region10: #{_lambda_.56} parent=0 // pred_check
    _
  $region11: #{_lambda_.56} parent=0 // pred_check_branch
    %15 = sbr.rel (0) target = $region13
  $region12: #{_lambda_.56} parent=0 // pred_region
    _
  $region13: #{_lambda_.56} parent=0 // pred_fallthru
    _
  %v16 = vld [vmem:[%s0] sm:$0xff]
  %v17 = vld [vmem:[%s0 + $0x8] sm:$0xff]
  %v18 = vld [vmem:[%s0 + $0x10] sm:$0xff]
  %v19 = vld [vmem:[%s0 + $0x18] sm:$0xff]
  %v20 = vld [vmem:[%s0 + $0x20] sm:$0xff]
  %v21 = vld [vmem:[%s0 + $0x28] sm:$0xff]
  %v22 = vld [vmem:[%s0 + $0x30] sm:$0xff]
  %v23 = vld [vmem:[%s0 + $0x38] sm:$0xff]
  %v24 = vld [vmem:[%s0 + $0x40] sm:$0xff]
  %v25 = vld [vmem:[%s0 + $0x48] sm:$0xff]
  %v26 = vld [vmem:[%s0 + $0x50] sm:$0xff]
  %v27 = vld [vmem:[%s0 + $0x58] sm:$0xff]
  %v28 = vld [vmem:[%s0 + $0x60] sm:$0xff]
  %v29 = vld [vmem:[%s0 + $0x68] sm:$0xff]
  %v30 = vld [vmem:[%s0 + $0x70] sm:$0xff]
  %v31 = vld [vmem:[%s0 + $0x78] sm:$0xff]
  %v32 = vld [vmem:[%s1] sm:$0xff]
  %v33 = vld [vmem:[%s1 + $0x8] sm:$0xff]
  %v34 = vld [vmem:[%s1 + $0x10] sm:$0xff]
  %v35 = vld [vmem:[%s1 + $0x18] sm:$0xff]
  %v36 = vld [vmem:[%s1 + $0x20] sm:$0xff]
  %v37 = vld [vmem:[%s1 + $0x28] sm:$0xff]
  %v38 = vld [vmem:[%s1 + $0x30] sm:$0xff]
  %v39 = vld [vmem:[%s1 + $0x38] sm:$0xff]
  %v40 = vld [vmem:[%s1 + $0x40] sm:$0xff]
  %v41 = vld [vmem:[%s1 + $0x48] sm:$0xff]
  %v42 = vld [vmem:[%s1 + $0x50] sm:$0xff]
  %v43 = vld [vmem:[%s1 + $0x58] sm:$0xff]
  %v44 = vld [vmem:[%s1 + $0x60] sm:$0xff]
  %v45 = vld [vmem:[%s1 + $0x68] sm:$0xff]
  %v46 = vld [vmem:[%s1 + $0x70] sm:$0xff]
  %v47 = vld [vmem:[%s1 + $0x78] sm:$0xff]
  %v48 = vadd.f32 %v16, %v32
  %v49 = vadd.f32 %v17, %v33
  %v50 = vadd.f32 %v18, %v34
  %v51 = vadd.f32 %v19, %v35
  %v52 = vadd.f32 %v20, %v36
  %v53 = vadd.f32 %v21, %v37
  %v54 = vadd.f32 %v22, %v38
  %v55 = vadd.f32 %v23, %v39
  %v56 = vadd.f32 %v24, %v40
  %v57 = vadd.f32 %v25, %v41
  %v58 = vadd.f32 %v26, %v42
  %v59 = vadd.f32 %v27, %v43
  %v60 = vadd.f32 %v28, %v44
  %v61 = vadd.f32 %v29, %v45
  %v62 = vadd.f32 %v30, %v46
  %v63 = vadd.f32 %v31, %v47
  %vm64 = vcmask 130048
  %65 = vst.msk [vmem:[%s4] sm:$0xff] %vm64, %v48
  %66 = vst.msk [vmem:[%s4 + $0x8] sm:$0xff] %vm64, %v49
  %67 = vst.msk [vmem:[%s4 + $0x10] sm:$0xff] %vm64, %v50
  %68 = vst.msk [vmem:[%s4 + $0x18] sm:$0xff] %vm64, %v51
  %69 = vst.msk [vmem:[%s4 + $0x20] sm:$0xff] %vm64, %v52
  %70 = vst.msk [vmem:[%s4 + $0x28] sm:$0xff] %vm64, %v53
  %71 = vst.msk [vmem:[%s4 + $0x30] sm:$0xff] %vm64, %v54
  %72 = vst.msk [vmem:[%s4 + $0x38] sm:$0xff] %vm64, %v55
  %73 = vst.msk [vmem:[%s4 + $0x40] sm:$0xff] %vm64, %v56
  %74 = vst.msk [vmem:[%s4 + $0x48] sm:$0xff] %vm64, %v57
  %75 = vst.msk [vmem:[%s4 + $0x50] sm:$0xff] %vm64, %v58
  %76 = vst.msk [vmem:[%s4 + $0x58] sm:$0xff] %vm64, %v59
  %77 = vst.msk [vmem:[%s4 + $0x60] sm:$0xff] %vm64, %v60
  %78 = vst.msk [vmem:[%s4 + $0x68] sm:$0xff] %vm64, %v61
  %79 = vst.msk [vmem:[%s4 + $0x70] sm:$0xff] %vm64, %v62
  %80 = vst.msk [vmem:[%s4 + $0x78] sm:$0xff] %vm64, %v63
  %v81 = vmul.f32 %v48, %v48
  %v82 = vmul.f32 %v49, %v49
  %v83 = vmul.f32 %v50, %v50
  %v84 = vmul.f32 %v51, %v51
  %v85 = vmul.f32 %v52, %v52
  %v86 = vmul.f32 %v53, %v53
  %v87 = vmul.f32 %v54, %v54
  %v88 = vmul.f32 %v55, %v55
  %v89 = vmul.f32 %v56, %v56
  %v90 = vmul.f32 %v57, %v57
  %v91 = vmul.f32 %v58, %v58
  %v92 = vmul.f32 %v59, %v59
  %v93 = vmul.f32 %v60, %v60
  %v94 = vmul.f32 %v61, %v61
  %v95 = vmul.f32 %v62, %v62
  %v96 = vmul.f32 %v63, %v63
  %v97 = vsel %vm64, %v81, 0.0
  %98 = vadd.xlane.f32.xlu0 %v97
  %v99 = vpop.xlane.xlu0 %98
  %v100 = vsel %vm64, %v82, 0.0
  %101 = vadd.xlane.f32.xlu0 %v100
  %v102 = vpop.xlane.xlu0 %101
  %v103 = vsel %vm64, %v83, 0.0
  %104 = vadd.xlane.f32.xlu0 %v103
  %v105 = vpop.xlane.xlu0 %104
  %v106 = vsel %vm64, %v84, 0.0
  %107 = vadd.xlane.f32.xlu0 %v106
  %v108 = vpop.xlane.xlu0 %107
  %v109 = vsel %vm64, %v85, 0.0
  %110 = vadd.xlane.f32.xlu0 %v109
  %v111 = vpop.xlane.xlu0 %110
  %v112 = vsel %vm64, %v86, 0.0
  %113 = vadd.xlane.f32.xlu0 %v112
  %v114 = vpop.xlane.xlu0 %113
  %v115 = vsel %vm64, %v87, 0.0
  %116 = vadd.xlane.f32.xlu0 %v115
  %v117 = vpop.xlane.xlu0 %116
  %v118 = vsel %vm64, %v88, 0.0
  %119 = vadd.xlane.f32.xlu0 %v118
  %v120 = vpop.xlane.xlu0 %119
  %v121 = vsel %vm64, %v89, 0.0
  %122 = vadd.xlane.f32.xlu0 %v121
  %v123 = vpop.xlane.xlu0 %122
  %v124 = vsel %vm64, %v90, 0.0
  %125 = vadd.xlane.f32.xlu0 %v124
  %v126 = vpop.xlane.xlu0 %125
  %v127 = vsel %vm64, %v91, 0.0
  %128 = vadd.xlane.f32.xlu0 %v127
  %v129 = vpop.xlane.xlu0 %128
  %v130 = vsel %vm64, %v92, 0.0
  %131 = vadd.xlane.f32.xlu0 %v130
  %v132 = vpop.xlane.xlu0 %131
  %v133 = vsel %vm64, %v93, 0.0
  %134 = vadd.xlane.f32.xlu0 %v133
  %v135 = vpop.xlane.xlu0 %134
  %v136 = vsel %vm64, %v94, 0.0
  %137 = vadd.xlane.f32.xlu0 %v136
  %v138 = vpop.xlane.xlu0 %137
  %v139 = vsel %vm64, %v95, 0.0
  %140 = vadd.xlane.f32.xlu0 %v139
  %v141 = vpop.xlane.xlu0 %140
  %v142 = vsel %vm64, %v96, 0.0
  %143 = vadd.xlane.f32.xlu0 %v142
  %v144 = vpop.xlane.xlu0 %143
  %v145 = vrcp.pop 16.0
  %v146 = vmul.f32 %v99, %v145
  %v147 = vmul.f32 %v102, %v145
  %v148 = vmul.f32 %v105, %v145
  %v149 = vmul.f32 %v108, %v145
  %v150 = vmul.f32 %v111, %v145
  %v151 = vmul.f32 %v114, %v145
  %v152 = vmul.f32 %v117, %v145
  %v153 = vmul.f32 %v120, %v145
  %v154 = vmul.f32 %v123, %v145
  %v155 = vmul.f32 %v126, %v145
  %v156 = vmul.f32 %v129, %v145
  %v157 = vmul.f32 %v132, %v145
  %v158 = vmul.f32 %v135, %v145
  %v159 = vmul.f32 %v138, %v145
  %v160 = vmul.f32 %v141, %v145
  %v161 = vmul.f32 %v144, %v145
  %v162 = vadd.f32 %v146, 1e-05
  %v163 = vadd.f32 %v147, 1e-05
  %v164 = vadd.f32 %v148, 1e-05
  %v165 = vadd.f32 %v149, 1e-05
  %v166 = vadd.f32 %v150, 1e-05
  %v167 = vadd.f32 %v151, 1e-05
  %v168 = vadd.f32 %v152, 1e-05
  %v169 = vadd.f32 %v153, 1e-05
  %v170 = vadd.f32 %v154, 1e-05
  %v171 = vadd.f32 %v155, 1e-05
  %v172 = vadd.f32 %v156, 1e-05
  %v173 = vadd.f32 %v157, 1e-05
  %v174 = vadd.f32 %v158, 1e-05
  %v175 = vadd.f32 %v159, 1e-05
  %v176 = vadd.f32 %v160, 1e-05
  %v177 = vadd.f32 %v161, 1e-05
  %v178 = vrsqrt.pop %v162
  %v179 = vrsqrt.pop %v163
  %v180 = vrsqrt.pop %v164
  %v181 = vrsqrt.pop %v165
  %v182 = vrsqrt.pop %v166
  %v183 = vrsqrt.pop %v167
  %v184 = vrsqrt.pop %v168
  %v185 = vrsqrt.pop %v169
  %v186 = vrsqrt.pop %v170
  %v187 = vrsqrt.pop %v171
  %v188 = vrsqrt.pop %v172
  %v189 = vrsqrt.pop %v173
  %v190 = vrsqrt.pop %v174
  %v191 = vrsqrt.pop %v175
  %v192 = vrsqrt.pop %v176
  %v193 = vrsqrt.pop %v177
  %v194 = vmul.f32 %v48, %v178
  %v195 = vmul.f32 %v49, %v179
  %v196 = vmul.f32 %v50, %v180
  %v197 = vmul.f32 %v51, %v181
  %v198 = vmul.f32 %v52, %v182
  %v199 = vmul.f32 %v53, %v183
  %v200 = vmul.f32 %v54, %v184
  %v201 = vmul.f32 %v55, %v185
  %v202 = vmul.f32 %v56, %v186
  %v203 = vmul.f32 %v57, %v187
  %v204 = vmul.f32 %v58, %v188
  %v205 = vmul.f32 %v59, %v189
  %v206 = vmul.f32 %v60, %v190
  %v207 = vmul.f32 %v61, %v191
  %v208 = vmul.f32 %v62, %v192
  %v209 = vmul.f32 %v63, %v193
  %v210 = vld [vmem:[%s2] sm:$0x1]
  %v212 = vlaneseq
  %v213 = vshrl.u32 %v212, 7
  %v214 = vsub.s32 0, %v213
  %v215 = vrot.slane %v210, %v214
  %v217 = vmul.f32 %v194, %v215
  %v218 = vmul.f32 %v195, %v215
  %v219 = vmul.f32 %v196, %v215
  %v220 = vmul.f32 %v197, %v215
  %v221 = vmul.f32 %v198, %v215
  %v222 = vmul.f32 %v199, %v215
  %v223 = vmul.f32 %v200, %v215
  %v224 = vmul.f32 %v201, %v215
  %v225 = vmul.f32 %v202, %v215
  %v226 = vmul.f32 %v203, %v215
  %v227 = vmul.f32 %v204, %v215
  %v228 = vmul.f32 %v205, %v215
  %v229 = vmul.f32 %v206, %v215
  %v230 = vmul.f32 %v207, %v215
  %v231 = vmul.f32 %v208, %v215
  %v232 = vmul.f32 %v209, %v215
  %233 = vst.msk [vmem:[%s3] sm:$0xff] %vm64, %v217
  %234 = vst.msk [vmem:[%s3 + $0x8] sm:$0xff] %vm64, %v218
  %235 = vst.msk [vmem:[%s3 + $0x10] sm:$0xff] %vm64, %v219
  %236 = vst.msk [vmem:[%s3 + $0x18] sm:$0xff] %vm64, %v220
  %237 = vst.msk [vmem:[%s3 + $0x20] sm:$0xff] %vm64, %v221
  %238 = vst.msk [vmem:[%s3 + $0x28] sm:$0xff] %vm64, %v222
  %239 = vst.msk [vmem:[%s3 + $0x30] sm:$0xff] %vm64, %v223
  %240 = vst.msk [vmem:[%s3 + $0x38] sm:$0xff] %vm64, %v224
  %241 = vst.msk [vmem:[%s3 + $0x40] sm:$0xff] %vm64, %v225
  %242 = vst.msk [vmem:[%s3 + $0x48] sm:$0xff] %vm64, %v226
  %243 = vst.msk [vmem:[%s3 + $0x50] sm:$0xff] %vm64, %v227
  %244 = vst.msk [vmem:[%s3 + $0x58] sm:$0xff] %vm64, %v228
  %245 = vst.msk [vmem:[%s3 + $0x60] sm:$0xff] %vm64, %v229
  %246 = vst.msk [vmem:[%s3 + $0x68] sm:$0xff] %vm64, %v230
  %247 = vst.msk [vmem:[%s3 + $0x70] sm:$0xff] %vm64, %v231
  %248 = vst.msk [vmem:[%s3 + $0x78] sm:$0xff] %vm64, %v232
  // Predicated region
  $region14: #{_lambda_.56} parent=0 // pred_check
    _
  $region15: #{_lambda_.56} parent=0 // pred_check_branch
    %250 = sbr.rel (0) target = $region17
  $region16: #{_lambda_.56} parent=0 // pred_region
    _
  $region17: #{_lambda_.56} parent=0 // pred_fallthru
    _
  // Predicated region
  $region18: #{_lambda_.56} parent=0 // pred_check
    _
  $region19: #{_lambda_.56} parent=0 // pred_check_branch
    %252 = sbr.rel (0) target = $region21
  $region20: #{_lambda_.56} parent=0 // pred_region
    _
  $region21: #{_lambda_.56} parent=0 // pred_fallthru
    _
  // Predicated region
  $region22: #{_lambda_.56} parent=0 // pred_check
    _
  $region23: #{_lambda_.56} parent=0 // pred_check_branch
    %254 = sbr.rel (0) target = $region25
  $region24: #{_lambda_.56} parent=0 // pred_region
    _
  $region25: #{_lambda_.56} parent=0 // pred_fallthru
    _
  // Predicated region
  $region26: #{_lambda_.56} parent=0 // pred_check
    _
  $region27: #{_lambda_.56} parent=0 // pred_check_branch
    %256 = sbr.rel (0) target = $region29
  $region28: #{_lambda_.56} parent=0 // pred_region
    _
  $region29: #{_lambda_.56} parent=0 // pred_fallthru
    _

// kernel: _lambda_.58
$region0: #{_lambda_.58}
  #allocation0 [shape = 'u32[]', space=smem, size = 0x4, offset = 0x4, fixed_abs, tag = 'smem constant byte address 0x4 - core index']
  #allocation1 [shape = 'u32[144,128]{1,0:T(1,128)}', space=vmem, size = 0x12000, scoped, tag = 'internal scratch']
  #allocation2 [shape = 'f32[67,32]{1,0:T(8,128)}', space=vmem, size = 0x9000, scoped, tag = 'scratch operand']
  %s0 = inlined_call_operand.vmem [shape: f32[2,64,32], index: 0, kind: input, shape index: {}]
  %s1 = inlined_call_operand.vmem [shape: f32[4,32], index: 1, kind: input, shape index: {}]
  %s2 = inlined_call_operand.vmem [shape: f32[1,32], index: 2, kind: input, shape index: {}]
  %s3 = inlined_call_operand.vmem [shape: f32[2,64,32], index: 3, kind: output, shape index: {}]
  %s4 = sld [smem:[#allocation0]]
  $region45: #{_lambda_.58} parent=0
    _
  %s6 = ssub.s32 1, %s4
  %s7 = scalar_select 0, %s6, %s4
  loop: start=0, step=1, limit=4
  $region2: #{_lambda_.58} parent=0 // loop_pre_header
    _
  $region3: #{_lambda_.58} parent=0 // loop_header
    %s9 = sphi 0, %s13
    %p10 = scmp.ge.s32.totalorder %s9, 4
    %s19 = sphi 0, %s21
    %s22 = sphi 0, %s19
    %s23 = sphi 0, %s22
    %s39 = sphi 0, %s23
    %s43 = sphi 0, %s43
    %s45 = sphi 0, %s43
    %s46 = sphi 0, %s45
    %s60 = sphi 0, %s46
    %s64 = sphi 0, %s64
    %s66 = sphi 0, %s64
    %s67 = sphi 0, %s66
    %s81 = sphi 0, %s67
    %s87 = sphi 0, %s89
    %s90 = sphi 0, %s87
    %s91 = sphi 0, %s90
    %s107 = sphi 0, %s91
  $region4: #{_lambda_.58} parent=0 // loop_header_branch
    %12 = sbr.rel (%p10) target = $region8
  $region5: #{_lambda_.58} parent=0 // loop_body
    %s14 = ssub.s32 %s9, 1
    %s15 = ssub.s32 %s9, 2
    %s16 = sadd.s32 %s9, 1
    %s17 = ssub.s32 %s9, %s16
    %p18 = scmp.eq.s32.totalorder %s17, 0
    %s20 = sadd.s32 %s19, 1
    %s21 = scalar_select %p18, %s19, %s20
    %p24 = pneg %p18
    %p25 = scmp.eq.s32.totalorder %s9, 1
    %p26 = por %p24, %p25
    %p27 = scmp.ne.s32.totalorder %s19, %s22
    %p28 = scmp.eq.s32.totalorder %s9, 0
    %p29 = por %p27, %p28
    %p30 = scmp.ne.s32.totalorder %s19, %s22
    %p31 = scmp.eq.s32.totalorder %s14, 1
    %p32 = por %p30, %p31
    %p33 = scmp.ne.s32.totalorder %s22, %s23
    %p34 = scmp.eq.s32.totalorder %s14, 0
    %p35 = por %p33, %p34
    %p36 = scmp.ne.s32.totalorder %s22, %s23
    %p37 = scmp.eq.s32.totalorder %s15, 1
    %p38 = por %p36, %p37
    %p40 = scmp.ne.s32.totalorder %s23, %s39
    %p41 = scmp.eq.s32.totalorder %s15, 0
    %p42 = por %p40, %p41
    %s44 = sadd.s32 %s43, 1
    %p47 = scmp.eq.s32.totalorder %s9, 1
    %p48 = scmp.ne.s32.totalorder %s43, %s45
    %p49 = scmp.eq.s32.totalorder %s9, 0
    %p50 = por %p48, %p49
    %p51 = scmp.ne.s32.totalorder %s43, %s45
    %p52 = scmp.eq.s32.totalorder %s14, 1
    %p53 = por %p51, %p52
    %p54 = scmp.ne.s32.totalorder %s45, %s46
    %p55 = scmp.eq.s32.totalorder %s14, 0
    %p56 = por %p54, %p55
    %p57 = scmp.ne.s32.totalorder %s45, %s46
    %p58 = scmp.eq.s32.totalorder %s15, 1
    %p59 = por %p57, %p58
    %p61 = scmp.ne.s32.totalorder %s46, %s60
    %p62 = scmp.eq.s32.totalorder %s15, 0
    %p63 = por %p61, %p62
    %s65 = sadd.s32 %s64, 1
    %p68 = scmp.eq.s32.totalorder %s9, 1
    %p69 = scmp.ne.s32.totalorder %s64, %s66
    %p70 = scmp.eq.s32.totalorder %s9, 0
    %p71 = por %p69, %p70
    %p72 = scmp.ne.s32.totalorder %s64, %s66
    %p73 = scmp.eq.s32.totalorder %s14, 1
    %p74 = por %p72, %p73
    %p75 = scmp.ne.s32.totalorder %s66, %s67
    %p76 = scmp.eq.s32.totalorder %s14, 0
    %p77 = por %p75, %p76
    %p78 = scmp.ne.s32.totalorder %s66, %s67
    %p79 = scmp.eq.s32.totalorder %s15, 1
    %p80 = por %p78, %p79
    %p82 = scmp.ne.s32.totalorder %s67, %s81
    %p83 = scmp.eq.s32.totalorder %s15, 0
    %p84 = por %p82, %p83
    %s85 = ssub.s32 %s9, %s16
    %p86 = scmp.eq.s32.totalorder %s85, 0
    %s88 = sadd.s32 %s87, 1
    %s89 = scalar_select %p86, %s87, %s88
    %p92 = pneg %p86
    %p93 = scmp.eq.s32.totalorder %s9, 1
    %p94 = por %p92, %p93
    %p95 = scmp.ne.s32.totalorder %s87, %s90
    %p96 = scmp.eq.s32.totalorder %s9, 0
    %p97 = por %p95, %p96
    %p98 = scmp.ne.s32.totalorder %s87, %s90
    %p99 = scmp.eq.s32.totalorder %s14, 1
    %p100 = por %p98, %p99
    %p101 = scmp.ne.s32.totalorder %s90, %s91
    %p102 = scmp.eq.s32.totalorder %s14, 0
    %p103 = por %p101, %p102
    %p104 = scmp.ne.s32.totalorder %s90, %s91
    %p105 = scmp.eq.s32.totalorder %s15, 1
    %p106 = por %p104, %p105
    %p108 = scmp.ne.s32.totalorder %s91, %s107
    %p109 = scmp.eq.s32.totalorder %s15, 0
    %p110 = por %p108, %p109
    %p111 = scmp.le.s32.totalorder 1, %s9
    %p112 = scmp.lt.s32.totalorder %s9, 3
    %p113 = pnand %p111, %p112
    %p114 = pneg %p113
    // Predicated region
    $region9: #{_lambda_.58} parent=5 // pred_check
      _
    $region10: #{_lambda_.58} parent=5 // pred_check_branch
      %116 = sbr.rel (%p113) target = $region12
    $region11: #{_lambda_.58} parent=5 // pred_region
      %s117 = ssub.s32 %s9, 1
      // Predicated region
      $region13: #{_lambda_.58} parent=11 // pred_check
        %p118 = pneg %p56
      $region14: #{_lambda_.58} parent=11 // pred_check_branch
        %120 = sbr.rel (%p118) target = $region16
      $region15: #{_lambda_.58} parent=11 // pred_region
        _
      $region16: #{_lambda_.58} parent=11 // pred_fallthru
        _
      // Predicated region
      $region17: #{_lambda_.58} parent=11 // pred_check
        %p121 = pneg %p77
      $region18: #{_lambda_.58} parent=11 // pred_check_branch
        %123 = sbr.rel (%p121) target = $region20
      $region19: #{_lambda_.58} parent=11 // pred_region
        _
      $region20: #{_lambda_.58} parent=11 // pred_fallthru
        _
    $region12: #{_lambda_.58} parent=5 // pred_fallthru
      _
    %p124 = scmp.lt.s32.totalorder %s9, 2
    // Predicated region
    $region21: #{_lambda_.58} parent=5 // pred_check
      %p125 = pneg %p124
    $region22: #{_lambda_.58} parent=5 // pred_check_branch
      %127 = sbr.rel (%p125) target = $region24
    $region23: #{_lambda_.58} parent=5 // pred_region
      // Predicated region
      $region25: #{_lambda_.58} parent=23 // pred_check
        %p128 = pneg %p29
      $region26: #{_lambda_.58} parent=23 // pred_check_branch
        %130 = sbr.rel (%p128) target = $region28
      $region27: #{_lambda_.58} parent=23 // pred_region
        %p131 = scmp.lt.s32.totalorder %s9, 1
        %s132 = scalar_select %p131, %s9, 1
        %s133 = smul.addr %s132, 8
        %s134 = smul.addr %s133, 8
        %s135 = scalar_lea.vmem %s0, %s134
      $region28: #{_lambda_.58} parent=23 // pred_fallthru
        _
    $region24: #{_lambda_.58} parent=5 // pred_fallthru
      _
    %p136 = scmp.le.s32.totalorder 1, %s9
    %p137 = scmp.lt.s32.totalorder %s9, 3
    %p138 = pnand %p136, %p137
    %p139 = pneg %p138
    // Predicated region
    $region29: #{_lambda_.58} parent=5 // pred_check
      _
    $region30: #{_lambda_.58} parent=5 // pred_check_branch
      %141 = sbr.rel (%p138) target = $region32
    $region31: #{_lambda_.58} parent=5 // pred_region
      %s142 = ssub.s32 %s9, 1
      %p143 = scmp.lt.s32.totalorder %s14, 1
      %s144 = scalar_select %p143, %s14, 1
      %s145 = smul.addr %s144, 8
      %s146 = smul.addr %s145, 8
      %s147 = scalar_lea.vmem %s0, %s146
      %p148 = pneg %p35
      %p149 = pneg %p32
      %p150 = pneg %p56
      %p151 = pneg %p53
      %p152 = pneg %p77
      %p153 = pneg %p74
      %p154 = pneg %p103
      %p155 = pneg %p100
      %p156 = scmp.lt.s32.totalorder %s14, 1
      %s157 = scalar_select %p156, %s14, 1
      %s158 = smul.addr %s157, 8
      %s159 = smul.addr %s158, 8
      %s160 = scalar_lea.vmem %s3, %s159
      %p161 = scmp.lt.s32.totalorder %s14, 1
      %s162 = scalar_select %p161, %s14, 1
      %s163 = smul.addr %s162, 8
      %s164 = smul.addr %s163, 8
      %s165 = scalar_lea.vmem %s0, %s164
      %p166 = scmp.lt.s32.totalorder %s14, 1
      %s167 = scalar_select %p166, %s14, 1
      %s168 = smul.addr %s167, 8
      %s169 = smul.addr %s168, 8
      %s170 = scalar_lea.vmem %s3, %s169
      %vm171 = vcmask 256000
      %172 = vst.msk [vmem:[#allocation2] sm:$0x7] %vm171, 0.0
      %v173 = vld [vmem:[%s165] sm:$0xff]
      %v174 = vld [vmem:[%s165 + $0x8] sm:$0xff]
      %v175 = vld [vmem:[%s165 + $0x10] sm:$0xff]
      %v176 = vld [vmem:[%s165 + $0x18] sm:$0xff]
      %v177 = vld [vmem:[%s165 + $0x20] sm:$0xff]
      %v178 = vld [vmem:[%s165 + $0x28] sm:$0xff]
      %v179 = vld [vmem:[%s165 + $0x30] sm:$0xff]
      %v180 = vld [vmem:[%s165 + $0x38] sm:$0xff]
      %vm181 = vcmask 261120
      %182 = vst.msk [vmem:[#allocation2 + $0x3] sm:$0xff] %vm181, %v173
      %183 = vst.msk [vmem:[#allocation2 + $0xb] sm:$0xff] %vm181, %v174
      %184 = vst.msk [vmem:[#allocation2 + $0x13] sm:$0xff] %vm181, %v175
      %185 = vst.msk [vmem:[#allocation2 + $0x1b] sm:$0xff] %vm181, %v176
      %186 = vst.msk [vmem:[#allocation2 + $0x23] sm:$0xff] %vm181, %v177
      %187 = vst.msk [vmem:[#allocation2 + $0x2b] sm:$0xff] %vm181, %v178
      %188 = vst.msk [vmem:[#allocation2 + $0x33] sm:$0xff] %vm181, %v179
      %189 = vst.msk [vmem:[#allocation2 + $0x3b] sm:$0xff] %vm181, %v180
      %v190 = vld [vmem:[%s2] sm:$0x1]
      %v192 = vlaneseq
      %v193 = vshrl.u32 %v192, 7
      %v194 = vsub.s32 0, %v193
      %v195 = vrot.slane %v190, %v194
      %v197 = vadd.f32 %v195, 0.0
      %v198 = vld [vmem:[#allocation2] sm:$0xff]
      %v199 = vld [vmem:[#allocation2 + $0x8] sm:$0xff]
      %v200 = vld [vmem:[#allocation2 + $0x10] sm:$0xff]
      %v201 = vld [vmem:[#allocation2 + $0x18] sm:$0xff]
      %v202 = vld [vmem:[#allocation2 + $0x20] sm:$0xff]
      %v203 = vld [vmem:[#allocation2 + $0x28] sm:$0xff]
      %v204 = vld [vmem:[#allocation2 + $0x30] sm:$0xff]
      %v205 = vld [vmem:[#allocation2 + $0x38] sm:$0xff]
      %v206 = vld [vmem:[%s1] sm:$0x1]
      %v207 = vlaneseq
      %v208 = vshrl.u32 %v207, 7
      %v209 = vsub.s32 0, %v208
      %v210 = vrot.slane %v206, %v209
      %v211 = vmul.f32 %v198, %v210
      %v212 = vmul.f32 %v199, %v210
      %v213 = vmul.f32 %v200, %v210
      %v214 = vmul.f32 %v201, %v210
      %v215 = vmul.f32 %v202, %v210
      %v216 = vmul.f32 %v203, %v210
      %v217 = vmul.f32 %v204, %v210
      %v218 = vmul.f32 %v205, %v210
      %v219 = vadd.f32 %v197, %v211
      %v220 = vadd.f32 %v197, %v212
      %v221 = vadd.f32 %v197, %v213
      %v222 = vadd.f32 %v197, %v214
      %v223 = vadd.f32 %v197, %v215
      %v224 = vadd.f32 %v197, %v216
      %v225 = vadd.f32 %v197, %v217
      %v226 = vadd.f32 %v197, %v218
      %v227 = vld [vmem:[#allocation2 + $0x1] sm:$0xff]
      %v228 = vld [vmem:[#allocation2 + $0x9] sm:$0xff]
      %v229 = vld [vmem:[#allocation2 + $0x11] sm:$0xff]
      %v230 = vld [vmem:[#allocation2 + $0x19] sm:$0xff]
      %v231 = vld [vmem:[#allocation2 + $0x21] sm:$0xff]
      %v232 = vld [vmem:[#allocation2 + $0x29] sm:$0xff]
      %v233 = vld [vmem:[#allocation2 + $0x31] sm:$0xff]
      %v234 = vld [vmem:[#allocation2 + $0x39] sm:$0xff]
      %v235 = vld [vmem:[%s1 + $0x1] sm:$0x1]
      %v236 = vlaneseq
      %v237 = vshrl.u32 %v236, 7
      %v238 = vsub.s32 0, %v237
      %v239 = vrot.slane %v235, %v238
      %v240 = vmul.f32 %v227, %v239
      %v241 = vmul.f32 %v228, %v239
      %v242 = vmul.f32 %v229, %v239
      %v243 = vmul.f32 %v230, %v239
      %v244 = vmul.f32 %v231, %v239
      %v245 = vmul.f32 %v232, %v239
      %v246 = vmul.f32 %v233, %v239
      %v247 = vmul.f32 %v234, %v239
      %v248 = vadd.f32 %v219, %v240
      %v249 = vadd.f32 %v220, %v241
      %v250 = vadd.f32 %v221, %v242
      %v251 = vadd.f32 %v222, %v243
      %v252 = vadd.f32 %v223, %v244
      %v253 = vadd.f32 %v224, %v245
      %v254 = vadd.f32 %v225, %v246
      %v255 = vadd.f32 %v226, %v247
      %v256 = vld [vmem:[#allocation2 + $0x2] sm:$0xff]
      %v257 = vld [vmem:[#allocation2 + $0xa] sm:$0xff]
      %v258 = vld [vmem:[#allocation2 + $0x12] sm:$0xff]
      %v259 = vld [vmem:[#allocation2 + $0x1a] sm:$0xff]
      %v260 = vld [vmem:[#allocation2 + $0x22] sm:$0xff]
      %v261 = vld [vmem:[#allocation2 + $0x2a] sm:$0xff]
      %v262 = vld [vmem:[#allocation2 + $0x32] sm:$0xff]
      %v263 = vld [vmem:[#allocation2 + $0x3a] sm:$0xff]
      %v264 = vld [vmem:[%s1 + $0x2] sm:$0x1]
      %v265 = vlaneseq
      %v266 = vshrl.u32 %v265, 7
      %v267 = vsub.s32 0, %v266
      %v268 = vrot.slane %v264, %v267
      %v269 = vmul.f32 %v256, %v268
      %v270 = vmul.f32 %v257, %v268
      %v271 = vmul.f32 %v258, %v268
      %v272 = vmul.f32 %v259, %v268
      %v273 = vmul.f32 %v260, %v268
      %v274 = vmul.f32 %v261, %v268
      %v275 = vmul.f32 %v262, %v268
      %v276 = vmul.f32 %v263, %v268
      %v277 = vadd.f32 %v248, %v269
      %v278 = vadd.f32 %v249, %v270
      %v279 = vadd.f32 %v250, %v271
      %v280 = vadd.f32 %v251, %v272
      %v281 = vadd.f32 %v252, %v273
      %v282 = vadd.f32 %v253, %v274
      %v283 = vadd.f32 %v254, %v275
      %v284 = vadd.f32 %v255, %v276
      %v285 = vld [vmem:[#allocation2 + $0x3] sm:$0xff]
      %v286 = vld [vmem:[#allocation2 + $0xb] sm:$0xff]
      %v287 = vld [vmem:[#allocation2 + $0x13] sm:$0xff]
      %v288 = vld [vmem:[#allocation2 + $0x1b] sm:$0xff]
      %v289 = vld [vmem:[#allocation2 + $0x23] sm:$0xff]
      %v290 = vld [vmem:[#allocation2 + $0x2b] sm:$0xff]
      %v291 = vld [vmem:[#allocation2 + $0x33] sm:$0xff]
      %v292 = vld [vmem:[#allocation2 + $0x3b] sm:$0xff]
      %v293 = vld [vmem:[%s1 + $0x3] sm:$0x1]
      %v294 = vlaneseq
      %v295 = vshrl.u32 %v294, 7
      %v296 = vsub.s32 0, %v295
      %v297 = vrot.slane %v293, %v296
      %v298 = vmul.f32 %v285, %v297
      %v299 = vmul.f32 %v286, %v297
      %v300 = vmul.f32 %v287, %v297
      %v301 = vmul.f32 %v288, %v297
      %v302 = vmul.f32 %v289, %v297
      %v303 = vmul.f32 %v290, %v297
      %v304 = vmul.f32 %v291, %v297
      %v305 = vmul.f32 %v292, %v297
      %v306 = vadd.f32 %v277, %v298
      %v307 = vadd.f32 %v278, %v299
      %v308 = vadd.f32 %v279, %v300
      %v309 = vadd.f32 %v280, %v301
      %v310 = vadd.f32 %v281, %v302
      %v311 = vadd.f32 %v282, %v303
      %v312 = vadd.f32 %v283, %v304
      %v313 = vadd.f32 %v284, %v305
      %v314 = vsub.f32 0.0, %v306
      %v315 = vsub.f32 0.0, %v307
      %v316 = vsub.f32 0.0, %v308
      %v317 = vsub.f32 0.0, %v309
      %v318 = vsub.f32 0.0, %v310
      %v319 = vsub.f32 0.0, %v311
      %v320 = vsub.f32 0.0, %v312
      %v321 = vsub.f32 0.0, %v313
      %v322 = vmul.f32 %v314, 1.442695
      %v323 = vpow.pop %v322
      %v324 = vmul.f32 %v315, 1.442695
      %v325 = vpow.pop %v324
      %v326 = vmul.f32 %v316, 1.442695
      %v327 = vpow.pop %v326
      %v328 = vmul.f32 %v317, 1.442695
      %v329 = vpow.pop %v328
      %v330 = vmul.f32 %v318, 1.442695
      %v331 = vpow.pop %v330
      %v332 = vmul.f32 %v319, 1.442695
      %v333 = vpow.pop %v332
      %v334 = vmul.f32 %v320, 1.442695
      %v335 = vpow.pop %v334
      %v336 = vmul.f32 %v321, 1.442695
      %v337 = vpow.pop %v336
      %v338 = vadd.f32 %v323, 1.0
      %v339 = vadd.f32 %v325, 1.0
      %v340 = vadd.f32 %v327, 1.0
      %v341 = vadd.f32 %v329, 1.0
      %v342 = vadd.f32 %v331, 1.0
      %v343 = vadd.f32 %v333, 1.0
      %v344 = vadd.f32 %v335, 1.0
      %v345 = vadd.f32 %v337, 1.0
      %v346 = vrcp.pop %v338
      %v347 = vrcp.pop %v339
      %v348 = vrcp.pop %v340
      %v349 = vrcp.pop %v341
      %v350 = vrcp.pop %v342
      %v351 = vrcp.pop %v343
      %v352 = vrcp.pop %v344
      %v353 = vrcp.pop %v345
      %v354 = vmul.f32 %v306, %v346
      %v355 = vmul.f32 %v307, %v347
      %v356 = vmul.f32 %v308, %v348
      %v357 = vmul.f32 %v309, %v349
      %v358 = vmul.f32 %v310, %v350
      %v359 = vmul.f32 %v311, %v351
      %v360 = vmul.f32 %v312, %v352
      %v361 = vmul.f32 %v313, %v353
      %362 = vst.msk [vmem:[%s170] sm:$0xff] %vm181, %v354
      %363 = vst.msk [vmem:[%s170 + $0x8] sm:$0xff] %vm181, %v355
      %364 = vst.msk [vmem:[%s170 + $0x10] sm:$0xff] %vm181, %v356
      %365 = vst.msk [vmem:[%s170 + $0x18] sm:$0xff] %vm181, %v357
      %366 = vst.msk [vmem:[%s170 + $0x20] sm:$0xff] %vm181, %v358
      %367 = vst.msk [vmem:[%s170 + $0x28] sm:$0xff] %vm181, %v359
      %368 = vst.msk [vmem:[%s170 + $0x30] sm:$0xff] %vm181, %v360
      %369 = vst.msk [vmem:[%s170 + $0x38] sm:$0xff] %vm181, %v361
      %p370 = scmp.lt.s32.totalorder %s14, 1
      %s371 = scalar_select %p370, %s14, 1
      %s372 = smul.addr %s371, 8
      %s373 = smul.addr %s372, 8
      %s374 = scalar_lea.vmem %s3, %s373
      // Predicated region
      $region33: #{_lambda_.58} parent=31 // pred_check
        %p375 = pneg %p100
      $region34: #{_lambda_.58} parent=31 // pred_check_branch
        %377 = sbr.rel (%p375) target = $region36
      $region35: #{_lambda_.58} parent=31 // pred_region
        _
      $region36: #{_lambda_.58} parent=31 // pred_fallthru
        _
    $region32: #{_lambda_.58} parent=5 // pred_fallthru
      _
    %p378 = scmp.le.s32.totalorder 2, %s9
    // Predicated region
    $region37: #{_lambda_.58} parent=5 // pred_check
      %p379 = pneg %p378
    $region38: #{_lambda_.58} parent=5 // pred_check_branch
      %381 = sbr.rel (%p379) target = $region40
    $region39: #{_lambda_.58} parent=5 // pred_region
      %s382 = ssub.s32 %s9, 2
      // Predicated region
      $region41: #{_lambda_.58} parent=39 // pred_check
        %p383 = pneg %p106
      $region42: #{_lambda_.58} parent=39 // pred_check_branch
        %385 = sbr.rel (%p383) target = $region44
      $region43: #{_lambda_.58} parent=39 // pred_region
        %p386 = scmp.lt.s32.totalorder %s15, 1
        %s387 = scalar_select %p386, %s15, 1
        %s388 = smul.addr %s387, 8
        %s389 = smul.addr %s388, 8
        %s390 = scalar_lea.vmem %s3, %s389
      $region44: #{_lambda_.58} parent=39 // pred_fallthru
        _
    $region40: #{_lambda_.58} parent=5 // pred_fallthru
      _
  $region6: #{_lambda_.58} parent=0 // loop_footer
    %s13 = sadd.s32 1, %s9
  $region7: #{_lambda_.58} parent=0 // loop_footer_branch
    %8 = sbr.rel target = $region3
  $region8: #{_lambda_.58} parent=0 // loop_exit
    _

// kernel: _lambda_.60
$region0: #{_lambda_.60}
  #allocation0 [shape = 'u32[]', space=smem, size = 0x4, offset = 0x4, fixed_abs, tag = 'smem constant byte address 0x4 - core index']
  #allocation1 [shape = 'u32[144,128]{1,0:T(1,128)}', space=vmem, size = 0x12000, scoped, tag = 'internal scratch']
  #allocation2 [shape = 'f32[16,32]{1,0:T(8,128)}', space=vmem, size = 0x2000, scoped, tag = 'scratch operand']
  #allocation3 [shape = 'f32[64,32]{1,0:T(8,128)}', space=vmem, size = 0x8000, scoped, tag = 'scratch operand']
  #allocation4 [shape = 'f32[64,32]{1,0:T(8,128)}', space=vmem, size = 0x8000, scoped, tag = 'scratch operand']
  #allocation5 [shape = 'f32[64,32]{1,0:T(8,128)}', space=vmem, size = 0x8000, scoped, tag = 'scratch operand']
  %s0 = inlined_call_operand.vmem [shape: f32[2,64,32], index: 0, kind: input, shape index: {}]
  %s1 = inlined_call_operand.vmem [shape: f32[2,64,32], index: 1, kind: input, shape index: {}]
  %s2 = inlined_call_operand.vmem [shape: f32[2,64,32], index: 2, kind: input, shape index: {}]
  %s3 = inlined_call_operand.vmem [shape: f32[2,64,16], index: 3, kind: input, shape index: {}]
  %s4 = inlined_call_operand.vmem [shape: f32[2,64,16], index: 4, kind: input, shape index: {}]
  %s5 = inlined_call_operand.vmem [shape: f32[16,32], index: 5, kind: input, shape index: {}]
  %s6 = inlined_call_operand.vmem [shape: f32[1,32], index: 6, kind: input, shape index: {}]
  %s7 = inlined_call_operand.vmem [shape: f32[1,32], index: 7, kind: input, shape index: {}]
  %s8 = inlined_call_operand.vmem [shape: f32[2,64,32], index: 8, kind: output, shape index: {}]
  %s9 = sld [smem:[#allocation0]]
  $region76: #{_lambda_.60} parent=0
    _
  %s11 = ssub.s32 1, %s9
  %s12 = scalar_select 0, %s11, %s9
  loop: start=0, step=1, limit=4
  $region2: #{_lambda_.60} parent=0 // loop_pre_header
    _
  $region3: #{_lambda_.60} parent=0 // loop_header
    %s14 = sphi 0, %s18
    %p15 = scmp.ge.s32.totalorder %s14, 4
    %s21 = sphi 0, %s33
    %s22 = sphi 0, %s29
    %s23 = sphi 0, %s21
    %s24 = sphi 0, %s22
    %s25 = sphi 0, %s23
    %s26 = sphi 0, %s24
    %s38 = sphi 0, %s40
    %s41 = sphi 0, %s38
    %s42 = sphi 0, %s41
    %s58 = sphi 0, %s42
    %s66 = sphi 0, %s68
    %s69 = sphi 0, %s66
    %s70 = sphi 0, %s69
    %s86 = sphi 0, %s70
    %s94 = sphi 0, %s96
    %s97 = sphi 0, %s94
    %s98 = sphi 0, %s97
    %s114 = sphi 0, %s98
    %s122 = sphi 0, %s124
    %s125 = sphi 0, %s122
    %s126 = sphi 0, %s125
    %s142 = sphi 0, %s126
    %s150 = sphi 0, %s152
    %s153 = sphi 0, %s150
    %s154 = sphi 0, %s153
    %s170 = sphi 0, %s154
    %s174 = sphi 0, %s174
    %s176 = sphi 0, %s174
    %s177 = sphi 0, %s176
    %s191 = sphi 0, %s177
    %s195 = sphi 0, %s195
    %s197 = sphi 0, %s195
    %s198 = sphi 0, %s197
    %s212 = sphi 0, %s198
    %s216 = sphi 0, %s216
    %s218 = sphi 0, %s216
    %s219 = sphi 0, %s218
    %s233 = sphi 0, %s219
    %s241 = sphi 0, %s243
    %s244 = sphi 0, %s241
    %s245 = sphi 0, %s244
    %s261 = sphi 0, %s245
  $region4: #{_lambda_.60} parent=0 // loop_header_branch
    %17 = sbr.rel (%p15) target = $region8
  $region5: #{_lambda_.60} parent=0 // loop_body
    %s19 = ssub.s32 %s14, 1
    %s20 = ssub.s32 %s14, 2
    %s27 = sadd.s32 1, %s22
    %p28 = scmp.ge.s32.totalorder %s27, 1
    %s29 = scalar_select %p28, 0, %s27
    %s30 = sadd.s32 1, %s21
    %s31 = scalar_select %p28, %s30, %s21
    %p32 = scmp.ge.s32.totalorder %s31, 2
    %s33 = scalar_select %p32, 0, %s31
    %s34 = ssub.s32 %s21, %s33
    %s35 = ssub.s32 %s22, %s29
    %s36 = sor.u32 %s34, %s35
    %p37 = scmp.eq.s32.totalorder %s36, 0
    %s39 = sadd.s32 %s38, 1
    %s40 = scalar_select %p37, %s38, %s39
    %p43 = pneg %p37
    %p44 = scmp.eq.s32.totalorder %s14, 1
    %p45 = por %p43, %p44
    %p46 = scmp.ne.s32.totalorder %s38, %s41
    %p47 = scmp.eq.s32.totalorder %s14, 0
    %p48 = por %p46, %p47
    %p49 = scmp.ne.s32.totalorder %s38, %s41
    %p50 = scmp.eq.s32.totalorder %s19, 1
    %p51 = por %p49, %p50
    %p52 = scmp.ne.s32.totalorder %s41, %s42
    %p53 = scmp.eq.s32.totalorder %s19, 0
    %p54 = por %p52, %p53
    %p55 = scmp.ne.s32.totalorder %s41, %s42
    %p56 = scmp.eq.s32.totalorder %s20, 1
    %p57 = por %p55, %p56
    %p59 = scmp.ne.s32.totalorder %s42, %s58
    %p60 = scmp.eq.s32.totalorder %s20, 0
    %p61 = por %p59, %p60
    %s62 = ssub.s32 %s21, %s33
    %s63 = ssub.s32 %s22, %s29
    %s64 = sor.u32 %s62, %s63
    %p65 = scmp.eq.s32.totalorder %s64, 0
    %s67 = sadd.s32 %s66, 1
    %s68 = scalar_select %p65, %s66, %s67
    %p71 = pneg %p65
    %p72 = scmp.eq.s32.totalorder %s14, 1
    %p73 = por %p71, %p72
    %p74 = scmp.ne.s32.totalorder %s66, %s69
    %p75 = scmp.eq.s32.totalorder %s14, 0
    %p76 = por %p74, %p75
    %p77 = scmp.ne.s32.totalorder %s66, %s69
    %p78 = scmp.eq.s32.totalorder %s19, 1
    %p79 = por %p77, %p78
    %p80 = scmp.ne.s32.totalorder %s69, %s70
    %p81 = scmp.eq.s32.totalorder %s19, 0
    %p82 = por %p80, %p81
    %p83 = scmp.ne.s32.totalorder %s69, %s70
    %p84 = scmp.eq.s32.totalorder %s20, 1
    %p85 = por %p83, %p84
    %p87 = scmp.ne.s32.totalorder %s70, %s86
    %p88 = scmp.eq.s32.totalorder %s20, 0
    %p89 = por %p87, %p88
    %s90 = ssub.s32 %s21, %s33
    %s91 = ssub.s32 %s22, %s29
    %s92 = sor.u32 %s90, %s91
    %p93 = scmp.eq.s32.totalorder %s92, 0
    %s95 = sadd.s32 %s94, 1
    %s96 = scalar_select %p93, %s94, %s95
    %p99 = pneg %p93
    %p100 = scmp.eq.s32.totalorder %s14, 1
    %p101 = por %p99, %p100
    %p102 = scmp.ne.s32.totalorder %s94, %s97
    %p103 = scmp.eq.s32.totalorder %s14, 0
    %p104 = por %p102, %p103
    %p105 = scmp.ne.s32.totalorder %s94, %s97
    %p106 = scmp.eq.s32.totalorder %s19, 1
    %p107 = por %p105, %p106
    %p108 = scmp.ne.s32.totalorder %s97, %s98
    %p109 = scmp.eq.s32.totalorder %s19, 0
    %p110 = por %p108, %p109
    %p111 = scmp.ne.s32.totalorder %s97, %s98
    %p112 = scmp.eq.s32.totalorder %s20, 1
    %p113 = por %p111, %p112
    %p115 = scmp.ne.s32.totalorder %s98, %s114
    %p116 = scmp.eq.s32.totalorder %s20, 0
    %p117 = por %p115, %p116
    %s118 = ssub.s32 %s21, %s33
    %s119 = ssub.s32 %s22, %s29
    %s120 = sor.u32 %s118, %s119
    %p121 = scmp.eq.s32.totalorder %s120, 0
    %s123 = sadd.s32 %s122, 1
    %s124 = scalar_select %p121, %s122, %s123
    %p127 = pneg %p121
    %p128 = scmp.eq.s32.totalorder %s14, 1
    %p129 = por %p127, %p128
    %p130 = scmp.ne.s32.totalorder %s122, %s125
    %p131 = scmp.eq.s32.totalorder %s14, 0
    %p132 = por %p130, %p131
    %p133 = scmp.ne.s32.totalorder %s122, %s125
    %p134 = scmp.eq.s32.totalorder %s19, 1
    %p135 = por %p133, %p134
    %p136 = scmp.ne.s32.totalorder %s125, %s126
    %p137 = scmp.eq.s32.totalorder %s19, 0
    %p138 = por %p136, %p137
    %p139 = scmp.ne.s32.totalorder %s125, %s126
    %p140 = scmp.eq.s32.totalorder %s20, 1
    %p141 = por %p139, %p140
    %p143 = scmp.ne.s32.totalorder %s126, %s142
    %p144 = scmp.eq.s32.totalorder %s20, 0
    %p145 = por %p143, %p144
    %s146 = ssub.s32 %s21, %s33
    %s147 = ssub.s32 %s22, %s29
    %s148 = sor.u32 %s146, %s147
    %p149 = scmp.eq.s32.totalorder %s148, 0
    %s151 = sadd.s32 %s150, 1
    %s152 = scalar_select %p149, %s150, %s151
    %p155 = pneg %p149
    %p156 = scmp.eq.s32.totalorder %s14, 1
    %p157 = por %p155, %p156
    %p158 = scmp.ne.s32.totalorder %s150, %s153
    %p159 = scmp.eq.s32.totalorder %s14, 0
    %p160 = por %p158, %p159
    %p161 = scmp.ne.s32.totalorder %s150, %s153
    %p162 = scmp.eq.s32.totalorder %s19, 1
    %p163 = por %p161, %p162
    %p164 = scmp.ne.s32.totalorder %s153, %s154
    %p165 = scmp.eq.s32.totalorder %s19, 0
    %p166 = por %p164, %p165
    %p167 = scmp.ne.s32.totalorder %s153, %s154
    %p168 = scmp.eq.s32.totalorder %s20, 1
    %p169 = por %p167, %p168
    %p171 = scmp.ne.s32.totalorder %s154, %s170
    %p172 = scmp.eq.s32.totalorder %s20, 0
    %p173 = por %p171, %p172
    %s175 = sadd.s32 %s174, 1
    %p178 = scmp.eq.s32.totalorder %s14, 1
    %p179 = scmp.ne.s32.totalorder %s174, %s176
    %p180 = scmp.eq.s32.totalorder %s14, 0
    %p181 = por %p179, %p180
    %p182 = scmp.ne.s32.totalorder %s174, %s176
    %p183 = scmp.eq.s32.totalorder %s19, 1
    %p184 = por %p182, %p183
    %p185 = scmp.ne.s32.totalorder %s176, %s177
    %p186 = scmp.eq.s32.totalorder %s19, 0
    %p187 = por %p185, %p186
    %p188 = scmp.ne.s32.totalorder %s176, %s177
    %p189 = scmp.eq.s32.totalorder %s20, 1
    %p190 = por %p188, %p189
    %p192 = scmp.ne.s32.totalorder %s177, %s191
    %p193 = scmp.eq.s32.totalorder %s20, 0
    %p194 = por %p192, %p193
    %s196 = sadd.s32 %s195, 1
    %p199 = scmp.eq.s32.totalorder %s14, 1
    %p200 = scmp.ne.s32.totalorder %s195, %s197
    %p201 = scmp.eq.s32.totalorder %s14, 0
    %p202 = por %p200, %p201
    %p203 = scmp.ne.s32.totalorder %s195, %s197
    %p204 = scmp.eq.s32.totalorder %s19, 1
    %p205 = por %p203, %p204
    %p206 = scmp.ne.s32.totalorder %s197, %s198
    %p207 = scmp.eq.s32.totalorder %s19, 0
    %p208 = por %p206, %p207
    %p209 = scmp.ne.s32.totalorder %s197, %s198
    %p210 = scmp.eq.s32.totalorder %s20, 1
    %p211 = por %p209, %p210
    %p213 = scmp.ne.s32.totalorder %s198, %s212
    %p214 = scmp.eq.s32.totalorder %s20, 0
    %p215 = por %p213, %p214
    %s217 = sadd.s32 %s216, 1
    %p220 = scmp.eq.s32.totalorder %s14, 1
    %p221 = scmp.ne.s32.totalorder %s216, %s218
    %p222 = scmp.eq.s32.totalorder %s14, 0
    %p223 = por %p221, %p222
    %p224 = scmp.ne.s32.totalorder %s216, %s218
    %p225 = scmp.eq.s32.totalorder %s19, 1
    %p226 = por %p224, %p225
    %p227 = scmp.ne.s32.totalorder %s218, %s219
    %p228 = scmp.eq.s32.totalorder %s19, 0
    %p229 = por %p227, %p228
    %p230 = scmp.ne.s32.totalorder %s218, %s219
    %p231 = scmp.eq.s32.totalorder %s20, 1
    %p232 = por %p230, %p231
    %p234 = scmp.ne.s32.totalorder %s219, %s233
    %p235 = scmp.eq.s32.totalorder %s20, 0
    %p236 = por %p234, %p235
    %s237 = ssub.s32 %s21, %s33
    %s238 = ssub.s32 %s22, %s29
    %s239 = sor.u32 %s237, %s238
    %p240 = scmp.eq.s32.totalorder %s239, 0
    %s242 = sadd.s32 %s241, 1
    %s243 = scalar_select %p240, %s241, %s242
    %p246 = pneg %p240
    %p247 = scmp.eq.s32.totalorder %s14, 1
    %p248 = por %p246, %p247
    %p249 = scmp.ne.s32.totalorder %s241, %s244
    %p250 = scmp.eq.s32.totalorder %s14, 0
    %p251 = por %p249, %p250
    %p252 = scmp.ne.s32.totalorder %s241, %s244
    %p253 = scmp.eq.s32.totalorder %s19, 1
    %p254 = por %p252, %p253
    %p255 = scmp.ne.s32.totalorder %s244, %s245
    %p256 = scmp.eq.s32.totalorder %s19, 0
    %p257 = por %p255, %p256
    %p258 = scmp.ne.s32.totalorder %s244, %s245
    %p259 = scmp.eq.s32.totalorder %s20, 1
    %p260 = por %p258, %p259
    %p262 = scmp.ne.s32.totalorder %s245, %s261
    %p263 = scmp.eq.s32.totalorder %s20, 0
    %p264 = por %p262, %p263
    %p265 = scmp.le.s32.totalorder 1, %s14
    %p266 = scmp.lt.s32.totalorder %s14, 3
    %p267 = pnand %p265, %p266
    %p268 = pneg %p267
    // Predicated region
    $region9: #{_lambda_.60} parent=5 // pred_check
      _
    $region10: #{_lambda_.60} parent=5 // pred_check_branch
      %270 = sbr.rel (%p267) target = $region12
    $region11: #{_lambda_.60} parent=5 // pred_region
      %s271 = ssub.s32 %s14, 1
      // Predicated region
      $region13: #{_lambda_.60} parent=11 // pred_check
        %p272 = pneg %p187
      $region14: #{_lambda_.60} parent=11 // pred_check_branch
        %274 = sbr.rel (%p272) target = $region16
      $region15: #{_lambda_.60} parent=11 // pred_region
        _
      $region16: #{_lambda_.60} parent=11 // pred_fallthru
        _
      // Predicated region
      $region17: #{_lambda_.60} parent=11 // pred_check
        %p275 = pneg %p208
      $region18: #{_lambda_.60} parent=11 // pred_check_branch
        %277 = sbr.rel (%p275) target = $region20
      $region19: #{_lambda_.60} parent=11 // pred_region
        _
      $region20: #{_lambda_.60} parent=11 // pred_fallthru
        _
      // Predicated region
      $region21: #{_lambda_.60} parent=11 // pred_check
        %p278 = pneg %p229
      $region22: #{_lambda_.60} parent=11 // pred_check_branch
        %280 = sbr.rel (%p278) target = $region24
      $region23: #{_lambda_.60} parent=11 // pred_region
        _
      $region24: #{_lambda_.60} parent=11 // pred_fallthru
        _
    $region12: #{_lambda_.60} parent=5 // pred_fallthru
      _
    %p281 = scmp.lt.s32.totalorder %s14, 2
    // Predicated region
    $region25: #{_lambda_.60} parent=5 // pred_check
      %p282 = pneg %p281
    $region26: #{_lambda_.60} parent=5 // pred_check_branch
      %284 = sbr.rel (%p282) target = $region28
    $region27: #{_lambda_.60} parent=5 // pred_region
      // Predicated region
      $region29: #{_lambda_.60} parent=27 // pred_check
        %p285 = pneg %p48
      $region30: #{_lambda_.60} parent=27 // pred_check_branch
        %287 = sbr.rel (%p285) target = $region32
      $region31: #{_lambda_.60} parent=27 // pred_region
        %s288 = smul.u32 8, %s22
        %p289 = scmp.lt.s32.totalorder %s21, 1
        %s290 = scalar_select %p289, %s21, 1
        %p291 = scmp.lt.s32.totalorder %s288, 7
        %s292 = scalar_select %p291, %s288, 7
        %s293 = smul.addr %s290, 8
        %s294 = sadd.s32 %s292, %s293
        %s295 = smul.addr %s294, 8
        %s296 = scalar_lea.vmem %s0, %s295
        %s297 = smul.u32 8, %s22
      $region32: #{_lambda_.60} parent=27 // pred_fallthru
        _
      // Predicated region
      $region33: #{_lambda_.60} parent=27 // pred_check
        %p298 = pneg %p76
      $region34: #{_lambda_.60} parent=27 // pred_check_branch
        %300 = sbr.rel (%p298) target = $region36
      $region35: #{_lambda_.60} parent=27 // pred_region
        %s301 = smul.u32 8, %s22
        %p302 = scmp.lt.s32.totalorder %s21, 1
        %s303 = scalar_select %p302, %s21, 1
        %p304 = scmp.lt.s32.totalorder %s301, 7
        %s305 = scalar_select %p304, %s301, 7
        %s306 = smul.addr %s303, 8
        %s307 = sadd.s32 %s305, %s306
        %s308 = smul.addr %s307, 8
        %s309 = scalar_lea.vmem %s1, %s308
        %s310 = smul.u32 8, %s22
      $region36: #{_lambda_.60} parent=27 // pred_fallthru
        _
      // Predicated region
      $region37: #{_lambda_.60} parent=27 // pred_check
        %p311 = pneg %p104
      $region38: #{_lambda_.60} parent=27 // pred_check_branch
        %313 = sbr.rel (%p311) target = $region40
      $region39: #{_lambda_.60} parent=27 // pred_region
        %s314 = smul.u32 8, %s22
        %p315 = scmp.lt.s32.totalorder %s21, 1
        %s316 = scalar_select %p315, %s21, 1
        %p317 = scmp.lt.s32.totalorder %s314, 7
        %s318 = scalar_select %p317, %s314, 7
        %s319 = smul.addr %s316, 8
        %s320 = sadd.s32 %s318, %s319
        %s321 = smul.addr %s320, 8
        %s322 = scalar_lea.vmem %s2, %s321
        %s323 = smul.u32 8, %s22
      $region40: #{_lambda_.60} parent=27 // pred_fallthru
        _
      // Predicated region
      $region41: #{_lambda_.60} parent=27 // pred_check
        %p324 = pneg %p132
      $region42: #{_lambda_.60} parent=27 // pred_check_branch
        %326 = sbr.rel (%p324) target = $region44
      $region43: #{_lambda_.60} parent=27 // pred_region
        %s327 = smul.u32 8, %s22
        %p328 = scmp.lt.s32.totalorder %s21, 1
        %s329 = scalar_select %p328, %s21, 1
        %p330 = scmp.lt.s32.totalorder %s327, 7
        %s331 = scalar_select %p330, %s327, 7
        %s332 = smul.addr %s329, 8
        %s333 = sadd.s32 %s331, %s332
        %s334 = smul.addr %s333, 8
        %s335 = scalar_lea.vmem %s3, %s334
        %s336 = smul.u32 8, %s22
      $region44: #{_lambda_.60} parent=27 // pred_fallthru
        _
      // Predicated region
      $region45: #{_lambda_.60} parent=27 // pred_check
        %p337 = pneg %p160
      $region46: #{_lambda_.60} parent=27 // pred_check_branch
        %339 = sbr.rel (%p337) target = $region48
      $region47: #{_lambda_.60} parent=27 // pred_region
        %s340 = smul.u32 8, %s22
        %p341 = scmp.lt.s32.totalorder %s21, 1
        %s342 = scalar_select %p341, %s21, 1
        %p343 = scmp.lt.s32.totalorder %s340, 7
        %s344 = scalar_select %p343, %s340, 7
        %s345 = smul.addr %s342, 8
        %s346 = sadd.s32 %s344, %s345
        %s347 = smul.addr %s346, 8
        %s348 = scalar_lea.vmem %s4, %s347
        %s349 = smul.u32 8, %s22
      $region48: #{_lambda_.60} parent=27 // pred_fallthru
        _
    $region28: #{_lambda_.60} parent=5 // pred_fallthru
      _
    %p350 = scmp.le.s32.totalorder 1, %s14
    %p351 = scmp.lt.s32.totalorder %s14, 3
    %p352 = pnand %p350, %p351
    %p353 = pneg %p352
    // Predicated region
    $region49: #{_lambda_.60} parent=5 // pred_check
      _
    $region50: #{_lambda_.60} parent=5 // pred_check_branch
      %355 = sbr.rel (%p352) target = $region52
    $region51: #{_lambda_.60} parent=5 // pred_region
      %s356 = ssub.s32 %s14, 1
      %s357 = smul.u32 8, %s24
      %p358 = scmp.lt.s32.totalorder %s23, 1
      %s359 = scalar_select %p358, %s23, 1
      %p360 = scmp.lt.s32.totalorder %s357, 7
      %s361 = scalar_select %p360, %s357, 7
      %s362 = smul.addr %s359, 8
      %s363 = sadd.s32 %s361, %s362
      %s364 = smul.addr %s363, 8
      %s365 = scalar_lea.vmem %s0, %s364
      %p366 = pneg %p54
      %p367 = pneg %p51
      %s368 = smul.u32 8, %s24
      %p369 = scmp.lt.s32.totalorder %s23, 1
      %s370 = scalar_select %p369, %s23, 1
      %p371 = scmp.lt.s32.totalorder %s368, 7
      %s372 = scalar_select %p371, %s368, 7
      %s373 = smul.addr %s370, 8
      %s374 = sadd.s32 %s372, %s373
      %s375 = smul.addr %s374, 8
      %s376 = scalar_lea.vmem %s1, %s375
      %p377 = pneg %p82
      %p378 = pneg %p79
      %s379 = smul.u32 8, %s24
      %p380 = scmp.lt.s32.totalorder %s23, 1
      %s381 = scalar_select %p380, %s23, 1
      %p382 = scmp.lt.s32.totalorder %s379, 7
      %s383 = scalar_select %p382, %s379, 7
      %s384 = smul.addr %s381, 8
      %s385 = sadd.s32 %s383, %s384
      %s386 = smul.addr %s385, 8
      %s387 = scalar_lea.vmem %s2, %s386
      %p388 = pneg %p110
      %p389 = pneg %p107
      %s390 = smul.u32 8, %s24
      %p391 = scmp.lt.s32.totalorder %s23, 1
      %s392 = scalar_select %p391, %s23, 1
      %p393 = scmp.lt.s32.totalorder %s390, 7
      %s394 = scalar_select %p393, %s390, 7
      %s395 = smul.addr %s392, 8
      %s396 = sadd.s32 %s394, %s395
      %s397 = smul.addr %s396, 8
      %s398 = scalar_lea.vmem %s3, %s397
      %p399 = pneg %p138
      %p400 = pneg %p135
      %s401 = smul.u32 8, %s24
      %p402 = scmp.lt.s32.totalorder %s23, 1
      %s403 = scalar_select %p402, %s23, 1
      %p404 = scmp.lt.s32.totalorder %s401, 7
      %s405 = scalar_select %p404, %s401, 7
      %s406 = smul.addr %s403, 8
      %s407 = sadd.s32 %s405, %s406
      %s408 = smul.addr %s407, 8
      %s409 = scalar_lea.vmem %s4, %s408
      %p410 = pneg %p166
      %p411 = pneg %p163
      %p412 = pneg %p187
      %p413 = pneg %p184
      %p414 = pneg %p208
      %p415 = pneg %p205
      %p416 = pneg %p229
      %p417 = pneg %p226
      %p418 = pneg %p257
      %p419 = pneg %p254
      %s420 = smul.u32 8, %s24
      %p421 = scmp.lt.s32.totalorder %s23, 1
      %s422 = scalar_select %p421, %s23, 1
      %p423 = scmp.lt.s32.totalorder %s420, 7
      %s424 = scalar_select %p423, %s420, 7
      %s425 = smul.addr %s422, 8
      %s426 = sadd.s32 %s424, %s425
      %s427 = smul.addr %s426, 8
      %s428 = scalar_lea.vmem %s8, %s427
      %s429 = smul.u32 8, %s24
      %p430 = scmp.lt.s32.totalorder %s23, 1
      %s431 = scalar_select %p430, %s23, 1
      %p432 = scmp.lt.s32.totalorder %s429, 7
      %s433 = scalar_select %p432, %s429, 7
      %s434 = smul.addr %s431, 8
      %s435 = sadd.s32 %s433, %s434
      %s436 = smul.addr %s435, 8
      %s437 = scalar_lea.vmem %s0, %s436
      %s438 = smul.u32 8, %s24
      %s439 = smul.u32 8, %s24
      %p440 = scmp.lt.s32.totalorder %s23, 1
      %s441 = scalar_select %p440, %s23, 1
      %p442 = scmp.lt.s32.totalorder %s439, 7
      %s443 = scalar_select %p442, %s439, 7
      %s444 = smul.addr %s441, 8
      %s445 = sadd.s32 %s443, %s444
      %s446 = smul.addr %s445, 8
      %s447 = scalar_lea.vmem %s1, %s446
      %s448 = smul.u32 8, %s24
      %s449 = smul.u32 8, %s24
      %p450 = scmp.lt.s32.totalorder %s23, 1
      %s451 = scalar_select %p450, %s23, 1
      %p452 = scmp.lt.s32.totalorder %s449, 7
      %s453 = scalar_select %p452, %s449, 7
      %s454 = smul.addr %s451, 8
      %s455 = sadd.s32 %s453, %s454
      %s456 = smul.addr %s455, 8
      %s457 = scalar_lea.vmem %s2, %s456
      %s458 = smul.u32 8, %s24
      %s459 = smul.u32 8, %s24
      %p460 = scmp.lt.s32.totalorder %s23, 1
      %s461 = scalar_select %p460, %s23, 1
      %p462 = scmp.lt.s32.totalorder %s459, 7
      %s463 = scalar_select %p462, %s459, 7
      %s464 = smul.addr %s461, 8
      %s465 = sadd.s32 %s463, %s464
      %s466 = smul.addr %s465, 8
      %s467 = scalar_lea.vmem %s3, %s466
      %s468 = smul.u32 8, %s24
      %s469 = smul.u32 8, %s24
      %p470 = scmp.lt.s32.totalorder %s23, 1
      %s471 = scalar_select %p470, %s23, 1
      %p472 = scmp.lt.s32.totalorder %s469, 7
      %s473 = scalar_select %p472, %s469, 7
      %s474 = smul.addr %s471, 8
      %s475 = sadd.s32 %s473, %s474
      %s476 = smul.addr %s475, 8
      %s477 = scalar_lea.vmem %s4, %s476
      %s478 = smul.u32 8, %s24
      %s479 = smul.u32 8, %s24
      %p480 = scmp.lt.s32.totalorder %s23, 1
      %s481 = scalar_select %p480, %s23, 1
      %p482 = scmp.lt.s32.totalorder %s479, 7
      %s483 = scalar_select %p482, %s479, 7
      %s484 = smul.addr %s481, 8
      %s485 = sadd.s32 %s483, %s484
      %s486 = smul.addr %s485, 8
      %s487 = scalar_lea.vmem %s8, %s486
      %s488 = smul.u32 8, %s24
      %p489 = scmp.eq.s32.totalorder %s24, 0
      // Predicated region
      $region53: #{_lambda_.60} parent=51 // pred_check
        %p490 = pneg %p489
      $region54: #{_lambda_.60} parent=51 // pred_check_branch
        %492 = sbr.rel (%p490) target = $region56
      $region55: #{_lambda_.60} parent=51 // pred_region
        %vm493 = vcmask 261120
        %494 = vst.msk [vmem:[#allocation2] sm:$0xff] %vm493, 0.0
        %495 = vst.msk [vmem:[#allocation2 + $0x8] sm:$0xff] %vm493, 0.0
      $region56: #{_lambda_.60} parent=51 // pred_fallthru
        _
      %v496 = vld [vmem:[%s447] sm:$0xff]
      %v497 = vld [vmem:[%s447 + $0x8] sm:$0xff]
      %v498 = vld [vmem:[%s447 + $0x10] sm:$0xff]
      %v499 = vld [vmem:[%s447 + $0x18] sm:$0xff]
      %v500 = vld [vmem:[%s447 + $0x20] sm:$0xff]
      %v501 = vld [vmem:[%s447 + $0x28] sm:$0xff]
      %v502 = vld [vmem:[%s447 + $0x30] sm:$0xff]
      %v503 = vld [vmem:[%s447 + $0x38] sm:$0xff]
      %v504 = vld [vmem:[%s7] sm:$0x1]
      %v506 = vlaneseq
      %v507 = vshrl.u32 %v506, 7
      %v508 = vsub.s32 0, %v507
      %v509 = vrot.slane %v504, %v508
      %v511 = vadd.f32 %v496, %v509
      %v512 = vadd.f32 %v497, %v509
      %v513 = vadd.f32 %v498, %v509
      %v514 = vadd.f32 %v499, %v509
      %v515 = vadd.f32 %v500, %v509
      %v516 = vadd.f32 %v501, %v509
      %v517 = vadd.f32 %v502, %v509
      %v518 = vadd.f32 %v503, %v509
      %v519 = vmax.f32 %v511, 0.0
      %v520 = vmax.f32 %v512, 0.0
      %v521 = vmax.f32 %v513, 0.0
      %v522 = vmax.f32 %v514, 0.0
      %v523 = vmax.f32 %v515, 0.0
      %v524 = vmax.f32 %v516, 0.0
      %v525 = vmax.f32 %v517, 0.0
      %v526 = vmax.f32 %v518, 0.0
      %v527 = vand.u32 2147483647, %v511
      %v528 = vand.u32 2147483647, %v512
      %v529 = vand.u32 2147483647, %v513
      %v530 = vand.u32 2147483647, %v514
      %v531 = vand.u32 2147483647, %v515
      %v532 = vand.u32 2147483647, %v516
      %v533 = vand.u32 2147483647, %v517
      %v534 = vand.u32 2147483647, %v518
      %v535 = vsub.f32 0.0, %v527
      %v536 = vsub.f32 0.0, %v528
      %v537 = vsub.f32 0.0, %v529
      %v538 = vsub.f32 0.0, %v530
      %v539 = vsub.f32 0.0, %v531
      %v540 = vsub.f32 0.0, %v532
      %v541 = vsub.f32 0.0, %v533
      %v542 = vsub.f32 0.0, %v534
      %v543 = vmul.f32 %v535, 1.442695
      %v544 = vpow.pop %v543
      %v545 = vmul.f32 %v536, 1.442695
      %v546 = vpow.pop %v545
      %v547 = vmul.f32 %v537, 1.442695
      %v548 = vpow.pop %v547
      %v549 = vmul.f32 %v538, 1.442695
      %v550 = vpow.pop %v549
      %v551 = vmul.f32 %v539, 1.442695
      %v552 = vpow.pop %v551
      %v553 = vmul.f32 %v540, 1.442695
      %v554 = vpow.pop %v553
      %v555 = vmul.f32 %v541, 1.442695
      %v556 = vpow.pop %v555
      %v557 = vmul.f32 %v542, 1.442695
      %v558 = vpow.pop %v557
      %v559 = vadd.f32 %v544, 1.0
      %v560 = vadd.f32 %v546, 1.0
      %v561 = vadd.f32 %v548, 1.0
      %v562 = vadd.f32 %v550, 1.0
      %v563 = vadd.f32 %v552, 1.0
      %v564 = vadd.f32 %v554, 1.0
      %v565 = vadd.f32 %v556, 1.0
      %v566 = vadd.f32 %v558, 1.0
      %v567 = vlog2.pop %v559
      %v568 = vmul.f32 %v567, 0.6931472
      %v569 = vlog2.pop %v560
      %v570 = vmul.f32 %v569, 0.6931472
      %v571 = vlog2.pop %v561
      %v572 = vmul.f32 %v571, 0.6931472
      %v573 = vlog2.pop %v562
      %v574 = vmul.f32 %v573, 0.6931472
      %v575 = vlog2.pop %v563
      %v576 = vmul.f32 %v575, 0.6931472
      %v577 = vlog2.pop %v564
      %v578 = vmul.f32 %v577, 0.6931472
      %v579 = vlog2.pop %v565
      %v580 = vmul.f32 %v579, 0.6931472
      %v581 = vlog2.pop %v566
      %v582 = vmul.f32 %v581, 0.6931472
      %v583 = vadd.f32 %v519, %v568
      %v584 = vadd.f32 %v520, %v570
      %v585 = vadd.f32 %v521, %v572
      %v586 = vadd.f32 %v522, %v574
      %v587 = vadd.f32 %v523, %v576
      %v588 = vadd.f32 %v524, %v578
      %v589 = vadd.f32 %v525, %v580
      %v590 = vadd.f32 %v526, %v582
      %vm591 = vcmask 261120
      %592 = vst.msk [vmem:[#allocation3] sm:$0xff] %vm591, %v583
      %593 = vst.msk [vmem:[#allocation3 + $0x8] sm:$0xff] %vm591, %v584
      %594 = vst.msk [vmem:[#allocation3 + $0x10] sm:$0xff] %vm591, %v585
      %595 = vst.msk [vmem:[#allocation3 + $0x18] sm:$0xff] %vm591, %v586
      %596 = vst.msk [vmem:[#allocation3 + $0x20] sm:$0xff] %vm591, %v587
      %597 = vst.msk [vmem:[#allocation3 + $0x28] sm:$0xff] %vm591, %v588
      %598 = vst.msk [vmem:[#allocation3 + $0x30] sm:$0xff] %vm591, %v589
      %599 = vst.msk [vmem:[#allocation3 + $0x38] sm:$0xff] %vm591, %v590
      %v600 = vld [vmem:[#allocation3] sm:$0xff]
      %v601 = vld [vmem:[#allocation3 + $0x8] sm:$0xff]
      %v602 = vld [vmem:[#allocation3 + $0x10] sm:$0xff]
      %v603 = vld [vmem:[#allocation3 + $0x18] sm:$0xff]
      %v604 = vld [vmem:[#allocation3 + $0x20] sm:$0xff]
      %v605 = vld [vmem:[#allocation3 + $0x28] sm:$0xff]
      %v606 = vld [vmem:[#allocation3 + $0x30] sm:$0xff]
      %v607 = vld [vmem:[#allocation3 + $0x38] sm:$0xff]
      %v608 = vld [vmem:[%s437] sm:$0xff]
      %v609 = vld [vmem:[%s437 + $0x8] sm:$0xff]
      %v610 = vld [vmem:[%s437 + $0x10] sm:$0xff]
      %v611 = vld [vmem:[%s437 + $0x18] sm:$0xff]
      %v612 = vld [vmem:[%s437 + $0x20] sm:$0xff]
      %v613 = vld [vmem:[%s437 + $0x28] sm:$0xff]
      %v614 = vld [vmem:[%s437 + $0x30] sm:$0xff]
      %v615 = vld [vmem:[%s437 + $0x38] sm:$0xff]
      %v616 = vmul.f32 %v600, %v608
      %v617 = vmul.f32 %v601, %v609
      %v618 = vmul.f32 %v602, %v610
      %v619 = vmul.f32 %v603, %v611
      %v620 = vmul.f32 %v604, %v612
      %v621 = vmul.f32 %v605, %v613
      %v622 = vmul.f32 %v606, %v614
      %v623 = vmul.f32 %v607, %v615
      %624 = vst.msk [vmem:[#allocation4] sm:$0xff] %vm591, %v616
      %625 = vst.msk [vmem:[#allocation4 + $0x8] sm:$0xff] %vm591, %v617
      %626 = vst.msk [vmem:[#allocation4 + $0x10] sm:$0xff] %vm591, %v618
      %627 = vst.msk [vmem:[#allocation4 + $0x18] sm:$0xff] %vm591, %v619
      %628 = vst.msk [vmem:[#allocation4 + $0x20] sm:$0xff] %vm591, %v620
      %629 = vst.msk [vmem:[#allocation4 + $0x28] sm:$0xff] %vm591, %v621
      %630 = vst.msk [vmem:[#allocation4 + $0x30] sm:$0xff] %vm591, %v622
      %631 = vst.msk [vmem:[#allocation4 + $0x38] sm:$0xff] %vm591, %v623
      %v632 = vld [vmem:[%s5] sm:$0xff]
      %v633 = vld [vmem:[%s5 + $0x8] sm:$0xff]
      loop: start=0, step=1, limit=64
      $region57: #{_lambda_.60} parent=51 // loop_pre_header
        _
      $region58: #{_lambda_.60} parent=51 // loop_header
        %s635 = sphi 0, %s639
        %p636 = scmp.ge.s32.totalorder %s635, 64
      $region59: #{_lambda_.60} parent=51 // loop_header_branch
        %638 = sbr.rel (%p636) target = $region63
      $region60: #{_lambda_.60} parent=51 // loop_body
        %s640 = scalar_lea.vmem [#allocation3], %s635
        %v641 = vld [vmem:[%s640] sm:$0x1]
        %v642 = vlaneseq
        %v643 = vshrl.u32 %v642, 7
        %v644 = vsub.s32 0, %v643
        %v645 = vrot.slane %v641, %v644
        %v646 = vmul.f32 %v632, %v645
        %v647 = vmul.f32 %v633, %v645
        %v648 = vmul.f32 %v646, 1.442695
        %v649 = vpow.pop %v648
        %v650 = vmul.f32 %v647, 1.442695
        %v651 = vpow.pop %v650
        %s652 = scalar_lea.vmem %s467, %s635
        %v653 = vld [vmem:[%s652] sm:$0x1]
        %s654 = scalar_lea.vmem [#allocation4], %s635
        %v655 = vld [vmem:[%s654] sm:$0x1]
        %656 = vxpose.xlu0.b32.start [1/16] %v653, 128
        %657 = vxpose.xlu0.b32.cont [2/16] 0.0, 128
        %658 = vxpose.xlu0.b32.cont [3/16] 0.0, 128
        %659 = vxpose.xlu0.b32.cont [4/16] 0.0, 128
        %660 = vxpose.xlu0.b32.cont [5/16] 0.0, 128
        %661 = vxpose.xlu0.b32.cont [6/16] 0.0, 128
        %662 = vxpose.xlu0.b32.cont [7/16] 0.0, 128
        %663 = vxpose.xlu0.b32.cont [8/16] 0.0, 128
        %664 = vxpose.xlu0.b32.cont [9/16] 0.0, 128
        %665 = vxpose.xlu0.b32.cont [10/16] 0.0, 128
        %666 = vxpose.xlu0.b32.cont [11/16] 0.0, 128
        %667 = vxpose.xlu0.b32.cont [12/16] 0.0, 128
        %668 = vxpose.xlu0.b32.cont [13/16] 0.0, 128
        %669 = vxpose.xlu0.b32.cont [14/16] 0.0, 128
        %670 = vxpose.xlu0.b32.cont [15/16] 0.0, 128
        %671 = vxpose.xlu0.b32.end [16/16] 0.0, 128
        %v672 = vpop.trf.xlu0
        %v673 = vpop.trf.xlu0
        %v674 = vpop.trf.xlu0
        %v675 = vpop.trf.xlu0
        %v676 = vpop.trf.xlu0
        %v677 = vpop.trf.xlu0
        %v678 = vpop.trf.xlu0
        %v679 = vpop.trf.xlu0
        %v680 = vpop.trf.xlu0
        %v681 = vpop.trf.xlu0
        %v682 = vpop.trf.xlu0
        %v683 = vpop.trf.xlu0
        %v684 = vpop.trf.xlu0
        %v685 = vpop.trf.xlu0
        %v686 = vpop.trf.xlu0
        %v687 = vpop.trf.xlu0
        %vm688 = vcmask 7168
        %v690 = vsel %vm688, %v672, 0
        %v693 = vsel %vm688, %v673, 0
        %vm695 = vcmask 1040384
        %v697 = vsel %vm695, %v655, 0
        %699 = vmatprep.subr.mxu0 0.0
        %700 = vmatpush1.msra.mxu0 %v697
        %701 = vmatprep.subr.mxu0 0.0
        %702 = vmatpush1.msra.mxu0 0.0
        %703 = vmatprep.subr.mxu0 0.0
        %704 = vmatpush1.msra.mxu0 0.0
        %705 = vmatprep.subr.mxu0 0.0
        %706 = vmatpush1.msra.mxu0 0.0
        %707 = vmatprep.subr.mxu0 0.0
        %708 = vmatpush1.msra.mxu0 0.0
        %709 = vmatprep.subr.mxu0 0.0
        %710 = vmatpush1.msra.mxu0 0.0
        %711 = vmatprep.subr.mxu0 0.0
        %712 = vmatpush1.msra.mxu0 0.0
        %713 = vmatprep.subr.mxu0 0.0
        %714 = vmatpush1.msra.mxu0 0.0
        %715 = vmatprep.subr.mxu0 0.0
        %716 = vmatpush1.msra.mxu0 0.0
        %717 = vmatprep.subr.mxu0 0.0
        %718 = vmatpush1.msra.mxu0 0.0
        %719 = vmatprep.subr.mxu0 0.0
        %720 = vmatpush1.msra.mxu0 0.0
        %721 = vmatprep.subr.mxu0 0.0
        %722 = vmatpush1.msra.mxu0 0.0
        %723 = vmatprep.subr.mxu0 0.0
        %724 = vmatpush1.msra.mxu0 0.0
        %725 = vmatprep.subr.mxu0 0.0
        %726 = vmatpush1.msra.mxu0 0.0
        %727 = vmatprep.subr.mxu0 0.0
        %728 = vmatpush1.msra.mxu0 0.0
        %729 = vmatprep.subr.mxu0 0.0
        %730 = vmatpush1.msra.mxu0 0.0
        %731 = vmatprep.subr.mxu0 0.0
        %732 = vmatpush1.msra.mxu0 0.0
        %733 = vmatprep.subr.mxu0 0.0
        %734 = vmatpush1.msra.mxu0 0.0
        %735 = vmatprep.subr.mxu0 0.0
        %736 = vmatpush1.msra.mxu0 0.0
        %737 = vmatprep.subr.mxu0 0.0
        %738 = vmatpush1.msra.mxu0 0.0
        %739 = vmatprep.subr.mxu0 0.0
        %740 = vmatpush1.msra.mxu0 0.0
        %741 = vmatprep.subr.mxu0 0.0
        %742 = vmatpush1.msra.mxu0 0.0
        %743 = vmatprep.subr.mxu0 0.0
        %744 = vmatpush1.msra.mxu0 0.0
        %745 = vmatprep.subr.mxu0 0.0
        %746 = vmatpush1.msra.mxu0 0.0
        %747 = vmatprep.subr.mxu0 0.0
        %748 = vmatpush1.msra.mxu0 0.0
        %749 = vmatprep.subr.mxu0 0.0
        %750 = vmatpush1.msra.mxu0 0.0
        %751 = vmatprep.subr.mxu0 0.0
        %752 = vmatpush1.msra.mxu0 0.0
        %753 = vmatprep.subr.mxu0 0.0
        %754 = vmatpush1.msra.mxu0 0.0
        %755 = vmatprep.subr.mxu0 0.0
        %756 = vmatpush1.msra.mxu0 0.0
        %757 = vmatprep.subr.mxu0 0.0
        %758 = vmatpush1.msra.mxu0 0.0
        %759 = vmatprep.subr.mxu0 0.0
        %760 = vmatpush1.msra.mxu0 0.0
        %761 = vmatprep.subr.mxu0 0.0
        %762 = vmatpush1.msra.mxu0 0.0
        %763 = vmatprep.mubr.f32.mxu0 0.0
        %764 = vmatmul.mubr.f32.gmra.mrb[0].mxu0 %v690
        %v765 = vpop.f32.mrb[0].mxu0
        %v766 = vadd.f32 0.0, %v765
        %v767 = vpop.f32.mrb[0].mxu0
        %768 = vmatprep.mubr.f32.mxu0 0.0
        %769 = vmatmul.mubr.f32.gmra.mrb[0].mxu0 %v693
        %v770 = vpop.f32.mrb[0].mxu0
        %v771 = vadd.f32 0.0, %v770
        %v772 = vpop.f32.mrb[0].mxu0
        %773 = vdwg.mxu0
        %v774 = vld [vmem:[#allocation2] sm:$0xff]
        %v775 = vld [vmem:[#allocation2 + $0x8] sm:$0xff]
        %v776 = vmul.f32 %v649, %v774
        %v777 = vmul.f32 %v651, %v775
        %v778 = vadd.f32 %v776, %v766
        %v779 = vadd.f32 %v777, %v771
        %780 = vst.msk [vmem:[#allocation2] sm:$0xff] %vm591, %v778
        %781 = vst.msk [vmem:[#allocation2 + $0x8] sm:$0xff] %vm591, %v779
        %s782 = scalar_lea.vmem %s477, %s635
        %v783 = vld [vmem:[%s782] sm:$0x1]
        %vm784 = vcmask 130048
        %v786 = vsel %vm784, %v783, 0
        %788 = vmatprep.subr.mxu0 0.0
        %789 = vmatpush1.msra.mxu0 %v778
        %790 = vmatprep.subr.mxu0 0.0
        %791 = vmatpush1.msra.mxu0 %v779
        %792 = vmatprep.subr.mxu0 0.0
        %793 = vmatpush1.msra.mxu0 0.0
        %794 = vmatprep.subr.mxu0 0.0
        %795 = vmatpush1.msra.mxu0 0.0
        %796 = vmatprep.subr.mxu0 0.0
        %797 = vmatpush1.msra.mxu0 0.0
        %798 = vmatprep.subr.mxu0 0.0
        %799 = vmatpush1.msra.mxu0 0.0
        %800 = vmatprep.subr.mxu0 0.0
        %801 = vmatpush1.msra.mxu0 0.0
        %802 = vmatprep.subr.mxu0 0.0
        %803 = vmatpush1.msra.mxu0 0.0
        %804 = vmatprep.subr.mxu0 0.0
        %805 = vmatpush1.msra.mxu0 0.0
        %806 = vmatprep.subr.mxu0 0.0
        %807 = vmatpush1.msra.mxu0 0.0
        %808 = vmatprep.subr.mxu0 0.0
        %809 = vmatpush1.msra.mxu0 0.0
        %810 = vmatprep.subr.mxu0 0.0
        %811 = vmatpush1.msra.mxu0 0.0
        %812 = vmatprep.subr.mxu0 0.0
        %813 = vmatpush1.msra.mxu0 0.0
        %814 = vmatprep.subr.mxu0 0.0
        %815 = vmatpush1.msra.mxu0 0.0
        %816 = vmatprep.subr.mxu0 0.0
        %817 = vmatpush1.msra.mxu0 0.0
        %818 = vmatprep.subr.mxu0 0.0
        %819 = vmatpush1.msra.mxu0 0.0
        %820 = vmatprep.subr.mxu0 0.0
        %821 = vmatpush1.msra.mxu0 0.0
        %822 = vmatprep.subr.mxu0 0.0
        %823 = vmatpush1.msra.mxu0 0.0
        %824 = vmatprep.subr.mxu0 0.0
        %825 = vmatpush1.msra.mxu0 0.0
        %826 = vmatprep.subr.mxu0 0.0
        %827 = vmatpush1.msra.mxu0 0.0
        %828 = vmatprep.subr.mxu0 0.0
        %829 = vmatpush1.msra.mxu0 0.0
        %830 = vmatprep.subr.mxu0 0.0
        %831 = vmatpush1.msra.mxu0 0.0
        %832 = vmatprep.subr.mxu0 0.0
        %833 = vmatpush1.msra.mxu0 0.0
        %834 = vmatprep.subr.mxu0 0.0
        %835 = vmatpush1.msra.mxu0 0.0
        %836 = vmatprep.subr.mxu0 0.0
        %837 = vmatpush1.msra.mxu0 0.0
        %838 = vmatprep.subr.mxu0 0.0
        %839 = vmatpush1.msra.mxu0 0.0
        %840 = vmatprep.subr.mxu0 0.0
        %841 = vmatpush1.msra.mxu0 0.0
        %842 = vmatprep.subr.mxu0 0.0
        %843 = vmatpush1.msra.mxu0 0.0
        %844 = vmatprep.subr.mxu0 0.0
        %845 = vmatpush1.msra.mxu0 0.0
        %846 = vmatprep.subr.mxu0 0.0
        %847 = vmatpush1.msra.mxu0 0.0
        %848 = vmatprep.subr.mxu0 0.0
        %849 = vmatpush1.msra.mxu0 0.0
        %850 = vmatprep.subr.mxu0 0.0
        %851 = vmatpush1.msra.mxu0 0.0
        %852 = vmatprep.mubr.f32.mxu0 0.0
        %853 = vmatmul.mubr.f32.gmra.mrb[0].mxu0 %v786
        %v854 = vpop.f32.mrb[0].mxu0
        %v855 = vadd.f32 0.0, %v854
        %v856 = vpop.f32.mrb[0].mxu0
        %857 = vdwg.mxu0
        %s858 = scalar_lea.vmem [#allocation5], %s635
        %vm859 = vcmask 253952
        %860 = vst.msk [vmem:[%s858] sm:$0x1] %vm859, %v855
      $region61: #{_lambda_.60} parent=51 // loop_footer
        %s639 = sadd.s32 1, %s635
      $region62: #{_lambda_.60} parent=51 // loop_footer_branch
        %634 = sbr.rel target = $region58
      $region63: #{_lambda_.60} parent=51 // loop_exit
        _
      %v861 = vld [vmem:[%s457] sm:$0xff]
      %v862 = vld [vmem:[%s457 + $0x8] sm:$0xff]
      %v863 = vld [vmem:[%s457 + $0x10] sm:$0xff]
      %v864 = vld [vmem:[%s457 + $0x18] sm:$0xff]
      %v865 = vld [vmem:[%s457 + $0x20] sm:$0xff]
      %v866 = vld [vmem:[%s457 + $0x28] sm:$0xff]
      %v867 = vld [vmem:[%s457 + $0x30] sm:$0xff]
      %v868 = vld [vmem:[%s457 + $0x38] sm:$0xff]
      %v869 = vsub.f32 0.0, %v861
      %v870 = vsub.f32 0.0, %v862
      %v871 = vsub.f32 0.0, %v863
      %v872 = vsub.f32 0.0, %v864
      %v873 = vsub.f32 0.0, %v865
      %v874 = vsub.f32 0.0, %v866
      %v875 = vsub.f32 0.0, %v867
      %v876 = vsub.f32 0.0, %v868
      %v877 = vmul.f32 %v869, 1.442695
      %v878 = vpow.pop %v877
      %v879 = vmul.f32 %v870, 1.442695
      %v880 = vpow.pop %v879
      %v881 = vmul.f32 %v871, 1.442695
      %v882 = vpow.pop %v881
      %v883 = vmul.f32 %v872, 1.442695
      %v884 = vpow.pop %v883
      %v885 = vmul.f32 %v873, 1.442695
      %v886 = vpow.pop %v885
      %v887 = vmul.f32 %v874, 1.442695
      %v888 = vpow.pop %v887
      %v889 = vmul.f32 %v875, 1.442695
      %v890 = vpow.pop %v889
      %v891 = vmul.f32 %v876, 1.442695
      %v892 = vpow.pop %v891
      %v893 = vadd.f32 %v878, 1.0
      %v894 = vadd.f32 %v880, 1.0
      %v895 = vadd.f32 %v882, 1.0
      %v896 = vadd.f32 %v884, 1.0
      %v897 = vadd.f32 %v886, 1.0
      %v898 = vadd.f32 %v888, 1.0
      %v899 = vadd.f32 %v890, 1.0
      %v900 = vadd.f32 %v892, 1.0
      %v901 = vrcp.pop %v893
      %v902 = vrcp.pop %v894
      %v903 = vrcp.pop %v895
      %v904 = vrcp.pop %v896
      %v905 = vrcp.pop %v897
      %v906 = vrcp.pop %v898
      %v907 = vrcp.pop %v899
      %v908 = vrcp.pop %v900
      %v909 = vmul.f32 %v861, %v901
      %v910 = vmul.f32 %v862, %v902
      %v911 = vmul.f32 %v863, %v903
      %v912 = vmul.f32 %v864, %v904
      %v913 = vmul.f32 %v865, %v905
      %v914 = vmul.f32 %v866, %v906
      %v915 = vmul.f32 %v867, %v907
      %v916 = vmul.f32 %v868, %v908
      %v917 = vld [vmem:[%s6] sm:$0x1]
      %v918 = vld [vmem:[%s437] sm:$0xff]
      %v919 = vld [vmem:[%s437 + $0x8] sm:$0xff]
      %v920 = vld [vmem:[%s437 + $0x10] sm:$0xff]
      %v921 = vld [vmem:[%s437 + $0x18] sm:$0xff]
      %v922 = vld [vmem:[%s437 + $0x20] sm:$0xff]
      %v923 = vld [vmem:[%s437 + $0x28] sm:$0xff]
      %v924 = vld [vmem:[%s437 + $0x30] sm:$0xff]
      %v925 = vld [vmem:[%s437 + $0x38] sm:$0xff]
      %v927 = vlaneseq
      %v928 = vshrl.u32 %v927, 7
      %v929 = vsub.s32 0, %v928
      %v930 = vrot.slane %v917, %v929
      %v932 = vmul.f32 %v930, %v918
      %v933 = vmul.f32 %v930, %v919
      %v934 = vmul.f32 %v930, %v920
      %v935 = vmul.f32 %v930, %v921
      %v936 = vmul.f32 %v930, %v922
      %v937 = vmul.f32 %v930, %v923
      %v938 = vmul.f32 %v930, %v924
      %v939 = vmul.f32 %v930, %v925
      %v940 = vld [vmem:[#allocation5] sm:$0xff]
      %v941 = vld [vmem:[#allocation5 + $0x8] sm:$0xff]
      %v942 = vld [vmem:[#allocation5 + $0x10] sm:$0xff]
      %v943 = vld [vmem:[#allocation5 + $0x18] sm:$0xff]
      %v944 = vld [vmem:[#allocation5 + $0x20] sm:$0xff]
      %v945 = vld [vmem:[#allocation5 + $0x28] sm:$0xff]
      %v946 = vld [vmem:[#allocation5 + $0x30] sm:$0xff]
      %v947 = vld [vmem:[#allocation5 + $0x38] sm:$0xff]
      %v948 = vadd.f32 %v932, %v940
      %v949 = vadd.f32 %v933, %v941
      %v950 = vadd.f32 %v934, %v942
      %v951 = vadd.f32 %v935, %v943
      %v952 = vadd.f32 %v936, %v944
      %v953 = vadd.f32 %v937, %v945
      %v954 = vadd.f32 %v938, %v946
      %v955 = vadd.f32 %v939, %v947
      %v956 = vmul.f32 %v948, %v909
      %v957 = vmul.f32 %v949, %v910
      %v958 = vmul.f32 %v950, %v911
      %v959 = vmul.f32 %v951, %v912
      %v960 = vmul.f32 %v952, %v913
      %v961 = vmul.f32 %v953, %v914
      %v962 = vmul.f32 %v954, %v915
      %v963 = vmul.f32 %v955, %v916
      %964 = vst.msk [vmem:[%s487] sm:$0xff] %vm591, %v956
      %965 = vst.msk [vmem:[%s487 + $0x8] sm:$0xff] %vm591, %v957
      %966 = vst.msk [vmem:[%s487 + $0x10] sm:$0xff] %vm591, %v958
      %967 = vst.msk [vmem:[%s487 + $0x18] sm:$0xff] %vm591, %v959
      %968 = vst.msk [vmem:[%s487 + $0x20] sm:$0xff] %vm591, %v960
      %969 = vst.msk [vmem:[%s487 + $0x28] sm:$0xff] %vm591, %v961
      %970 = vst.msk [vmem:[%s487 + $0x30] sm:$0xff] %vm591, %v962
      %971 = vst.msk [vmem:[%s487 + $0x38] sm:$0xff] %vm591, %v963
      %s972 = smul.u32 8, %s24
      %p973 = scmp.lt.s32.totalorder %s23, 1
      %s974 = scalar_select %p973, %s23, 1
      %p975 = scmp.lt.s32.totalorder %s972, 7
      %s976 = scalar_select %p975, %s972, 7
      %s977 = smul.addr %s974, 8
      %s978 = sadd.s32 %s976, %s977
      %s979 = smul.addr %s978, 8
      %s980 = scalar_lea.vmem %s8, %s979
      // Predicated region
      $region64: #{_lambda_.60} parent=51 // pred_check
        %p981 = pneg %p254
      $region65: #{_lambda_.60} parent=51 // pred_check_branch
        %983 = sbr.rel (%p981) target = $region67
      $region66: #{_lambda_.60} parent=51 // pred_region
        %s984 = smul.u32 8, %s24
      $region67: #{_lambda_.60} parent=51 // pred_fallthru
        _
    $region52: #{_lambda_.60} parent=5 // pred_fallthru
      _
    %p985 = scmp.le.s32.totalorder 2, %s14
    // Predicated region
    $region68: #{_lambda_.60} parent=5 // pred_check
      %p986 = pneg %p985
    $region69: #{_lambda_.60} parent=5 // pred_check_branch
      %988 = sbr.rel (%p986) target = $region71
    $region70: #{_lambda_.60} parent=5 // pred_region
      %s989 = ssub.s32 %s14, 2
      // Predicated region
      $region72: #{_lambda_.60} parent=70 // pred_check
        %p990 = pneg %p260
      $region73: #{_lambda_.60} parent=70 // pred_check_branch
        %992 = sbr.rel (%p990) target = $region75
      $region74: #{_lambda_.60} parent=70 // pred_region
        %s993 = smul.u32 8, %s26
        %p994 = scmp.lt.s32.totalorder %s25, 1
        %s995 = scalar_select %p994, %s25, 1
        %p996 = scmp.lt.s32.totalorder %s993, 7
        %s997 = scalar_select %p996, %s993, 7
        %s998 = smul.addr %s995, 8
        %s999 = sadd.s32 %s997, %s998
        %s1000 = smul.addr %s999, 8
        %s1001 = scalar_lea.vmem %s8, %s1000
      $region75: #{_lambda_.60} parent=70 // pred_fallthru
        _
    $region71: #{_lambda_.60} parent=5 // pred_fallthru
      _
  $region6: #{_lambda_.60} parent=0 // loop_footer
    %s18 = sadd.s32 1, %s14
  $region7: #{_lambda_.60} parent=0 // loop_footer_branch
    %13 = sbr.rel target = $region3
  $region8: #{_lambda_.60} parent=0 // loop_exit
    _

// kernel: _lambda_.68
$region0: #{_lambda_.68}
  #allocation0 [shape = 'u32[]', space=smem, size = 0x4, offset = 0x4, fixed_abs, tag = 'smem constant byte address 0x4 - core index']
  #allocation1 [shape = 'u32[144,128]{1,0:T(1,128)}', space=vmem, size = 0x12000, scoped, tag = 'internal scratch']
  %s0 = inlined_call_operand.vmem [shape: f32[128,16], index: 0, kind: input, shape index: {}]
  %s1 = inlined_call_operand.vmem [shape: f32[128,16], index: 1, kind: input, shape index: {}]
  %s2 = inlined_call_operand.vmem [shape: f32[1,16], index: 2, kind: input, shape index: {}]
  %s3 = inlined_call_operand.vmem [shape: f32[128,16], index: 3, kind: output, shape index: {0}]
  %s4 = inlined_call_operand.hbm [shape: f32[128,16], index: 4, kind: output, shape index: {1}]
  %5 = xla_tuple %s3, %s4
  %s6 = sld [smem:[#allocation0]]
  $region30: #{_lambda_.68} parent=0
    _
  %s8 = ssub.s32 1, %s6
  %s9 = scalar_select 0, %s8, %s6
  $region1: #{_lambda_.68} parent=0
    #allocation2 [shape = 'u8[65536]{0}', space=vmem, size = 0x10000, scoped, tag = 'output window, operand 1, single buffered']
    #allocation3 [shape = 's32[1]{0}', space=sflag, size = 0x4, scoped, tag = 'scoped memory for _lambda_.68']
    %10 = vsyncpa [#allocation3], 0
    // Predicated region
    $region2: #{_lambda_.68} parent=1 // pred_check
      _
    $region3: #{_lambda_.68} parent=1 // pred_check_branch
      %12 = sbr.rel (0) target = $region5
    $region4: #{_lambda_.68} parent=1 // pred_region
      _
    $region5: #{_lambda_.68} parent=1 // pred_fallthru
      _
    // Predicated region
    $region6: #{_lambda_.68} parent=1 // pred_check
      _
    $region7: #{_lambda_.68} parent=1 // pred_check_branch
      %14 = sbr.rel (0) target = $region9
    $region8: #{_lambda_.68} parent=1 // pred_region
      _
    $region9: #{_lambda_.68} parent=1 // pred_fallthru
      _
    // Predicated region
    $region10: #{_lambda_.68} parent=1 // pred_check
      _
    $region11: #{_lambda_.68} parent=1 // pred_check_branch
      %16 = sbr.rel (0) target = $region13
    $region12: #{_lambda_.68} parent=1 // pred_region
      _
    $region13: #{_lambda_.68} parent=1 // pred_fallthru
      _
    %v17 = vld [vmem:[%s0] sm:$0xff]
    %v18 = vld [vmem:[%s0 + $0x8] sm:$0xff]
    %v19 = vld [vmem:[%s0 + $0x10] sm:$0xff]
    %v20 = vld [vmem:[%s0 + $0x18] sm:$0xff]
    %v21 = vld [vmem:[%s0 + $0x20] sm:$0xff]
    %v22 = vld [vmem:[%s0 + $0x28] sm:$0xff]
    %v23 = vld [vmem:[%s0 + $0x30] sm:$0xff]
    %v24 = vld [vmem:[%s0 + $0x38] sm:$0xff]
    %v25 = vld [vmem:[%s0 + $0x40] sm:$0xff]
    %v26 = vld [vmem:[%s0 + $0x48] sm:$0xff]
    %v27 = vld [vmem:[%s0 + $0x50] sm:$0xff]
    %v28 = vld [vmem:[%s0 + $0x58] sm:$0xff]
    %v29 = vld [vmem:[%s0 + $0x60] sm:$0xff]
    %v30 = vld [vmem:[%s0 + $0x68] sm:$0xff]
    %v31 = vld [vmem:[%s0 + $0x70] sm:$0xff]
    %v32 = vld [vmem:[%s0 + $0x78] sm:$0xff]
    %v33 = vld [vmem:[%s1] sm:$0xff]
    %v34 = vld [vmem:[%s1 + $0x8] sm:$0xff]
    %v35 = vld [vmem:[%s1 + $0x10] sm:$0xff]
    %v36 = vld [vmem:[%s1 + $0x18] sm:$0xff]
    %v37 = vld [vmem:[%s1 + $0x20] sm:$0xff]
    %v38 = vld [vmem:[%s1 + $0x28] sm:$0xff]
    %v39 = vld [vmem:[%s1 + $0x30] sm:$0xff]
    %v40 = vld [vmem:[%s1 + $0x38] sm:$0xff]
    %v41 = vld [vmem:[%s1 + $0x40] sm:$0xff]
    %v42 = vld [vmem:[%s1 + $0x48] sm:$0xff]
    %v43 = vld [vmem:[%s1 + $0x50] sm:$0xff]
    %v44 = vld [vmem:[%s1 + $0x58] sm:$0xff]
    %v45 = vld [vmem:[%s1 + $0x60] sm:$0xff]
    %v46 = vld [vmem:[%s1 + $0x68] sm:$0xff]
    %v47 = vld [vmem:[%s1 + $0x70] sm:$0xff]
    %v48 = vld [vmem:[%s1 + $0x78] sm:$0xff]
    %v49 = vadd.f32 %v17, %v33
    %v50 = vadd.f32 %v18, %v34
    %v51 = vadd.f32 %v19, %v35
    %v52 = vadd.f32 %v20, %v36
    %v53 = vadd.f32 %v21, %v37
    %v54 = vadd.f32 %v22, %v38
    %v55 = vadd.f32 %v23, %v39
    %v56 = vadd.f32 %v24, %v40
    %v57 = vadd.f32 %v25, %v41
    %v58 = vadd.f32 %v26, %v42
    %v59 = vadd.f32 %v27, %v43
    %v60 = vadd.f32 %v28, %v44
    %v61 = vadd.f32 %v29, %v45
    %v62 = vadd.f32 %v30, %v46
    %v63 = vadd.f32 %v31, %v47
    %v64 = vadd.f32 %v32, %v48
    %vm65 = vcmask 130048
    %66 = vst.msk [vmem:[#allocation2] sm:$0xff] %vm65, %v49
    %67 = vst.msk [vmem:[#allocation2 + $0x8] sm:$0xff] %vm65, %v50
    %68 = vst.msk [vmem:[#allocation2 + $0x10] sm:$0xff] %vm65, %v51
    %69 = vst.msk [vmem:[#allocation2 + $0x18] sm:$0xff] %vm65, %v52
    %70 = vst.msk [vmem:[#allocation2 + $0x20] sm:$0xff] %vm65, %v53
    %71 = vst.msk [vmem:[#allocation2 + $0x28] sm:$0xff] %vm65, %v54
    %72 = vst.msk [vmem:[#allocation2 + $0x30] sm:$0xff] %vm65, %v55
    %73 = vst.msk [vmem:[#allocation2 + $0x38] sm:$0xff] %vm65, %v56
    %74 = vst.msk [vmem:[#allocation2 + $0x40] sm:$0xff] %vm65, %v57
    %75 = vst.msk [vmem:[#allocation2 + $0x48] sm:$0xff] %vm65, %v58
    %76 = vst.msk [vmem:[#allocation2 + $0x50] sm:$0xff] %vm65, %v59
    %77 = vst.msk [vmem:[#allocation2 + $0x58] sm:$0xff] %vm65, %v60
    %78 = vst.msk [vmem:[#allocation2 + $0x60] sm:$0xff] %vm65, %v61
    %79 = vst.msk [vmem:[#allocation2 + $0x68] sm:$0xff] %vm65, %v62
    %80 = vst.msk [vmem:[#allocation2 + $0x70] sm:$0xff] %vm65, %v63
    %81 = vst.msk [vmem:[#allocation2 + $0x78] sm:$0xff] %vm65, %v64
    %v82 = vmul.f32 %v49, %v49
    %v83 = vmul.f32 %v50, %v50
    %v84 = vmul.f32 %v51, %v51
    %v85 = vmul.f32 %v52, %v52
    %v86 = vmul.f32 %v53, %v53
    %v87 = vmul.f32 %v54, %v54
    %v88 = vmul.f32 %v55, %v55
    %v89 = vmul.f32 %v56, %v56
    %v90 = vmul.f32 %v57, %v57
    %v91 = vmul.f32 %v58, %v58
    %v92 = vmul.f32 %v59, %v59
    %v93 = vmul.f32 %v60, %v60
    %v94 = vmul.f32 %v61, %v61
    %v95 = vmul.f32 %v62, %v62
    %v96 = vmul.f32 %v63, %v63
    %v97 = vmul.f32 %v64, %v64
    %v98 = vsel %vm65, %v82, 0.0
    %99 = vadd.xlane.f32.xlu0 %v98
    %v100 = vpop.xlane.xlu0 %99
    %v101 = vsel %vm65, %v83, 0.0
    %102 = vadd.xlane.f32.xlu0 %v101
    %v103 = vpop.xlane.xlu0 %102
    %v104 = vsel %vm65, %v84, 0.0
    %105 = vadd.xlane.f32.xlu0 %v104
    %v106 = vpop.xlane.xlu0 %105
    %v107 = vsel %vm65, %v85, 0.0
    %108 = vadd.xlane.f32.xlu0 %v107
    %v109 = vpop.xlane.xlu0 %108
    %v110 = vsel %vm65, %v86, 0.0
    %111 = vadd.xlane.f32.xlu0 %v110
    %v112 = vpop.xlane.xlu0 %111
    %v113 = vsel %vm65, %v87, 0.0
    %114 = vadd.xlane.f32.xlu0 %v113
    %v115 = vpop.xlane.xlu0 %114
    %v116 = vsel %vm65, %v88, 0.0
    %117 = vadd.xlane.f32.xlu0 %v116
    %v118 = vpop.xlane.xlu0 %117
    %v119 = vsel %vm65, %v89, 0.0
    %120 = vadd.xlane.f32.xlu0 %v119
    %v121 = vpop.xlane.xlu0 %120
    %v122 = vsel %vm65, %v90, 0.0
    %123 = vadd.xlane.f32.xlu0 %v122
    %v124 = vpop.xlane.xlu0 %123
    %v125 = vsel %vm65, %v91, 0.0
    %126 = vadd.xlane.f32.xlu0 %v125
    %v127 = vpop.xlane.xlu0 %126
    %v128 = vsel %vm65, %v92, 0.0
    %129 = vadd.xlane.f32.xlu0 %v128
    %v130 = vpop.xlane.xlu0 %129
    %v131 = vsel %vm65, %v93, 0.0
    %132 = vadd.xlane.f32.xlu0 %v131
    %v133 = vpop.xlane.xlu0 %132
    %v134 = vsel %vm65, %v94, 0.0
    %135 = vadd.xlane.f32.xlu0 %v134
    %v136 = vpop.xlane.xlu0 %135
    %v137 = vsel %vm65, %v95, 0.0
    %138 = vadd.xlane.f32.xlu0 %v137
    %v139 = vpop.xlane.xlu0 %138
    %v140 = vsel %vm65, %v96, 0.0
    %141 = vadd.xlane.f32.xlu0 %v140
    %v142 = vpop.xlane.xlu0 %141
    %v143 = vsel %vm65, %v97, 0.0
    %144 = vadd.xlane.f32.xlu0 %v143
    %v145 = vpop.xlane.xlu0 %144
    %v146 = vrcp.pop 16.0
    %v147 = vmul.f32 %v100, %v146
    %v148 = vmul.f32 %v103, %v146
    %v149 = vmul.f32 %v106, %v146
    %v150 = vmul.f32 %v109, %v146
    %v151 = vmul.f32 %v112, %v146
    %v152 = vmul.f32 %v115, %v146
    %v153 = vmul.f32 %v118, %v146
    %v154 = vmul.f32 %v121, %v146
    %v155 = vmul.f32 %v124, %v146
    %v156 = vmul.f32 %v127, %v146
    %v157 = vmul.f32 %v130, %v146
    %v158 = vmul.f32 %v133, %v146
    %v159 = vmul.f32 %v136, %v146
    %v160 = vmul.f32 %v139, %v146
    %v161 = vmul.f32 %v142, %v146
    %v162 = vmul.f32 %v145, %v146
    %v163 = vadd.f32 %v147, 1e-05
    %v164 = vadd.f32 %v148, 1e-05
    %v165 = vadd.f32 %v149, 1e-05
    %v166 = vadd.f32 %v150, 1e-05
    %v167 = vadd.f32 %v151, 1e-05
    %v168 = vadd.f32 %v152, 1e-05
    %v169 = vadd.f32 %v153, 1e-05
    %v170 = vadd.f32 %v154, 1e-05
    %v171 = vadd.f32 %v155, 1e-05
    %v172 = vadd.f32 %v156, 1e-05
    %v173 = vadd.f32 %v157, 1e-05
    %v174 = vadd.f32 %v158, 1e-05
    %v175 = vadd.f32 %v159, 1e-05
    %v176 = vadd.f32 %v160, 1e-05
    %v177 = vadd.f32 %v161, 1e-05
    %v178 = vadd.f32 %v162, 1e-05
    %v179 = vrsqrt.pop %v163
    %v180 = vrsqrt.pop %v164
    %v181 = vrsqrt.pop %v165
    %v182 = vrsqrt.pop %v166
    %v183 = vrsqrt.pop %v167
    %v184 = vrsqrt.pop %v168
    %v185 = vrsqrt.pop %v169
    %v186 = vrsqrt.pop %v170
    %v187 = vrsqrt.pop %v171
    %v188 = vrsqrt.pop %v172
    %v189 = vrsqrt.pop %v173
    %v190 = vrsqrt.pop %v174
    %v191 = vrsqrt.pop %v175
    %v192 = vrsqrt.pop %v176
    %v193 = vrsqrt.pop %v177
    %v194 = vrsqrt.pop %v178
    %v195 = vmul.f32 %v49, %v179
    %v196 = vmul.f32 %v50, %v180
    %v197 = vmul.f32 %v51, %v181
    %v198 = vmul.f32 %v52, %v182
    %v199 = vmul.f32 %v53, %v183
    %v200 = vmul.f32 %v54, %v184
    %v201 = vmul.f32 %v55, %v185
    %v202 = vmul.f32 %v56, %v186
    %v203 = vmul.f32 %v57, %v187
    %v204 = vmul.f32 %v58, %v188
    %v205 = vmul.f32 %v59, %v189
    %v206 = vmul.f32 %v60, %v190
    %v207 = vmul.f32 %v61, %v191
    %v208 = vmul.f32 %v62, %v192
    %v209 = vmul.f32 %v63, %v193
    %v210 = vmul.f32 %v64, %v194
    %v211 = vld [vmem:[%s2] sm:$0x1]
    %v213 = vlaneseq
    %v214 = vshrl.u32 %v213, 7
    %v215 = vsub.s32 0, %v214
    %v216 = vrot.slane %v211, %v215
    %v218 = vmul.f32 %v195, %v216
    %v219 = vmul.f32 %v196, %v216
    %v220 = vmul.f32 %v197, %v216
    %v221 = vmul.f32 %v198, %v216
    %v222 = vmul.f32 %v199, %v216
    %v223 = vmul.f32 %v200, %v216
    %v224 = vmul.f32 %v201, %v216
    %v225 = vmul.f32 %v202, %v216
    %v226 = vmul.f32 %v203, %v216
    %v227 = vmul.f32 %v204, %v216
    %v228 = vmul.f32 %v205, %v216
    %v229 = vmul.f32 %v206, %v216
    %v230 = vmul.f32 %v207, %v216
    %v231 = vmul.f32 %v208, %v216
    %v232 = vmul.f32 %v209, %v216
    %v233 = vmul.f32 %v210, %v216
    %234 = vst.msk [vmem:[%s3] sm:$0xff] %vm65, %v218
    %235 = vst.msk [vmem:[%s3 + $0x8] sm:$0xff] %vm65, %v219
    %236 = vst.msk [vmem:[%s3 + $0x10] sm:$0xff] %vm65, %v220
    %237 = vst.msk [vmem:[%s3 + $0x18] sm:$0xff] %vm65, %v221
    %238 = vst.msk [vmem:[%s3 + $0x20] sm:$0xff] %vm65, %v222
    %239 = vst.msk [vmem:[%s3 + $0x28] sm:$0xff] %vm65, %v223
    %240 = vst.msk [vmem:[%s3 + $0x30] sm:$0xff] %vm65, %v224
    %241 = vst.msk [vmem:[%s3 + $0x38] sm:$0xff] %vm65, %v225
    %242 = vst.msk [vmem:[%s3 + $0x40] sm:$0xff] %vm65, %v226
    %243 = vst.msk [vmem:[%s3 + $0x48] sm:$0xff] %vm65, %v227
    %244 = vst.msk [vmem:[%s3 + $0x50] sm:$0xff] %vm65, %v228
    %245 = vst.msk [vmem:[%s3 + $0x58] sm:$0xff] %vm65, %v229
    %246 = vst.msk [vmem:[%s3 + $0x60] sm:$0xff] %vm65, %v230
    %247 = vst.msk [vmem:[%s3 + $0x68] sm:$0xff] %vm65, %v231
    %248 = vst.msk [vmem:[%s3 + $0x70] sm:$0xff] %vm65, %v232
    %249 = vst.msk [vmem:[%s3 + $0x78] sm:$0xff] %vm65, %v233
    // Predicated region
    $region14: #{_lambda_.68} parent=1 // pred_check
      _
    $region15: #{_lambda_.68} parent=1 // pred_check_branch
      %251 = sbr.rel (0) target = $region17
    $region16: #{_lambda_.68} parent=1 // pred_region
      _
    $region17: #{_lambda_.68} parent=1 // pred_fallthru
      _
    // Predicated region
    $region18: #{_lambda_.68} parent=1 // pred_check
      _
    $region19: #{_lambda_.68} parent=1 // pred_check_branch
      %253 = sbr.rel (0) target = $region21
    $region20: #{_lambda_.68} parent=1 // pred_region
      %s255 = ssub.s32 2048, 2048
      %256 = vsyncadd [#allocation3], %s255
      %s257 = sshll.u32 [#allocation2], 4
      %s258 = int_to_ptr.vmem [resolvable:$true] %s257
      %263 = dma.vmem_to_hbm [thread:$0]  %s258, 2048, %s4, [#allocation3], 128, 128, 8
    $region21: #{_lambda_.68} parent=1 // pred_fallthru
      _
    // Predicated region
    $region22: #{_lambda_.68} parent=1 // pred_check
      _
    $region23: #{_lambda_.68} parent=1 // pred_check_branch
      %265 = sbr.rel (0) target = $region25
    $region24: #{_lambda_.68} parent=1 // pred_region
      _
    $region25: #{_lambda_.68} parent=1 // pred_fallthru
      _
    // Predicated region
    $region26: #{_lambda_.68} parent=1 // pred_check
      _
    $region27: #{_lambda_.68} parent=1 // pred_check_branch
      %267 = sbr.rel (0) target = $region29
    $region28: #{_lambda_.68} parent=1 // pred_region
      %268 = dma.done [#allocation3], 2048
    $region29: #{_lambda_.68} parent=1 // pred_fallthru
      _
    %269 = vsyncpa [#allocation3], 1

// kernel: _lambda_.69
$region0: #{_lambda_.69}
  #allocation0 [shape = 'u32[]', space=smem, size = 0x4, offset = 0x4, fixed_abs, tag = 'smem constant byte address 0x4 - core index']
  #allocation1 [shape = 'u32[144,128]{1,0:T(1,128)}', space=vmem, size = 0x12000, scoped, tag = 'internal scratch']
  #allocation2 [shape = 'f32[32,128]{1,0:T(8,128)}', space=vmem, size = 0x4000, scoped, tag = 'scratch operand']
  %s0 = inlined_call_operand.vmem [shape: bf16[32,128], index: 0, kind: input, shape index: {}]
  %s1 = inlined_call_operand.vmem [shape: bf16[128,128], index: 1, kind: input, shape index: {}]
  %s2 = inlined_call_operand.vmem [shape: f32[32,128], index: 2, kind: output, shape index: {}]
  %s3 = sld [smem:[#allocation0]]
  $region26: #{_lambda_.69} parent=0
    _
  %s5 = ssub.s32 1, %s3
  %s6 = scalar_select 0, %s5, %s3
  // Predicated region
  $region2: #{_lambda_.69} parent=0 // pred_check
    _
  $region3: #{_lambda_.69} parent=0 // pred_check_branch
    %8 = sbr.rel (0) target = $region5
  $region4: #{_lambda_.69} parent=0 // pred_region
    _
  $region5: #{_lambda_.69} parent=0 // pred_fallthru
    _
  // Predicated region
  $region6: #{_lambda_.69} parent=0 // pred_check
    _
  $region7: #{_lambda_.69} parent=0 // pred_check_branch
    %10 = sbr.rel (0) target = $region9
  $region8: #{_lambda_.69} parent=0 // pred_region
    _
  $region9: #{_lambda_.69} parent=0 // pred_fallthru
    _
  %p12 = scmp.eq.s32.totalorder 0, 0
  // Predicated region
  $region10: #{_lambda_.69} parent=0 // pred_check
    %p13 = pneg %p12
  $region11: #{_lambda_.69} parent=0 // pred_check_branch
    %15 = sbr.rel (%p13) target = $region13
  $region12: #{_lambda_.69} parent=0 // pred_region
    %16 = vst [vmem:[#allocation2] sm:$0xff] 0.0
    %17 = vst [vmem:[#allocation2 + $0x8] sm:$0xff] 0.0
    %18 = vst [vmem:[#allocation2 + $0x10] sm:$0xff] 0.0
    %19 = vst [vmem:[#allocation2 + $0x18] sm:$0xff] 0.0
  $region13: #{_lambda_.69} parent=0 // pred_fallthru
    _
  %v20 = vld [vmem:[#allocation2] sm:$0xff]
  %v21 = vld [vmem:[#allocation2 + $0x8] sm:$0xff]
  %v22 = vld [vmem:[#allocation2 + $0x10] sm:$0xff]
  %v23 = vld [vmem:[#allocation2 + $0x18] sm:$0xff]
  %v24 = vld [vmem:[%s0] sm:$0xf]
  %v25 = vld [vmem:[%s0 + $0x4] sm:$0xf]
  %v26 = vld [vmem:[%s0 + $0x8] sm:$0xf]
  %v27 = vld [vmem:[%s0 + $0xc] sm:$0xf]
  %v28 = vld [vmem:[%s1] sm:$0xf]
  %v29 = vld [vmem:[%s1 + $0x4] sm:$0xf]
  %v30 = vld [vmem:[%s1 + $0x8] sm:$0xf]
  %v31 = vld [vmem:[%s1 + $0xc] sm:$0xf]
  %v32 = vld [vmem:[%s1 + $0x10] sm:$0xf]
  %v33 = vld [vmem:[%s1 + $0x14] sm:$0xf]
  %v34 = vld [vmem:[%s1 + $0x18] sm:$0xf]
  %v35 = vld [vmem:[%s1 + $0x1c] sm:$0xf]
  %v36 = vld [vmem:[%s1 + $0x20] sm:$0xf]
  %v37 = vld [vmem:[%s1 + $0x24] sm:$0xf]
  %v38 = vld [vmem:[%s1 + $0x28] sm:$0xf]
  %v39 = vld [vmem:[%s1 + $0x2c] sm:$0xf]
  %v40 = vld [vmem:[%s1 + $0x30] sm:$0xf]
  %v41 = vld [vmem:[%s1 + $0x34] sm:$0xf]
  %v42 = vld [vmem:[%s1 + $0x38] sm:$0xf]
  %v43 = vld [vmem:[%s1 + $0x3c] sm:$0xf]
  %v48 = vunpack.c.l.b16 %v24
  %v49 = vunpack.c.l.b16 %v25
  %v50 = vunpack.c.l.b16 %v26
  %v51 = vunpack.c.l.b16 %v27
  %v52 = vpack.c.b16 %v49, %v48
  %v53 = vpack.c.b16 %v51, %v50
  %v72 = vunpack.c.l.b16 %v28
  %v73 = vunpack.c.l.b16 %v29
  %v74 = vunpack.c.l.b16 %v30
  %v75 = vunpack.c.l.b16 %v31
  %v76 = vunpack.c.l.b16 %v32
  %v77 = vunpack.c.l.b16 %v33
  %v78 = vunpack.c.l.b16 %v34
  %v79 = vunpack.c.l.b16 %v35
  %v80 = vunpack.c.l.b16 %v36
  %v81 = vunpack.c.l.b16 %v37
  %v82 = vunpack.c.l.b16 %v38
  %v83 = vunpack.c.l.b16 %v39
  %v84 = vunpack.c.l.b16 %v40
  %v85 = vunpack.c.l.b16 %v41
  %v86 = vunpack.c.l.b16 %v42
  %v87 = vunpack.c.l.b16 %v43
  %v88 = vpack.c.b16 %v73, %v72
  %v89 = vpack.c.b16 %v75, %v74
  %v90 = vpack.c.b16 %v77, %v76
  %v91 = vpack.c.b16 %v79, %v78
  %v92 = vpack.c.b16 %v81, %v80
  %v93 = vpack.c.b16 %v83, %v82
  %v94 = vpack.c.b16 %v85, %v84
  %v95 = vpack.c.b16 %v87, %v86
  %104 = vmatprep.subr.bf16.mxu0 0
  %105 = vmatpush1.bf16.msra.mxu0 %v88
  %106 = vmatprep.subr.bf16.mxu0 0
  %107 = vmatpush1.bf16.msra.mxu0 %v89
  %108 = vmatprep.subr.bf16.mxu0 0
  %109 = vmatpush1.bf16.msra.mxu0 %v90
  %110 = vmatprep.subr.bf16.mxu0 0
  %111 = vmatpush1.bf16.msra.mxu0 %v91
  %112 = vmatprep.subr.bf16.mxu0 0
  %113 = vmatpush1.bf16.msra.mxu0 %v92
  %114 = vmatprep.subr.bf16.mxu0 0
  %115 = vmatpush1.bf16.msra.mxu0 %v93
  %116 = vmatprep.subr.bf16.mxu0 0
  %117 = vmatpush1.bf16.msra.mxu0 %v94
  %118 = vmatprep.subr.bf16.mxu0 0
  %119 = vmatpush1.bf16.msra.mxu0 %v95
  %120 = vmatprep.subr.bf16.mxu0 0
  %121 = vmatpush1.bf16.msra.mxu0 0
  %122 = vmatprep.subr.bf16.mxu0 0
  %123 = vmatpush1.bf16.msra.mxu0 0
  %124 = vmatprep.subr.bf16.mxu0 0
  %125 = vmatpush1.bf16.msra.mxu0 0
  %126 = vmatprep.subr.bf16.mxu0 0
  %127 = vmatpush1.bf16.msra.mxu0 0
  %128 = vmatprep.subr.bf16.mxu0 0
  %129 = vmatpush1.bf16.msra.mxu0 0
  %130 = vmatprep.subr.bf16.mxu0 0
  %131 = vmatpush1.bf16.msra.mxu0 0
  %132 = vmatprep.subr.bf16.mxu0 0
  %133 = vmatpush1.bf16.msra.mxu0 0
  %134 = vmatprep.subr.bf16.mxu0 0
  %135 = vmatpush1.bf16.msra.mxu0 0
  %136 = vmatprep.mubr.bf16.mxu0 0
  %137 = vmatmul.mubr.bf16.gmra.mrb[0].mxu0 %v52
  %v138 = vpop.f32.mrb[0].mxu0
  %v139 = vadd.f32 0.0, %v138
  %v140 = vpop.f32.mrb[0].mxu0
  %v141 = vpop.f32.mrb[0].mxu0
  %v142 = vadd.f32 0.0, %v141
  %v143 = vpop.f32.mrb[0].mxu0
  %144 = vmatprep.mubr.bf16.mxu0 0
  %145 = vmatmul.mubr.bf16.gmra.mrb[0].mxu0 %v53
  %v146 = vpop.f32.mrb[0].mxu0
  %v147 = vadd.f32 0.0, %v146
  %v148 = vpop.f32.mrb[0].mxu0
  %v149 = vpop.f32.mrb[0].mxu0
  %v150 = vadd.f32 0.0, %v149
  %v151 = vpop.f32.mrb[0].mxu0
  %152 = vdwg.mxu0
  %v153 = vadd.f32 %v20, %v139
  %v154 = vadd.f32 %v21, %v142
  %v155 = vadd.f32 %v22, %v147
  %v156 = vadd.f32 %v23, %v150
  %157 = vst [vmem:[#allocation2] sm:$0xff] %v153
  %158 = vst [vmem:[#allocation2 + $0x8] sm:$0xff] %v154
  %159 = vst [vmem:[#allocation2 + $0x10] sm:$0xff] %v155
  %160 = vst [vmem:[#allocation2 + $0x18] sm:$0xff] %v156
  // Predicated region
  $region14: #{_lambda_.69} parent=0 // pred_check
    %p161 = pneg %p12
  $region15: #{_lambda_.69} parent=0 // pred_check_branch
    %163 = sbr.rel (%p161) target = $region17
  $region16: #{_lambda_.69} parent=0 // pred_region
    %v164 = vld [vmem:[#allocation2] sm:$0xff]
    %v165 = vld [vmem:[#allocation2 + $0x8] sm:$0xff]
    %v166 = vld [vmem:[#allocation2 + $0x10] sm:$0xff]
    %v167 = vld [vmem:[#allocation2 + $0x18] sm:$0xff]
    %168 = vst [vmem:[%s2] sm:$0xff] %v164
    %169 = vst [vmem:[%s2 + $0x8] sm:$0xff] %v165
    %170 = vst [vmem:[%s2 + $0x10] sm:$0xff] %v166
    %171 = vst [vmem:[%s2 + $0x18] sm:$0xff] %v167
  $region17: #{_lambda_.69} parent=0 // pred_fallthru
    _
  // Predicated region
  $region18: #{_lambda_.69} parent=0 // pred_check
    _
  $region19: #{_lambda_.69} parent=0 // pred_check_branch
    %173 = sbr.rel (0) target = $region21
  $region20: #{_lambda_.69} parent=0 // pred_region
    _
  $region21: #{_lambda_.69} parent=0 // pred_fallthru
    _
  // Predicated region
  $region22: #{_lambda_.69} parent=0 // pred_check
    _
  $region23: #{_lambda_.69} parent=0 // pred_check_branch
    %175 = sbr.rel (0) target = $region25
  $region24: #{_lambda_.69} parent=0 // pred_region
    _
  $region25: #{_lambda_.69} parent=0 // pred_fallthru
    _

// kernel: _lambda_.70
$region0: #{_lambda_.70}
  #allocation0 [shape = 'u32[]', space=smem, size = 0x4, offset = 0x4, fixed_abs, tag = 'smem constant byte address 0x4 - core index']
  #allocation1 [shape = 'u32[144,128]{1,0:T(1,128)}', space=vmem, size = 0x12000, scoped, tag = 'internal scratch']
  %s0 = inlined_call_operand.vmem [shape: f32[32,32], index: 0, kind: input, shape index: {}]
  %s1 = inlined_call_operand.vmem [shape: f32[32,32], index: 1, kind: input, shape index: {}]
  %s2 = inlined_call_operand.vmem [shape: f32[1,32], index: 2, kind: input, shape index: {}]
  %s3 = inlined_call_operand.vmem [shape: f32[32,32], index: 3, kind: output, shape index: {0}]
  %s4 = inlined_call_operand.vmem [shape: f32[32,32], index: 4, kind: output, shape index: {1}]
  %5 = xla_tuple %s3, %s4
  %s6 = sld [smem:[#allocation0]]
  $region30: #{_lambda_.70} parent=0
    _
  %s8 = ssub.s32 1, %s6
  %s9 = scalar_select 0, %s8, %s6
  // Predicated region
  $region2: #{_lambda_.70} parent=0 // pred_check
    _
  $region3: #{_lambda_.70} parent=0 // pred_check_branch
    %11 = sbr.rel (0) target = $region5
  $region4: #{_lambda_.70} parent=0 // pred_region
    _
  $region5: #{_lambda_.70} parent=0 // pred_fallthru
    _
  // Predicated region
  $region6: #{_lambda_.70} parent=0 // pred_check
    _
  $region7: #{_lambda_.70} parent=0 // pred_check_branch
    %13 = sbr.rel (0) target = $region9
  $region8: #{_lambda_.70} parent=0 // pred_region
    _
  $region9: #{_lambda_.70} parent=0 // pred_fallthru
    _
  // Predicated region
  $region10: #{_lambda_.70} parent=0 // pred_check
    _
  $region11: #{_lambda_.70} parent=0 // pred_check_branch
    %15 = sbr.rel (0) target = $region13
  $region12: #{_lambda_.70} parent=0 // pred_region
    _
  $region13: #{_lambda_.70} parent=0 // pred_fallthru
    _
  %v16 = vld [vmem:[%s0] sm:$0xff]
  %v17 = vld [vmem:[%s0 + $0x8] sm:$0xff]
  %v18 = vld [vmem:[%s0 + $0x10] sm:$0xff]
  %v19 = vld [vmem:[%s0 + $0x18] sm:$0xff]
  %v20 = vld [vmem:[%s1] sm:$0xff]
  %v21 = vld [vmem:[%s1 + $0x8] sm:$0xff]
  %v22 = vld [vmem:[%s1 + $0x10] sm:$0xff]
  %v23 = vld [vmem:[%s1 + $0x18] sm:$0xff]
  %v24 = vadd.f32 %v16, %v20
  %v25 = vadd.f32 %v17, %v21
  %v26 = vadd.f32 %v18, %v22
  %v27 = vadd.f32 %v19, %v23
  %vm28 = vcmask 261120
  %29 = vst.msk [vmem:[%s4] sm:$0xff] %vm28, %v24
  %30 = vst.msk [vmem:[%s4 + $0x8] sm:$0xff] %vm28, %v25
  %31 = vst.msk [vmem:[%s4 + $0x10] sm:$0xff] %vm28, %v26
  %32 = vst.msk [vmem:[%s4 + $0x18] sm:$0xff] %vm28, %v27
  %v33 = vmul.f32 %v24, %v24
  %v34 = vmul.f32 %v25, %v25
  %v35 = vmul.f32 %v26, %v26
  %v36 = vmul.f32 %v27, %v27
  %v37 = vsel %vm28, %v33, 0.0
  %38 = vadd.xlane.f32.xlu0 %v37
  %v39 = vpop.xlane.xlu0 %38
  %v40 = vsel %vm28, %v34, 0.0
  %41 = vadd.xlane.f32.xlu0 %v40
  %v42 = vpop.xlane.xlu0 %41
  %v43 = vsel %vm28, %v35, 0.0
  %44 = vadd.xlane.f32.xlu0 %v43
  %v45 = vpop.xlane.xlu0 %44
  %v46 = vsel %vm28, %v36, 0.0
  %47 = vadd.xlane.f32.xlu0 %v46
  %v48 = vpop.xlane.xlu0 %47
  %v49 = vrcp.pop 32.0
  %v50 = vmul.f32 %v39, %v49
  %v51 = vmul.f32 %v42, %v49
  %v52 = vmul.f32 %v45, %v49
  %v53 = vmul.f32 %v48, %v49
  %v54 = vadd.f32 %v50, 1e-05
  %v55 = vadd.f32 %v51, 1e-05
  %v56 = vadd.f32 %v52, 1e-05
  %v57 = vadd.f32 %v53, 1e-05
  %v58 = vrsqrt.pop %v54
  %v59 = vrsqrt.pop %v55
  %v60 = vrsqrt.pop %v56
  %v61 = vrsqrt.pop %v57
  %v62 = vmul.f32 %v24, %v58
  %v63 = vmul.f32 %v25, %v59
  %v64 = vmul.f32 %v26, %v60
  %v65 = vmul.f32 %v27, %v61
  %v66 = vld [vmem:[%s2] sm:$0x1]
  %v68 = vlaneseq
  %v69 = vshrl.u32 %v68, 7
  %v70 = vsub.s32 0, %v69
  %v71 = vrot.slane %v66, %v70
  %v73 = vmul.f32 %v62, %v71
  %v74 = vmul.f32 %v63, %v71
  %v75 = vmul.f32 %v64, %v71
  %v76 = vmul.f32 %v65, %v71
  %77 = vst.msk [vmem:[%s3] sm:$0xff] %vm28, %v73
  %78 = vst.msk [vmem:[%s3 + $0x8] sm:$0xff] %vm28, %v74
  %79 = vst.msk [vmem:[%s3 + $0x10] sm:$0xff] %vm28, %v75
  %80 = vst.msk [vmem:[%s3 + $0x18] sm:$0xff] %vm28, %v76
  // Predicated region
  $region14: #{_lambda_.70} parent=0 // pred_check
    _
  $region15: #{_lambda_.70} parent=0 // pred_check_branch
    %82 = sbr.rel (0) target = $region17
  $region16: #{_lambda_.70} parent=0 // pred_region
    _
  $region17: #{_lambda_.70} parent=0 // pred_fallthru
    _
  // Predicated region
  $region18: #{_lambda_.70} parent=0 // pred_check
    _
  $region19: #{_lambda_.70} parent=0 // pred_check_branch
    %84 = sbr.rel (0) target = $region21
  $region20: #{_lambda_.70} parent=0 // pred_region
    _
  $region21: #{_lambda_.70} parent=0 // pred_fallthru
    _
  // Predicated region
  $region22: #{_lambda_.70} parent=0 // pred_check
    _
  $region23: #{_lambda_.70} parent=0 // pred_check_branch
    %86 = sbr.rel (0) target = $region25
  $region24: #{_lambda_.70} parent=0 // pred_region
    _
  $region25: #{_lambda_.70} parent=0 // pred_fallthru
    _
  // Predicated region
  $region26: #{_lambda_.70} parent=0 // pred_check
    _
  $region27: #{_lambda_.70} parent=0 // pred_check_branch
    %88 = sbr.rel (0) target = $region29
  $region28: #{_lambda_.70} parent=0 // pred_region
    _
  $region29: #{_lambda_.70} parent=0 // pred_fallthru
    _

// kernel: _lambda_.72
$region0: #{_lambda_.72}
  #allocation0 [shape = 'u32[]', space=smem, size = 0x4, offset = 0x4, fixed_abs, tag = 'smem constant byte address 0x4 - core index']
  #allocation1 [shape = 'u32[144,128]{1,0:T(1,128)}', space=vmem, size = 0x12000, scoped, tag = 'internal scratch']
  #allocation2 [shape = 'f32[19,64]{1,0:T(8,128)}', space=vmem, size = 0x3000, scoped, tag = 'scratch operand']
  %s0 = inlined_call_operand.vmem [shape: f32[2,16,64], index: 0, kind: input, shape index: {}]
  %s1 = inlined_call_operand.vmem [shape: f32[4,64], index: 1, kind: input, shape index: {}]
  %s2 = inlined_call_operand.vmem [shape: f32[1,64], index: 2, kind: input, shape index: {}]
  %s3 = inlined_call_operand.vmem [shape: f32[2,16,64], index: 3, kind: output, shape index: {}]
  %s4 = sld [smem:[#allocation0]]
  $region45: #{_lambda_.72} parent=0
    _
  %s6 = ssub.s32 1, %s4
  %s7 = scalar_select 0, %s6, %s4
  loop: start=0, step=1, limit=4
  $region2: #{_lambda_.72} parent=0 // loop_pre_header
    _
  $region3: #{_lambda_.72} parent=0 // loop_header
    %s9 = sphi 0, %s13
    %p10 = scmp.ge.s32.totalorder %s9, 4
    %s19 = sphi 0, %s21
    %s22 = sphi 0, %s19
    %s23 = sphi 0, %s22
    %s39 = sphi 0, %s23
    %s43 = sphi 0, %s43
    %s45 = sphi 0, %s43
    %s46 = sphi 0, %s45
    %s60 = sphi 0, %s46
    %s64 = sphi 0, %s64
    %s66 = sphi 0, %s64
    %s67 = sphi 0, %s66
    %s81 = sphi 0, %s67
    %s87 = sphi 0, %s89
    %s90 = sphi 0, %s87
    %s91 = sphi 0, %s90
    %s107 = sphi 0, %s91
  $region4: #{_lambda_.72} parent=0 // loop_header_branch
    %12 = sbr.rel (%p10) target = $region8
  $region5: #{_lambda_.72} parent=0 // loop_body
    %s14 = ssub.s32 %s9, 1
    %s15 = ssub.s32 %s9, 2
    %s16 = sadd.s32 %s9, 1
    %s17 = ssub.s32 %s9, %s16
    %p18 = scmp.eq.s32.totalorder %s17, 0
    %s20 = sadd.s32 %s19, 1
    %s21 = scalar_select %p18, %s19, %s20
    %p24 = pneg %p18
    %p25 = scmp.eq.s32.totalorder %s9, 1
    %p26 = por %p24, %p25
    %p27 = scmp.ne.s32.totalorder %s19, %s22
    %p28 = scmp.eq.s32.totalorder %s9, 0
    %p29 = por %p27, %p28
    %p30 = scmp.ne.s32.totalorder %s19, %s22
    %p31 = scmp.eq.s32.totalorder %s14, 1
    %p32 = por %p30, %p31
    %p33 = scmp.ne.s32.totalorder %s22, %s23
    %p34 = scmp.eq.s32.totalorder %s14, 0
    %p35 = por %p33, %p34
    %p36 = scmp.ne.s32.totalorder %s22, %s23
    %p37 = scmp.eq.s32.totalorder %s15, 1
    %p38 = por %p36, %p37
    %p40 = scmp.ne.s32.totalorder %s23, %s39
    %p41 = scmp.eq.s32.totalorder %s15, 0
    %p42 = por %p40, %p41
    %s44 = sadd.s32 %s43, 1
    %p47 = scmp.eq.s32.totalorder %s9, 1
    %p48 = scmp.ne.s32.totalorder %s43, %s45
    %p49 = scmp.eq.s32.totalorder %s9, 0
    %p50 = por %p48, %p49
    %p51 = scmp.ne.s32.totalorder %s43, %s45
    %p52 = scmp.eq.s32.totalorder %s14, 1
    %p53 = por %p51, %p52
    %p54 = scmp.ne.s32.totalorder %s45, %s46
    %p55 = scmp.eq.s32.totalorder %s14, 0
    %p56 = por %p54, %p55
    %p57 = scmp.ne.s32.totalorder %s45, %s46
    %p58 = scmp.eq.s32.totalorder %s15, 1
    %p59 = por %p57, %p58
    %p61 = scmp.ne.s32.totalorder %s46, %s60
    %p62 = scmp.eq.s32.totalorder %s15, 0
    %p63 = por %p61, %p62
    %s65 = sadd.s32 %s64, 1
    %p68 = scmp.eq.s32.totalorder %s9, 1
    %p69 = scmp.ne.s32.totalorder %s64, %s66
    %p70 = scmp.eq.s32.totalorder %s9, 0
    %p71 = por %p69, %p70
    %p72 = scmp.ne.s32.totalorder %s64, %s66
    %p73 = scmp.eq.s32.totalorder %s14, 1
    %p74 = por %p72, %p73
    %p75 = scmp.ne.s32.totalorder %s66, %s67
    %p76 = scmp.eq.s32.totalorder %s14, 0
    %p77 = por %p75, %p76
    %p78 = scmp.ne.s32.totalorder %s66, %s67
    %p79 = scmp.eq.s32.totalorder %s15, 1
    %p80 = por %p78, %p79
    %p82 = scmp.ne.s32.totalorder %s67, %s81
    %p83 = scmp.eq.s32.totalorder %s15, 0
    %p84 = por %p82, %p83
    %s85 = ssub.s32 %s9, %s16
    %p86 = scmp.eq.s32.totalorder %s85, 0
    %s88 = sadd.s32 %s87, 1
    %s89 = scalar_select %p86, %s87, %s88
    %p92 = pneg %p86
    %p93 = scmp.eq.s32.totalorder %s9, 1
    %p94 = por %p92, %p93
    %p95 = scmp.ne.s32.totalorder %s87, %s90
    %p96 = scmp.eq.s32.totalorder %s9, 0
    %p97 = por %p95, %p96
    %p98 = scmp.ne.s32.totalorder %s87, %s90
    %p99 = scmp.eq.s32.totalorder %s14, 1
    %p100 = por %p98, %p99
    %p101 = scmp.ne.s32.totalorder %s90, %s91
    %p102 = scmp.eq.s32.totalorder %s14, 0
    %p103 = por %p101, %p102
    %p104 = scmp.ne.s32.totalorder %s90, %s91
    %p105 = scmp.eq.s32.totalorder %s15, 1
    %p106 = por %p104, %p105
    %p108 = scmp.ne.s32.totalorder %s91, %s107
    %p109 = scmp.eq.s32.totalorder %s15, 0
    %p110 = por %p108, %p109
    %p111 = scmp.le.s32.totalorder 1, %s9
    %p112 = scmp.lt.s32.totalorder %s9, 3
    %p113 = pnand %p111, %p112
    %p114 = pneg %p113
    // Predicated region
    $region9: #{_lambda_.72} parent=5 // pred_check
      _
    $region10: #{_lambda_.72} parent=5 // pred_check_branch
      %116 = sbr.rel (%p113) target = $region12
    $region11: #{_lambda_.72} parent=5 // pred_region
      %s117 = ssub.s32 %s9, 1
      // Predicated region
      $region13: #{_lambda_.72} parent=11 // pred_check
        %p118 = pneg %p56
      $region14: #{_lambda_.72} parent=11 // pred_check_branch
        %120 = sbr.rel (%p118) target = $region16
      $region15: #{_lambda_.72} parent=11 // pred_region
        _
      $region16: #{_lambda_.72} parent=11 // pred_fallthru
        _
      // Predicated region
      $region17: #{_lambda_.72} parent=11 // pred_check
        %p121 = pneg %p77
      $region18: #{_lambda_.72} parent=11 // pred_check_branch
        %123 = sbr.rel (%p121) target = $region20
      $region19: #{_lambda_.72} parent=11 // pred_region
        _
      $region20: #{_lambda_.72} parent=11 // pred_fallthru
        _
    $region12: #{_lambda_.72} parent=5 // pred_fallthru
      _
    %p124 = scmp.lt.s32.totalorder %s9, 2
    // Predicated region
    $region21: #{_lambda_.72} parent=5 // pred_check
      %p125 = pneg %p124
    $region22: #{_lambda_.72} parent=5 // pred_check_branch
      %127 = sbr.rel (%p125) target = $region24
    $region23: #{_lambda_.72} parent=5 // pred_region
      // Predicated region
      $region25: #{_lambda_.72} parent=23 // pred_check
        %p128 = pneg %p29
      $region26: #{_lambda_.72} parent=23 // pred_check_branch
        %130 = sbr.rel (%p128) target = $region28
      $region27: #{_lambda_.72} parent=23 // pred_region
        %p131 = scmp.lt.s32.totalorder %s9, 1
        %s132 = scalar_select %p131, %s9, 1
        %s133 = smul.addr %s132, 2
        %s134 = smul.addr %s133, 8
        %s135 = scalar_lea.vmem %s0, %s134
      $region28: #{_lambda_.72} parent=23 // pred_fallthru
        _
    $region24: #{_lambda_.72} parent=5 // pred_fallthru
      _
    %p136 = scmp.le.s32.totalorder 1, %s9
    %p137 = scmp.lt.s32.totalorder %s9, 3
    %p138 = pnand %p136, %p137
    %p139 = pneg %p138
    // Predicated region
    $region29: #{_lambda_.72} parent=5 // pred_check
      _
    $region30: #{_lambda_.72} parent=5 // pred_check_branch
      %141 = sbr.rel (%p138) target = $region32
    $region31: #{_lambda_.72} parent=5 // pred_region
      %s142 = ssub.s32 %s9, 1
      %p143 = scmp.lt.s32.totalorder %s14, 1
      %s144 = scalar_select %p143, %s14, 1
      %s145 = smul.addr %s144, 2
      %s146 = smul.addr %s145, 8
      %s147 = scalar_lea.vmem %s0, %s146
      %p148 = pneg %p35
      %p149 = pneg %p32
      %p150 = pneg %p56
      %p151 = pneg %p53
      %p152 = pneg %p77
      %p153 = pneg %p74
      %p154 = pneg %p103
      %p155 = pneg %p100
      %p156 = scmp.lt.s32.totalorder %s14, 1
      %s157 = scalar_select %p156, %s14, 1
      %s158 = smul.addr %s157, 2
      %s159 = smul.addr %s158, 8
      %s160 = scalar_lea.vmem %s3, %s159
      %p161 = scmp.lt.s32.totalorder %s14, 1
      %s162 = scalar_select %p161, %s14, 1
      %s163 = smul.addr %s162, 2
      %s164 = smul.addr %s163, 8
      %s165 = scalar_lea.vmem %s0, %s164
      %p166 = scmp.lt.s32.totalorder %s14, 1
      %s167 = scalar_select %p166, %s14, 1
      %s168 = smul.addr %s167, 2
      %s169 = smul.addr %s168, 8
      %s170 = scalar_lea.vmem %s3, %s169
      %vm171 = vcmask 518144
      %172 = vst.msk [vmem:[#allocation2] sm:$0x7] %vm171, 0.0
      %v173 = vld [vmem:[%s165] sm:$0xff]
      %v174 = vld [vmem:[%s165 + $0x8] sm:$0xff]
      %vm175 = vcmask 523264
      %176 = vst.msk [vmem:[#allocation2 + $0x3] sm:$0xff] %vm175, %v173
      %177 = vst.msk [vmem:[#allocation2 + $0xb] sm:$0xff] %vm175, %v174
      %v178 = vld [vmem:[%s2] sm:$0x1]
      %v180 = vlaneseq
      %v181 = vshrl.u32 %v180, 7
      %v182 = vsub.s32 0, %v181
      %v183 = vrot.slane %v178, %v182
      %v185 = vadd.f32 %v183, 0.0
      %v186 = vld [vmem:[#allocation2] sm:$0xff]
      %v187 = vld [vmem:[#allocation2 + $0x8] sm:$0xff]
      %v188 = vld [vmem:[%s1] sm:$0x1]
      %v189 = vlaneseq
      %v190 = vshrl.u32 %v189, 7
      %v191 = vsub.s32 0, %v190
      %v192 = vrot.slane %v188, %v191
      %v193 = vmul.f32 %v186, %v192
      %v194 = vmul.f32 %v187, %v192
      %v195 = vadd.f32 %v185, %v193
      %v196 = vadd.f32 %v185, %v194
      %v197 = vld [vmem:[#allocation2 + $0x1] sm:$0xff]
      %v198 = vld [vmem:[#allocation2 + $0x9] sm:$0xff]
      %v199 = vld [vmem:[%s1 + $0x1] sm:$0x1]
      %v200 = vlaneseq
      %v201 = vshrl.u32 %v200, 7
      %v202 = vsub.s32 0, %v201
      %v203 = vrot.slane %v199, %v202
      %v204 = vmul.f32 %v197, %v203
      %v205 = vmul.f32 %v198, %v203
      %v206 = vadd.f32 %v195, %v204
      %v207 = vadd.f32 %v196, %v205
      %v208 = vld [vmem:[#allocation2 + $0x2] sm:$0xff]
      %v209 = vld [vmem:[#allocation2 + $0xa] sm:$0xff]
      %v210 = vld [vmem:[%s1 + $0x2] sm:$0x1]
      %v211 = vlaneseq
      %v212 = vshrl.u32 %v211, 7
      %v213 = vsub.s32 0, %v212
      %v214 = vrot.slane %v210, %v213
      %v215 = vmul.f32 %v208, %v214
      %v216 = vmul.f32 %v209, %v214
      %v217 = vadd.f32 %v206, %v215
      %v218 = vadd.f32 %v207, %v216
      %v219 = vld [vmem:[#allocation2 + $0x3] sm:$0xff]
      %v220 = vld [vmem:[#allocation2 + $0xb] sm:$0xff]
      %v221 = vld [vmem:[%s1 + $0x3] sm:$0x1]
      %v222 = vlaneseq
      %v223 = vshrl.u32 %v222, 7
      %v224 = vsub.s32 0, %v223
      %v225 = vrot.slane %v221, %v224
      %v226 = vmul.f32 %v219, %v225
      %v227 = vmul.f32 %v220, %v225
      %v228 = vadd.f32 %v217, %v226
      %v229 = vadd.f32 %v218, %v227
      %v230 = vsub.f32 0.0, %v228
      %v231 = vsub.f32 0.0, %v229
      %v232 = vmul.f32 %v230, 1.442695
      %v233 = vpow.pop %v232
      %v234 = vmul.f32 %v231, 1.442695
      %v235 = vpow.pop %v234
      %v236 = vadd.f32 %v233, 1.0
      %v237 = vadd.f32 %v235, 1.0
      %v238 = vrcp.pop %v236
      %v239 = vrcp.pop %v237
      %v240 = vmul.f32 %v228, %v238
      %v241 = vmul.f32 %v229, %v239
      %242 = vst.msk [vmem:[%s170] sm:$0xff] %vm175, %v240
      %243 = vst.msk [vmem:[%s170 + $0x8] sm:$0xff] %vm175, %v241
      %p244 = scmp.lt.s32.totalorder %s14, 1
      %s245 = scalar_select %p244, %s14, 1
      %s246 = smul.addr %s245, 2
      %s247 = smul.addr %s246, 8
      %s248 = scalar_lea.vmem %s3, %s247
      // Predicated region
      $region33: #{_lambda_.72} parent=31 // pred_check
        %p249 = pneg %p100
      $region34: #{_lambda_.72} parent=31 // pred_check_branch
        %251 = sbr.rel (%p249) target = $region36
      $region35: #{_lambda_.72} parent=31 // pred_region
        _
      $region36: #{_lambda_.72} parent=31 // pred_fallthru
        _
    $region32: #{_lambda_.72} parent=5 // pred_fallthru
      _
    %p252 = scmp.le.s32.totalorder 2, %s9
    // Predicated region
    $region37: #{_lambda_.72} parent=5 // pred_check
      %p253 = pneg %p252
    $region38: #{_lambda_.72} parent=5 // pred_check_branch
      %255 = sbr.rel (%p253) target = $region40
    $region39: #{_lambda_.72} parent=5 // pred_region
      %s256 = ssub.s32 %s9, 2
      // Predicated region
      $region41: #{_lambda_.72} parent=39 // pred_check
        %p257 = pneg %p106
      $region42: #{_lambda_.72} parent=39 // pred_check_branch
        %259 = sbr.rel (%p257) target = $region44
      $region43: #{_lambda_.72} parent=39 // pred_region
        %p260 = scmp.lt.s32.totalorder %s15, 1
        %s261 = scalar_select %p260, %s15, 1
        %s262 = smul.addr %s261, 2
        %s263 = smul.addr %s262, 8
        %s264 = scalar_lea.vmem %s3, %s263
      $region44: #{_lambda_.72} parent=39 // pred_fallthru
        _
    $region40: #{_lambda_.72} parent=5 // pred_fallthru
      _
  $region6: #{_lambda_.72} parent=0 // loop_footer
    %s13 = sadd.s32 1, %s9
  $region7: #{_lambda_.72} parent=0 // loop_footer_branch
    %8 = sbr.rel target = $region3
  $region8: #{_lambda_.72} parent=0 // loop_exit
    _

// kernel: _lambda_.94
$region0: #{_lambda_.94}
  #allocation0 [shape = 'u32[]', space=smem, size = 0x4, offset = 0x4, fixed_abs, tag = 'smem constant byte address 0x4 - core index']
  #allocation1 [shape = 'u32[144,128]{1,0:T(1,128)}', space=vmem, size = 0x12000, scoped, tag = 'internal scratch']
  %s0 = inlined_call_operand.vmem [shape: f32[32,32], index: 0, kind: input, shape index: {}]
  %s1 = inlined_call_operand.vmem [shape: f32[32,32], index: 1, kind: input, shape index: {}]
  %s2 = inlined_call_operand.vmem [shape: f32[1,32], index: 2, kind: input, shape index: {}]
  %s3 = inlined_call_operand.vmem [shape: f32[32,32], index: 3, kind: output, shape index: {0}]
  %s4 = inlined_call_operand.hbm [shape: f32[32,32], index: 4, kind: output, shape index: {1}]
  %5 = xla_tuple %s3, %s4
  %s6 = sld [smem:[#allocation0]]
  $region30: #{_lambda_.94} parent=0
    _
  %s8 = ssub.s32 1, %s6
  %s9 = scalar_select 0, %s8, %s6
  $region1: #{_lambda_.94} parent=0
    #allocation2 [shape = 'u8[16384]{0}', space=vmem, size = 0x4000, scoped, tag = 'output window, operand 1, single buffered']
    #allocation3 [shape = 's32[1]{0}', space=sflag, size = 0x4, scoped, tag = 'scoped memory for _lambda_.94']
    %10 = vsyncpa [#allocation3], 0
    // Predicated region
    $region2: #{_lambda_.94} parent=1 // pred_check
      _
    $region3: #{_lambda_.94} parent=1 // pred_check_branch
      %12 = sbr.rel (0) target = $region5
    $region4: #{_lambda_.94} parent=1 // pred_region
      _
    $region5: #{_lambda_.94} parent=1 // pred_fallthru
      _
    // Predicated region
    $region6: #{_lambda_.94} parent=1 // pred_check
      _
    $region7: #{_lambda_.94} parent=1 // pred_check_branch
      %14 = sbr.rel (0) target = $region9
    $region8: #{_lambda_.94} parent=1 // pred_region
      _
    $region9: #{_lambda_.94} parent=1 // pred_fallthru
      _
    // Predicated region
    $region10: #{_lambda_.94} parent=1 // pred_check
      _
    $region11: #{_lambda_.94} parent=1 // pred_check_branch
      %16 = sbr.rel (0) target = $region13
    $region12: #{_lambda_.94} parent=1 // pred_region
      _
    $region13: #{_lambda_.94} parent=1 // pred_fallthru
      _
    %v17 = vld [vmem:[%s0] sm:$0xff]
    %v18 = vld [vmem:[%s0 + $0x8] sm:$0xff]
    %v19 = vld [vmem:[%s0 + $0x10] sm:$0xff]
    %v20 = vld [vmem:[%s0 + $0x18] sm:$0xff]
    %v21 = vld [vmem:[%s1] sm:$0xff]
    %v22 = vld [vmem:[%s1 + $0x8] sm:$0xff]
    %v23 = vld [vmem:[%s1 + $0x10] sm:$0xff]
    %v24 = vld [vmem:[%s1 + $0x18] sm:$0xff]
    %v25 = vadd.f32 %v17, %v21
    %v26 = vadd.f32 %v18, %v22
    %v27 = vadd.f32 %v19, %v23
    %v28 = vadd.f32 %v20, %v24
    %vm29 = vcmask 261120
    %30 = vst.msk [vmem:[#allocation2] sm:$0xff] %vm29, %v25
    %31 = vst.msk [vmem:[#allocation2 + $0x8] sm:$0xff] %vm29, %v26
    %32 = vst.msk [vmem:[#allocation2 + $0x10] sm:$0xff] %vm29, %v27
    %33 = vst.msk [vmem:[#allocation2 + $0x18] sm:$0xff] %vm29, %v28
    %v34 = vmul.f32 %v25, %v25
    %v35 = vmul.f32 %v26, %v26
    %v36 = vmul.f32 %v27, %v27
    %v37 = vmul.f32 %v28, %v28
    %v38 = vsel %vm29, %v34, 0.0
    %39 = vadd.xlane.f32.xlu0 %v38
    %v40 = vpop.xlane.xlu0 %39
    %v41 = vsel %vm29, %v35, 0.0
    %42 = vadd.xlane.f32.xlu0 %v41
    %v43 = vpop.xlane.xlu0 %42
    %v44 = vsel %vm29, %v36, 0.0
    %45 = vadd.xlane.f32.xlu0 %v44
    %v46 = vpop.xlane.xlu0 %45
    %v47 = vsel %vm29, %v37, 0.0
    %48 = vadd.xlane.f32.xlu0 %v47
    %v49 = vpop.xlane.xlu0 %48
    %v50 = vrcp.pop 32.0
    %v51 = vmul.f32 %v40, %v50
    %v52 = vmul.f32 %v43, %v50
    %v53 = vmul.f32 %v46, %v50
    %v54 = vmul.f32 %v49, %v50
    %v55 = vadd.f32 %v51, 1e-05
    %v56 = vadd.f32 %v52, 1e-05
    %v57 = vadd.f32 %v53, 1e-05
    %v58 = vadd.f32 %v54, 1e-05
    %v59 = vrsqrt.pop %v55
    %v60 = vrsqrt.pop %v56
    %v61 = vrsqrt.pop %v57
    %v62 = vrsqrt.pop %v58
    %v63 = vmul.f32 %v25, %v59
    %v64 = vmul.f32 %v26, %v60
    %v65 = vmul.f32 %v27, %v61
    %v66 = vmul.f32 %v28, %v62
    %v67 = vld [vmem:[%s2] sm:$0x1]
    %v69 = vlaneseq
    %v70 = vshrl.u32 %v69, 7
    %v71 = vsub.s32 0, %v70
    %v72 = vrot.slane %v67, %v71
    %v74 = vmul.f32 %v63, %v72
    %v75 = vmul.f32 %v64, %v72
    %v76 = vmul.f32 %v65, %v72
    %v77 = vmul.f32 %v66, %v72
    %78 = vst.msk [vmem:[%s3] sm:$0xff] %vm29, %v74
    %79 = vst.msk [vmem:[%s3 + $0x8] sm:$0xff] %vm29, %v75
    %80 = vst.msk [vmem:[%s3 + $0x10] sm:$0xff] %vm29, %v76
    %81 = vst.msk [vmem:[%s3 + $0x18] sm:$0xff] %vm29, %v77
    // Predicated region
    $region14: #{_lambda_.94} parent=1 // pred_check
      _
    $region15: #{_lambda_.94} parent=1 // pred_check_branch
      %83 = sbr.rel (0) target = $region17
    $region16: #{_lambda_.94} parent=1 // pred_region
      _
    $region17: #{_lambda_.94} parent=1 // pred_fallthru
      _
    // Predicated region
    $region18: #{_lambda_.94} parent=1 // pred_check
      _
    $region19: #{_lambda_.94} parent=1 // pred_check_branch
      %85 = sbr.rel (0) target = $region21
    $region20: #{_lambda_.94} parent=1 // pred_region
      %s87 = ssub.s32 512, 512
      %88 = vsyncadd [#allocation3], %s87
      %s89 = sshll.u32 [#allocation2], 4
      %s90 = int_to_ptr.vmem [resolvable:$true] %s89
      %95 = dma.vmem_to_hbm [thread:$0]  %s90, 512, %s4, [#allocation3], 128, 128, 8
    $region21: #{_lambda_.94} parent=1 // pred_fallthru
      _
    // Predicated region
    $region22: #{_lambda_.94} parent=1 // pred_check
      _
    $region23: #{_lambda_.94} parent=1 // pred_check_branch
      %97 = sbr.rel (0) target = $region25
    $region24: #{_lambda_.94} parent=1 // pred_region
      _
    $region25: #{_lambda_.94} parent=1 // pred_fallthru
      _
    // Predicated region
    $region26: #{_lambda_.94} parent=1 // pred_check
      _
    $region27: #{_lambda_.94} parent=1 // pred_check_branch
      %99 = sbr.rel (0) target = $region29
    $region28: #{_lambda_.94} parent=1 // pred_region
      %100 = dma.done [#allocation3], 512
    $region29: #{_lambda_.94} parent=1 // pred_fallthru
      _
    %101 = vsyncpa [#allocation3], 1

// kernel: _lambda_.74
$region0: #{_lambda_.74}
  #allocation0 [shape = 'u32[]', space=smem, size = 0x4, offset = 0x4, fixed_abs, tag = 'smem constant byte address 0x4 - core index']
  #allocation1 [shape = 'u32[144,128]{1,0:T(1,128)}', space=vmem, size = 0x12000, scoped, tag = 'internal scratch']
  #allocation2 [shape = 'f32[16,64]{1,0:T(8,128)}', space=vmem, size = 0x2000, scoped, tag = 'scratch operand']
  #allocation3 [shape = 'f32[16,64]{1,0:T(8,128)}', space=vmem, size = 0x2000, scoped, tag = 'scratch operand']
  #allocation4 [shape = 'f32[16,64]{1,0:T(8,128)}', space=vmem, size = 0x2000, scoped, tag = 'scratch operand']
  #allocation5 [shape = 'f32[16,64]{1,0:T(8,128)}', space=vmem, size = 0x2000, scoped, tag = 'scratch operand']
  %s0 = inlined_call_operand.vmem [shape: f32[2,16,64], index: 0, kind: input, shape index: {}]
  %s1 = inlined_call_operand.vmem [shape: f32[2,16,64], index: 1, kind: input, shape index: {}]
  %s2 = inlined_call_operand.vmem [shape: f32[2,16,64], index: 2, kind: input, shape index: {}]
  %s3 = inlined_call_operand.vmem [shape: f32[2,16,16], index: 3, kind: input, shape index: {}]
  %s4 = inlined_call_operand.vmem [shape: f32[2,16,16], index: 4, kind: input, shape index: {}]
  %s5 = inlined_call_operand.vmem [shape: f32[16,64], index: 5, kind: input, shape index: {}]
  %s6 = inlined_call_operand.vmem [shape: f32[1,64], index: 6, kind: input, shape index: {}]
  %s7 = inlined_call_operand.vmem [shape: f32[1,64], index: 7, kind: input, shape index: {}]
  %s8 = inlined_call_operand.vmem [shape: f32[2,16,64], index: 8, kind: output, shape index: {}]
  %s9 = sld [smem:[#allocation0]]
  $region76: #{_lambda_.74} parent=0
    _
  %s11 = ssub.s32 1, %s9
  %s12 = scalar_select 0, %s11, %s9
  loop: start=0, step=1, limit=4
  $region2: #{_lambda_.74} parent=0 // loop_pre_header
    _
  $region3: #{_lambda_.74} parent=0 // loop_header
    %s14 = sphi 0, %s18
    %p15 = scmp.ge.s32.totalorder %s14, 4
    %s21 = sphi 0, %s33
    %s22 = sphi 0, %s29
    %s23 = sphi 0, %s21
    %s24 = sphi 0, %s22
    %s25 = sphi 0, %s23
    %s26 = sphi 0, %s24
    %s38 = sphi 0, %s40
    %s41 = sphi 0, %s38
    %s42 = sphi 0, %s41
    %s58 = sphi 0, %s42
    %s66 = sphi 0, %s68
    %s69 = sphi 0, %s66
    %s70 = sphi 0, %s69
    %s86 = sphi 0, %s70
    %s94 = sphi 0, %s96
    %s97 = sphi 0, %s94
    %s98 = sphi 0, %s97
    %s114 = sphi 0, %s98
    %s122 = sphi 0, %s124
    %s125 = sphi 0, %s122
    %s126 = sphi 0, %s125
    %s142 = sphi 0, %s126
    %s150 = sphi 0, %s152
    %s153 = sphi 0, %s150
    %s154 = sphi 0, %s153
    %s170 = sphi 0, %s154
    %s174 = sphi 0, %s174
    %s176 = sphi 0, %s174
    %s177 = sphi 0, %s176
    %s191 = sphi 0, %s177
    %s195 = sphi 0, %s195
    %s197 = sphi 0, %s195
    %s198 = sphi 0, %s197
    %s212 = sphi 0, %s198
    %s216 = sphi 0, %s216
    %s218 = sphi 0, %s216
    %s219 = sphi 0, %s218
    %s233 = sphi 0, %s219
    %s241 = sphi 0, %s243
    %s244 = sphi 0, %s241
    %s245 = sphi 0, %s244
    %s261 = sphi 0, %s245
  $region4: #{_lambda_.74} parent=0 // loop_header_branch
    %17 = sbr.rel (%p15) target = $region8
  $region5: #{_lambda_.74} parent=0 // loop_body
    %s19 = ssub.s32 %s14, 1
    %s20 = ssub.s32 %s14, 2
    %s27 = sadd.s32 1, %s22
    %p28 = scmp.ge.s32.totalorder %s27, 1
    %s29 = scalar_select %p28, 0, %s27
    %s30 = sadd.s32 1, %s21
    %s31 = scalar_select %p28, %s30, %s21
    %p32 = scmp.ge.s32.totalorder %s31, 2
    %s33 = scalar_select %p32, 0, %s31
    %s34 = ssub.s32 %s21, %s33
    %s35 = ssub.s32 %s22, %s29
    %s36 = sor.u32 %s34, %s35
    %p37 = scmp.eq.s32.totalorder %s36, 0
    %s39 = sadd.s32 %s38, 1
    %s40 = scalar_select %p37, %s38, %s39
    %p43 = pneg %p37
    %p44 = scmp.eq.s32.totalorder %s14, 1
    %p45 = por %p43, %p44
    %p46 = scmp.ne.s32.totalorder %s38, %s41
    %p47 = scmp.eq.s32.totalorder %s14, 0
    %p48 = por %p46, %p47
    %p49 = scmp.ne.s32.totalorder %s38, %s41
    %p50 = scmp.eq.s32.totalorder %s19, 1
    %p51 = por %p49, %p50
    %p52 = scmp.ne.s32.totalorder %s41, %s42
    %p53 = scmp.eq.s32.totalorder %s19, 0
    %p54 = por %p52, %p53
    %p55 = scmp.ne.s32.totalorder %s41, %s42
    %p56 = scmp.eq.s32.totalorder %s20, 1
    %p57 = por %p55, %p56
    %p59 = scmp.ne.s32.totalorder %s42, %s58
    %p60 = scmp.eq.s32.totalorder %s20, 0
    %p61 = por %p59, %p60
    %s62 = ssub.s32 %s21, %s33
    %s63 = ssub.s32 %s22, %s29
    %s64 = sor.u32 %s62, %s63
    %p65 = scmp.eq.s32.totalorder %s64, 0
    %s67 = sadd.s32 %s66, 1
    %s68 = scalar_select %p65, %s66, %s67
    %p71 = pneg %p65
    %p72 = scmp.eq.s32.totalorder %s14, 1
    %p73 = por %p71, %p72
    %p74 = scmp.ne.s32.totalorder %s66, %s69
    %p75 = scmp.eq.s32.totalorder %s14, 0
    %p76 = por %p74, %p75
    %p77 = scmp.ne.s32.totalorder %s66, %s69
    %p78 = scmp.eq.s32.totalorder %s19, 1
    %p79 = por %p77, %p78
    %p80 = scmp.ne.s32.totalorder %s69, %s70
    %p81 = scmp.eq.s32.totalorder %s19, 0
    %p82 = por %p80, %p81
    %p83 = scmp.ne.s32.totalorder %s69, %s70
    %p84 = scmp.eq.s32.totalorder %s20, 1
    %p85 = por %p83, %p84
    %p87 = scmp.ne.s32.totalorder %s70, %s86
    %p88 = scmp.eq.s32.totalorder %s20, 0
    %p89 = por %p87, %p88
    %s90 = ssub.s32 %s21, %s33
    %s91 = ssub.s32 %s22, %s29
    %s92 = sor.u32 %s90, %s91
    %p93 = scmp.eq.s32.totalorder %s92, 0
    %s95 = sadd.s32 %s94, 1
    %s96 = scalar_select %p93, %s94, %s95
    %p99 = pneg %p93
    %p100 = scmp.eq.s32.totalorder %s14, 1
    %p101 = por %p99, %p100
    %p102 = scmp.ne.s32.totalorder %s94, %s97
    %p103 = scmp.eq.s32.totalorder %s14, 0
    %p104 = por %p102, %p103
    %p105 = scmp.ne.s32.totalorder %s94, %s97
    %p106 = scmp.eq.s32.totalorder %s19, 1
    %p107 = por %p105, %p106
    %p108 = scmp.ne.s32.totalorder %s97, %s98
    %p109 = scmp.eq.s32.totalorder %s19, 0
    %p110 = por %p108, %p109
    %p111 = scmp.ne.s32.totalorder %s97, %s98
    %p112 = scmp.eq.s32.totalorder %s20, 1
    %p113 = por %p111, %p112
    %p115 = scmp.ne.s32.totalorder %s98, %s114
    %p116 = scmp.eq.s32.totalorder %s20, 0
    %p117 = por %p115, %p116
    %s118 = ssub.s32 %s21, %s33
    %s119 = ssub.s32 %s22, %s29
    %s120 = sor.u32 %s118, %s119
    %p121 = scmp.eq.s32.totalorder %s120, 0
    %s123 = sadd.s32 %s122, 1
    %s124 = scalar_select %p121, %s122, %s123
    %p127 = pneg %p121
    %p128 = scmp.eq.s32.totalorder %s14, 1
    %p129 = por %p127, %p128
    %p130 = scmp.ne.s32.totalorder %s122, %s125
    %p131 = scmp.eq.s32.totalorder %s14, 0
    %p132 = por %p130, %p131
    %p133 = scmp.ne.s32.totalorder %s122, %s125
    %p134 = scmp.eq.s32.totalorder %s19, 1
    %p135 = por %p133, %p134
    %p136 = scmp.ne.s32.totalorder %s125, %s126
    %p137 = scmp.eq.s32.totalorder %s19, 0
    %p138 = por %p136, %p137
    %p139 = scmp.ne.s32.totalorder %s125, %s126
    %p140 = scmp.eq.s32.totalorder %s20, 1
    %p141 = por %p139, %p140
    %p143 = scmp.ne.s32.totalorder %s126, %s142
    %p144 = scmp.eq.s32.totalorder %s20, 0
    %p145 = por %p143, %p144
    %s146 = ssub.s32 %s21, %s33
    %s147 = ssub.s32 %s22, %s29
    %s148 = sor.u32 %s146, %s147
    %p149 = scmp.eq.s32.totalorder %s148, 0
    %s151 = sadd.s32 %s150, 1
    %s152 = scalar_select %p149, %s150, %s151
    %p155 = pneg %p149
    %p156 = scmp.eq.s32.totalorder %s14, 1
    %p157 = por %p155, %p156
    %p158 = scmp.ne.s32.totalorder %s150, %s153
    %p159 = scmp.eq.s32.totalorder %s14, 0
    %p160 = por %p158, %p159
    %p161 = scmp.ne.s32.totalorder %s150, %s153
    %p162 = scmp.eq.s32.totalorder %s19, 1
    %p163 = por %p161, %p162
    %p164 = scmp.ne.s32.totalorder %s153, %s154
    %p165 = scmp.eq.s32.totalorder %s19, 0
    %p166 = por %p164, %p165
    %p167 = scmp.ne.s32.totalorder %s153, %s154
    %p168 = scmp.eq.s32.totalorder %s20, 1
    %p169 = por %p167, %p168
    %p171 = scmp.ne.s32.totalorder %s154, %s170
    %p172 = scmp.eq.s32.totalorder %s20, 0
    %p173 = por %p171, %p172
    %s175 = sadd.s32 %s174, 1
    %p178 = scmp.eq.s32.totalorder %s14, 1
    %p179 = scmp.ne.s32.totalorder %s174, %s176
    %p180 = scmp.eq.s32.totalorder %s14, 0
    %p181 = por %p179, %p180
    %p182 = scmp.ne.s32.totalorder %s174, %s176
    %p183 = scmp.eq.s32.totalorder %s19, 1
    %p184 = por %p182, %p183
    %p185 = scmp.ne.s32.totalorder %s176, %s177
    %p186 = scmp.eq.s32.totalorder %s19, 0
    %p187 = por %p185, %p186
    %p188 = scmp.ne.s32.totalorder %s176, %s177
    %p189 = scmp.eq.s32.totalorder %s20, 1
    %p190 = por %p188, %p189
    %p192 = scmp.ne.s32.totalorder %s177, %s191
    %p193 = scmp.eq.s32.totalorder %s20, 0
    %p194 = por %p192, %p193
    %s196 = sadd.s32 %s195, 1
    %p199 = scmp.eq.s32.totalorder %s14, 1
    %p200 = scmp.ne.s32.totalorder %s195, %s197
    %p201 = scmp.eq.s32.totalorder %s14, 0
    %p202 = por %p200, %p201
    %p203 = scmp.ne.s32.totalorder %s195, %s197
    %p204 = scmp.eq.s32.totalorder %s19, 1
    %p205 = por %p203, %p204
    %p206 = scmp.ne.s32.totalorder %s197, %s198
    %p207 = scmp.eq.s32.totalorder %s19, 0
    %p208 = por %p206, %p207
    %p209 = scmp.ne.s32.totalorder %s197, %s198
    %p210 = scmp.eq.s32.totalorder %s20, 1
    %p211 = por %p209, %p210
    %p213 = scmp.ne.s32.totalorder %s198, %s212
    %p214 = scmp.eq.s32.totalorder %s20, 0
    %p215 = por %p213, %p214
    %s217 = sadd.s32 %s216, 1
    %p220 = scmp.eq.s32.totalorder %s14, 1
    %p221 = scmp.ne.s32.totalorder %s216, %s218
    %p222 = scmp.eq.s32.totalorder %s14, 0
    %p223 = por %p221, %p222
    %p224 = scmp.ne.s32.totalorder %s216, %s218
    %p225 = scmp.eq.s32.totalorder %s19, 1
    %p226 = por %p224, %p225
    %p227 = scmp.ne.s32.totalorder %s218, %s219
    %p228 = scmp.eq.s32.totalorder %s19, 0
    %p229 = por %p227, %p228
    %p230 = scmp.ne.s32.totalorder %s218, %s219
    %p231 = scmp.eq.s32.totalorder %s20, 1
    %p232 = por %p230, %p231
    %p234 = scmp.ne.s32.totalorder %s219, %s233
    %p235 = scmp.eq.s32.totalorder %s20, 0
    %p236 = por %p234, %p235
    %s237 = ssub.s32 %s21, %s33
    %s238 = ssub.s32 %s22, %s29
    %s239 = sor.u32 %s237, %s238
    %p240 = scmp.eq.s32.totalorder %s239, 0
    %s242 = sadd.s32 %s241, 1
    %s243 = scalar_select %p240, %s241, %s242
    %p246 = pneg %p240
    %p247 = scmp.eq.s32.totalorder %s14, 1
    %p248 = por %p246, %p247
    %p249 = scmp.ne.s32.totalorder %s241, %s244
    %p250 = scmp.eq.s32.totalorder %s14, 0
    %p251 = por %p249, %p250
    %p252 = scmp.ne.s32.totalorder %s241, %s244
    %p253 = scmp.eq.s32.totalorder %s19, 1
    %p254 = por %p252, %p253
    %p255 = scmp.ne.s32.totalorder %s244, %s245
    %p256 = scmp.eq.s32.totalorder %s19, 0
    %p257 = por %p255, %p256
    %p258 = scmp.ne.s32.totalorder %s244, %s245
    %p259 = scmp.eq.s32.totalorder %s20, 1
    %p260 = por %p258, %p259
    %p262 = scmp.ne.s32.totalorder %s245, %s261
    %p263 = scmp.eq.s32.totalorder %s20, 0
    %p264 = por %p262, %p263
    %p265 = scmp.le.s32.totalorder 1, %s14
    %p266 = scmp.lt.s32.totalorder %s14, 3
    %p267 = pnand %p265, %p266
    %p268 = pneg %p267
    // Predicated region
    $region9: #{_lambda_.74} parent=5 // pred_check
      _
    $region10: #{_lambda_.74} parent=5 // pred_check_branch
      %270 = sbr.rel (%p267) target = $region12
    $region11: #{_lambda_.74} parent=5 // pred_region
      %s271 = ssub.s32 %s14, 1
      // Predicated region
      $region13: #{_lambda_.74} parent=11 // pred_check
        %p272 = pneg %p187
      $region14: #{_lambda_.74} parent=11 // pred_check_branch
        %274 = sbr.rel (%p272) target = $region16
      $region15: #{_lambda_.74} parent=11 // pred_region
        _
      $region16: #{_lambda_.74} parent=11 // pred_fallthru
        _
      // Predicated region
      $region17: #{_lambda_.74} parent=11 // pred_check
        %p275 = pneg %p208
      $region18: #{_lambda_.74} parent=11 // pred_check_branch
        %277 = sbr.rel (%p275) target = $region20
      $region19: #{_lambda_.74} parent=11 // pred_region
        _
      $region20: #{_lambda_.74} parent=11 // pred_fallthru
        _
      // Predicated region
      $region21: #{_lambda_.74} parent=11 // pred_check
        %p278 = pneg %p229
      $region22: #{_lambda_.74} parent=11 // pred_check_branch
        %280 = sbr.rel (%p278) target = $region24
      $region23: #{_lambda_.74} parent=11 // pred_region
        _
      $region24: #{_lambda_.74} parent=11 // pred_fallthru
        _
    $region12: #{_lambda_.74} parent=5 // pred_fallthru
      _
    %p281 = scmp.lt.s32.totalorder %s14, 2
    // Predicated region
    $region25: #{_lambda_.74} parent=5 // pred_check
      %p282 = pneg %p281
    $region26: #{_lambda_.74} parent=5 // pred_check_branch
      %284 = sbr.rel (%p282) target = $region28
    $region27: #{_lambda_.74} parent=5 // pred_region
      // Predicated region
      $region29: #{_lambda_.74} parent=27 // pred_check
        %p285 = pneg %p48
      $region30: #{_lambda_.74} parent=27 // pred_check_branch
        %287 = sbr.rel (%p285) target = $region32
      $region31: #{_lambda_.74} parent=27 // pred_region
        %s288 = smul.u32 2, %s22
        %p289 = scmp.lt.s32.totalorder %s21, 1
        %s290 = scalar_select %p289, %s21, 1
        %p291 = scmp.lt.s32.totalorder %s288, 1
        %s292 = scalar_select %p291, %s288, 1
        %s293 = smul.addr %s290, 2
        %s294 = sadd.s32 %s292, %s293
        %s295 = smul.addr %s294, 8
        %s296 = scalar_lea.vmem %s0, %s295
        %s297 = smul.u32 2, %s22
      $region32: #{_lambda_.74} parent=27 // pred_fallthru
        _
      // Predicated region
      $region33: #{_lambda_.74} parent=27 // pred_check
        %p298 = pneg %p76
      $region34: #{_lambda_.74} parent=27 // pred_check_branch
        %300 = sbr.rel (%p298) target = $region36
      $region35: #{_lambda_.74} parent=27 // pred_region
        %s301 = smul.u32 2, %s22
        %p302 = scmp.lt.s32.totalorder %s21, 1
        %s303 = scalar_select %p302, %s21, 1
        %p304 = scmp.lt.s32.totalorder %s301, 1
        %s305 = scalar_select %p304, %s301, 1
        %s306 = smul.addr %s303, 2
        %s307 = sadd.s32 %s305, %s306
        %s308 = smul.addr %s307, 8
        %s309 = scalar_lea.vmem %s1, %s308
        %s310 = smul.u32 2, %s22
      $region36: #{_lambda_.74} parent=27 // pred_fallthru
        _
      // Predicated region
      $region37: #{_lambda_.74} parent=27 // pred_check
        %p311 = pneg %p104
      $region38: #{_lambda_.74} parent=27 // pred_check_branch
        %313 = sbr.rel (%p311) target = $region40
      $region39: #{_lambda_.74} parent=27 // pred_region
        %s314 = smul.u32 2, %s22
        %p315 = scmp.lt.s32.totalorder %s21, 1
        %s316 = scalar_select %p315, %s21, 1
        %p317 = scmp.lt.s32.totalorder %s314, 1
        %s318 = scalar_select %p317, %s314, 1
        %s319 = smul.addr %s316, 2
        %s320 = sadd.s32 %s318, %s319
        %s321 = smul.addr %s320, 8
        %s322 = scalar_lea.vmem %s2, %s321
        %s323 = smul.u32 2, %s22
      $region40: #{_lambda_.74} parent=27 // pred_fallthru
        _
      // Predicated region
      $region41: #{_lambda_.74} parent=27 // pred_check
        %p324 = pneg %p132
      $region42: #{_lambda_.74} parent=27 // pred_check_branch
        %326 = sbr.rel (%p324) target = $region44
      $region43: #{_lambda_.74} parent=27 // pred_region
        %s327 = smul.u32 2, %s22
        %p328 = scmp.lt.s32.totalorder %s21, 1
        %s329 = scalar_select %p328, %s21, 1
        %p330 = scmp.lt.s32.totalorder %s327, 1
        %s331 = scalar_select %p330, %s327, 1
        %s332 = smul.addr %s329, 2
        %s333 = sadd.s32 %s331, %s332
        %s334 = smul.addr %s333, 8
        %s335 = scalar_lea.vmem %s3, %s334
        %s336 = smul.u32 2, %s22
      $region44: #{_lambda_.74} parent=27 // pred_fallthru
        _
      // Predicated region
      $region45: #{_lambda_.74} parent=27 // pred_check
        %p337 = pneg %p160
      $region46: #{_lambda_.74} parent=27 // pred_check_branch
        %339 = sbr.rel (%p337) target = $region48
      $region47: #{_lambda_.74} parent=27 // pred_region
        %s340 = smul.u32 2, %s22
        %p341 = scmp.lt.s32.totalorder %s21, 1
        %s342 = scalar_select %p341, %s21, 1
        %p343 = scmp.lt.s32.totalorder %s340, 1
        %s344 = scalar_select %p343, %s340, 1
        %s345 = smul.addr %s342, 2
        %s346 = sadd.s32 %s344, %s345
        %s347 = smul.addr %s346, 8
        %s348 = scalar_lea.vmem %s4, %s347
        %s349 = smul.u32 2, %s22
      $region48: #{_lambda_.74} parent=27 // pred_fallthru
        _
    $region28: #{_lambda_.74} parent=5 // pred_fallthru
      _
    %p350 = scmp.le.s32.totalorder 1, %s14
    %p351 = scmp.lt.s32.totalorder %s14, 3
    %p352 = pnand %p350, %p351
    %p353 = pneg %p352
    // Predicated region
    $region49: #{_lambda_.74} parent=5 // pred_check
      _
    $region50: #{_lambda_.74} parent=5 // pred_check_branch
      %355 = sbr.rel (%p352) target = $region52
    $region51: #{_lambda_.74} parent=5 // pred_region
      %s356 = ssub.s32 %s14, 1
      %s357 = smul.u32 2, %s24
      %p358 = scmp.lt.s32.totalorder %s23, 1
      %s359 = scalar_select %p358, %s23, 1
      %p360 = scmp.lt.s32.totalorder %s357, 1
      %s361 = scalar_select %p360, %s357, 1
      %s362 = smul.addr %s359, 2
      %s363 = sadd.s32 %s361, %s362
      %s364 = smul.addr %s363, 8
      %s365 = scalar_lea.vmem %s0, %s364
      %p366 = pneg %p54
      %p367 = pneg %p51
      %s368 = smul.u32 2, %s24
      %p369 = scmp.lt.s32.totalorder %s23, 1
      %s370 = scalar_select %p369, %s23, 1
      %p371 = scmp.lt.s32.totalorder %s368, 1
      %s372 = scalar_select %p371, %s368, 1
      %s373 = smul.addr %s370, 2
      %s374 = sadd.s32 %s372, %s373
      %s375 = smul.addr %s374, 8
      %s376 = scalar_lea.vmem %s1, %s375
      %p377 = pneg %p82
      %p378 = pneg %p79
      %s379 = smul.u32 2, %s24
      %p380 = scmp.lt.s32.totalorder %s23, 1
      %s381 = scalar_select %p380, %s23, 1
      %p382 = scmp.lt.s32.totalorder %s379, 1
      %s383 = scalar_select %p382, %s379, 1
      %s384 = smul.addr %s381, 2
      %s385 = sadd.s32 %s383, %s384
      %s386 = smul.addr %s385, 8
      %s387 = scalar_lea.vmem %s2, %s386
      %p388 = pneg %p110
      %p389 = pneg %p107
      %s390 = smul.u32 2, %s24
      %p391 = scmp.lt.s32.totalorder %s23, 1
      %s392 = scalar_select %p391, %s23, 1
      %p393 = scmp.lt.s32.totalorder %s390, 1
      %s394 = scalar_select %p393, %s390, 1
      %s395 = smul.addr %s392, 2
      %s396 = sadd.s32 %s394, %s395
      %s397 = smul.addr %s396, 8
      %s398 = scalar_lea.vmem %s3, %s397
      %p399 = pneg %p138
      %p400 = pneg %p135
      %s401 = smul.u32 2, %s24
      %p402 = scmp.lt.s32.totalorder %s23, 1
      %s403 = scalar_select %p402, %s23, 1
      %p404 = scmp.lt.s32.totalorder %s401, 1
      %s405 = scalar_select %p404, %s401, 1
      %s406 = smul.addr %s403, 2
      %s407 = sadd.s32 %s405, %s406
      %s408 = smul.addr %s407, 8
      %s409 = scalar_lea.vmem %s4, %s408
      %p410 = pneg %p166
      %p411 = pneg %p163
      %p412 = pneg %p187
      %p413 = pneg %p184
      %p414 = pneg %p208
      %p415 = pneg %p205
      %p416 = pneg %p229
      %p417 = pneg %p226
      %p418 = pneg %p257
      %p419 = pneg %p254
      %s420 = smul.u32 2, %s24
      %p421 = scmp.lt.s32.totalorder %s23, 1
      %s422 = scalar_select %p421, %s23, 1
      %p423 = scmp.lt.s32.totalorder %s420, 1
      %s424 = scalar_select %p423, %s420, 1
      %s425 = smul.addr %s422, 2
      %s426 = sadd.s32 %s424, %s425
      %s427 = smul.addr %s426, 8
      %s428 = scalar_lea.vmem %s8, %s427
      %s429 = smul.u32 2, %s24
      %p430 = scmp.lt.s32.totalorder %s23, 1
      %s431 = scalar_select %p430, %s23, 1
      %p432 = scmp.lt.s32.totalorder %s429, 1
      %s433 = scalar_select %p432, %s429, 1
      %s434 = smul.addr %s431, 2
      %s435 = sadd.s32 %s433, %s434
      %s436 = smul.addr %s435, 8
      %s437 = scalar_lea.vmem %s0, %s436
      %s438 = smul.u32 2, %s24
      %s439 = smul.u32 2, %s24
      %p440 = scmp.lt.s32.totalorder %s23, 1
      %s441 = scalar_select %p440, %s23, 1
      %p442 = scmp.lt.s32.totalorder %s439, 1
      %s443 = scalar_select %p442, %s439, 1
      %s444 = smul.addr %s441, 2
      %s445 = sadd.s32 %s443, %s444
      %s446 = smul.addr %s445, 8
      %s447 = scalar_lea.vmem %s1, %s446
      %s448 = smul.u32 2, %s24
      %s449 = smul.u32 2, %s24
      %p450 = scmp.lt.s32.totalorder %s23, 1
      %s451 = scalar_select %p450, %s23, 1
      %p452 = scmp.lt.s32.totalorder %s449, 1
      %s453 = scalar_select %p452, %s449, 1
      %s454 = smul.addr %s451, 2
      %s455 = sadd.s32 %s453, %s454
      %s456 = smul.addr %s455, 8
      %s457 = scalar_lea.vmem %s2, %s456
      %s458 = smul.u32 2, %s24
      %s459 = smul.u32 2, %s24
      %p460 = scmp.lt.s32.totalorder %s23, 1
      %s461 = scalar_select %p460, %s23, 1
      %p462 = scmp.lt.s32.totalorder %s459, 1
      %s463 = scalar_select %p462, %s459, 1
      %s464 = smul.addr %s461, 2
      %s465 = sadd.s32 %s463, %s464
      %s466 = smul.addr %s465, 8
      %s467 = scalar_lea.vmem %s3, %s466
      %s468 = smul.u32 2, %s24
      %s469 = smul.u32 2, %s24
      %p470 = scmp.lt.s32.totalorder %s23, 1
      %s471 = scalar_select %p470, %s23, 1
      %p472 = scmp.lt.s32.totalorder %s469, 1
      %s473 = scalar_select %p472, %s469, 1
      %s474 = smul.addr %s471, 2
      %s475 = sadd.s32 %s473, %s474
      %s476 = smul.addr %s475, 8
      %s477 = scalar_lea.vmem %s4, %s476
      %s478 = smul.u32 2, %s24
      %s479 = smul.u32 2, %s24
      %p480 = scmp.lt.s32.totalorder %s23, 1
      %s481 = scalar_select %p480, %s23, 1
      %p482 = scmp.lt.s32.totalorder %s479, 1
      %s483 = scalar_select %p482, %s479, 1
      %s484 = smul.addr %s481, 2
      %s485 = sadd.s32 %s483, %s484
      %s486 = smul.addr %s485, 8
      %s487 = scalar_lea.vmem %s8, %s486
      %s488 = smul.u32 2, %s24
      %p489 = scmp.eq.s32.totalorder %s24, 0
      // Predicated region
      $region53: #{_lambda_.74} parent=51 // pred_check
        %p490 = pneg %p489
      $region54: #{_lambda_.74} parent=51 // pred_check_branch
        %492 = sbr.rel (%p490) target = $region56
      $region55: #{_lambda_.74} parent=51 // pred_region
        %vm493 = vcmask 523264
        %494 = vst.msk [vmem:[#allocation2] sm:$0xff] %vm493, 0.0
        %495 = vst.msk [vmem:[#allocation2 + $0x8] sm:$0xff] %vm493, 0.0
      $region56: #{_lambda_.74} parent=51 // pred_fallthru
        _
      %v496 = vld [vmem:[%s447] sm:$0xff]
      %v497 = vld [vmem:[%s447 + $0x8] sm:$0xff]
      %v498 = vld [vmem:[%s7] sm:$0x1]
      %v500 = vlaneseq
      %v501 = vshrl.u32 %v500, 7
      %v502 = vsub.s32 0, %v501
      %v503 = vrot.slane %v498, %v502
      %v505 = vadd.f32 %v496, %v503
      %v506 = vadd.f32 %v497, %v503
      %v507 = vmax.f32 %v505, 0.0
      %v508 = vmax.f32 %v506, 0.0
      %v509 = vand.u32 2147483647, %v505
      %v510 = vand.u32 2147483647, %v506
      %v511 = vsub.f32 0.0, %v509
      %v512 = vsub.f32 0.0, %v510
      %v513 = vmul.f32 %v511, 1.442695
      %v514 = vpow.pop %v513
      %v515 = vmul.f32 %v512, 1.442695
      %v516 = vpow.pop %v515
      %v517 = vadd.f32 %v514, 1.0
      %v518 = vadd.f32 %v516, 1.0
      %v519 = vlog2.pop %v517
      %v520 = vmul.f32 %v519, 0.6931472
      %v521 = vlog2.pop %v518
      %v522 = vmul.f32 %v521, 0.6931472
      %v523 = vadd.f32 %v507, %v520
      %v524 = vadd.f32 %v508, %v522
      %vm525 = vcmask 523264
      %526 = vst.msk [vmem:[#allocation3] sm:$0xff] %vm525, %v523
      %527 = vst.msk [vmem:[#allocation3 + $0x8] sm:$0xff] %vm525, %v524
      %v528 = vld [vmem:[#allocation3] sm:$0xff]
      %v529 = vld [vmem:[#allocation3 + $0x8] sm:$0xff]
      %v530 = vld [vmem:[%s437] sm:$0xff]
      %v531 = vld [vmem:[%s437 + $0x8] sm:$0xff]
      %v532 = vmul.f32 %v528, %v530
      %v533 = vmul.f32 %v529, %v531
      %534 = vst.msk [vmem:[#allocation4] sm:$0xff] %vm525, %v532
      %535 = vst.msk [vmem:[#allocation4 + $0x8] sm:$0xff] %vm525, %v533
      %v536 = vld [vmem:[%s5] sm:$0xff]
      %v537 = vld [vmem:[%s5 + $0x8] sm:$0xff]
      loop: start=0, step=1, limit=16
      $region57: #{_lambda_.74} parent=51 // loop_pre_header
        _
      $region58: #{_lambda_.74} parent=51 // loop_header
        %s539 = sphi 0, %s543
        %p540 = scmp.ge.s32.totalorder %s539, 16
      $region59: #{_lambda_.74} parent=51 // loop_header_branch
        %542 = sbr.rel (%p540) target = $region63
      $region60: #{_lambda_.74} parent=51 // loop_body
        %s544 = scalar_lea.vmem [#allocation3], %s539
        %v545 = vld [vmem:[%s544] sm:$0x1]
        %v546 = vlaneseq
        %v547 = vshrl.u32 %v546, 7
        %v548 = vsub.s32 0, %v547
        %v549 = vrot.slane %v545, %v548
        %v550 = vmul.f32 %v536, %v549
        %v551 = vmul.f32 %v537, %v549
        %v552 = vmul.f32 %v550, 1.442695
        %v553 = vpow.pop %v552
        %v554 = vmul.f32 %v551, 1.442695
        %v555 = vpow.pop %v554
        %s556 = scalar_lea.vmem %s467, %s539
        %v557 = vld [vmem:[%s556] sm:$0x1]
        %s558 = scalar_lea.vmem [#allocation4], %s539
        %v559 = vld [vmem:[%s558] sm:$0x1]
        %560 = vxpose.xlu0.b32.start [1/16] %v557, 128
        %561 = vxpose.xlu0.b32.cont [2/16] 0.0, 128
        %562 = vxpose.xlu0.b32.cont [3/16] 0.0, 128
        %563 = vxpose.xlu0.b32.cont [4/16] 0.0, 128
        %564 = vxpose.xlu0.b32.cont [5/16] 0.0, 128
        %565 = vxpose.xlu0.b32.cont [6/16] 0.0, 128
        %566 = vxpose.xlu0.b32.cont [7/16] 0.0, 128
        %567 = vxpose.xlu0.b32.cont [8/16] 0.0, 128
        %568 = vxpose.xlu0.b32.cont [9/16] 0.0, 128
        %569 = vxpose.xlu0.b32.cont [10/16] 0.0, 128
        %570 = vxpose.xlu0.b32.cont [11/16] 0.0, 128
        %571 = vxpose.xlu0.b32.cont [12/16] 0.0, 128
        %572 = vxpose.xlu0.b32.cont [13/16] 0.0, 128
        %573 = vxpose.xlu0.b32.cont [14/16] 0.0, 128
        %574 = vxpose.xlu0.b32.cont [15/16] 0.0, 128
        %575 = vxpose.xlu0.b32.end [16/16] 0.0, 128
        %v576 = vpop.trf.xlu0
        %v577 = vpop.trf.xlu0
        %v578 = vpop.trf.xlu0
        %v579 = vpop.trf.xlu0
        %v580 = vpop.trf.xlu0
        %v581 = vpop.trf.xlu0
        %v582 = vpop.trf.xlu0
        %v583 = vpop.trf.xlu0
        %v584 = vpop.trf.xlu0
        %v585 = vpop.trf.xlu0
        %v586 = vpop.trf.xlu0
        %v587 = vpop.trf.xlu0
        %v588 = vpop.trf.xlu0
        %v589 = vpop.trf.xlu0
        %v590 = vpop.trf.xlu0
        %v591 = vpop.trf.xlu0
        %vm592 = vcmask 7168
        %v594 = vsel %vm592, %v576, 0
        %v597 = vsel %vm592, %v577, 0
        %vm599 = vcmask 1040384
        %v601 = vsel %vm599, %v559, 0
        %603 = vmatprep.subr.mxu0 0.0
        %604 = vmatpush1.msra.mxu0 %v601
        %605 = vmatprep.subr.mxu0 0.0
        %606 = vmatpush1.msra.mxu0 0.0
        %607 = vmatprep.subr.mxu0 0.0
        %608 = vmatpush1.msra.mxu0 0.0
        %609 = vmatprep.subr.mxu0 0.0
        %610 = vmatpush1.msra.mxu0 0.0
        %611 = vmatprep.subr.mxu0 0.0
        %612 = vmatpush1.msra.mxu0 0.0
        %613 = vmatprep.subr.mxu0 0.0
        %614 = vmatpush1.msra.mxu0 0.0
        %615 = vmatprep.subr.mxu0 0.0
        %616 = vmatpush1.msra.mxu0 0.0
        %617 = vmatprep.subr.mxu0 0.0
        %618 = vmatpush1.msra.mxu0 0.0
        %619 = vmatprep.subr.mxu0 0.0
        %620 = vmatpush1.msra.mxu0 0.0
        %621 = vmatprep.subr.mxu0 0.0
        %622 = vmatpush1.msra.mxu0 0.0
        %623 = vmatprep.subr.mxu0 0.0
        %624 = vmatpush1.msra.mxu0 0.0
        %625 = vmatprep.subr.mxu0 0.0
        %626 = vmatpush1.msra.mxu0 0.0
        %627 = vmatprep.subr.mxu0 0.0
        %628 = vmatpush1.msra.mxu0 0.0
        %629 = vmatprep.subr.mxu0 0.0
        %630 = vmatpush1.msra.mxu0 0.0
        %631 = vmatprep.subr.mxu0 0.0
        %632 = vmatpush1.msra.mxu0 0.0
        %633 = vmatprep.subr.mxu0 0.0
        %634 = vmatpush1.msra.mxu0 0.0
        %635 = vmatprep.subr.mxu0 0.0
        %636 = vmatpush1.msra.mxu0 0.0
        %637 = vmatprep.subr.mxu0 0.0
        %638 = vmatpush1.msra.mxu0 0.0
        %639 = vmatprep.subr.mxu0 0.0
        %640 = vmatpush1.msra.mxu0 0.0
        %641 = vmatprep.subr.mxu0 0.0
        %642 = vmatpush1.msra.mxu0 0.0
        %643 = vmatprep.subr.mxu0 0.0
        %644 = vmatpush1.msra.mxu0 0.0
        %645 = vmatprep.subr.mxu0 0.0
        %646 = vmatpush1.msra.mxu0 0.0
        %647 = vmatprep.subr.mxu0 0.0
        %648 = vmatpush1.msra.mxu0 0.0
        %649 = vmatprep.subr.mxu0 0.0
        %650 = vmatpush1.msra.mxu0 0.0
        %651 = vmatprep.subr.mxu0 0.0
        %652 = vmatpush1.msra.mxu0 0.0
        %653 = vmatprep.subr.mxu0 0.0
        %654 = vmatpush1.msra.mxu0 0.0
        %655 = vmatprep.subr.mxu0 0.0
        %656 = vmatpush1.msra.mxu0 0.0
        %657 = vmatprep.subr.mxu0 0.0
        %658 = vmatpush1.msra.mxu0 0.0
        %659 = vmatprep.subr.mxu0 0.0
        %660 = vmatpush1.msra.mxu0 0.0
        %661 = vmatprep.subr.mxu0 0.0
        %662 = vmatpush1.msra.mxu0 0.0
        %663 = vmatprep.subr.mxu0 0.0
        %664 = vmatpush1.msra.mxu0 0.0
        %665 = vmatprep.subr.mxu0 0.0
        %666 = vmatpush1.msra.mxu0 0.0
        %667 = vmatprep.mubr.f32.mxu0 0.0
        %668 = vmatmul.mubr.f32.gmra.mrb[0].mxu0 %v594
        %v669 = vpop.f32.mrb[0].mxu0
        %v670 = vadd.f32 0.0, %v669
        %v671 = vpop.f32.mrb[0].mxu0
        %672 = vmatprep.mubr.f32.mxu0 0.0
        %673 = vmatmul.mubr.f32.gmra.mrb[0].mxu0 %v597
        %v674 = vpop.f32.mrb[0].mxu0
        %v675 = vadd.f32 0.0, %v674
        %v676 = vpop.f32.mrb[0].mxu0
        %677 = vdwg.mxu0
        %v678 = vld [vmem:[#allocation2] sm:$0xff]
        %v679 = vld [vmem:[#allocation2 + $0x8] sm:$0xff]
        %v680 = vmul.f32 %v553, %v678
        %v681 = vmul.f32 %v555, %v679
        %v682 = vadd.f32 %v680, %v670
        %v683 = vadd.f32 %v681, %v675
        %684 = vst.msk [vmem:[#allocation2] sm:$0xff] %vm525, %v682
        %685 = vst.msk [vmem:[#allocation2 + $0x8] sm:$0xff] %vm525, %v683
        %s686 = scalar_lea.vmem %s477, %s539
        %v687 = vld [vmem:[%s686] sm:$0x1]
        %vm688 = vcmask 130048
        %v690 = vsel %vm688, %v687, 0
        %692 = vmatprep.subr.mxu0 0.0
        %693 = vmatpush1.msra.mxu0 %v682
        %694 = vmatprep.subr.mxu0 0.0
        %695 = vmatpush1.msra.mxu0 %v683
        %696 = vmatprep.subr.mxu0 0.0
        %697 = vmatpush1.msra.mxu0 0.0
        %698 = vmatprep.subr.mxu0 0.0
        %699 = vmatpush1.msra.mxu0 0.0
        %700 = vmatprep.subr.mxu0 0.0
        %701 = vmatpush1.msra.mxu0 0.0
        %702 = vmatprep.subr.mxu0 0.0
        %703 = vmatpush1.msra.mxu0 0.0
        %704 = vmatprep.subr.mxu0 0.0
        %705 = vmatpush1.msra.mxu0 0.0
        %706 = vmatprep.subr.mxu0 0.0
        %707 = vmatpush1.msra.mxu0 0.0
        %708 = vmatprep.subr.mxu0 0.0
        %709 = vmatpush1.msra.mxu0 0.0
        %710 = vmatprep.subr.mxu0 0.0
        %711 = vmatpush1.msra.mxu0 0.0
        %712 = vmatprep.subr.mxu0 0.0
        %713 = vmatpush1.msra.mxu0 0.0
        %714 = vmatprep.subr.mxu0 0.0
        %715 = vmatpush1.msra.mxu0 0.0
        %716 = vmatprep.subr.mxu0 0.0
        %717 = vmatpush1.msra.mxu0 0.0
        %718 = vmatprep.subr.mxu0 0.0
        %719 = vmatpush1.msra.mxu0 0.0
        %720 = vmatprep.subr.mxu0 0.0
        %721 = vmatpush1.msra.mxu0 0.0
        %722 = vmatprep.subr.mxu0 0.0
        %723 = vmatpush1.msra.mxu0 0.0
        %724 = vmatprep.subr.mxu0 0.0
        %725 = vmatpush1.msra.mxu0 0.0
        %726 = vmatprep.subr.mxu0 0.0
        %727 = vmatpush1.msra.mxu0 0.0
        %728 = vmatprep.subr.mxu0 0.0
        %729 = vmatpush1.msra.mxu0 0.0
        %730 = vmatprep.subr.mxu0 0.0
        %731 = vmatpush1.msra.mxu0 0.0
        %732 = vmatprep.subr.mxu0 0.0
        %733 = vmatpush1.msra.mxu0 0.0
        %734 = vmatprep.subr.mxu0 0.0
        %735 = vmatpush1.msra.mxu0 0.0
        %736 = vmatprep.subr.mxu0 0.0
        %737 = vmatpush1.msra.mxu0 0.0
        %738 = vmatprep.subr.mxu0 0.0
        %739 = vmatpush1.msra.mxu0 0.0
        %740 = vmatprep.subr.mxu0 0.0
        %741 = vmatpush1.msra.mxu0 0.0
        %742 = vmatprep.subr.mxu0 0.0
        %743 = vmatpush1.msra.mxu0 0.0
        %744 = vmatprep.subr.mxu0 0.0
        %745 = vmatpush1.msra.mxu0 0.0
        %746 = vmatprep.subr.mxu0 0.0
        %747 = vmatpush1.msra.mxu0 0.0
        %748 = vmatprep.subr.mxu0 0.0
        %749 = vmatpush1.msra.mxu0 0.0
        %750 = vmatprep.subr.mxu0 0.0
        %751 = vmatpush1.msra.mxu0 0.0
        %752 = vmatprep.subr.mxu0 0.0
        %753 = vmatpush1.msra.mxu0 0.0
        %754 = vmatprep.subr.mxu0 0.0
        %755 = vmatpush1.msra.mxu0 0.0
        %756 = vmatprep.mubr.f32.mxu0 0.0
        %757 = vmatmul.mubr.f32.gmra.mrb[0].mxu0 %v690
        %v758 = vpop.f32.mrb[0].mxu0
        %v759 = vadd.f32 0.0, %v758
        %v760 = vpop.f32.mrb[0].mxu0
        %761 = vdwg.mxu0
        %s762 = scalar_lea.vmem [#allocation5], %s539
        %vm763 = vcmask 516096
        %764 = vst.msk [vmem:[%s762] sm:$0x1] %vm763, %v759
      $region61: #{_lambda_.74} parent=51 // loop_footer
        %s543 = sadd.s32 1, %s539
      $region62: #{_lambda_.74} parent=51 // loop_footer_branch
        %538 = sbr.rel target = $region58
      $region63: #{_lambda_.74} parent=51 // loop_exit
        _
      %v765 = vld [vmem:[%s457] sm:$0xff]
      %v766 = vld [vmem:[%s457 + $0x8] sm:$0xff]
      %v767 = vsub.f32 0.0, %v765
      %v768 = vsub.f32 0.0, %v766
      %v769 = vmul.f32 %v767, 1.442695
      %v770 = vpow.pop %v769
      %v771 = vmul.f32 %v768, 1.442695
      %v772 = vpow.pop %v771
      %v773 = vadd.f32 %v770, 1.0
      %v774 = vadd.f32 %v772, 1.0
      %v775 = vrcp.pop %v773
      %v776 = vrcp.pop %v774
      %v777 = vmul.f32 %v765, %v775
      %v778 = vmul.f32 %v766, %v776
      %v779 = vld [vmem:[%s6] sm:$0x1]
      %v780 = vld [vmem:[%s437] sm:$0xff]
      %v781 = vld [vmem:[%s437 + $0x8] sm:$0xff]
      %v783 = vlaneseq
      %v784 = vshrl.u32 %v783, 7
      %v785 = vsub.s32 0, %v784
      %v786 = vrot.slane %v779, %v785
      %v788 = vmul.f32 %v786, %v780
      %v789 = vmul.f32 %v786, %v781
      %v790 = vld [vmem:[#allocation5] sm:$0xff]
      %v791 = vld [vmem:[#allocation5 + $0x8] sm:$0xff]
      %v792 = vadd.f32 %v788, %v790
      %v793 = vadd.f32 %v789, %v791
      %v794 = vmul.f32 %v792, %v777
      %v795 = vmul.f32 %v793, %v778
      %796 = vst.msk [vmem:[%s487] sm:$0xff] %vm525, %v794
      %797 = vst.msk [vmem:[%s487 + $0x8] sm:$0xff] %vm525, %v795
      %s798 = smul.u32 2, %s24
      %p799 = scmp.lt.s32.totalorder %s23, 1
      %s800 = scalar_select %p799, %s23, 1
      %p801 = scmp.lt.s32.totalorder %s798, 1
      %s802 = scalar_select %p801, %s798, 1
      %s803 = smul.addr %s800, 2
      %s804 = sadd.s32 %s802, %s803
      %s805 = smul.addr %s804, 8
      %s806 = scalar_lea.vmem %s8, %s805
      // Predicated region
      $region64: #{_lambda_.74} parent=51 // pred_check
        %p807 = pneg %p254
      $region65: #{_lambda_.74} parent=51 // pred_check_branch
        %809 = sbr.rel (%p807) target = $region67
      $region66: #{_lambda_.74} parent=51 // pred_region
        %s810 = smul.u32 2, %s24
      $region67: #{_lambda_.74} parent=51 // pred_fallthru
        _
    $region52: #{_lambda_.74} parent=5 // pred_fallthru
      _
    %p811 = scmp.le.s32.totalorder 2, %s14
    // Predicated region
    $region68: #{_lambda_.74} parent=5 // pred_check
      %p812 = pneg %p811
    $region69: #{_lambda_.74} parent=5 // pred_check_branch
      %814 = sbr.rel (%p812) target = $region71
    $region70: #{_lambda_.74} parent=5 // pred_region
      %s815 = ssub.s32 %s14, 2
      // Predicated region
      $region72: #{_lambda_.74} parent=70 // pred_check
        %p816 = pneg %p260
      $region73: #{_lambda_.74} parent=70 // pred_check_branch
        %818 = sbr.rel (%p816) target = $region75
      $region74: #{_lambda_.74} parent=70 // pred_region
        %s819 = smul.u32 2, %s26
        %p820 = scmp.lt.s32.totalorder %s25, 1
        %s821 = scalar_select %p820, %s25, 1
        %p822 = scmp.lt.s32.totalorder %s819, 1
        %s823 = scalar_select %p822, %s819, 1
        %s824 = smul.addr %s821, 2
        %s825 = sadd.s32 %s823, %s824
        %s826 = smul.addr %s825, 8
        %s827 = scalar_lea.vmem %s8, %s826
      $region75: #{_lambda_.74} parent=70 // pred_fallthru
        _
    $region71: #{_lambda_.74} parent=5 // pred_fallthru
      _
  $region6: #{_lambda_.74} parent=0 // loop_footer
    %s18 = sadd.s32 1, %s14
  $region7: #{_lambda_.74} parent=0 // loop_footer_branch
    %13 = sbr.rel target = $region3
  $region8: #{_lambda_.74} parent=0 // loop_exit
    _

// kernel: _lambda_.95
$region0: #{_lambda_.95}
  #allocation0 [shape = 'u32[]', space=smem, size = 0x4, offset = 0x4, fixed_abs, tag = 'smem constant byte address 0x4 - core index']
  #allocation1 [shape = 'u32[144,128]{1,0:T(1,128)}', space=vmem, size = 0x12000, scoped, tag = 'internal scratch']
  #allocation2 [shape = 'f32[16,128]{1,0:T(8,128)}', space=vmem, size = 0x2000, scoped, tag = 'scratch operand']
  %s0 = inlined_call_operand.vmem [shape: bf16[16,128], index: 0, kind: input, shape index: {}]
  %s1 = inlined_call_operand.vmem [shape: bf16[128,128], index: 1, kind: input, shape index: {}]
  %s2 = inlined_call_operand.vmem [shape: f32[16,128], index: 2, kind: output, shape index: {}]
  %s3 = sld [smem:[#allocation0]]
  $region26: #{_lambda_.95} parent=0
    _
  %s5 = ssub.s32 1, %s3
  %s6 = scalar_select 0, %s5, %s3
  // Predicated region
  $region2: #{_lambda_.95} parent=0 // pred_check
    _
  $region3: #{_lambda_.95} parent=0 // pred_check_branch
    %8 = sbr.rel (0) target = $region5
  $region4: #{_lambda_.95} parent=0 // pred_region
    _
  $region5: #{_lambda_.95} parent=0 // pred_fallthru
    _
  // Predicated region
  $region6: #{_lambda_.95} parent=0 // pred_check
    _
  $region7: #{_lambda_.95} parent=0 // pred_check_branch
    %10 = sbr.rel (0) target = $region9
  $region8: #{_lambda_.95} parent=0 // pred_region
    _
  $region9: #{_lambda_.95} parent=0 // pred_fallthru
    _
  %p12 = scmp.eq.s32.totalorder 0, 0
  // Predicated region
  $region10: #{_lambda_.95} parent=0 // pred_check
    %p13 = pneg %p12
  $region11: #{_lambda_.95} parent=0 // pred_check_branch
    %15 = sbr.rel (%p13) target = $region13
  $region12: #{_lambda_.95} parent=0 // pred_region
    %16 = vst [vmem:[#allocation2] sm:$0xff] 0.0
    %17 = vst [vmem:[#allocation2 + $0x8] sm:$0xff] 0.0
  $region13: #{_lambda_.95} parent=0 // pred_fallthru
    _
  %v18 = vld [vmem:[#allocation2] sm:$0xff]
  %v19 = vld [vmem:[#allocation2 + $0x8] sm:$0xff]
  %v20 = vld [vmem:[%s0] sm:$0xf]
  %v21 = vld [vmem:[%s0 + $0x4] sm:$0xf]
  %v22 = vld [vmem:[%s1] sm:$0xf]
  %v23 = vld [vmem:[%s1 + $0x4] sm:$0xf]
  %v24 = vld [vmem:[%s1 + $0x8] sm:$0xf]
  %v25 = vld [vmem:[%s1 + $0xc] sm:$0xf]
  %v26 = vld [vmem:[%s1 + $0x10] sm:$0xf]
  %v27 = vld [vmem:[%s1 + $0x14] sm:$0xf]
  %v28 = vld [vmem:[%s1 + $0x18] sm:$0xf]
  %v29 = vld [vmem:[%s1 + $0x1c] sm:$0xf]
  %v30 = vld [vmem:[%s1 + $0x20] sm:$0xf]
  %v31 = vld [vmem:[%s1 + $0x24] sm:$0xf]
  %v32 = vld [vmem:[%s1 + $0x28] sm:$0xf]
  %v33 = vld [vmem:[%s1 + $0x2c] sm:$0xf]
  %v34 = vld [vmem:[%s1 + $0x30] sm:$0xf]
  %v35 = vld [vmem:[%s1 + $0x34] sm:$0xf]
  %v36 = vld [vmem:[%s1 + $0x38] sm:$0xf]
  %v37 = vld [vmem:[%s1 + $0x3c] sm:$0xf]
  %v40 = vunpack.c.l.b16 %v20
  %v41 = vunpack.c.l.b16 %v21
  %v42 = vpack.c.b16 %v41, %v40
  %v60 = vunpack.c.l.b16 %v22
  %v61 = vunpack.c.l.b16 %v23
  %v62 = vunpack.c.l.b16 %v24
  %v63 = vunpack.c.l.b16 %v25
  %v64 = vunpack.c.l.b16 %v26
  %v65 = vunpack.c.l.b16 %v27
  %v66 = vunpack.c.l.b16 %v28
  %v67 = vunpack.c.l.b16 %v29
  %v68 = vunpack.c.l.b16 %v30
  %v69 = vunpack.c.l.b16 %v31
  %v70 = vunpack.c.l.b16 %v32
  %v71 = vunpack.c.l.b16 %v33
  %v72 = vunpack.c.l.b16 %v34
  %v73 = vunpack.c.l.b16 %v35
  %v74 = vunpack.c.l.b16 %v36
  %v75 = vunpack.c.l.b16 %v37
  %v76 = vpack.c.b16 %v61, %v60
  %v77 = vpack.c.b16 %v63, %v62
  %v78 = vpack.c.b16 %v65, %v64
  %v79 = vpack.c.b16 %v67, %v66
  %v80 = vpack.c.b16 %v69, %v68
  %v81 = vpack.c.b16 %v71, %v70
  %v82 = vpack.c.b16 %v73, %v72
  %v83 = vpack.c.b16 %v75, %v74
  %92 = vmatprep.subr.bf16.mxu0 0
  %93 = vmatpush1.bf16.msra.mxu0 %v76
  %94 = vmatprep.subr.bf16.mxu0 0
  %95 = vmatpush1.bf16.msra.mxu0 %v77
  %96 = vmatprep.subr.bf16.mxu0 0
  %97 = vmatpush1.bf16.msra.mxu0 %v78
  %98 = vmatprep.subr.bf16.mxu0 0
  %99 = vmatpush1.bf16.msra.mxu0 %v79
  %100 = vmatprep.subr.bf16.mxu0 0
  %101 = vmatpush1.bf16.msra.mxu0 %v80
  %102 = vmatprep.subr.bf16.mxu0 0
  %103 = vmatpush1.bf16.msra.mxu0 %v81
  %104 = vmatprep.subr.bf16.mxu0 0
  %105 = vmatpush1.bf16.msra.mxu0 %v82
  %106 = vmatprep.subr.bf16.mxu0 0
  %107 = vmatpush1.bf16.msra.mxu0 %v83
  %108 = vmatprep.subr.bf16.mxu0 0
  %109 = vmatpush1.bf16.msra.mxu0 0
  %110 = vmatprep.subr.bf16.mxu0 0
  %111 = vmatpush1.bf16.msra.mxu0 0
  %112 = vmatprep.subr.bf16.mxu0 0
  %113 = vmatpush1.bf16.msra.mxu0 0
  %114 = vmatprep.subr.bf16.mxu0 0
  %115 = vmatpush1.bf16.msra.mxu0 0
  %116 = vmatprep.subr.bf16.mxu0 0
  %117 = vmatpush1.bf16.msra.mxu0 0
  %118 = vmatprep.subr.bf16.mxu0 0
  %119 = vmatpush1.bf16.msra.mxu0 0
  %120 = vmatprep.subr.bf16.mxu0 0
  %121 = vmatpush1.bf16.msra.mxu0 0
  %122 = vmatprep.subr.bf16.mxu0 0
  %123 = vmatpush1.bf16.msra.mxu0 0
  %124 = vmatprep.mubr.bf16.mxu0 0
  %125 = vmatmul.mubr.bf16.gmra.mrb[0].mxu0 %v42
  %v126 = vpop.f32.mrb[0].mxu0
  %v127 = vadd.f32 0.0, %v126
  %v128 = vpop.f32.mrb[0].mxu0
  %v129 = vpop.f32.mrb[0].mxu0
  %v130 = vadd.f32 0.0, %v129
  %v131 = vpop.f32.mrb[0].mxu0
  %132 = vdwg.mxu0
  %v133 = vadd.f32 %v18, %v127
  %v134 = vadd.f32 %v19, %v130
  %135 = vst [vmem:[#allocation2] sm:$0xff] %v133
  %136 = vst [vmem:[#allocation2 + $0x8] sm:$0xff] %v134
  // Predicated region
  $region14: #{_lambda_.95} parent=0 // pred_check
    %p137 = pneg %p12
  $region15: #{_lambda_.95} parent=0 // pred_check_branch
    %139 = sbr.rel (%p137) target = $region17
  $region16: #{_lambda_.95} parent=0 // pred_region
    %v140 = vld [vmem:[#allocation2] sm:$0xff]
    %v141 = vld [vmem:[#allocation2 + $0x8] sm:$0xff]
    %142 = vst [vmem:[%s2] sm:$0xff] %v140
    %143 = vst [vmem:[%s2 + $0x8] sm:$0xff] %v141
  $region17: #{_lambda_.95} parent=0 // pred_fallthru
    _
  // Predicated region
  $region18: #{_lambda_.95} parent=0 // pred_check
    _
  $region19: #{_lambda_.95} parent=0 // pred_check_branch
    %145 = sbr.rel (0) target = $region21
  $region20: #{_lambda_.95} parent=0 // pred_region
    _
  $region21: #{_lambda_.95} parent=0 // pred_fallthru
    _
  // Predicated region
  $region22: #{_lambda_.95} parent=0 // pred_check
    _
  $region23: #{_lambda_.95} parent=0 // pred_check_branch
    %147 = sbr.rel (0) target = $region25
  $region24: #{_lambda_.95} parent=0 // pred_region
    _
  $region25: #{_lambda_.95} parent=0 // pred_fallthru
    _

// kernel: _lambda_.96
$region0: #{_lambda_.96}
  #allocation0 [shape = 'u32[]', space=smem, size = 0x4, offset = 0x4, fixed_abs, tag = 'smem constant byte address 0x4 - core index']
  #allocation1 [shape = 'u32[144,128]{1,0:T(1,128)}', space=vmem, size = 0x12000, scoped, tag = 'internal scratch']
  %s0 = inlined_call_operand.vmem [shape: f32[8,64], index: 0, kind: input, shape index: {}]
  %s1 = inlined_call_operand.vmem [shape: f32[8,64], index: 1, kind: input, shape index: {}]
  %s2 = inlined_call_operand.vmem [shape: f32[1,64], index: 2, kind: input, shape index: {}]
  %s3 = inlined_call_operand.vmem [shape: f32[8,64], index: 3, kind: output, shape index: {0}]
  %s4 = inlined_call_operand.vmem [shape: f32[8,64], index: 4, kind: output, shape index: {1}]
  %5 = xla_tuple %s3, %s4
  %s6 = sld [smem:[#allocation0]]
  $region30: #{_lambda_.96} parent=0
    _
  %s8 = ssub.s32 1, %s6
  %s9 = scalar_select 0, %s8, %s6
  // Predicated region
  $region2: #{_lambda_.96} parent=0 // pred_check
    _
  $region3: #{_lambda_.96} parent=0 // pred_check_branch
    %11 = sbr.rel (0) target = $region5
  $region4: #{_lambda_.96} parent=0 // pred_region
    _
  $region5: #{_lambda_.96} parent=0 // pred_fallthru
    _
  // Predicated region
  $region6: #{_lambda_.96} parent=0 // pred_check
    _
  $region7: #{_lambda_.96} parent=0 // pred_check_branch
    %13 = sbr.rel (0) target = $region9
  $region8: #{_lambda_.96} parent=0 // pred_region
    _
  $region9: #{_lambda_.96} parent=0 // pred_fallthru
    _
  // Predicated region
  $region10: #{_lambda_.96} parent=0 // pred_check
    _
  $region11: #{_lambda_.96} parent=0 // pred_check_branch
    %15 = sbr.rel (0) target = $region13
  $region12: #{_lambda_.96} parent=0 // pred_region
    _
  $region13: #{_lambda_.96} parent=0 // pred_fallthru
    _
  %v16 = vld [vmem:[%s0] sm:$0xff]
  %v17 = vld [vmem:[%s1] sm:$0xff]
  %v18 = vadd.f32 %v16, %v17
  %vm19 = vcmask 523264
  %20 = vst.msk [vmem:[%s4] sm:$0xff] %vm19, %v18
  %v21 = vmul.f32 %v18, %v18
  %v22 = vsel %vm19, %v21, 0.0
  %23 = vadd.xlane.f32.xlu0 %v22
  %v24 = vpop.xlane.xlu0 %23
  %v25 = vrcp.pop 64.0
  %v26 = vmul.f32 %v24, %v25
  %v27 = vadd.f32 %v26, 1e-05
  %v28 = vrsqrt.pop %v27
  %v29 = vmul.f32 %v18, %v28
  %v30 = vld [vmem:[%s2] sm:$0x1]
  %v32 = vlaneseq
  %v33 = vshrl.u32 %v32, 7
  %v34 = vsub.s32 0, %v33
  %v35 = vrot.slane %v30, %v34
  %v37 = vmul.f32 %v29, %v35
  %38 = vst.msk [vmem:[%s3] sm:$0xff] %vm19, %v37
  // Predicated region
  $region14: #{_lambda_.96} parent=0 // pred_check
    _
  $region15: #{_lambda_.96} parent=0 // pred_check_branch
    %40 = sbr.rel (0) target = $region17
  $region16: #{_lambda_.96} parent=0 // pred_region
    _
  $region17: #{_lambda_.96} parent=0 // pred_fallthru
    _
  // Predicated region
  $region18: #{_lambda_.96} parent=0 // pred_check
    _
  $region19: #{_lambda_.96} parent=0 // pred_check_branch
    %42 = sbr.rel (0) target = $region21
  $region20: #{_lambda_.96} parent=0 // pred_region
    _
  $region21: #{_lambda_.96} parent=0 // pred_fallthru
    _
  // Predicated region
  $region22: #{_lambda_.96} parent=0 // pred_check
    _
  $region23: #{_lambda_.96} parent=0 // pred_check_branch
    %44 = sbr.rel (0) target = $region25
  $region24: #{_lambda_.96} parent=0 // pred_region
    _
  $region25: #{_lambda_.96} parent=0 // pred_fallthru
    _
  // Predicated region
  $region26: #{_lambda_.96} parent=0 // pred_check
    _
  $region27: #{_lambda_.96} parent=0 // pred_check_branch
    %46 = sbr.rel (0) target = $region29
  $region28: #{_lambda_.96} parent=0 // pred_region
    _
  $region29: #{_lambda_.96} parent=0 // pred_fallthru
    _

// kernel: _lambda_.97
$region0: #{_lambda_.97}
  #allocation0 [shape = 'u32[]', space=smem, size = 0x4, offset = 0x4, fixed_abs, tag = 'smem constant byte address 0x4 - core index']
  #allocation1 [shape = 'u32[144,128]{1,0:T(1,128)}', space=vmem, size = 0x12000, scoped, tag = 'internal scratch']
  #allocation2 [shape = 'f32[16,256]{1,0:T(8,128)}', space=vmem, size = 0x4000, scoped, tag = 'scratch operand']
  %s0 = inlined_call_operand.vmem [shape: bf16[16,128], index: 0, kind: input, shape index: {}]
  %s1 = inlined_call_operand.vmem [shape: bf16[128,256], index: 1, kind: input, shape index: {}]
  %s2 = inlined_call_operand.vmem [shape: f32[16,256], index: 2, kind: output, shape index: {}]
  %s3 = sld [smem:[#allocation0]]
  $region26: #{_lambda_.97} parent=0
    _
  %s5 = ssub.s32 1, %s3
  %s6 = scalar_select 0, %s5, %s3
  // Predicated region
  $region2: #{_lambda_.97} parent=0 // pred_check
    _
  $region3: #{_lambda_.97} parent=0 // pred_check_branch
    %8 = sbr.rel (0) target = $region5
  $region4: #{_lambda_.97} parent=0 // pred_region
    _
  $region5: #{_lambda_.97} parent=0 // pred_fallthru
    _
  // Predicated region
  $region6: #{_lambda_.97} parent=0 // pred_check
    _
  $region7: #{_lambda_.97} parent=0 // pred_check_branch
    %10 = sbr.rel (0) target = $region9
  $region8: #{_lambda_.97} parent=0 // pred_region
    _
  $region9: #{_lambda_.97} parent=0 // pred_fallthru
    _
  %p12 = scmp.eq.s32.totalorder 0, 0
  // Predicated region
  $region10: #{_lambda_.97} parent=0 // pred_check
    %p13 = pneg %p12
  $region11: #{_lambda_.97} parent=0 // pred_check_branch
    %15 = sbr.rel (%p13) target = $region13
  $region12: #{_lambda_.97} parent=0 // pred_region
    %16 = vst [vmem:[#allocation2] sm:$0xff] 0.0
    %17 = vst [vmem:[#allocation2 + $0x8] sm:$0xff] 0.0
    %18 = vst [vmem:[#allocation2 + $0x10] sm:$0xff] 0.0
    %19 = vst [vmem:[#allocation2 + $0x18] sm:$0xff] 0.0
  $region13: #{_lambda_.97} parent=0 // pred_fallthru
    _
  %v20 = vld [vmem:[#allocation2] sm:$0xff]
  %v21 = vld [vmem:[#allocation2 + $0x8] sm:$0xff]
  %v22 = vld [vmem:[#allocation2 + $0x10] sm:$0xff]
  %v23 = vld [vmem:[#allocation2 + $0x18] sm:$0xff]
  %v24 = vld [vmem:[%s0] sm:$0xf]
  %v25 = vld [vmem:[%s0 + $0x4] sm:$0xf]
  %v26 = vld [vmem:[%s1] sm:$0xff]
  %v27 = vld [vmem:[%s1 + $0x8] sm:$0xff]
  %v28 = vld [vmem:[%s1 + $0x10] sm:$0xff]
  %v29 = vld [vmem:[%s1 + $0x18] sm:$0xff]
  %v30 = vld [vmem:[%s1 + $0x20] sm:$0xff]
  %v31 = vld [vmem:[%s1 + $0x28] sm:$0xff]
  %v32 = vld [vmem:[%s1 + $0x30] sm:$0xff]
  %v33 = vld [vmem:[%s1 + $0x38] sm:$0xff]
  %v34 = vld [vmem:[%s1 + $0x40] sm:$0xff]
  %v35 = vld [vmem:[%s1 + $0x48] sm:$0xff]
  %v36 = vld [vmem:[%s1 + $0x50] sm:$0xff]
  %v37 = vld [vmem:[%s1 + $0x58] sm:$0xff]
  %v38 = vld [vmem:[%s1 + $0x60] sm:$0xff]
  %v39 = vld [vmem:[%s1 + $0x68] sm:$0xff]
  %v40 = vld [vmem:[%s1 + $0x70] sm:$0xff]
  %v41 = vld [vmem:[%s1 + $0x78] sm:$0xff]
  %v44 = vunpack.c.l.b16 %v24
  %v45 = vunpack.c.l.b16 %v25
  %v46 = vpack.c.b16 %v45, %v44
  %v64 = vunpack.c.l.b16 %v26
  %v65 = vunpack.c.h.b16 %v26
  %v66 = vunpack.c.l.b16 %v27
  %v67 = vunpack.c.h.b16 %v27
  %v68 = vunpack.c.l.b16 %v28
  %v69 = vunpack.c.h.b16 %v28
  %v70 = vunpack.c.l.b16 %v29
  %v71 = vunpack.c.h.b16 %v29
  %v72 = vunpack.c.l.b16 %v30
  %v73 = vunpack.c.h.b16 %v30
  %v74 = vunpack.c.l.b16 %v31
  %v75 = vunpack.c.h.b16 %v31
  %v76 = vunpack.c.l.b16 %v32
  %v77 = vunpack.c.h.b16 %v32
  %v78 = vunpack.c.l.b16 %v33
  %v79 = vunpack.c.h.b16 %v33
  %v80 = vunpack.c.l.b16 %v34
  %v81 = vunpack.c.h.b16 %v34
  %v82 = vunpack.c.l.b16 %v35
  %v83 = vunpack.c.h.b16 %v35
  %v84 = vunpack.c.l.b16 %v36
  %v85 = vunpack.c.h.b16 %v36
  %v86 = vunpack.c.l.b16 %v37
  %v87 = vunpack.c.h.b16 %v37
  %v88 = vunpack.c.l.b16 %v38
  %v89 = vunpack.c.h.b16 %v38
  %v90 = vunpack.c.l.b16 %v39
  %v91 = vunpack.c.h.b16 %v39
  %v92 = vunpack.c.l.b16 %v40
  %v93 = vunpack.c.h.b16 %v40
  %v94 = vunpack.c.l.b16 %v41
  %v95 = vunpack.c.h.b16 %v41
  %v96 = vpack.c.b16 %v66, %v64
  %v97 = vpack.c.b16 %v67, %v65
  %v98 = vpack.c.b16 %v70, %v68
  %v99 = vpack.c.b16 %v71, %v69
  %v100 = vpack.c.b16 %v74, %v72
  %v101 = vpack.c.b16 %v75, %v73
  %v102 = vpack.c.b16 %v78, %v76
  %v103 = vpack.c.b16 %v79, %v77
  %v104 = vpack.c.b16 %v82, %v80
  %v105 = vpack.c.b16 %v83, %v81
  %v106 = vpack.c.b16 %v86, %v84
  %v107 = vpack.c.b16 %v87, %v85
  %v108 = vpack.c.b16 %v90, %v88
  %v109 = vpack.c.b16 %v91, %v89
  %v110 = vpack.c.b16 %v94, %v92
  %v111 = vpack.c.b16 %v95, %v93
  %128 = vmatprep.subr.bf16.mxu0 %v97
  %129 = vmatpush1.bf16.msra.mxu0 %v96
  %130 = vmatprep.subr.bf16.mxu0 %v99
  %131 = vmatpush1.bf16.msra.mxu0 %v98
  %132 = vmatprep.subr.bf16.mxu0 %v101
  %133 = vmatpush1.bf16.msra.mxu0 %v100
  %134 = vmatprep.subr.bf16.mxu0 %v103
  %135 = vmatpush1.bf16.msra.mxu0 %v102
  %136 = vmatprep.subr.bf16.mxu0 %v105
  %137 = vmatpush1.bf16.msra.mxu0 %v104
  %138 = vmatprep.subr.bf16.mxu0 %v107
  %139 = vmatpush1.bf16.msra.mxu0 %v106
  %140 = vmatprep.subr.bf16.mxu0 %v109
  %141 = vmatpush1.bf16.msra.mxu0 %v108
  %142 = vmatprep.subr.bf16.mxu0 %v111
  %143 = vmatpush1.bf16.msra.mxu0 %v110
  %144 = vmatprep.subr.bf16.mxu0 0
  %145 = vmatpush1.bf16.msra.mxu0 0
  %146 = vmatprep.subr.bf16.mxu0 0
  %147 = vmatpush1.bf16.msra.mxu0 0
  %148 = vmatprep.subr.bf16.mxu0 0
  %149 = vmatpush1.bf16.msra.mxu0 0
  %150 = vmatprep.subr.bf16.mxu0 0
  %151 = vmatpush1.bf16.msra.mxu0 0
  %152 = vmatprep.subr.bf16.mxu0 0
  %153 = vmatpush1.bf16.msra.mxu0 0
  %154 = vmatprep.subr.bf16.mxu0 0
  %155 = vmatpush1.bf16.msra.mxu0 0
  %156 = vmatprep.subr.bf16.mxu0 0
  %157 = vmatpush1.bf16.msra.mxu0 0
  %158 = vmatprep.subr.bf16.mxu0 0
  %159 = vmatpush1.bf16.msra.mxu0 0
  %160 = vmatprep.mubr.bf16.mxu0 0
  %161 = vmatmul.mubr.bf16.gmra.mrb[0].mxu0 %v46
  %v162 = vpop.f32.mrb[0].mxu0
  %v163 = vadd.f32 0.0, %v162
  %v164 = vpop.f32.mrb[0].mxu0
  %v165 = vadd.f32 0.0, %v164
  %v166 = vpop.f32.mrb[0].mxu0
  %v167 = vadd.f32 0.0, %v166
  %v168 = vpop.f32.mrb[0].mxu0
  %v169 = vadd.f32 0.0, %v168
  %170 = vdwg.mxu0
  %v171 = vadd.f32 %v20, %v163
  %v172 = vadd.f32 %v21, %v165
  %v173 = vadd.f32 %v22, %v167
  %v174 = vadd.f32 %v23, %v169
  %175 = vst [vmem:[#allocation2] sm:$0xff] %v171
  %176 = vst [vmem:[#allocation2 + $0x8] sm:$0xff] %v172
  %177 = vst [vmem:[#allocation2 + $0x10] sm:$0xff] %v173
  %178 = vst [vmem:[#allocation2 + $0x18] sm:$0xff] %v174
  // Predicated region
  $region14: #{_lambda_.97} parent=0 // pred_check
    %p179 = pneg %p12
  $region15: #{_lambda_.97} parent=0 // pred_check_branch
    %181 = sbr.rel (%p179) target = $region17
  $region16: #{_lambda_.97} parent=0 // pred_region
    %v182 = vld [vmem:[#allocation2] sm:$0xff]
    %v183 = vld [vmem:[#allocation2 + $0x8] sm:$0xff]
    %v184 = vld [vmem:[#allocation2 + $0x10] sm:$0xff]
    %v185 = vld [vmem:[#allocation2 + $0x18] sm:$0xff]
    %186 = vst [vmem:[%s2] sm:$0xff] %v182
    %187 = vst [vmem:[%s2 + $0x8] sm:$0xff] %v183
    %188 = vst [vmem:[%s2 + $0x10] sm:$0xff] %v184
    %189 = vst [vmem:[%s2 + $0x18] sm:$0xff] %v185
  $region17: #{_lambda_.97} parent=0 // pred_fallthru
    _
  // Predicated region
  $region18: #{_lambda_.97} parent=0 // pred_check
    _
  $region19: #{_lambda_.97} parent=0 // pred_check_branch
    %191 = sbr.rel (0) target = $region21
  $region20: #{_lambda_.97} parent=0 // pred_region
    _
  $region21: #{_lambda_.97} parent=0 // pred_fallthru
    _
  // Predicated region
  $region22: #{_lambda_.97} parent=0 // pred_check
    _
  $region23: #{_lambda_.97} parent=0 // pred_check_branch
    %193 = sbr.rel (0) target = $region25
  $region24: #{_lambda_.97} parent=0 // pred_region
    _
  $region25: #{_lambda_.97} parent=0 // pred_fallthru
    _

// kernel: _lambda_.98
$region0: #{_lambda_.98}
  #allocation0 [shape = 'u32[]', space=smem, size = 0x4, offset = 0x4, fixed_abs, tag = 'smem constant byte address 0x4 - core index']
  #allocation1 [shape = 'u32[144,128]{1,0:T(1,128)}', space=vmem, size = 0x12000, scoped, tag = 'internal scratch']
  #allocation2 [shape = 'f32[7,128]{1,0:T(8,128)}', space=vmem, size = 0x1000, scoped, tag = 'scratch operand']
  %s0 = inlined_call_operand.vmem [shape: f32[2,4,128], index: 0, kind: input, shape index: {}]
  %s1 = inlined_call_operand.vmem [shape: f32[4,128], index: 1, kind: input, shape index: {}]
  %s2 = inlined_call_operand.vmem [shape: f32[1,128], index: 2, kind: input, shape index: {}]
  %s3 = inlined_call_operand.vmem [shape: f32[2,4,128], index: 3, kind: output, shape index: {}]
  %s4 = sld [smem:[#allocation0]]
  $region45: #{_lambda_.98} parent=0
    _
  %s6 = ssub.s32 1, %s4
  %s7 = scalar_select 0, %s6, %s4
  loop: start=0, step=1, limit=4
  $region2: #{_lambda_.98} parent=0 // loop_pre_header
    _
  $region3: #{_lambda_.98} parent=0 // loop_header
    %s9 = sphi 0, %s13
    %p10 = scmp.ge.s32.totalorder %s9, 4
    %s19 = sphi 0, %s21
    %s22 = sphi 0, %s19
    %s23 = sphi 0, %s22
    %s39 = sphi 0, %s23
    %s43 = sphi 0, %s43
    %s45 = sphi 0, %s43
    %s46 = sphi 0, %s45
    %s60 = sphi 0, %s46
    %s64 = sphi 0, %s64
    %s66 = sphi 0, %s64
    %s67 = sphi 0, %s66
    %s81 = sphi 0, %s67
    %s87 = sphi 0, %s89
    %s90 = sphi 0, %s87
    %s91 = sphi 0, %s90
    %s107 = sphi 0, %s91
  $region4: #{_lambda_.98} parent=0 // loop_header_branch
    %12 = sbr.rel (%p10) target = $region8
  $region5: #{_lambda_.98} parent=0 // loop_body
    %s14 = ssub.s32 %s9, 1
    %s15 = ssub.s32 %s9, 2
    %s16 = sadd.s32 %s9, 1
    %s17 = ssub.s32 %s9, %s16
    %p18 = scmp.eq.s32.totalorder %s17, 0
    %s20 = sadd.s32 %s19, 1
    %s21 = scalar_select %p18, %s19, %s20
    %p24 = pneg %p18
    %p25 = scmp.eq.s32.totalorder %s9, 1
    %p26 = por %p24, %p25
    %p27 = scmp.ne.s32.totalorder %s19, %s22
    %p28 = scmp.eq.s32.totalorder %s9, 0
    %p29 = por %p27, %p28
    %p30 = scmp.ne.s32.totalorder %s19, %s22
    %p31 = scmp.eq.s32.totalorder %s14, 1
    %p32 = por %p30, %p31
    %p33 = scmp.ne.s32.totalorder %s22, %s23
    %p34 = scmp.eq.s32.totalorder %s14, 0
    %p35 = por %p33, %p34
    %p36 = scmp.ne.s32.totalorder %s22, %s23
    %p37 = scmp.eq.s32.totalorder %s15, 1
    %p38 = por %p36, %p37
    %p40 = scmp.ne.s32.totalorder %s23, %s39
    %p41 = scmp.eq.s32.totalorder %s15, 0
    %p42 = por %p40, %p41
    %s44 = sadd.s32 %s43, 1
    %p47 = scmp.eq.s32.totalorder %s9, 1
    %p48 = scmp.ne.s32.totalorder %s43, %s45
    %p49 = scmp.eq.s32.totalorder %s9, 0
    %p50 = por %p48, %p49
    %p51 = scmp.ne.s32.totalorder %s43, %s45
    %p52 = scmp.eq.s32.totalorder %s14, 1
    %p53 = por %p51, %p52
    %p54 = scmp.ne.s32.totalorder %s45, %s46
    %p55 = scmp.eq.s32.totalorder %s14, 0
    %p56 = por %p54, %p55
    %p57 = scmp.ne.s32.totalorder %s45, %s46
    %p58 = scmp.eq.s32.totalorder %s15, 1
    %p59 = por %p57, %p58
    %p61 = scmp.ne.s32.totalorder %s46, %s60
    %p62 = scmp.eq.s32.totalorder %s15, 0
    %p63 = por %p61, %p62
    %s65 = sadd.s32 %s64, 1
    %p68 = scmp.eq.s32.totalorder %s9, 1
    %p69 = scmp.ne.s32.totalorder %s64, %s66
    %p70 = scmp.eq.s32.totalorder %s9, 0
    %p71 = por %p69, %p70
    %p72 = scmp.ne.s32.totalorder %s64, %s66
    %p73 = scmp.eq.s32.totalorder %s14, 1
    %p74 = por %p72, %p73
    %p75 = scmp.ne.s32.totalorder %s66, %s67
    %p76 = scmp.eq.s32.totalorder %s14, 0
    %p77 = por %p75, %p76
    %p78 = scmp.ne.s32.totalorder %s66, %s67
    %p79 = scmp.eq.s32.totalorder %s15, 1
    %p80 = por %p78, %p79
    %p82 = scmp.ne.s32.totalorder %s67, %s81
    %p83 = scmp.eq.s32.totalorder %s15, 0
    %p84 = por %p82, %p83
    %s85 = ssub.s32 %s9, %s16
    %p86 = scmp.eq.s32.totalorder %s85, 0
    %s88 = sadd.s32 %s87, 1
    %s89 = scalar_select %p86, %s87, %s88
    %p92 = pneg %p86
    %p93 = scmp.eq.s32.totalorder %s9, 1
    %p94 = por %p92, %p93
    %p95 = scmp.ne.s32.totalorder %s87, %s90
    %p96 = scmp.eq.s32.totalorder %s9, 0
    %p97 = por %p95, %p96
    %p98 = scmp.ne.s32.totalorder %s87, %s90
    %p99 = scmp.eq.s32.totalorder %s14, 1
    %p100 = por %p98, %p99
    %p101 = scmp.ne.s32.totalorder %s90, %s91
    %p102 = scmp.eq.s32.totalorder %s14, 0
    %p103 = por %p101, %p102
    %p104 = scmp.ne.s32.totalorder %s90, %s91
    %p105 = scmp.eq.s32.totalorder %s15, 1
    %p106 = por %p104, %p105
    %p108 = scmp.ne.s32.totalorder %s91, %s107
    %p109 = scmp.eq.s32.totalorder %s15, 0
    %p110 = por %p108, %p109
    %p111 = scmp.le.s32.totalorder 1, %s9
    %p112 = scmp.lt.s32.totalorder %s9, 3
    %p113 = pnand %p111, %p112
    %p114 = pneg %p113
    // Predicated region
    $region9: #{_lambda_.98} parent=5 // pred_check
      _
    $region10: #{_lambda_.98} parent=5 // pred_check_branch
      %116 = sbr.rel (%p113) target = $region12
    $region11: #{_lambda_.98} parent=5 // pred_region
      %s117 = ssub.s32 %s9, 1
      // Predicated region
      $region13: #{_lambda_.98} parent=11 // pred_check
        %p118 = pneg %p56
      $region14: #{_lambda_.98} parent=11 // pred_check_branch
        %120 = sbr.rel (%p118) target = $region16
      $region15: #{_lambda_.98} parent=11 // pred_region
        _
      $region16: #{_lambda_.98} parent=11 // pred_fallthru
        _
      // Predicated region
      $region17: #{_lambda_.98} parent=11 // pred_check
        %p121 = pneg %p77
      $region18: #{_lambda_.98} parent=11 // pred_check_branch
        %123 = sbr.rel (%p121) target = $region20
      $region19: #{_lambda_.98} parent=11 // pred_region
        _
      $region20: #{_lambda_.98} parent=11 // pred_fallthru
        _
    $region12: #{_lambda_.98} parent=5 // pred_fallthru
      _
    %p124 = scmp.lt.s32.totalorder %s9, 2
    // Predicated region
    $region21: #{_lambda_.98} parent=5 // pred_check
      %p125 = pneg %p124
    $region22: #{_lambda_.98} parent=5 // pred_check_branch
      %127 = sbr.rel (%p125) target = $region24
    $region23: #{_lambda_.98} parent=5 // pred_region
      // Predicated region
      $region25: #{_lambda_.98} parent=23 // pred_check
        %p128 = pneg %p29
      $region26: #{_lambda_.98} parent=23 // pred_check_branch
        %130 = sbr.rel (%p128) target = $region28
      $region27: #{_lambda_.98} parent=23 // pred_region
        %p131 = scmp.lt.s32.totalorder %s9, 1
        %s132 = scalar_select %p131, %s9, 1
        %s133 = smul.addr %s132, 4
        %s134 = scalar_lea.vmem %s0, %s133
      $region28: #{_lambda_.98} parent=23 // pred_fallthru
        _
    $region24: #{_lambda_.98} parent=5 // pred_fallthru
      _
    %p135 = scmp.le.s32.totalorder 1, %s9
    %p136 = scmp.lt.s32.totalorder %s9, 3
    %p137 = pnand %p135, %p136
    %p138 = pneg %p137
    // Predicated region
    $region29: #{_lambda_.98} parent=5 // pred_check
      _
    $region30: #{_lambda_.98} parent=5 // pred_check_branch
      %140 = sbr.rel (%p137) target = $region32
    $region31: #{_lambda_.98} parent=5 // pred_region
      %s141 = ssub.s32 %s9, 1
      %p142 = scmp.lt.s32.totalorder %s14, 1
      %s143 = scalar_select %p142, %s14, 1
      %s144 = smul.addr %s143, 4
      %s145 = scalar_lea.vmem %s0, %s144
      %p146 = pneg %p35
      %p147 = pneg %p32
      %p148 = pneg %p56
      %p149 = pneg %p53
      %p150 = pneg %p77
      %p151 = pneg %p74
      %p152 = pneg %p103
      %p153 = pneg %p100
      %p154 = scmp.lt.s32.totalorder %s14, 1
      %s155 = scalar_select %p154, %s14, 1
      %s156 = smul.addr %s155, 4
      %s157 = scalar_lea.vmem %s3, %s156
      %p158 = scmp.lt.s32.totalorder %s14, 1
      %s159 = scalar_select %p158, %s14, 1
      %s160 = smul.addr %s159, 4
      %s161 = scalar_lea.vmem %s0, %s160
      %p162 = scmp.lt.s32.totalorder %s14, 1
      %s163 = scalar_select %p162, %s14, 1
      %s164 = smul.addr %s163, 4
      %s165 = scalar_lea.vmem %s3, %s164
      %166 = vst [vmem:[#allocation2] sm:$0x7] 0.0
      %v167 = vld [vmem:[%s161] sm:$0xf]
      %168 = vst [vmem:[#allocation2 + $0x3] sm:$0xf] %v167
      %v169 = vld [vmem:[%s2] sm:$0x1]
      %v171 = vlaneseq
      %v172 = vshrl.u32 %v171, 7
      %v173 = vsub.s32 0, %v172
      %v174 = vrot.slane %v169, %v173
      %v176 = vadd.f32 %v174, 0.0
      %v177 = vld [vmem:[#allocation2] sm:$0xf]
      %v178 = vld [vmem:[%s1] sm:$0x1]
      %v179 = vlaneseq
      %v180 = vshrl.u32 %v179, 7
      %v181 = vsub.s32 0, %v180
      %v182 = vrot.slane %v178, %v181
      %v183 = vmul.f32 %v177, %v182
      %v184 = vadd.f32 %v176, %v183
      %v185 = vld [vmem:[#allocation2 + $0x1] sm:$0xf]
      %v186 = vld [vmem:[%s1 + $0x1] sm:$0x1]
      %v187 = vlaneseq
      %v188 = vshrl.u32 %v187, 7
      %v189 = vsub.s32 0, %v188
      %v190 = vrot.slane %v186, %v189
      %v191 = vmul.f32 %v185, %v190
      %v192 = vadd.f32 %v184, %v191
      %v193 = vld [vmem:[#allocation2 + $0x2] sm:$0xf]
      %v194 = vld [vmem:[%s1 + $0x2] sm:$0x1]
      %v195 = vlaneseq
      %v196 = vshrl.u32 %v195, 7
      %v197 = vsub.s32 0, %v196
      %v198 = vrot.slane %v194, %v197
      %v199 = vmul.f32 %v193, %v198
      %v200 = vadd.f32 %v192, %v199
      %v201 = vld [vmem:[#allocation2 + $0x3] sm:$0xf]
      %v202 = vld [vmem:[%s1 + $0x3] sm:$0x1]
      %v203 = vlaneseq
      %v204 = vshrl.u32 %v203, 7
      %v205 = vsub.s32 0, %v204
      %v206 = vrot.slane %v202, %v205
      %v207 = vmul.f32 %v201, %v206
      %v208 = vadd.f32 %v200, %v207
      %v209 = vsub.f32 0.0, %v208
      %v210 = vmul.f32 %v209, 1.442695
      %v211 = vpow.pop %v210
      %v212 = vadd.f32 %v211, 1.0
      %v213 = vrcp.pop %v212
      %v214 = vmul.f32 %v208, %v213
      %215 = vst [vmem:[%s165] sm:$0xf] %v214
      %p216 = scmp.lt.s32.totalorder %s14, 1
      %s217 = scalar_select %p216, %s14, 1
      %s218 = smul.addr %s217, 4
      %s219 = scalar_lea.vmem %s3, %s218
      // Predicated region
      $region33: #{_lambda_.98} parent=31 // pred_check
        %p220 = pneg %p100
      $region34: #{_lambda_.98} parent=31 // pred_check_branch
        %222 = sbr.rel (%p220) target = $region36
      $region35: #{_lambda_.98} parent=31 // pred_region
        _
      $region36: #{_lambda_.98} parent=31 // pred_fallthru
        _
    $region32: #{_lambda_.98} parent=5 // pred_fallthru
      _
    %p223 = scmp.le.s32.totalorder 2, %s9
    // Predicated region
    $region37: #{_lambda_.98} parent=5 // pred_check
      %p224 = pneg %p223
    $region38: #{_lambda_.98} parent=5 // pred_check_branch
      %226 = sbr.rel (%p224) target = $region40
    $region39: #{_lambda_.98} parent=5 // pred_region
      %s227 = ssub.s32 %s9, 2
      // Predicated region
      $region41: #{_lambda_.98} parent=39 // pred_check
        %p228 = pneg %p106
      $region42: #{_lambda_.98} parent=39 // pred_check_branch
        %230 = sbr.rel (%p228) target = $region44
      $region43: #{_lambda_.98} parent=39 // pred_region
        %p231 = scmp.lt.s32.totalorder %s15, 1
        %s232 = scalar_select %p231, %s15, 1
        %s233 = smul.addr %s232, 4
        %s234 = scalar_lea.vmem %s3, %s233
      $region44: #{_lambda_.98} parent=39 // pred_fallthru
        _
    $region40: #{_lambda_.98} parent=5 // pred_fallthru
      _
  $region6: #{_lambda_.98} parent=0 // loop_footer
    %s13 = sadd.s32 1, %s9
  $region7: #{_lambda_.98} parent=0 // loop_footer_branch
    %8 = sbr.rel target = $region3
  $region8: #{_lambda_.98} parent=0 // loop_exit
    _

// kernel: _lambda_.108
$region0: #{_lambda_.108}
  #allocation0 [shape = 'u32[]', space=smem, size = 0x4, offset = 0x4, fixed_abs, tag = 'smem constant byte address 0x4 - core index']
  #allocation1 [shape = 'u32[144,128]{1,0:T(1,128)}', space=vmem, size = 0x12000, scoped, tag = 'internal scratch']
  %s0 = inlined_call_operand.vmem [shape: f32[8,64], index: 0, kind: input, shape index: {}]
  %s1 = inlined_call_operand.vmem [shape: f32[8,64], index: 1, kind: input, shape index: {}]
  %s2 = inlined_call_operand.vmem [shape: f32[1,64], index: 2, kind: input, shape index: {}]
  %s3 = inlined_call_operand.vmem [shape: f32[8,64], index: 3, kind: output, shape index: {0}]
  %s4 = inlined_call_operand.hbm [shape: f32[8,64], index: 4, kind: output, shape index: {1}]
  %5 = xla_tuple %s3, %s4
  %s6 = sld [smem:[#allocation0]]
  $region30: #{_lambda_.108} parent=0
    _
  %s8 = ssub.s32 1, %s6
  %s9 = scalar_select 0, %s8, %s6
  $region1: #{_lambda_.108} parent=0
    #allocation2 [shape = 'u8[4096]{0}', space=vmem, size = 0x1000, scoped, tag = 'output window, operand 1, single buffered']
    #allocation3 [shape = 's32[1]{0}', space=sflag, size = 0x4, scoped, tag = 'scoped memory for _lambda_.108']
    %10 = vsyncpa [#allocation3], 0
    // Predicated region
    $region2: #{_lambda_.108} parent=1 // pred_check
      _
    $region3: #{_lambda_.108} parent=1 // pred_check_branch
      %12 = sbr.rel (0) target = $region5
    $region4: #{_lambda_.108} parent=1 // pred_region
      _
    $region5: #{_lambda_.108} parent=1 // pred_fallthru
      _
    // Predicated region
    $region6: #{_lambda_.108} parent=1 // pred_check
      _
    $region7: #{_lambda_.108} parent=1 // pred_check_branch
      %14 = sbr.rel (0) target = $region9
    $region8: #{_lambda_.108} parent=1 // pred_region
      _
    $region9: #{_lambda_.108} parent=1 // pred_fallthru
      _
    // Predicated region
    $region10: #{_lambda_.108} parent=1 // pred_check
      _
    $region11: #{_lambda_.108} parent=1 // pred_check_branch
      %16 = sbr.rel (0) target = $region13
    $region12: #{_lambda_.108} parent=1 // pred_region
      _
    $region13: #{_lambda_.108} parent=1 // pred_fallthru
      _
    %v17 = vld [vmem:[%s0] sm:$0xff]
    %v18 = vld [vmem:[%s1] sm:$0xff]
    %v19 = vadd.f32 %v17, %v18
    %vm20 = vcmask 523264
    %21 = vst.msk [vmem:[#allocation2] sm:$0xff] %vm20, %v19
    %v22 = vmul.f32 %v19, %v19
    %v23 = vsel %vm20, %v22, 0.0
    %24 = vadd.xlane.f32.xlu0 %v23
    %v25 = vpop.xlane.xlu0 %24
    %v26 = vrcp.pop 64.0
    %v27 = vmul.f32 %v25, %v26
    %v28 = vadd.f32 %v27, 1e-05
    %v29 = vrsqrt.pop %v28
    %v30 = vmul.f32 %v19, %v29
    %v31 = vld [vmem:[%s2] sm:$0x1]
    %v33 = vlaneseq
    %v34 = vshrl.u32 %v33, 7
    %v35 = vsub.s32 0, %v34
    %v36 = vrot.slane %v31, %v35
    %v38 = vmul.f32 %v30, %v36
    %39 = vst.msk [vmem:[%s3] sm:$0xff] %vm20, %v38
    // Predicated region
    $region14: #{_lambda_.108} parent=1 // pred_check
      _
    $region15: #{_lambda_.108} parent=1 // pred_check_branch
      %41 = sbr.rel (0) target = $region17
    $region16: #{_lambda_.108} parent=1 // pred_region
      _
    $region17: #{_lambda_.108} parent=1 // pred_fallthru
      _
    // Predicated region
    $region18: #{_lambda_.108} parent=1 // pred_check
      _
    $region19: #{_lambda_.108} parent=1 // pred_check_branch
      %43 = sbr.rel (0) target = $region21
    $region20: #{_lambda_.108} parent=1 // pred_region
      %s45 = ssub.s32 128, 128
      %46 = vsyncadd [#allocation3], %s45
      %s48 = sshll.u32 [#allocation2], 4
      %s49 = int_to_ptr.vmem [resolvable:$true] %s48
      %51 = dma.vmem_to_hbm [thread:$0]  %s49, 128, %s4, [#allocation3]
    $region21: #{_lambda_.108} parent=1 // pred_fallthru
      _
    // Predicated region
    $region22: #{_lambda_.108} parent=1 // pred_check
      _
    $region23: #{_lambda_.108} parent=1 // pred_check_branch
      %53 = sbr.rel (0) target = $region25
    $region24: #{_lambda_.108} parent=1 // pred_region
      _
    $region25: #{_lambda_.108} parent=1 // pred_fallthru
      _
    // Predicated region
    $region26: #{_lambda_.108} parent=1 // pred_check
      _
    $region27: #{_lambda_.108} parent=1 // pred_check_branch
      %55 = sbr.rel (0) target = $region29
    $region28: #{_lambda_.108} parent=1 // pred_region
      %56 = dma.done [#allocation3], 128
    $region29: #{_lambda_.108} parent=1 // pred_fallthru
      _
    %57 = vsyncpa [#allocation3], 1

// kernel: _lambda_.100
$region0: #{_lambda_.100}
  #allocation0 [shape = 'u32[]', space=smem, size = 0x4, offset = 0x4, fixed_abs, tag = 'smem constant byte address 0x4 - core index']
  #allocation1 [shape = 'u32[144,128]{1,0:T(1,128)}', space=vmem, size = 0x12000, scoped, tag = 'internal scratch']
  #allocation2 [shape = 'f32[16,128]{1,0:T(8,128)}', space=vmem, size = 0x2000, scoped, tag = 'scratch operand']
  #allocation3 [shape = 'f32[4,128]{1,0:T(4,128)}', space=vmem, size = 0x800, scoped, tag = 'scratch operand']
  #allocation4 [shape = 'f32[4,128]{1,0:T(4,128)}', space=vmem, size = 0x800, scoped, tag = 'scratch operand']
  #allocation5 [shape = 'f32[4,128]{1,0:T(4,128)}', space=vmem, size = 0x800, scoped, tag = 'scratch operand']
  %s0 = inlined_call_operand.vmem [shape: f32[2,4,128], index: 0, kind: input, shape index: {}]
  %s1 = inlined_call_operand.vmem [shape: f32[2,4,128], index: 1, kind: input, shape index: {}]
  %s2 = inlined_call_operand.vmem [shape: f32[2,4,128], index: 2, kind: input, shape index: {}]
  %s3 = inlined_call_operand.vmem [shape: f32[2,4,16], index: 3, kind: input, shape index: {}]
  %s4 = inlined_call_operand.vmem [shape: f32[2,4,16], index: 4, kind: input, shape index: {}]
  %s5 = inlined_call_operand.vmem [shape: f32[16,128], index: 5, kind: input, shape index: {}]
  %s6 = inlined_call_operand.vmem [shape: f32[1,128], index: 6, kind: input, shape index: {}]
  %s7 = inlined_call_operand.vmem [shape: f32[1,128], index: 7, kind: input, shape index: {}]
  %s8 = inlined_call_operand.vmem [shape: f32[2,4,128], index: 8, kind: output, shape index: {}]
  %s9 = sld [smem:[#allocation0]]
  $region76: #{_lambda_.100} parent=0
    _
  %s11 = ssub.s32 1, %s9
  %s12 = scalar_select 0, %s11, %s9
  loop: start=0, step=1, limit=4
  $region2: #{_lambda_.100} parent=0 // loop_pre_header
    _
  $region3: #{_lambda_.100} parent=0 // loop_header
    %s14 = sphi 0, %s18
    %p15 = scmp.ge.s32.totalorder %s14, 4
    %s21 = sphi 0, %s33
    %s22 = sphi 0, %s29
    %s23 = sphi 0, %s21
    %s24 = sphi 0, %s22
    %s25 = sphi 0, %s23
    %s26 = sphi 0, %s24
    %s38 = sphi 0, %s40
    %s41 = sphi 0, %s38
    %s42 = sphi 0, %s41
    %s58 = sphi 0, %s42
    %s66 = sphi 0, %s68
    %s69 = sphi 0, %s66
    %s70 = sphi 0, %s69
    %s86 = sphi 0, %s70
    %s94 = sphi 0, %s96
    %s97 = sphi 0, %s94
    %s98 = sphi 0, %s97
    %s114 = sphi 0, %s98
    %s122 = sphi 0, %s124
    %s125 = sphi 0, %s122
    %s126 = sphi 0, %s125
    %s142 = sphi 0, %s126
    %s150 = sphi 0, %s152
    %s153 = sphi 0, %s150
    %s154 = sphi 0, %s153
    %s170 = sphi 0, %s154
    %s174 = sphi 0, %s174
    %s176 = sphi 0, %s174
    %s177 = sphi 0, %s176
    %s191 = sphi 0, %s177
    %s195 = sphi 0, %s195
    %s197 = sphi 0, %s195
    %s198 = sphi 0, %s197
    %s212 = sphi 0, %s198
    %s216 = sphi 0, %s216
    %s218 = sphi 0, %s216
    %s219 = sphi 0, %s218
    %s233 = sphi 0, %s219
    %s241 = sphi 0, %s243
    %s244 = sphi 0, %s241
    %s245 = sphi 0, %s244
    %s261 = sphi 0, %s245
  $region4: #{_lambda_.100} parent=0 // loop_header_branch
    %17 = sbr.rel (%p15) target = $region8
  $region5: #{_lambda_.100} parent=0 // loop_body
    %s19 = ssub.s32 %s14, 1
    %s20 = ssub.s32 %s14, 2
    %s27 = sadd.s32 1, %s22
    %p28 = scmp.ge.s32.totalorder %s27, 1
    %s29 = scalar_select %p28, 0, %s27
    %s30 = sadd.s32 1, %s21
    %s31 = scalar_select %p28, %s30, %s21
    %p32 = scmp.ge.s32.totalorder %s31, 2
    %s33 = scalar_select %p32, 0, %s31
    %s34 = ssub.s32 %s21, %s33
    %s35 = ssub.s32 %s22, %s29
    %s36 = sor.u32 %s34, %s35
    %p37 = scmp.eq.s32.totalorder %s36, 0
    %s39 = sadd.s32 %s38, 1
    %s40 = scalar_select %p37, %s38, %s39
    %p43 = pneg %p37
    %p44 = scmp.eq.s32.totalorder %s14, 1
    %p45 = por %p43, %p44
    %p46 = scmp.ne.s32.totalorder %s38, %s41
    %p47 = scmp.eq.s32.totalorder %s14, 0
    %p48 = por %p46, %p47
    %p49 = scmp.ne.s32.totalorder %s38, %s41
    %p50 = scmp.eq.s32.totalorder %s19, 1
    %p51 = por %p49, %p50
    %p52 = scmp.ne.s32.totalorder %s41, %s42
    %p53 = scmp.eq.s32.totalorder %s19, 0
    %p54 = por %p52, %p53
    %p55 = scmp.ne.s32.totalorder %s41, %s42
    %p56 = scmp.eq.s32.totalorder %s20, 1
    %p57 = por %p55, %p56
    %p59 = scmp.ne.s32.totalorder %s42, %s58
    %p60 = scmp.eq.s32.totalorder %s20, 0
    %p61 = por %p59, %p60
    %s62 = ssub.s32 %s21, %s33
    %s63 = ssub.s32 %s22, %s29
    %s64 = sor.u32 %s62, %s63
    %p65 = scmp.eq.s32.totalorder %s64, 0
    %s67 = sadd.s32 %s66, 1
    %s68 = scalar_select %p65, %s66, %s67
    %p71 = pneg %p65
    %p72 = scmp.eq.s32.totalorder %s14, 1
    %p73 = por %p71, %p72
    %p74 = scmp.ne.s32.totalorder %s66, %s69
    %p75 = scmp.eq.s32.totalorder %s14, 0
    %p76 = por %p74, %p75
    %p77 = scmp.ne.s32.totalorder %s66, %s69
    %p78 = scmp.eq.s32.totalorder %s19, 1
    %p79 = por %p77, %p78
    %p80 = scmp.ne.s32.totalorder %s69, %s70
    %p81 = scmp.eq.s32.totalorder %s19, 0
    %p82 = por %p80, %p81
    %p83 = scmp.ne.s32.totalorder %s69, %s70
    %p84 = scmp.eq.s32.totalorder %s20, 1
    %p85 = por %p83, %p84
    %p87 = scmp.ne.s32.totalorder %s70, %s86
    %p88 = scmp.eq.s32.totalorder %s20, 0
    %p89 = por %p87, %p88
    %s90 = ssub.s32 %s21, %s33
    %s91 = ssub.s32 %s22, %s29
    %s92 = sor.u32 %s90, %s91
    %p93 = scmp.eq.s32.totalorder %s92, 0
    %s95 = sadd.s32 %s94, 1
    %s96 = scalar_select %p93, %s94, %s95
    %p99 = pneg %p93
    %p100 = scmp.eq.s32.totalorder %s14, 1
    %p101 = por %p99, %p100
    %p102 = scmp.ne.s32.totalorder %s94, %s97
    %p103 = scmp.eq.s32.totalorder %s14, 0
    %p104 = por %p102, %p103
    %p105 = scmp.ne.s32.totalorder %s94, %s97
    %p106 = scmp.eq.s32.totalorder %s19, 1
    %p107 = por %p105, %p106
    %p108 = scmp.ne.s32.totalorder %s97, %s98
    %p109 = scmp.eq.s32.totalorder %s19, 0
    %p110 = por %p108, %p109
    %p111 = scmp.ne.s32.totalorder %s97, %s98
    %p112 = scmp.eq.s32.totalorder %s20, 1
    %p113 = por %p111, %p112
    %p115 = scmp.ne.s32.totalorder %s98, %s114
    %p116 = scmp.eq.s32.totalorder %s20, 0
    %p117 = por %p115, %p116
    %s118 = ssub.s32 %s21, %s33
    %s119 = ssub.s32 %s22, %s29
    %s120 = sor.u32 %s118, %s119
    %p121 = scmp.eq.s32.totalorder %s120, 0
    %s123 = sadd.s32 %s122, 1
    %s124 = scalar_select %p121, %s122, %s123
    %p127 = pneg %p121
    %p128 = scmp.eq.s32.totalorder %s14, 1
    %p129 = por %p127, %p128
    %p130 = scmp.ne.s32.totalorder %s122, %s125
    %p131 = scmp.eq.s32.totalorder %s14, 0
    %p132 = por %p130, %p131
    %p133 = scmp.ne.s32.totalorder %s122, %s125
    %p134 = scmp.eq.s32.totalorder %s19, 1
    %p135 = por %p133, %p134
    %p136 = scmp.ne.s32.totalorder %s125, %s126
    %p137 = scmp.eq.s32.totalorder %s19, 0
    %p138 = por %p136, %p137
    %p139 = scmp.ne.s32.totalorder %s125, %s126
    %p140 = scmp.eq.s32.totalorder %s20, 1
    %p141 = por %p139, %p140
    %p143 = scmp.ne.s32.totalorder %s126, %s142
    %p144 = scmp.eq.s32.totalorder %s20, 0
    %p145 = por %p143, %p144
    %s146 = ssub.s32 %s21, %s33
    %s147 = ssub.s32 %s22, %s29
    %s148 = sor.u32 %s146, %s147
    %p149 = scmp.eq.s32.totalorder %s148, 0
    %s151 = sadd.s32 %s150, 1
    %s152 = scalar_select %p149, %s150, %s151
    %p155 = pneg %p149
    %p156 = scmp.eq.s32.totalorder %s14, 1
    %p157 = por %p155, %p156
    %p158 = scmp.ne.s32.totalorder %s150, %s153
    %p159 = scmp.eq.s32.totalorder %s14, 0
    %p160 = por %p158, %p159
    %p161 = scmp.ne.s32.totalorder %s150, %s153
    %p162 = scmp.eq.s32.totalorder %s19, 1
    %p163 = por %p161, %p162
    %p164 = scmp.ne.s32.totalorder %s153, %s154
    %p165 = scmp.eq.s32.totalorder %s19, 0
    %p166 = por %p164, %p165
    %p167 = scmp.ne.s32.totalorder %s153, %s154
    %p168 = scmp.eq.s32.totalorder %s20, 1
    %p169 = por %p167, %p168
    %p171 = scmp.ne.s32.totalorder %s154, %s170
    %p172 = scmp.eq.s32.totalorder %s20, 0
    %p173 = por %p171, %p172
    %s175 = sadd.s32 %s174, 1
    %p178 = scmp.eq.s32.totalorder %s14, 1
    %p179 = scmp.ne.s32.totalorder %s174, %s176
    %p180 = scmp.eq.s32.totalorder %s14, 0
    %p181 = por %p179, %p180
    %p182 = scmp.ne.s32.totalorder %s174, %s176
    %p183 = scmp.eq.s32.totalorder %s19, 1
    %p184 = por %p182, %p183
    %p185 = scmp.ne.s32.totalorder %s176, %s177
    %p186 = scmp.eq.s32.totalorder %s19, 0
    %p187 = por %p185, %p186
    %p188 = scmp.ne.s32.totalorder %s176, %s177
    %p189 = scmp.eq.s32.totalorder %s20, 1
    %p190 = por %p188, %p189
    %p192 = scmp.ne.s32.totalorder %s177, %s191
    %p193 = scmp.eq.s32.totalorder %s20, 0
    %p194 = por %p192, %p193
    %s196 = sadd.s32 %s195, 1
    %p199 = scmp.eq.s32.totalorder %s14, 1
    %p200 = scmp.ne.s32.totalorder %s195, %s197
    %p201 = scmp.eq.s32.totalorder %s14, 0
    %p202 = por %p200, %p201
    %p203 = scmp.ne.s32.totalorder %s195, %s197
    %p204 = scmp.eq.s32.totalorder %s19, 1
    %p205 = por %p203, %p204
    %p206 = scmp.ne.s32.totalorder %s197, %s198
    %p207 = scmp.eq.s32.totalorder %s19, 0
    %p208 = por %p206, %p207
    %p209 = scmp.ne.s32.totalorder %s197, %s198
    %p210 = scmp.eq.s32.totalorder %s20, 1
    %p211 = por %p209, %p210
    %p213 = scmp.ne.s32.totalorder %s198, %s212
    %p214 = scmp.eq.s32.totalorder %s20, 0
    %p215 = por %p213, %p214
    %s217 = sadd.s32 %s216, 1
    %p220 = scmp.eq.s32.totalorder %s14, 1
    %p221 = scmp.ne.s32.totalorder %s216, %s218
    %p222 = scmp.eq.s32.totalorder %s14, 0
    %p223 = por %p221, %p222
    %p224 = scmp.ne.s32.totalorder %s216, %s218
    %p225 = scmp.eq.s32.totalorder %s19, 1
    %p226 = por %p224, %p225
    %p227 = scmp.ne.s32.totalorder %s218, %s219
    %p228 = scmp.eq.s32.totalorder %s19, 0
    %p229 = por %p227, %p228
    %p230 = scmp.ne.s32.totalorder %s218, %s219
    %p231 = scmp.eq.s32.totalorder %s20, 1
    %p232 = por %p230, %p231
    %p234 = scmp.ne.s32.totalorder %s219, %s233
    %p235 = scmp.eq.s32.totalorder %s20, 0
    %p236 = por %p234, %p235
    %s237 = ssub.s32 %s21, %s33
    %s238 = ssub.s32 %s22, %s29
    %s239 = sor.u32 %s237, %s238
    %p240 = scmp.eq.s32.totalorder %s239, 0
    %s242 = sadd.s32 %s241, 1
    %s243 = scalar_select %p240, %s241, %s242
    %p246 = pneg %p240
    %p247 = scmp.eq.s32.totalorder %s14, 1
    %p248 = por %p246, %p247
    %p249 = scmp.ne.s32.totalorder %s241, %s244
    %p250 = scmp.eq.s32.totalorder %s14, 0
    %p251 = por %p249, %p250
    %p252 = scmp.ne.s32.totalorder %s241, %s244
    %p253 = scmp.eq.s32.totalorder %s19, 1
    %p254 = por %p252, %p253
    %p255 = scmp.ne.s32.totalorder %s244, %s245
    %p256 = scmp.eq.s32.totalorder %s19, 0
    %p257 = por %p255, %p256
    %p258 = scmp.ne.s32.totalorder %s244, %s245
    %p259 = scmp.eq.s32.totalorder %s20, 1
    %p260 = por %p258, %p259
    %p262 = scmp.ne.s32.totalorder %s245, %s261
    %p263 = scmp.eq.s32.totalorder %s20, 0
    %p264 = por %p262, %p263
    %p265 = scmp.le.s32.totalorder 1, %s14
    %p266 = scmp.lt.s32.totalorder %s14, 3
    %p267 = pnand %p265, %p266
    %p268 = pneg %p267
    // Predicated region
    $region9: #{_lambda_.100} parent=5 // pred_check
      _
    $region10: #{_lambda_.100} parent=5 // pred_check_branch
      %270 = sbr.rel (%p267) target = $region12
    $region11: #{_lambda_.100} parent=5 // pred_region
      %s271 = ssub.s32 %s14, 1
      // Predicated region
      $region13: #{_lambda_.100} parent=11 // pred_check
        %p272 = pneg %p187
      $region14: #{_lambda_.100} parent=11 // pred_check_branch
        %274 = sbr.rel (%p272) target = $region16
      $region15: #{_lambda_.100} parent=11 // pred_region
        _
      $region16: #{_lambda_.100} parent=11 // pred_fallthru
        _
      // Predicated region
      $region17: #{_lambda_.100} parent=11 // pred_check
        %p275 = pneg %p208
      $region18: #{_lambda_.100} parent=11 // pred_check_branch
        %277 = sbr.rel (%p275) target = $region20
      $region19: #{_lambda_.100} parent=11 // pred_region
        _
      $region20: #{_lambda_.100} parent=11 // pred_fallthru
        _
      // Predicated region
      $region21: #{_lambda_.100} parent=11 // pred_check
        %p278 = pneg %p229
      $region22: #{_lambda_.100} parent=11 // pred_check_branch
        %280 = sbr.rel (%p278) target = $region24
      $region23: #{_lambda_.100} parent=11 // pred_region
        _
      $region24: #{_lambda_.100} parent=11 // pred_fallthru
        _
    $region12: #{_lambda_.100} parent=5 // pred_fallthru
      _
    %p281 = scmp.lt.s32.totalorder %s14, 2
    // Predicated region
    $region25: #{_lambda_.100} parent=5 // pred_check
      %p282 = pneg %p281
    $region26: #{_lambda_.100} parent=5 // pred_check_branch
      %284 = sbr.rel (%p282) target = $region28
    $region27: #{_lambda_.100} parent=5 // pred_region
      // Predicated region
      $region29: #{_lambda_.100} parent=27 // pred_check
        %p285 = pneg %p48
      $region30: #{_lambda_.100} parent=27 // pred_check_branch
        %287 = sbr.rel (%p285) target = $region32
      $region31: #{_lambda_.100} parent=27 // pred_region
        %p288 = scmp.lt.s32.totalorder %s21, 1
        %s289 = scalar_select %p288, %s21, 1
        %p290 = scmp.lt.s32.totalorder %s22, 0
        %s291 = scalar_select %p290, %s22, 0
        %s292 = sadd.s32 %s291, %s289
        %s293 = smul.addr %s292, 4
        %s294 = scalar_lea.vmem %s0, %s293
      $region32: #{_lambda_.100} parent=27 // pred_fallthru
        _
      // Predicated region
      $region33: #{_lambda_.100} parent=27 // pred_check
        %p295 = pneg %p76
      $region34: #{_lambda_.100} parent=27 // pred_check_branch
        %297 = sbr.rel (%p295) target = $region36
      $region35: #{_lambda_.100} parent=27 // pred_region
        %p298 = scmp.lt.s32.totalorder %s21, 1
        %s299 = scalar_select %p298, %s21, 1
        %p300 = scmp.lt.s32.totalorder %s22, 0
        %s301 = scalar_select %p300, %s22, 0
        %s302 = sadd.s32 %s301, %s299
        %s303 = smul.addr %s302, 4
        %s304 = scalar_lea.vmem %s1, %s303
      $region36: #{_lambda_.100} parent=27 // pred_fallthru
        _
      // Predicated region
      $region37: #{_lambda_.100} parent=27 // pred_check
        %p305 = pneg %p104
      $region38: #{_lambda_.100} parent=27 // pred_check_branch
        %307 = sbr.rel (%p305) target = $region40
      $region39: #{_lambda_.100} parent=27 // pred_region
        %p308 = scmp.lt.s32.totalorder %s21, 1
        %s309 = scalar_select %p308, %s21, 1
        %p310 = scmp.lt.s32.totalorder %s22, 0
        %s311 = scalar_select %p310, %s22, 0
        %s312 = sadd.s32 %s311, %s309
        %s313 = smul.addr %s312, 4
        %s314 = scalar_lea.vmem %s2, %s313
      $region40: #{_lambda_.100} parent=27 // pred_fallthru
        _
      // Predicated region
      $region41: #{_lambda_.100} parent=27 // pred_check
        %p315 = pneg %p132
      $region42: #{_lambda_.100} parent=27 // pred_check_branch
        %317 = sbr.rel (%p315) target = $region44
      $region43: #{_lambda_.100} parent=27 // pred_region
        %p318 = scmp.lt.s32.totalorder %s21, 1
        %s319 = scalar_select %p318, %s21, 1
        %p320 = scmp.lt.s32.totalorder %s22, 0
        %s321 = scalar_select %p320, %s22, 0
        %s322 = sadd.s32 %s321, %s319
        %s323 = smul.addr %s322, 4
        %s324 = scalar_lea.vmem %s3, %s323
      $region44: #{_lambda_.100} parent=27 // pred_fallthru
        _
      // Predicated region
      $region45: #{_lambda_.100} parent=27 // pred_check
        %p325 = pneg %p160
      $region46: #{_lambda_.100} parent=27 // pred_check_branch
        %327 = sbr.rel (%p325) target = $region48
      $region47: #{_lambda_.100} parent=27 // pred_region
        %p328 = scmp.lt.s32.totalorder %s21, 1
        %s329 = scalar_select %p328, %s21, 1
        %p330 = scmp.lt.s32.totalorder %s22, 0
        %s331 = scalar_select %p330, %s22, 0
        %s332 = sadd.s32 %s331, %s329
        %s333 = smul.addr %s332, 4
        %s334 = scalar_lea.vmem %s4, %s333
      $region48: #{_lambda_.100} parent=27 // pred_fallthru
        _
    $region28: #{_lambda_.100} parent=5 // pred_fallthru
      _
    %p335 = scmp.le.s32.totalorder 1, %s14
    %p336 = scmp.lt.s32.totalorder %s14, 3
    %p337 = pnand %p335, %p336
    %p338 = pneg %p337
    // Predicated region
    $region49: #{_lambda_.100} parent=5 // pred_check
      _
    $region50: #{_lambda_.100} parent=5 // pred_check_branch
      %340 = sbr.rel (%p337) target = $region52
    $region51: #{_lambda_.100} parent=5 // pred_region
      %s341 = ssub.s32 %s14, 1
      %p342 = scmp.lt.s32.totalorder %s23, 1
      %s343 = scalar_select %p342, %s23, 1
      %p344 = scmp.lt.s32.totalorder %s24, 0
      %s345 = scalar_select %p344, %s24, 0
      %s346 = sadd.s32 %s345, %s343
      %s347 = smul.addr %s346, 4
      %s348 = scalar_lea.vmem %s0, %s347
      %p349 = pneg %p54
      %p350 = pneg %p51
      %p351 = scmp.lt.s32.totalorder %s23, 1
      %s352 = scalar_select %p351, %s23, 1
      %p353 = scmp.lt.s32.totalorder %s24, 0
      %s354 = scalar_select %p353, %s24, 0
      %s355 = sadd.s32 %s354, %s352
      %s356 = smul.addr %s355, 4
      %s357 = scalar_lea.vmem %s1, %s356
      %p358 = pneg %p82
      %p359 = pneg %p79
      %p360 = scmp.lt.s32.totalorder %s23, 1
      %s361 = scalar_select %p360, %s23, 1
      %p362 = scmp.lt.s32.totalorder %s24, 0
      %s363 = scalar_select %p362, %s24, 0
      %s364 = sadd.s32 %s363, %s361
      %s365 = smul.addr %s364, 4
      %s366 = scalar_lea.vmem %s2, %s365
      %p367 = pneg %p110
      %p368 = pneg %p107
      %p369 = scmp.lt.s32.totalorder %s23, 1
      %s370 = scalar_select %p369, %s23, 1
      %p371 = scmp.lt.s32.totalorder %s24, 0
      %s372 = scalar_select %p371, %s24, 0
      %s373 = sadd.s32 %s372, %s370
      %s374 = smul.addr %s373, 4
      %s375 = scalar_lea.vmem %s3, %s374
      %p376 = pneg %p138
      %p377 = pneg %p135
      %p378 = scmp.lt.s32.totalorder %s23, 1
      %s379 = scalar_select %p378, %s23, 1
      %p380 = scmp.lt.s32.totalorder %s24, 0
      %s381 = scalar_select %p380, %s24, 0
      %s382 = sadd.s32 %s381, %s379
      %s383 = smul.addr %s382, 4
      %s384 = scalar_lea.vmem %s4, %s383
      %p385 = pneg %p166
      %p386 = pneg %p163
      %p387 = pneg %p187
      %p388 = pneg %p184
      %p389 = pneg %p208
      %p390 = pneg %p205
      %p391 = pneg %p229
      %p392 = pneg %p226
      %p393 = pneg %p257
      %p394 = pneg %p254
      %p395 = scmp.lt.s32.totalorder %s23, 1
      %s396 = scalar_select %p395, %s23, 1
      %p397 = scmp.lt.s32.totalorder %s24, 0
      %s398 = scalar_select %p397, %s24, 0
      %s399 = sadd.s32 %s398, %s396
      %s400 = smul.addr %s399, 4
      %s401 = scalar_lea.vmem %s8, %s400
      %p402 = scmp.lt.s32.totalorder %s23, 1
      %s403 = scalar_select %p402, %s23, 1
      %p404 = scmp.lt.s32.totalorder %s24, 0
      %s405 = scalar_select %p404, %s24, 0
      %s406 = sadd.s32 %s405, %s403
      %s407 = smul.addr %s406, 4
      %s408 = scalar_lea.vmem %s0, %s407
      %p409 = scmp.lt.s32.totalorder %s23, 1
      %s410 = scalar_select %p409, %s23, 1
      %p411 = scmp.lt.s32.totalorder %s24, 0
      %s412 = scalar_select %p411, %s24, 0
      %s413 = sadd.s32 %s412, %s410
      %s414 = smul.addr %s413, 4
      %s415 = scalar_lea.vmem %s1, %s414
      %p416 = scmp.lt.s32.totalorder %s23, 1
      %s417 = scalar_select %p416, %s23, 1
      %p418 = scmp.lt.s32.totalorder %s24, 0
      %s419 = scalar_select %p418, %s24, 0
      %s420 = sadd.s32 %s419, %s417
      %s421 = smul.addr %s420, 4
      %s422 = scalar_lea.vmem %s2, %s421
      %p423 = scmp.lt.s32.totalorder %s23, 1
      %s424 = scalar_select %p423, %s23, 1
      %p425 = scmp.lt.s32.totalorder %s24, 0
      %s426 = scalar_select %p425, %s24, 0
      %s427 = sadd.s32 %s426, %s424
      %s428 = smul.addr %s427, 4
      %s429 = scalar_lea.vmem %s3, %s428
      %p430 = scmp.lt.s32.totalorder %s23, 1
      %s431 = scalar_select %p430, %s23, 1
      %p432 = scmp.lt.s32.totalorder %s24, 0
      %s433 = scalar_select %p432, %s24, 0
      %s434 = sadd.s32 %s433, %s431
      %s435 = smul.addr %s434, 4
      %s436 = scalar_lea.vmem %s4, %s435
      %p437 = scmp.lt.s32.totalorder %s23, 1
      %s438 = scalar_select %p437, %s23, 1
      %p439 = scmp.lt.s32.totalorder %s24, 0
      %s440 = scalar_select %p439, %s24, 0
      %s441 = sadd.s32 %s440, %s438
      %s442 = smul.addr %s441, 4
      %s443 = scalar_lea.vmem %s8, %s442
      %p444 = scmp.eq.s32.totalorder %s24, 0
      // Predicated region
      $region53: #{_lambda_.100} parent=51 // pred_check
        %p445 = pneg %p444
      $region54: #{_lambda_.100} parent=51 // pred_check_branch
        %447 = sbr.rel (%p445) target = $region56
      $region55: #{_lambda_.100} parent=51 // pred_region
        %448 = vst [vmem:[#allocation2] sm:$0xff] 0.0
        %449 = vst [vmem:[#allocation2 + $0x8] sm:$0xff] 0.0
      $region56: #{_lambda_.100} parent=51 // pred_fallthru
        _
      %v450 = vld [vmem:[%s415] sm:$0xf]
      %v451 = vld [vmem:[%s7] sm:$0x1]
      %v453 = vlaneseq
      %v454 = vshrl.u32 %v453, 7
      %v455 = vsub.s32 0, %v454
      %v456 = vrot.slane %v451, %v455
      %v458 = vadd.f32 %v450, %v456
      %v459 = vmax.f32 %v458, 0.0
      %v460 = vand.u32 2147483647, %v458
      %v461 = vsub.f32 0.0, %v460
      %v462 = vmul.f32 %v461, 1.442695
      %v463 = vpow.pop %v462
      %v464 = vadd.f32 %v463, 1.0
      %v465 = vlog2.pop %v464
      %v466 = vmul.f32 %v465, 0.6931472
      %v467 = vadd.f32 %v459, %v466
      %468 = vst [vmem:[#allocation3] sm:$0xf] %v467
      %v469 = vld [vmem:[#allocation3] sm:$0xf]
      %v470 = vld [vmem:[%s408] sm:$0xf]
      %v471 = vmul.f32 %v469, %v470
      %472 = vst [vmem:[#allocation4] sm:$0xf] %v471
      %v473 = vld [vmem:[%s5] sm:$0xff]
      %v474 = vld [vmem:[%s5 + $0x8] sm:$0xff]
      loop: start=0, step=1, limit=4
      $region57: #{_lambda_.100} parent=51 // loop_pre_header
        _
      $region58: #{_lambda_.100} parent=51 // loop_header
        %s476 = sphi 0, %s480
        %p477 = scmp.ge.s32.totalorder %s476, 4
      $region59: #{_lambda_.100} parent=51 // loop_header_branch
        %479 = sbr.rel (%p477) target = $region63
      $region60: #{_lambda_.100} parent=51 // loop_body
        %s481 = scalar_lea.vmem [#allocation3], %s476
        %v482 = vld [vmem:[%s481] sm:$0x1]
        %v483 = vlaneseq
        %v484 = vshrl.u32 %v483, 7
        %v485 = vsub.s32 0, %v484
        %v486 = vrot.slane %v482, %v485
        %v487 = vmul.f32 %v473, %v486
        %v488 = vmul.f32 %v474, %v486
        %v489 = vmul.f32 %v487, 1.442695
        %v490 = vpow.pop %v489
        %v491 = vmul.f32 %v488, 1.442695
        %v492 = vpow.pop %v491
        %s493 = scalar_lea.vmem %s429, %s476
        %v494 = vld [vmem:[%s493] sm:$0x1]
        %s495 = scalar_lea.vmem [#allocation4], %s476
        %v496 = vld [vmem:[%s495] sm:$0x1]
        %497 = vxpose.xlu0.b32.start [1/16] %v494, 128
        %498 = vxpose.xlu0.b32.cont [2/16] 0.0, 128
        %499 = vxpose.xlu0.b32.cont [3/16] 0.0, 128
        %500 = vxpose.xlu0.b32.cont [4/16] 0.0, 128
        %501 = vxpose.xlu0.b32.cont [5/16] 0.0, 128
        %502 = vxpose.xlu0.b32.cont [6/16] 0.0, 128
        %503 = vxpose.xlu0.b32.cont [7/16] 0.0, 128
        %504 = vxpose.xlu0.b32.cont [8/16] 0.0, 128
        %505 = vxpose.xlu0.b32.cont [9/16] 0.0, 128
        %506 = vxpose.xlu0.b32.cont [10/16] 0.0, 128
        %507 = vxpose.xlu0.b32.cont [11/16] 0.0, 128
        %508 = vxpose.xlu0.b32.cont [12/16] 0.0, 128
        %509 = vxpose.xlu0.b32.cont [13/16] 0.0, 128
        %510 = vxpose.xlu0.b32.cont [14/16] 0.0, 128
        %511 = vxpose.xlu0.b32.cont [15/16] 0.0, 128
        %512 = vxpose.xlu0.b32.end [16/16] 0.0, 128
        %v513 = vpop.trf.xlu0
        %v514 = vpop.trf.xlu0
        %v515 = vpop.trf.xlu0
        %v516 = vpop.trf.xlu0
        %v517 = vpop.trf.xlu0
        %v518 = vpop.trf.xlu0
        %v519 = vpop.trf.xlu0
        %v520 = vpop.trf.xlu0
        %v521 = vpop.trf.xlu0
        %v522 = vpop.trf.xlu0
        %v523 = vpop.trf.xlu0
        %v524 = vpop.trf.xlu0
        %v525 = vpop.trf.xlu0
        %v526 = vpop.trf.xlu0
        %v527 = vpop.trf.xlu0
        %v528 = vpop.trf.xlu0
        %vm529 = vcmask 7168
        %v531 = vsel %vm529, %v513, 0
        %v534 = vsel %vm529, %v514, 0
        %vm536 = vcmask 1040384
        %v538 = vsel %vm536, %v496, 0
        %540 = vmatprep.subr.mxu0 0.0
        %541 = vmatpush1.msra.mxu0 %v538
        %542 = vmatprep.subr.mxu0 0.0
        %543 = vmatpush1.msra.mxu0 0.0
        %544 = vmatprep.subr.mxu0 0.0
        %545 = vmatpush1.msra.mxu0 0.0
        %546 = vmatprep.subr.mxu0 0.0
        %547 = vmatpush1.msra.mxu0 0.0
        %548 = vmatprep.subr.mxu0 0.0
        %549 = vmatpush1.msra.mxu0 0.0
        %550 = vmatprep.subr.mxu0 0.0
        %551 = vmatpush1.msra.mxu0 0.0
        %552 = vmatprep.subr.mxu0 0.0
        %553 = vmatpush1.msra.mxu0 0.0
        %554 = vmatprep.subr.mxu0 0.0
        %555 = vmatpush1.msra.mxu0 0.0
        %556 = vmatprep.subr.mxu0 0.0
        %557 = vmatpush1.msra.mxu0 0.0
        %558 = vmatprep.subr.mxu0 0.0
        %559 = vmatpush1.msra.mxu0 0.0
        %560 = vmatprep.subr.mxu0 0.0
        %561 = vmatpush1.msra.mxu0 0.0
        %562 = vmatprep.subr.mxu0 0.0
        %563 = vmatpush1.msra.mxu0 0.0
        %564 = vmatprep.subr.mxu0 0.0
        %565 = vmatpush1.msra.mxu0 0.0
        %566 = vmatprep.subr.mxu0 0.0
        %567 = vmatpush1.msra.mxu0 0.0
        %568 = vmatprep.subr.mxu0 0.0
        %569 = vmatpush1.msra.mxu0 0.0
        %570 = vmatprep.subr.mxu0 0.0
        %571 = vmatpush1.msra.mxu0 0.0
        %572 = vmatprep.subr.mxu0 0.0
        %573 = vmatpush1.msra.mxu0 0.0
        %574 = vmatprep.subr.mxu0 0.0
        %575 = vmatpush1.msra.mxu0 0.0
        %576 = vmatprep.subr.mxu0 0.0
        %577 = vmatpush1.msra.mxu0 0.0
        %578 = vmatprep.subr.mxu0 0.0
        %579 = vmatpush1.msra.mxu0 0.0
        %580 = vmatprep.subr.mxu0 0.0
        %581 = vmatpush1.msra.mxu0 0.0
        %582 = vmatprep.subr.mxu0 0.0
        %583 = vmatpush1.msra.mxu0 0.0
        %584 = vmatprep.subr.mxu0 0.0
        %585 = vmatpush1.msra.mxu0 0.0
        %586 = vmatprep.subr.mxu0 0.0
        %587 = vmatpush1.msra.mxu0 0.0
        %588 = vmatprep.subr.mxu0 0.0
        %589 = vmatpush1.msra.mxu0 0.0
        %590 = vmatprep.subr.mxu0 0.0
        %591 = vmatpush1.msra.mxu0 0.0
        %592 = vmatprep.subr.mxu0 0.0
        %593 = vmatpush1.msra.mxu0 0.0
        %594 = vmatprep.subr.mxu0 0.0
        %595 = vmatpush1.msra.mxu0 0.0
        %596 = vmatprep.subr.mxu0 0.0
        %597 = vmatpush1.msra.mxu0 0.0
        %598 = vmatprep.subr.mxu0 0.0
        %599 = vmatpush1.msra.mxu0 0.0
        %600 = vmatprep.subr.mxu0 0.0
        %601 = vmatpush1.msra.mxu0 0.0
        %602 = vmatprep.subr.mxu0 0.0
        %603 = vmatpush1.msra.mxu0 0.0
        %604 = vmatprep.mubr.f32.mxu0 0.0
        %605 = vmatmul.mubr.f32.gmra.mrb[0].mxu0 %v531
        %v606 = vpop.f32.mrb[0].mxu0
        %v607 = vadd.f32 0.0, %v606
        %v608 = vpop.f32.mrb[0].mxu0
        %609 = vmatprep.mubr.f32.mxu0 0.0
        %610 = vmatmul.mubr.f32.gmra.mrb[0].mxu0 %v534
        %v611 = vpop.f32.mrb[0].mxu0
        %v612 = vadd.f32 0.0, %v611
        %v613 = vpop.f32.mrb[0].mxu0
        %614 = vdwg.mxu0
        %v615 = vld [vmem:[#allocation2] sm:$0xff]
        %v616 = vld [vmem:[#allocation2 + $0x8] sm:$0xff]
        %v617 = vmul.f32 %v490, %v615
        %v618 = vmul.f32 %v492, %v616
        %v619 = vadd.f32 %v617, %v607
        %v620 = vadd.f32 %v618, %v612
        %621 = vst [vmem:[#allocation2] sm:$0xff] %v619
        %622 = vst [vmem:[#allocation2 + $0x8] sm:$0xff] %v620
        %s623 = scalar_lea.vmem %s436, %s476
        %v624 = vld [vmem:[%s623] sm:$0x1]
        %vm625 = vcmask 130048
        %v627 = vsel %vm625, %v624, 0
        %629 = vmatprep.subr.mxu0 0.0
        %630 = vmatpush1.msra.mxu0 %v619
        %631 = vmatprep.subr.mxu0 0.0
        %632 = vmatpush1.msra.mxu0 %v620
        %633 = vmatprep.subr.mxu0 0.0
        %634 = vmatpush1.msra.mxu0 0.0
        %635 = vmatprep.subr.mxu0 0.0
        %636 = vmatpush1.msra.mxu0 0.0
        %637 = vmatprep.subr.mxu0 0.0
        %638 = vmatpush1.msra.mxu0 0.0
        %639 = vmatprep.subr.mxu0 0.0
        %640 = vmatpush1.msra.mxu0 0.0
        %641 = vmatprep.subr.mxu0 0.0
        %642 = vmatpush1.msra.mxu0 0.0
        %643 = vmatprep.subr.mxu0 0.0
        %644 = vmatpush1.msra.mxu0 0.0
        %645 = vmatprep.subr.mxu0 0.0
        %646 = vmatpush1.msra.mxu0 0.0
        %647 = vmatprep.subr.mxu0 0.0
        %648 = vmatpush1.msra.mxu0 0.0
        %649 = vmatprep.subr.mxu0 0.0
        %650 = vmatpush1.msra.mxu0 0.0
        %651 = vmatprep.subr.mxu0 0.0
        %652 = vmatpush1.msra.mxu0 0.0
        %653 = vmatprep.subr.mxu0 0.0
        %654 = vmatpush1.msra.mxu0 0.0
        %655 = vmatprep.subr.mxu0 0.0
        %656 = vmatpush1.msra.mxu0 0.0
        %657 = vmatprep.subr.mxu0 0.0
        %658 = vmatpush1.msra.mxu0 0.0
        %659 = vmatprep.subr.mxu0 0.0
        %660 = vmatpush1.msra.mxu0 0.0
        %661 = vmatprep.subr.mxu0 0.0
        %662 = vmatpush1.msra.mxu0 0.0
        %663 = vmatprep.subr.mxu0 0.0
        %664 = vmatpush1.msra.mxu0 0.0
        %665 = vmatprep.subr.mxu0 0.0
        %666 = vmatpush1.msra.mxu0 0.0
        %667 = vmatprep.subr.mxu0 0.0
        %668 = vmatpush1.msra.mxu0 0.0
        %669 = vmatprep.subr.mxu0 0.0
        %670 = vmatpush1.msra.mxu0 0.0
        %671 = vmatprep.subr.mxu0 0.0
        %672 = vmatpush1.msra.mxu0 0.0
        %673 = vmatprep.subr.mxu0 0.0
        %674 = vmatpush1.msra.mxu0 0.0
        %675 = vmatprep.subr.mxu0 0.0
        %676 = vmatpush1.msra.mxu0 0.0
        %677 = vmatprep.subr.mxu0 0.0
        %678 = vmatpush1.msra.mxu0 0.0
        %679 = vmatprep.subr.mxu0 0.0
        %680 = vmatpush1.msra.mxu0 0.0
        %681 = vmatprep.subr.mxu0 0.0
        %682 = vmatpush1.msra.mxu0 0.0
        %683 = vmatprep.subr.mxu0 0.0
        %684 = vmatpush1.msra.mxu0 0.0
        %685 = vmatprep.subr.mxu0 0.0
        %686 = vmatpush1.msra.mxu0 0.0
        %687 = vmatprep.subr.mxu0 0.0
        %688 = vmatpush1.msra.mxu0 0.0
        %689 = vmatprep.subr.mxu0 0.0
        %690 = vmatpush1.msra.mxu0 0.0
        %691 = vmatprep.subr.mxu0 0.0
        %692 = vmatpush1.msra.mxu0 0.0
        %693 = vmatprep.mubr.f32.mxu0 0.0
        %694 = vmatmul.mubr.f32.gmra.mrb[0].mxu0 %v627
        %v695 = vpop.f32.mrb[0].mxu0
        %v696 = vadd.f32 0.0, %v695
        %v697 = vpop.f32.mrb[0].mxu0
        %698 = vdwg.mxu0
        %s699 = scalar_lea.vmem [#allocation5], %s476
        %700 = vst [vmem:[%s699] sm:$0x1] %v696
      $region61: #{_lambda_.100} parent=51 // loop_footer
        %s480 = sadd.s32 1, %s476
      $region62: #{_lambda_.100} parent=51 // loop_footer_branch
        %475 = sbr.rel target = $region58
      $region63: #{_lambda_.100} parent=51 // loop_exit
        _
      %v701 = vld [vmem:[%s422] sm:$0xf]
      %v702 = vsub.f32 0.0, %v701
      %v703 = vmul.f32 %v702, 1.442695
      %v704 = vpow.pop %v703
      %v705 = vadd.f32 %v704, 1.0
      %v706 = vrcp.pop %v705
      %v707 = vmul.f32 %v701, %v706
      %v708 = vld [vmem:[%s6] sm:$0x1]
      %v709 = vld [vmem:[%s408] sm:$0xf]
      %v711 = vlaneseq
      %v712 = vshrl.u32 %v711, 7
      %v713 = vsub.s32 0, %v712
      %v714 = vrot.slane %v708, %v713
      %v716 = vmul.f32 %v714, %v709
      %v717 = vld [vmem:[#allocation5] sm:$0xf]
      %v718 = vadd.f32 %v716, %v717
      %v719 = vmul.f32 %v718, %v707
      %720 = vst [vmem:[%s443] sm:$0xf] %v719
      %p721 = scmp.lt.s32.totalorder %s23, 1
      %s722 = scalar_select %p721, %s23, 1
      %p723 = scmp.lt.s32.totalorder %s24, 0
      %s724 = scalar_select %p723, %s24, 0
      %s725 = sadd.s32 %s724, %s722
      %s726 = smul.addr %s725, 4
      %s727 = scalar_lea.vmem %s8, %s726
      // Predicated region
      $region64: #{_lambda_.100} parent=51 // pred_check
        %p728 = pneg %p254
      $region65: #{_lambda_.100} parent=51 // pred_check_branch
        %730 = sbr.rel (%p728) target = $region67
      $region66: #{_lambda_.100} parent=51 // pred_region
        _
      $region67: #{_lambda_.100} parent=51 // pred_fallthru
        _
    $region52: #{_lambda_.100} parent=5 // pred_fallthru
      _
    %p731 = scmp.le.s32.totalorder 2, %s14
    // Predicated region
    $region68: #{_lambda_.100} parent=5 // pred_check
      %p732 = pneg %p731
    $region69: #{_lambda_.100} parent=5 // pred_check_branch
      %734 = sbr.rel (%p732) target = $region71
    $region70: #{_lambda_.100} parent=5 // pred_region
      %s735 = ssub.s32 %s14, 2
      // Predicated region
      $region72: #{_lambda_.100} parent=70 // pred_check
        %p736 = pneg %p260
      $region73: #{_lambda_.100} parent=70 // pred_check_branch
        %738 = sbr.rel (%p736) target = $region75
      $region74: #{_lambda_.100} parent=70 // pred_region
        %p739 = scmp.lt.s32.totalorder %s25, 1
        %s740 = scalar_select %p739, %s25, 1
        %p741 = scmp.lt.s32.totalorder %s26, 0
        %s742 = scalar_select %p741, %s26, 0
        %s743 = sadd.s32 %s742, %s740
        %s744 = smul.addr %s743, 4
        %s745 = scalar_lea.vmem %s8, %s744
      $region75: #{_lambda_.100} parent=70 // pred_fallthru
        _
    $region71: #{_lambda_.100} parent=5 // pred_fallthru
      _
  $region6: #{_lambda_.100} parent=0 // loop_footer
    %s18 = sadd.s32 1, %s14
  $region7: #{_lambda_.100} parent=0 // loop_footer_branch
    %13 = sbr.rel target = $region3
  $region8: #{_lambda_.100} parent=0 // loop_exit
    _

</llo_original>
